<compile_context>
chip_gen: v7x
topology: tpu7x:2x2x1
jax: 0.10.0
libtpu: 0.0.40
codegen_flags: <defaults>
</compile_context>

<pallas_src>
import functools

import jax
import jax.numpy as jnp
from jax.experimental import pallas as pl
from jax.experimental.pallas import tpu as pltpu

EPS = 1e-5      # nn.InstanceNorm2d default eps (affine=False, biased variance)
LANE = 128      # TPU lane width; channel dim is padded to a multiple of this


# ---------------------------------------------------------------------------
# Fused kernel: 3x (conv3x3 + ReLU + InstanceNorm) + residual add + bilinear 2x
# upsample (align_corners=True).  One batch element per grid step.
# ---------------------------------------------------------------------------
def _up_kernel(x_ref, w1_ref, b1_ref, w2_ref, b2_ref, w3_ref, b3_ref,
               aw_ref, hw_ref, o_ref, slab1_ref, slabm_ref, *, H, W, Cin, Cpad):

    def zero_halo(slab_ref, C):
        # The tap writes below overwrite every interior cell each call; only the
        # 1-px halo strips are never written, so zero just those (tiny) instead
        # of the whole slab.  Re-done every step -> correct on any core split.
        z_row = jnp.zeros((1, W, 3 * C), slab_ref.dtype)
        slab_ref[0:1] = z_row                                   # x row -1
        slab_ref[H + 1:H + 2] = z_row                           # x row H
        z_col = jnp.zeros((H, 1, C), slab_ref.dtype)
        slab_ref[1:H + 1, 0:1, 0:C] = z_col                     # x col -1 (dx=-1 tap)
        slab_ref[1:H + 1, W - 1:W, 2 * C:3 * C] = z_col         # x col W  (dx=+1 tap)

    zero_halo(slab1_ref, Cin)
    zero_halo(slabm_ref, Cpad)

    def conv_relu_in(x_val, slab_ref, C, w_ref, b_ref):
        # x_val: (H, W, C) f32;  slab_ref: (H+2, W, 3*C) bf16 scratch
        # w_ref: (3, 3*C, Cpad) bf16 (one K=3*C matrix per dy tap); b_ref: (1, Cpad) f32
        xb = x_val.astype(jnp.bfloat16)
        # 3-tap (dx only) im2col slab; slab[r, w, dx*C+ci] = x[r-1, w+dx-1, ci].
        slab_ref[1:H + 1, 1:W, 0:C] = xb[:, 0:W - 1, :]          # dx = -1
        slab_ref[1:H + 1, :, C:2 * C] = xb                       # dx =  0 (centre)
        slab_ref[1:H + 1, 0:W - 1, 2 * C:3 * C] = xb[:, 1:W, :]  # dx = +1
        # dy shifts are free row views of the slab; accumulate 3 MXU matmuls.
        dn = (((2,), (0,)), ((), ()))
        acc = jax.lax.dot_general(slab_ref[0:H], w_ref[0], dn,
                                  preferred_element_type=jnp.float32)
        for dy in (1, 2):
            acc = acc + jax.lax.dot_general(slab_ref[dy:dy + H], w_ref[dy], dn,
                                            preferred_element_type=jnp.float32)
        acc = jnp.maximum(acc + b_ref[...], 0.0)                 # bias + ReLU, f32
        # InstanceNorm2d (no affine): one-pass per-channel stats over H*W, f32.
        inv_n = 1.0 / float(H * W)
        mean = jnp.sum(acc, axis=(0, 1), keepdims=True) * inv_n
        var = jnp.maximum(
            jnp.sum(acc * acc, axis=(0, 1), keepdims=True) * inv_n - mean * mean, 0.0)
        return (acc - mean) * jax.lax.rsqrt(var + EPS)           # (H, W, Cpad) f32

    x = x_ref[0].astype(jnp.float32)                             # (H, W, Cin)
    conv1 = conv_relu_in(x, slab1_ref, Cin, w1_ref, b1_ref)
    skip1 = conv_relu_in(conv1, slabm_ref, Cpad, w2_ref, b2_ref)
    skip2 = conv_relu_in(skip1, slabm_ref, Cpad, w3_ref, b3_ref)
    add1 = conv1 + skip2                                         # (H, W, Cpad) f32

    # Bilinear 2x upsample (align_corners=True):
    #  * W step: one-hot interpolation matmul on the MXU (bf16 in, f32 acc).
    #  * H step: 2-tap VPU blend in f32.  Row shifts are leading-dim views and
    #    the even/odd interleave is a leading-dim reshape -> no relayouts.
    t = jnp.einsum('pw,hwc->hpc', aw_ref[...], add1.astype(jnp.bfloat16),
                   preferred_element_type=jnp.float32)           # (H, 2W, Cpad) f32
    t_prev = jnp.concatenate([t[:1], t[:-1]], axis=0)            # t[m-1] (row 0 unused)
    t_next = jnp.concatenate([t[1:], t[-1:]], axis=0)            # t[m+1] (last unused)
    even = hw_ref[0][:, None, :] * t_prev + hw_ref[1][:, None, :] * t
    odd = hw_ref[2][:, None, :] * t + hw_ref[3][:, None, :] * t_next
    y = jnp.concatenate([even[:, None], odd[:, None]], axis=1)   # (H, 2, 2W, Cpad)
    o_ref[...] = y.reshape(1, 2 * H, 2 * W, Cpad).astype(o_ref.dtype)


# ---------------------------------------------------------------------------
# Host-side helpers
# ---------------------------------------------------------------------------
def _bilinear_matrix(in_size, out_size):
    # Interpolation matrix matching torch.nn.Upsample(bilinear, align_corners=True).
    if out_size == 1 or in_size == 1:
        src = jnp.zeros((out_size,), jnp.float32)
    else:
        src = jnp.arange(out_size, dtype=jnp.float32) * (in_size - 1) / (out_size - 1)
    i0 = jnp.clip(jnp.floor(src).astype(jnp.int32), 0, max(in_size - 2, 0))
    frac = src - i0.astype(jnp.float32)
    a0 = jax.nn.one_hot(i0, in_size, dtype=jnp.float32) * (1.0 - frac)[:, None]
    a1 = (jax.nn.one_hot(jnp.minimum(i0 + 1, in_size - 1), in_size, dtype=jnp.float32)
          * frac[:, None])
    return a0 + a1


def _h_blend_weights(H, Cpad):
    # 2-tap per-row weights for the H direction of the 2x align_corners=True
    # upsample, arranged for an even/odd row interleave:
    #   out[2m]   = we0[m]*t[m-1] + we1[m]*t[m]
    #   out[2m+1] = wo0[m]*t[m]   + wo1[m]*t[m+1]
    m = jnp.arange(H, dtype=jnp.float32)
    scale = (H - 1.0) / (2.0 * H - 1.0) if H > 1 else 0.0
    we0 = m - 2.0 * m * scale
    we1 = 1.0 - we0
    wo1 = (2.0 * m + 1.0) * scale - m
    wo0 = 1.0 - wo1
    hw = jnp.stack([we0, we1, wo0, wo1], axis=0)                 # (4, H)
    # Pre-broadcast along the 128-lane channel axis -> cheap sublane broadcast
    # in-kernel; kept f32 so interpolation coefficients stay exact.
    return jnp.broadcast_to(hw[:, :, None], (4, H, Cpad)).astype(jnp.float32)


def _prep_conv(w, b, cin_pad, cout_pad):
    # w: (3, 3, cin, cout) -> (3, 3*cin_pad, cout_pad) bf16 (one matrix per dy);
    # b -> (1, cout_pad) f32.  Zero-padded channels stay exactly zero through
    # conv / ReLU / InstanceNorm.
    _, _, cin, cout = w.shape
    w = jnp.pad(w, ((0, 0), (0, 0), (0, cin_pad - cin), (0, cout_pad - cout)))
    b = jnp.pad(b, ((0, cout_pad - cout),))
    return (w.reshape(3, 3 * cin_pad, cout_pad).astype(jnp.bfloat16),
            b.reshape(1, cout_pad).astype(jnp.float32))


def up_pallas(x_nhwc, params):
    # x_nhwc: (N, H, W, Cin) f32 -> (N, 2H, 2W, Cout) f32 (channels-last).
    N, H, W, Cin = x_nhwc.shape
    Cout = params["w1"].shape[-1]
    Cpad = ((Cout + LANE - 1) // LANE) * LANE      # lane-dense channel dim

    w1, b1 = _prep_conv(params["w1"], params["b1"], Cin, Cpad)
    w2, b2 = _prep_conv(params["w2"], params["b2"], Cpad, Cpad)
    w3, b3 = _prep_conv(params["w3"], params["b3"], Cpad, Cpad)
    aw = _bilinear_matrix(W, 2 * W).astype(jnp.bfloat16)          # (2W, W)
    hw = _h_blend_weights(H, Cpad)                                # (4, H, Cpad) f32

    kern = functools.partial(_up_kernel, H=H, W=W, Cin=Cin, Cpad=Cpad)

    # VMEM budget: double-buffered BlockSpec blocks + bf16 slabs + live f32
    # temporaries (activations, matmul results, bf16 cast temps, upsample).
    f32b, bf16b = 4, 2
    block_bytes = 2 * (H * W * Cin * f32b
                       + (2 * H) * (2 * W) * Cpad * f32b
                       + 9 * Cin * Cpad * bf16b + 2 * 9 * Cpad * Cpad * bf16b
                       + 3 * Cpad * f32b
                       + 2 * W * W * bf16b + 4 * H * Cpad * f32b)
    scratch_bytes = (H + 2) * W * 3 * (Cin + Cpad) * bf16b
    live_bytes = (5 * H * W * Cpad * f32b          # conv1/skip1/skip2/add1/acc
                  + H * W * Cpad * bf16b           # bf16 cast temporaries
                  + 4 * H * 2 * W * Cpad * f32b    # t / t_prev / t_next / even+odd
                  + 4 * H * W * Cpad * f32b)       # interleaved y before the store
    need = block_bytes + scratch_bytes + live_bytes
    try:
        vmem_cap = int(pltpu.get_tpu_info().vmem_capacity_bytes)
    except Exception:                               # conservative fallback
        vmem_cap = 64 * 2 ** 20
    # Raise toward physical VMEM on v5e/v6e (128 MiB) but always leave headroom
    # for compiler temporaries — never request all of v7x's 64 MiB.
    vmem_limit = int(min(max(need + (8 << 20), 32 << 20), vmem_cap - (12 << 20)))

    conv_flops = 2 * H * W * 9 * (Cin * Cpad + 2 * Cpad * Cpad)
    up_flops = 2 * H * (2 * W) * W * Cpad + 8 * (2 * H) * (2 * W) * Cpad
    bytes_accessed = (x_nhwc.size * f32b
                      + (w1.size + w2.size + w3.size + aw.size) * bf16b
                      + (b1.size + b2.size + b3.size + hw.size) * f32b
                      + N * (2 * H) * (2 * W) * Cpad * f32b)
    cost = pl.CostEstimate(flops=int(N * (conv_flops + up_flops)),
                           transcendentals=int(3 * N * Cpad),
                           bytes_accessed=int(bytes_accessed))

    out = pl.pallas_call(
        kern,
        out_shape=jax.ShapeDtypeStruct((N, 2 * H, 2 * W, Cpad), x_nhwc.dtype),
        grid=(N,),
        in_specs=[
            pl.BlockSpec((1, H, W, Cin), lambda n: (n, 0, 0, 0)),
            pl.BlockSpec((3, 3 * Cin, Cpad), lambda n: (0, 0, 0)),
            pl.BlockSpec((1, Cpad), lambda n: (0, 0)),
            pl.BlockSpec((3, 3 * Cpad, Cpad), lambda n: (0, 0, 0)),
            pl.BlockSpec((1, Cpad), lambda n: (0, 0)),
            pl.BlockSpec((3, 3 * Cpad, Cpad), lambda n: (0, 0, 0)),
            pl.BlockSpec((1, Cpad), lambda n: (0, 0)),
            pl.BlockSpec((2 * W, W), lambda n: (0, 0)),
            pl.BlockSpec((4, H, Cpad), lambda n: (0, 0, 0)),
        ],
        out_specs=pl.BlockSpec((1, 2 * H, 2 * W, Cpad), lambda n: (n, 0, 0, 0)),
        scratch_shapes=[
            pltpu.VMEM((H + 2, W, 3 * Cin), jnp.bfloat16),    # 3-tap slab, conv1
            pltpu.VMEM((H + 2, W, 3 * Cpad), jnp.bfloat16),   # 3-tap slab, conv2/3
        ],
        compiler_params=pltpu.CompilerParams(
            dimension_semantics=("parallel",),
            vmem_limit_bytes=vmem_limit),
        cost_estimate=cost,
    )(x_nhwc, w1, b1, w2, b2, w3, b3, aw, hw)

    if Cpad != Cout:
        out = out[..., :Cout]
    return out


# ---------------------------------------------------------------------------
# `Up` forward (NCHW in / NCHW out, like the PyTorch module).  In a full model
# the NCHW<->NHWC transposes should live only at the network boundaries.
# ---------------------------------------------------------------------------
def init_up_params(key, inchannel, outchannel, dtype=jnp.float32):
    ks = jax.random.split(key, 6)

    def conv_w(k, cin, cout):
        return 0.1 * jax.random.normal(k, (3, 3, cin, cout), dtype)

    return {
        "w1": conv_w(ks[0], inchannel, outchannel),
        "b1": 0.1 * jax.random.normal(ks[1], (outchannel,), dtype),
        "w2": conv_w(ks[2], outchannel, outchannel),
        "b2": 0.1 * jax.random.normal(ks[3], (outchannel,), dtype),
        "w3": conv_w(ks[4], outchannel, outchannel),
        "b3": 0.1 * jax.random.normal(ks[5], (outchannel,), dtype),
    }


@jax.jit
def up_forward(x_nchw, params):
    x = jnp.transpose(x_nchw, (0, 2, 3, 1))                  # NCHW -> NHWC
    y = up_pallas(x, params)                                 # (N, 2H, 2W, Cout)
    return jnp.transpose(y, (0, 3, 1, 2))                    # NHWC -> NCHW


if __name__ == "__main__":
    N, Cin, Cout, H, W = 2, 4, 8, 16, 16
    key = jax.random.PRNGKey(0)
    kx, kp = jax.random.split(key)
    x = jax.random.normal(kx, (N, Cin, H, W), jnp.float32)   # NCHW like PyTorch
    params = init_up_params(kp, Cin, Cout)

    y = up_forward(x, params)
    jax.block_until_ready(y)
    assert y.shape == (N, Cout, 2 * H, 2 * W)
    assert bool(jnp.all(jnp.isfinite(y)))
    print("KERNEL_OK")
</pallas_src>

<mosaic_0001>
module attributes {stable_mosaic.version = 11 : i64} {
  func.func @_up_kernel(%arg0: i32, %arg1: memref<1x16x16x4xf32, #tpu.memory_space<vmem>>, %arg2: memref<3x12x128xbf16, #tpu.memory_space<vmem>>, %arg3: memref<1x128xf32, #tpu.memory_space<vmem>>, %arg4: memref<3x384x128xbf16, #tpu.memory_space<vmem>>, %arg5: memref<1x128xf32, #tpu.memory_space<vmem>>, %arg6: memref<3x384x128xbf16, #tpu.memory_space<vmem>>, %arg7: memref<1x128xf32, #tpu.memory_space<vmem>>, %arg8: memref<32x16xbf16, #tpu.memory_space<vmem>>, %arg9: memref<4x16x128xf32, #tpu.memory_space<vmem>>, %arg10: memref<1x32x32x128xf32, #tpu.memory_space<vmem>>, %arg11: memref<18x16x12xbf16, #tpu.memory_space<vmem>>, %arg12: memref<18x16x384xbf16, #tpu.memory_space<vmem>>) attributes {dimension_semantics = [#tpu.dimension_semantics<parallel>], iteration_bounds = array<i64: 2>, scalar_prefetch = 0 : i64, scratch_operands = 2 : i64, tpu.core_type = #tpu.core_type<tc>, window_params = [{transform_indices = @transform_0, window_bounds = array<i64: 1, 16, 16, 4>}, {pipeline_mode = #tpu.pipeline_mode<synchronous>, transform_indices = @transform_1, window_bounds = array<i64: 3, 12, 128>}, {pipeline_mode = #tpu.pipeline_mode<synchronous>, transform_indices = @transform_2, window_bounds = array<i64: 1, 128>}, {pipeline_mode = #tpu.pipeline_mode<synchronous>, transform_indices = @transform_3, window_bounds = array<i64: 3, 384, 128>}, {pipeline_mode = #tpu.pipeline_mode<synchronous>, transform_indices = @transform_4, window_bounds = array<i64: 1, 128>}, {pipeline_mode = #tpu.pipeline_mode<synchronous>, transform_indices = @transform_5, window_bounds = array<i64: 3, 384, 128>}, {pipeline_mode = #tpu.pipeline_mode<synchronous>, transform_indices = @transform_6, window_bounds = array<i64: 1, 128>}, {pipeline_mode = #tpu.pipeline_mode<synchronous>, transform_indices = @transform_7, window_bounds = array<i64: 32, 16>}, {pipeline_mode = #tpu.pipeline_mode<synchronous>, transform_indices = @transform_8, window_bounds = array<i64: 4, 16, 128>}, {transform_indices = @transform_9, window_bounds = array<i64: 1, 32, 32, 128>}]} {
    %cst = arith.constant 0.000000e+00 : bf16
    %0 = vector.broadcast %cst : bf16 to vector<1x16x12xbf16>
    %c0 = arith.constant 0 : index
    %c0_0 = arith.constant 0 : index
    %c0_1 = arith.constant 0 : index
    %1 = vector.load %arg11[%c0, %c0_0, %c0_1] : memref<18x16x12xbf16, #tpu.memory_space<vmem>>, vector<1x16x12xbf16>
    tpu.vector_store %arg11[%c0, %c0_0, %c0_1], %0 {strides = array<i32>} : memref<18x16x12xbf16, #tpu.memory_space<vmem>>, vector<1x16x12xbf16>,
    %c17 = arith.constant 17 : index
    %c0_2 = arith.constant 0 : index
    %c0_3 = arith.constant 0 : index
    %2 = vector.load %arg11[%c17, %c0_2, %c0_3] : memref<18x16x12xbf16, #tpu.memory_space<vmem>>, vector<1x16x12xbf16>
    tpu.vector_store %arg11[%c17, %c0_2, %c0_3], %0 {strides = array<i32>} : memref<18x16x12xbf16, #tpu.memory_space<vmem>>, vector<1x16x12xbf16>,
    %cst_4 = arith.constant 0.000000e+00 : bf16
    %3 = vector.broadcast %cst_4 : bf16 to vector<16x1x4xbf16>
    %c1 = arith.constant 1 : index
    %c0_5 = arith.constant 0 : index
    %c0_6 = arith.constant 0 : index
    %4 = vector.load %arg11[%c1, %c0_5, %c0_6] : memref<18x16x12xbf16, #tpu.memory_space<vmem>>, vector<16x1x4xbf16>
    tpu.vector_store %arg11[%c1, %c0_5, %c0_6], %3 {strides = array<i32>} : memref<18x16x12xbf16, #tpu.memory_space<vmem>>, vector<16x1x4xbf16>,
    %c1_7 = arith.constant 1 : index
    %c15 = arith.constant 15 : index
    %c8 = arith.constant 8 : index
    %5 = vector.load %arg11[%c1_7, %c15, %c8] : memref<18x16x12xbf16, #tpu.memory_space<vmem>>, vector<16x1x4xbf16>
    tpu.vector_store %arg11[%c1_7, %c15, %c8], %3 {strides = array<i32>} : memref<18x16x12xbf16, #tpu.memory_space<vmem>>, vector<16x1x4xbf16>,
    %cst_8 = arith.constant 0.000000e+00 : bf16
    %6 = vector.broadcast %cst_8 : bf16 to vector<1x16x384xbf16>
    %c0_9 = arith.constant 0 : index
    %c0_10 = arith.constant 0 : index
    %c0_11 = arith.constant 0 : index
    %7 = vector.load %arg12[%c0_9, %c0_10, %c0_11] : memref<18x16x384xbf16, #tpu.memory_space<vmem>>, vector<1x16x384xbf16>
    tpu.vector_store %arg12[%c0_9, %c0_10, %c0_11], %6 {strides = array<i32>} : memref<18x16x384xbf16, #tpu.memory_space<vmem>>, vector<1x16x384xbf16>,
    %c17_12 = arith.constant 17 : index
    %c0_13 = arith.constant 0 : index
    %c0_14 = arith.constant 0 : index
    %8 = vector.load %arg12[%c17_12, %c0_13, %c0_14] : memref<18x16x384xbf16, #tpu.memory_space<vmem>>, vector<1x16x384xbf16>
    tpu.vector_store %arg12[%c17_12, %c0_13, %c0_14], %6 {strides = array<i32>} : memref<18x16x384xbf16, #tpu.memory_space<vmem>>, vector<1x16x384xbf16>,
    %cst_15 = arith.constant 0.000000e+00 : bf16
    %9 = vector.broadcast %cst_15 : bf16 to vector<16x1x128xbf16>
    %c1_16 = arith.constant 1 : index
    %c0_17 = arith.constant 0 : index
    %c0_18 = arith.constant 0 : index
    %10 = vector.load %arg12[%c1_16, %c0_17, %c0_18] : memref<18x16x384xbf16, #tpu.memory_space<vmem>>, vector<16x1x128xbf16>
    tpu.vector_store %arg12[%c1_16, %c0_17, %c0_18], %9 {strides = array<i32>} : memref<18x16x384xbf16, #tpu.memory_space<vmem>>, vector<16x1x128xbf16>,
    %c1_19 = arith.constant 1 : index
    %c15_20 = arith.constant 15 : index
    %c256 = arith.constant 256 : index
    %11 = vector.load %arg12[%c1_19, %c15_20, %c256] : memref<18x16x384xbf16, #tpu.memory_space<vmem>>, vector<16x1x128xbf16>
    tpu.vector_store %arg12[%c1_19, %c15_20, %c256], %9 {strides = array<i32>} : memref<18x16x384xbf16, #tpu.memory_space<vmem>>, vector<16x1x128xbf16>,
    %c0_21 = arith.constant 0 : index
    %c0_22 = arith.constant 0 : index
    %c0_23 = arith.constant 0 : index
    %c0_24 = arith.constant 0 : index
    %12 = vector.load %arg1[%c0_21, %c0_22, %c0_23, %c0_24] : memref<1x16x16x4xf32, #tpu.memory_space<vmem>>, vector<1x16x16x4xf32>
    %13 = vector.shape_cast %12 : vector<1x16x16x4xf32> to vector<16x16x4xf32>
    %14 = arith.truncf %13 : vector<16x16x4xf32> to vector<16x16x4xbf16>
    %15 = vector.extract_strided_slice %14 {offsets = [0, 0, 0], sizes = [16, 15, 4], strides = [1, 1, 1]} : vector<16x16x4xbf16> to vector<16x15x4xbf16>
    %c1_25 = arith.constant 1 : index
    %c1_26 = arith.constant 1 : index
    %c0_27 = arith.constant 0 : index
    %16 = vector.load %arg11[%c1_25, %c1_26, %c0_27] : memref<18x16x12xbf16, #tpu.memory_space<vmem>>, vector<16x15x4xbf16>
    tpu.vector_store %arg11[%c1_25, %c1_26, %c0_27], %15 {strides = array<i32>} : memref<18x16x12xbf16, #tpu.memory_space<vmem>>, vector<16x15x4xbf16>,
    %c1_28 = arith.constant 1 : index
    %c0_29 = arith.constant 0 : index
    %c4 = arith.constant 4 : index
    %17 = vector.load %arg11[%c1_28, %c0_29, %c4] : memref<18x16x12xbf16, #tpu.memory_space<vmem>>, vector<16x16x4xbf16>
    tpu.vector_store %arg11[%c1_28, %c0_29, %c4], %14 {strides = array<i32>} : memref<18x16x12xbf16, #tpu.memory_space<vmem>>, vector<16x16x4xbf16>,
    %18 = vector.extract_strided_slice %14 {offsets = [0, 1, 0], sizes = [16, 15, 4], strides = [1, 1, 1]} : vector<16x16x4xbf16> to vector<16x15x4xbf16>
    %c1_30 = arith.constant 1 : index
    %c0_31 = arith.constant 0 : index
    %c8_32 = arith.constant 8 : index
    %19 = vector.load %arg11[%c1_30, %c0_31, %c8_32] : memref<18x16x12xbf16, #tpu.memory_space<vmem>>, vector<16x15x4xbf16>
    tpu.vector_store %arg11[%c1_30, %c0_31, %c8_32], %18 {strides = array<i32>} : memref<18x16x12xbf16, #tpu.memory_space<vmem>>, vector<16x15x4xbf16>,
    %c0_33 = arith.constant 0 : index
    %c0_34 = arith.constant 0 : index
    %c0_35 = arith.constant 0 : index
    %20 = vector.load %arg11[%c0_33, %c0_34, %c0_35] : memref<18x16x12xbf16, #tpu.memory_space<vmem>>, vector<16x16x12xbf16>
    %c0_36 = arith.constant 0 : index
    %c0_37 = arith.constant 0 : index
    %c0_38 = arith.constant 0 : index
    %21 = vector.load %arg2[%c0_36, %c0_37, %c0_38] : memref<3x12x128xbf16, #tpu.memory_space<vmem>>, vector<1x12x128xbf16>
    %22 = vector.shape_cast %21 : vector<1x12x128xbf16> to vector<12x128xbf16>
    %cst_39 = arith.constant dense<0.000000e+00> : vector<16x16x128xf32>
    %23 = tpu.matmul %20, %22, %cst_39 {dimension_numbers = #tpu.dot_dimension_numbers<[2], [0], [0, 1], [1], [0, 0, 0, 1, 1, 1], [], []>} : vector<16x16x12xbf16>, vector<12x128xbf16>, vector<16x16x128xf32> -> vector<16x16x128xf32>
    %c1_40 = arith.constant 1 : index
    %c0_41 = arith.constant 0 : index
    %c0_42 = arith.constant 0 : index
    %24 = vector.load %arg11[%c1_40, %c0_41, %c0_42] : memref<18x16x12xbf16, #tpu.memory_space<vmem>>, vector<16x16x12xbf16>
    %c1_43 = arith.constant 1 : index
    %c0_44 = arith.constant 0 : index
    %c0_45 = arith.constant 0 : index
    %25 = vector.load %arg2[%c1_43, %c0_44, %c0_45] : memref<3x12x128xbf16, #tpu.memory_space<vmem>>, vector<1x12x128xbf16>
    %26 = vector.shape_cast %25 : vector<1x12x128xbf16> to vector<12x128xbf16>
    %cst_46 = arith.constant dense<0.000000e+00> : vector<16x16x128xf32>
    %27 = tpu.matmul %24, %26, %cst_46 {dimension_numbers = #tpu.dot_dimension_numbers<[2], [0], [0, 1], [1], [0, 0, 0, 1, 1, 1], [], []>} : vector<16x16x12xbf16>, vector<12x128xbf16>, vector<16x16x128xf32> -> vector<16x16x128xf32>
    %28 = arith.addf %23, %27 : vector<16x16x128xf32>
    %c2 = arith.constant 2 : index
    %c0_47 = arith.constant 0 : index
    %c0_48 = arith.constant 0 : index
    %29 = vector.load %arg11[%c2, %c0_47, %c0_48] : memref<18x16x12xbf16, #tpu.memory_space<vmem>>, vector<16x16x12xbf16>
    %c2_49 = arith.constant 2 : index
    %c0_50 = arith.constant 0 : index
    %c0_51 = arith.constant 0 : index
    %30 = vector.load %arg2[%c2_49, %c0_50, %c0_51] : memref<3x12x128xbf16, #tpu.memory_space<vmem>>, vector<1x12x128xbf16>
    %31 = vector.shape_cast %30 : vector<1x12x128xbf16> to vector<12x128xbf16>
    %cst_52 = arith.constant dense<0.000000e+00> : vector<16x16x128xf32>
    %32 = tpu.matmul %29, %31, %cst_52 {dimension_numbers = #tpu.dot_dimension_numbers<[2], [0], [0, 1], [1], [0, 0, 0, 1, 1, 1], [], []>} : vector<16x16x12xbf16>, vector<12x128xbf16>, vector<16x16x128xf32> -> vector<16x16x128xf32>
    %33 = arith.addf %28, %32 : vector<16x16x128xf32>
    %c0_53 = arith.constant 0 : index
    %c0_54 = arith.constant 0 : index
    %34 = vector.load %arg3[%c0_53, %c0_54] : memref<1x128xf32, #tpu.memory_space<vmem>>, vector<1x128xf32>
    %35 = vector.shape_cast %34 : vector<1x128xf32> to vector<1x1x128xf32>
    %36 = vector.broadcast %35 : vector<1x1x128xf32> to vector<16x16x128xf32>
    %37 = arith.addf %33, %36 : vector<16x16x128xf32>
    %cst_55 = arith.constant 0.000000e+00 : f32
    %38 = vector.broadcast %cst_55 : f32 to vector<16x16x128xf32>
    %39 = arith.maximumf %37, %38 : vector<16x16x128xf32>
    %cst_56 = arith.constant dense<0.000000e+00> : vector<128xf32>
    %40 = vector.multi_reduction <add>, %39, %cst_56 [0, 1] : vector<16x16x128xf32> to vector<128xf32>
    %41 = vector.shape_cast %40 : vector<128xf32> to vector<1x1x128xf32>
    %cst_57 = arith.constant 3.906250e-03 : f32
    %42 = vector.broadcast %cst_57 : f32 to vector<1x1x128xf32>
    %43 = arith.mulf %41, %42 : vector<1x1x128xf32>
    %44 = arith.mulf %39, %39 : vector<16x16x128xf32>
    %cst_58 = arith.constant dense<0.000000e+00> : vector<128xf32>
    %45 = vector.multi_reduction <add>, %44, %cst_58 [0, 1] : vector<16x16x128xf32> to vector<128xf32>
    %46 = vector.shape_cast %45 : vector<128xf32> to vector<1x1x128xf32>
    %cst_59 = arith.constant 3.906250e-03 : f32
    %47 = vector.broadcast %cst_59 : f32 to vector<1x1x128xf32>
    %48 = arith.mulf %46, %47 : vector<1x1x128xf32>
    %49 = arith.mulf %43, %43 : vector<1x1x128xf32>
    %50 = arith.subf %48, %49 : vector<1x1x128xf32>
    %cst_60 = arith.constant 0.000000e+00 : f32
    %51 = vector.broadcast %cst_60 : f32 to vector<1x1x128xf32>
    %52 = arith.maximumf %50, %51 : vector<1x1x128xf32>
    %53 = vector.broadcast %43 : vector<1x1x128xf32> to vector<16x16x128xf32>
    %54 = arith.subf %39, %53 : vector<16x16x128xf32>
    %cst_61 = arith.constant 9.99999974E-6 : f32
    %55 = vector.broadcast %cst_61 : f32 to vector<1x1x128xf32>
    %56 = arith.addf %52, %55 : vector<1x1x128xf32>
    %57 = math.rsqrt %56 : vector<1x1x128xf32>
    %58 = vector.broadcast %57 : vector<1x1x128xf32> to vector<16x16x128xf32>
    %59 = arith.mulf %54, %58 : vector<16x16x128xf32>
    %60 = arith.truncf %59 : vector<16x16x128xf32> to vector<16x16x128xbf16>
    %61 = vector.extract_strided_slice %60 {offsets = [0, 0, 0], sizes = [16, 15, 128], strides = [1, 1, 1]} : vector<16x16x128xbf16> to vector<16x15x128xbf16>
    %c1_62 = arith.constant 1 : index
    %c1_63 = arith.constant 1 : index
    %c0_64 = arith.constant 0 : index
    %62 = vector.load %arg12[%c1_62, %c1_63, %c0_64] : memref<18x16x384xbf16, #tpu.memory_space<vmem>>, vector<16x15x128xbf16>
    tpu.vector_store %arg12[%c1_62, %c1_63, %c0_64], %61 {strides = array<i32>} : memref<18x16x384xbf16, #tpu.memory_space<vmem>>, vector<16x15x128xbf16>,
    %c1_65 = arith.constant 1 : index
    %c0_66 = arith.constant 0 : index
    %c128 = arith.constant 128 : index
    %63 = vector.load %arg12[%c1_65, %c0_66, %c128] : memref<18x16x384xbf16, #tpu.memory_space<vmem>>, vector<16x16x128xbf16>
    tpu.vector_store %arg12[%c1_65, %c0_66, %c128], %60 {strides = array<i32>} : memref<18x16x384xbf16, #tpu.memory_space<vmem>>, vector<16x16x128xbf16>,
    %64 = vector.extract_strided_slice %60 {offsets = [0, 1, 0], sizes = [16, 15, 128], strides = [1, 1, 1]} : vector<16x16x128xbf16> to vector<16x15x128xbf16>
    %c1_67 = arith.constant 1 : index
    %c0_68 = arith.constant 0 : index
    %c256_69 = arith.constant 256 : index
    %65 = vector.load %arg12[%c1_67, %c0_68, %c256_69] : memref<18x16x384xbf16, #tpu.memory_space<vmem>>, vector<16x15x128xbf16>
    tpu.vector_store %arg12[%c1_67, %c0_68, %c256_69], %64 {strides = array<i32>} : memref<18x16x384xbf16, #tpu.memory_space<vmem>>, vector<16x15x128xbf16>,
    %c0_70 = arith.constant 0 : index
    %c0_71 = arith.constant 0 : index
    %c0_72 = arith.constant 0 : index
    %66 = vector.load %arg12[%c0_70, %c0_71, %c0_72] : memref<18x16x384xbf16, #tpu.memory_space<vmem>>, vector<16x16x384xbf16>
    %c0_73 = arith.constant 0 : index
    %c0_74 = arith.constant 0 : index
    %c0_75 = arith.constant 0 : index
    %67 = vector.load %arg4[%c0_73, %c0_74, %c0_75] : memref<3x384x128xbf16, #tpu.memory_space<vmem>>, vector<1x384x128xbf16>
    %68 = vector.shape_cast %67 : vector<1x384x128xbf16> to vector<384x128xbf16>
    %cst_76 = arith.constant dense<0.000000e+00> : vector<16x16x128xf32>
    %69 = tpu.matmul %66, %68, %cst_76 {dimension_numbers = #tpu.dot_dimension_numbers<[2], [0], [0, 1], [1], [0, 0, 0, 1, 1, 1], [], []>} : vector<16x16x384xbf16>, vector<384x128xbf16>, vector<16x16x128xf32> -> vector<16x16x128xf32>
    %c1_77 = arith.constant 1 : index
    %c0_78 = arith.constant 0 : index
    %c0_79 = arith.constant 0 : index
    %70 = vector.load %arg12[%c1_77, %c0_78, %c0_79] : memref<18x16x384xbf16, #tpu.memory_space<vmem>>, vector<16x16x384xbf16>
    %c1_80 = arith.constant 1 : index
    %c0_81 = arith.constant 0 : index
    %c0_82 = arith.constant 0 : index
    %71 = vector.load %arg4[%c1_80, %c0_81, %c0_82] : memref<3x384x128xbf16, #tpu.memory_space<vmem>>, vector<1x384x128xbf16>
    %72 = vector.shape_cast %71 : vector<1x384x128xbf16> to vector<384x128xbf16>
    %cst_83 = arith.constant dense<0.000000e+00> : vector<16x16x128xf32>
    %73 = tpu.matmul %70, %72, %cst_83 {dimension_numbers = #tpu.dot_dimension_numbers<[2], [0], [0, 1], [1], [0, 0, 0, 1, 1, 1], [], []>} : vector<16x16x384xbf16>, vector<384x128xbf16>, vector<16x16x128xf32> -> vector<16x16x128xf32>
    %74 = arith.addf %69, %73 : vector<16x16x128xf32>
    %c2_84 = arith.constant 2 : index
    %c0_85 = arith.constant 0 : index
    %c0_86 = arith.constant 0 : index
    %75 = vector.load %arg12[%c2_84, %c0_85, %c0_86] : memref<18x16x384xbf16, #tpu.memory_space<vmem>>, vector<16x16x384xbf16>
    %c2_87 = arith.constant 2 : index
    %c0_88 = arith.constant 0 : index
    %c0_89 = arith.constant 0 : index
    %76 = vector.load %arg4[%c2_87, %c0_88, %c0_89] : memref<3x384x128xbf16, #tpu.memory_space<vmem>>, vector<1x384x128xbf16>
    %77 = vector.shape_cast %76 : vector<1x384x128xbf16> to vector<384x128xbf16>
    %cst_90 = arith.constant dense<0.000000e+00> : vector<16x16x128xf32>
    %78 = tpu.matmul %75, %77, %cst_90 {dimension_numbers = #tpu.dot_dimension_numbers<[2], [0], [0, 1], [1], [0, 0, 0, 1, 1, 1], [], []>} : vector<16x16x384xbf16>, vector<384x128xbf16>, vector<16x16x128xf32> -> vector<16x16x128xf32>
    %79 = arith.addf %74, %78 : vector<16x16x128xf32>
    %c0_91 = arith.constant 0 : index
    %c0_92 = arith.constant 0 : index
    %80 = vector.load %arg5[%c0_91, %c0_92] : memref<1x128xf32, #tpu.memory_space<vmem>>, vector<1x128xf32>
    %81 = vector.shape_cast %80 : vector<1x128xf32> to vector<1x1x128xf32>
    %82 = vector.broadcast %81 : vector<1x1x128xf32> to vector<16x16x128xf32>
    %83 = arith.addf %79, %82 : vector<16x16x128xf32>
    %cst_93 = arith.constant 0.000000e+00 : f32
    %84 = vector.broadcast %cst_93 : f32 to vector<16x16x128xf32>
    %85 = arith.maximumf %83, %84 : vector<16x16x128xf32>
    %cst_94 = arith.constant dense<0.000000e+00> : vector<128xf32>
    %86 = vector.multi_reduction <add>, %85, %cst_94 [0, 1] : vector<16x16x128xf32> to vector<128xf32>
    %87 = vector.shape_cast %86 : vector<128xf32> to vector<1x1x128xf32>
    %cst_95 = arith.constant 3.906250e-03 : f32
    %88 = vector.broadcast %cst_95 : f32 to vector<1x1x128xf32>
    %89 = arith.mulf %87, %88 : vector<1x1x128xf32>
    %90 = arith.mulf %85, %85 : vector<16x16x128xf32>
    %cst_96 = arith.constant dense<0.000000e+00> : vector<128xf32>
    %91 = vector.multi_reduction <add>, %90, %cst_96 [0, 1] : vector<16x16x128xf32> to vector<128xf32>
    %92 = vector.shape_cast %91 : vector<128xf32> to vector<1x1x128xf32>
    %cst_97 = arith.constant 3.906250e-03 : f32
    %93 = vector.broadcast %cst_97 : f32 to vector<1x1x128xf32>
    %94 = arith.mulf %92, %93 : vector<1x1x128xf32>
    %95 = arith.mulf %89, %89 : vector<1x1x128xf32>
    %96 = arith.subf %94, %95 : vector<1x1x128xf32>
    %cst_98 = arith.constant 0.000000e+00 : f32
    %97 = vector.broadcast %cst_98 : f32 to vector<1x1x128xf32>
    %98 = arith.maximumf %96, %97 : vector<1x1x128xf32>
    %99 = vector.broadcast %89 : vector<1x1x128xf32> to vector<16x16x128xf32>
    %100 = arith.subf %85, %99 : vector<16x16x128xf32>
    %cst_99 = arith.constant 9.99999974E-6 : f32
    %101 = vector.broadcast %cst_99 : f32 to vector<1x1x128xf32>
    %102 = arith.addf %98, %101 : vector<1x1x128xf32>
    %103 = math.rsqrt %102 : vector<1x1x128xf32>
    %104 = vector.broadcast %103 : vector<1x1x128xf32> to vector<16x16x128xf32>
    %105 = arith.mulf %100, %104 : vector<16x16x128xf32>
    %106 = arith.truncf %105 : vector<16x16x128xf32> to vector<16x16x128xbf16>
    %107 = vector.extract_strided_slice %106 {offsets = [0, 0, 0], sizes = [16, 15, 128], strides = [1, 1, 1]} : vector<16x16x128xbf16> to vector<16x15x128xbf16>
    %c1_100 = arith.constant 1 : index
    %c1_101 = arith.constant 1 : index
    %c0_102 = arith.constant 0 : index
    %108 = vector.load %arg12[%c1_100, %c1_101, %c0_102] : memref<18x16x384xbf16, #tpu.memory_space<vmem>>, vector<16x15x128xbf16>
    tpu.vector_store %arg12[%c1_100, %c1_101, %c0_102], %107 {strides = array<i32>} : memref<18x16x384xbf16, #tpu.memory_space<vmem>>, vector<16x15x128xbf16>,
    %c1_103 = arith.constant 1 : index
    %c0_104 = arith.constant 0 : index
    %c128_105 = arith.constant 128 : index
    %109 = vector.load %arg12[%c1_103, %c0_104, %c128_105] : memref<18x16x384xbf16, #tpu.memory_space<vmem>>, vector<16x16x128xbf16>
    tpu.vector_store %arg12[%c1_103, %c0_104, %c128_105], %106 {strides = array<i32>} : memref<18x16x384xbf16, #tpu.memory_space<vmem>>, vector<16x16x128xbf16>,
    %110 = vector.extract_strided_slice %106 {offsets = [0, 1, 0], sizes = [16, 15, 128], strides = [1, 1, 1]} : vector<16x16x128xbf16> to vector<16x15x128xbf16>
    %c1_106 = arith.constant 1 : index
    %c0_107 = arith.constant 0 : index
    %c256_108 = arith.constant 256 : index
    %111 = vector.load %arg12[%c1_106, %c0_107, %c256_108] : memref<18x16x384xbf16, #tpu.memory_space<vmem>>, vector<16x15x128xbf16>
    tpu.vector_store %arg12[%c1_106, %c0_107, %c256_108], %110 {strides = array<i32>} : memref<18x16x384xbf16, #tpu.memory_space<vmem>>, vector<16x15x128xbf16>,
    %c0_109 = arith.constant 0 : index
    %c0_110 = arith.constant 0 : index
    %c0_111 = arith.constant 0 : index
    %112 = vector.load %arg12[%c0_109, %c0_110, %c0_111] : memref<18x16x384xbf16, #tpu.memory_space<vmem>>, vector<16x16x384xbf16>
    %c0_112 = arith.constant 0 : index
    %c0_113 = arith.constant 0 : index
    %c0_114 = arith.constant 0 : index
    %113 = vector.load %arg6[%c0_112, %c0_113, %c0_114] : memref<3x384x128xbf16, #tpu.memory_space<vmem>>, vector<1x384x128xbf16>
    %114 = vector.shape_cast %113 : vector<1x384x128xbf16> to vector<384x128xbf16>
    %cst_115 = arith.constant dense<0.000000e+00> : vector<16x16x128xf32>
    %115 = tpu.matmul %112, %114, %cst_115 {dimension_numbers = #tpu.dot_dimension_numbers<[2], [0], [0, 1], [1], [0, 0, 0, 1, 1, 1], [], []>} : vector<16x16x384xbf16>, vector<384x128xbf16>, vector<16x16x128xf32> -> vector<16x16x128xf32>
    %c1_116 = arith.constant 1 : index
    %c0_117 = arith.constant 0 : index
    %c0_118 = arith.constant 0 : index
    %116 = vector.load %arg12[%c1_116, %c0_117, %c0_118] : memref<18x16x384xbf16, #tpu.memory_space<vmem>>, vector<16x16x384xbf16>
    %c1_119 = arith.constant 1 : index
    %c0_120 = arith.constant 0 : index
    %c0_121 = arith.constant 0 : index
    %117 = vector.load %arg6[%c1_119, %c0_120, %c0_121] : memref<3x384x128xbf16, #tpu.memory_space<vmem>>, vector<1x384x128xbf16>
    %118 = vector.shape_cast %117 : vector<1x384x128xbf16> to vector<384x128xbf16>
    %cst_122 = arith.constant dense<0.000000e+00> : vector<16x16x128xf32>
    %119 = tpu.matmul %116, %118, %cst_122 {dimension_numbers = #tpu.dot_dimension_numbers<[2], [0], [0, 1], [1], [0, 0, 0, 1, 1, 1], [], []>} : vector<16x16x384xbf16>, vector<384x128xbf16>, vector<16x16x128xf32> -> vector<16x16x128xf32>
    %120 = arith.addf %115, %119 : vector<16x16x128xf32>
    %c2_123 = arith.constant 2 : index
    %c0_124 = arith.constant 0 : index
    %c0_125 = arith.constant 0 : index
    %121 = vector.load %arg12[%c2_123, %c0_124, %c0_125] : memref<18x16x384xbf16, #tpu.memory_space<vmem>>, vector<16x16x384xbf16>
    %c2_126 = arith.constant 2 : index
    %c0_127 = arith.constant 0 : index
    %c0_128 = arith.constant 0 : index
    %122 = vector.load %arg6[%c2_126, %c0_127, %c0_128] : memref<3x384x128xbf16, #tpu.memory_space<vmem>>, vector<1x384x128xbf16>
    %123 = vector.shape_cast %122 : vector<1x384x128xbf16> to vector<384x128xbf16>
    %cst_129 = arith.constant dense<0.000000e+00> : vector<16x16x128xf32>
    %124 = tpu.matmul %121, %123, %cst_129 {dimension_numbers = #tpu.dot_dimension_numbers<[2], [0], [0, 1], [1], [0, 0, 0, 1, 1, 1], [], []>} : vector<16x16x384xbf16>, vector<384x128xbf16>, vector<16x16x128xf32> -> vector<16x16x128xf32>
    %125 = arith.addf %120, %124 : vector<16x16x128xf32>
    %c0_130 = arith.constant 0 : index
    %c0_131 = arith.constant 0 : index
    %126 = vector.load %arg7[%c0_130, %c0_131] : memref<1x128xf32, #tpu.memory_space<vmem>>, vector<1x128xf32>
    %127 = vector.shape_cast %126 : vector<1x128xf32> to vector<1x1x128xf32>
    %128 = vector.broadcast %127 : vector<1x1x128xf32> to vector<16x16x128xf32>
    %129 = arith.addf %125, %128 : vector<16x16x128xf32>
    %cst_132 = arith.constant 0.000000e+00 : f32
    %130 = vector.broadcast %cst_132 : f32 to vector<16x16x128xf32>
    %131 = arith.maximumf %129, %130 : vector<16x16x128xf32>
    %cst_133 = arith.constant dense<0.000000e+00> : vector<128xf32>
    %132 = vector.multi_reduction <add>, %131, %cst_133 [0, 1] : vector<16x16x128xf32> to vector<128xf32>
    %133 = vector.shape_cast %132 : vector<128xf32> to vector<1x1x128xf32>
    %cst_134 = arith.constant 3.906250e-03 : f32
    %134 = vector.broadcast %cst_134 : f32 to vector<1x1x128xf32>
    %135 = arith.mulf %133, %134 : vector<1x1x128xf32>
    %136 = arith.mulf %131, %131 : vector<16x16x128xf32>
    %cst_135 = arith.constant dense<0.000000e+00> : vector<128xf32>
    %137 = vector.multi_reduction <add>, %136, %cst_135 [0, 1] : vector<16x16x128xf32> to vector<128xf32>
    %138 = vector.shape_cast %137 : vector<128xf32> to vector<1x1x128xf32>
    %cst_136 = arith.constant 3.906250e-03 : f32
    %139 = vector.broadcast %cst_136 : f32 to vector<1x1x128xf32>
    %140 = arith.mulf %138, %139 : vector<1x1x128xf32>
    %141 = arith.mulf %135, %135 : vector<1x1x128xf32>
    %142 = arith.subf %140, %141 : vector<1x1x128xf32>
    %cst_137 = arith.constant 0.000000e+00 : f32
    %143 = vector.broadcast %cst_137 : f32 to vector<1x1x128xf32>
    %144 = arith.maximumf %142, %143 : vector<1x1x128xf32>
    %145 = vector.broadcast %135 : vector<1x1x128xf32> to vector<16x16x128xf32>
    %146 = arith.subf %131, %145 : vector<16x16x128xf32>
    %cst_138 = arith.constant 9.99999974E-6 : f32
    %147 = vector.broadcast %cst_138 : f32 to vector<1x1x128xf32>
    %148 = arith.addf %144, %147 : vector<1x1x128xf32>
    %149 = math.rsqrt %148 : vector<1x1x128xf32>
    %150 = vector.broadcast %149 : vector<1x1x128xf32> to vector<16x16x128xf32>
    %151 = arith.mulf %146, %150 : vector<16x16x128xf32>
    %152 = arith.addf %59, %151 : vector<16x16x128xf32>
    %c0_139 = arith.constant 0 : index
    %c0_140 = arith.constant 0 : index
    %153 = vector.load %arg8[%c0_139, %c0_140] : memref<32x16xbf16, #tpu.memory_space<vmem>>, vector<32x16xbf16>
    %154 = arith.truncf %152 : vector<16x16x128xf32> to vector<16x16x128xbf16>
    "tpu.trace_start"() <{level = 10 : i32, message = "pw,hwc->hpc"}> : () -> ()
    %cst_141 = arith.constant dense<0.000000e+00> : vector<16x128x32xf32>
    %155 = tpu.matmul %154, %153, %cst_141 {dimension_numbers = #tpu.dot_dimension_numbers<[1], [1], [0, 2], [0], [0, 0, 0, 2, 1, 0], [], []>} : vector<16x16x128xbf16>, vector<32x16xbf16>, vector<16x128x32xf32> -> vector<16x128x32xf32>
    %156 = tpu.transpose %155, [0, 2, 1] : vector<16x128x32xf32> -> vector<16x32x128xf32>
    "tpu.trace_stop"() : () -> ()
    %157 = vector.extract_strided_slice %156 {offsets = [0, 0, 0], sizes = [1, 32, 128], strides = [1, 1, 1]} : vector<16x32x128xf32> to vector<1x32x128xf32>
    %158 = vector.extract_strided_slice %156 {offsets = [0, 0, 0], sizes = [15, 32, 128], strides = [1, 1, 1]} : vector<16x32x128xf32> to vector<15x32x128xf32>
    %159 = tpu.concatenate %157, %158 in 0 : vector<1x32x128xf32>, vector<15x32x128xf32> -> vector<16x32x128xf32>
    %160 = vector.extract_strided_slice %156 {offsets = [1, 0, 0], sizes = [15, 32, 128], strides = [1, 1, 1]} : vector<16x32x128xf32> to vector<15x32x128xf32>
    %161 = vector.extract_strided_slice %156 {offsets = [15, 0, 0], sizes = [1, 32, 128], strides = [1, 1, 1]} : vector<16x32x128xf32> to vector<1x32x128xf32>
    %162 = tpu.concatenate %160, %161 in 0 : vector<15x32x128xf32>, vector<1x32x128xf32> -> vector<16x32x128xf32>
    %c0_142 = arith.constant 0 : index
    %c0_143 = arith.constant 0 : index
    %c0_144 = arith.constant 0 : index
    %163 = vector.load %arg9[%c0_142, %c0_143, %c0_144] : memref<4x16x128xf32, #tpu.memory_space<vmem>>, vector<1x16x128xf32>
    %164 = vector.shape_cast %163 : vector<1x16x128xf32> to vector<16x128xf32>
    %165 = vector.shape_cast %164 : vector<16x128xf32> to vector<16x1x128xf32>
    %166 = vector.broadcast %165 : vector<16x1x128xf32> to vector<16x32x128xf32>
    %167 = arith.mulf %166, %159 : vector<16x32x128xf32>
    %c1_145 = arith.constant 1 : index
    %c0_146 = arith.constant 0 : index
    %c0_147 = arith.constant 0 : index
    %168 = vector.load %arg9[%c1_145, %c0_146, %c0_147] : memref<4x16x128xf32, #tpu.memory_space<vmem>>, vector<1x16x128xf32>
    %169 = vector.shape_cast %168 : vector<1x16x128xf32> to vector<16x128xf32>
    %170 = vector.shape_cast %169 : vector<16x128xf32> to vector<16x1x128xf32>
    %171 = vector.broadcast %170 : vector<16x1x128xf32> to vector<16x32x128xf32>
    %172 = arith.mulf %171, %156 : vector<16x32x128xf32>
    %173 = arith.addf %167, %172 : vector<16x32x128xf32>
    %c2_148 = arith.constant 2 : index
    %c0_149 = arith.constant 0 : index
    %c0_150 = arith.constant 0 : index
    %174 = vector.load %arg9[%c2_148, %c0_149, %c0_150] : memref<4x16x128xf32, #tpu.memory_space<vmem>>, vector<1x16x128xf32>
    %175 = vector.shape_cast %174 : vector<1x16x128xf32> to vector<16x128xf32>
    %176 = vector.shape_cast %175 : vector<16x128xf32> to vector<16x1x128xf32>
    %177 = vector.broadcast %176 : vector<16x1x128xf32> to vector<16x32x128xf32>
    %178 = arith.mulf %177, %156 : vector<16x32x128xf32>
    %c3 = arith.constant 3 : index
    %c0_151 = arith.constant 0 : index
    %c0_152 = arith.constant 0 : index
    %179 = vector.load %arg9[%c3, %c0_151, %c0_152] : memref<4x16x128xf32, #tpu.memory_space<vmem>>, vector<1x16x128xf32>
    %180 = vector.shape_cast %179 : vector<1x16x128xf32> to vector<16x128xf32>
    %181 = vector.shape_cast %180 : vector<16x128xf32> to vector<16x1x128xf32>
    %182 = vector.broadcast %181 : vector<16x1x128xf32> to vector<16x32x128xf32>
    %183 = arith.mulf %182, %162 : vector<16x32x128xf32>
    %184 = arith.addf %178, %183 : vector<16x32x128xf32>
    %185 = vector.shape_cast %173 : vector<16x32x128xf32> to vector<16x1x32x128xf32>
    %186 = vector.shape_cast %184 : vector<16x32x128xf32> to vector<16x1x32x128xf32>
    %187 = tpu.concatenate %185, %186 in 1 : vector<16x1x32x128xf32>, vector<16x1x32x128xf32> -> vector<16x2x32x128xf32>
    %188 = vector.shape_cast %187 : vector<16x2x32x128xf32> to vector<1x32x32x128xf32>
    %c0_153 = arith.constant 0 : index
    %c0_154 = arith.constant 0 : index
    %c0_155 = arith.constant 0 : index
    %c0_156 = arith.constant 0 : index
    %189 = vector.load %arg10[%c0_153, %c0_154, %c0_155, %c0_156] : memref<1x32x32x128xf32, #tpu.memory_space<vmem>>, vector<1x32x32x128xf32>
    tpu.vector_store %arg10[%c0_153, %c0_154, %c0_155, %c0_156], %188 {strides = array<i32>} : memref<1x32x32x128xf32, #tpu.memory_space<vmem>>, vector<1x32x32x128xf32>,
    return
  }
  func.func @transform_0(%arg0: i32) -> (i32, i32, i32, i32) {
    %c0_i32 = arith.constant 0 : i32
    %c0_i32_0 = arith.constant 0 : i32
    %c0_i32_1 = arith.constant 0 : i32
    %c0_i32_2 = arith.constant 0 : i32
    return %arg0, %c0_i32, %c0_i32_0, %c0_i32_1 : i32, i32, i32, i32
  }
  func.func @transform_1(%arg0: i32) -> (i32, i32, i32) {
    %c0_i32 = arith.constant 0 : i32
    %c0_i32_0 = arith.constant 0 : i32
    %c0_i32_1 = arith.constant 0 : i32
    %c0_i32_2 = arith.constant 0 : i32
    return %c0_i32, %c0_i32_0, %c0_i32_1 : i32, i32, i32
  }
  func.func @transform_2(%arg0: i32) -> (i32, i32) {
    %c0_i32 = arith.constant 0 : i32
    %c0_i32_0 = arith.constant 0 : i32
    %c0_i32_1 = arith.constant 0 : i32
    return %c0_i32, %c0_i32_0 : i32, i32
  }
  func.func @transform_3(%arg0: i32) -> (i32, i32, i32) {
    %c0_i32 = arith.constant 0 : i32
    %c0_i32_0 = arith.constant 0 : i32
    %c0_i32_1 = arith.constant 0 : i32
    %c0_i32_2 = arith.constant 0 : i32
    return %c0_i32, %c0_i32_0, %c0_i32_1 : i32, i32, i32
  }
  func.func @transform_4(%arg0: i32) -> (i32, i32) {
    %c0_i32 = arith.constant 0 : i32
    %c0_i32_0 = arith.constant 0 : i32
    %c0_i32_1 = arith.constant 0 : i32
    return %c0_i32, %c0_i32_0 : i32, i32
  }
  func.func @transform_5(%arg0: i32) -> (i32, i32, i32) {
    %c0_i32 = arith.constant 0 : i32
    %c0_i32_0 = arith.constant 0 : i32
    %c0_i32_1 = arith.constant 0 : i32
    %c0_i32_2 = arith.constant 0 : i32
    return %c0_i32, %c0_i32_0, %c0_i32_1 : i32, i32, i32
  }
  func.func @transform_6(%arg0: i32) -> (i32, i32) {
    %c0_i32 = arith.constant 0 : i32
    %c0_i32_0 = arith.constant 0 : i32
    %c0_i32_1 = arith.constant 0 : i32
    return %c0_i32, %c0_i32_0 : i32, i32
  }
  func.func @transform_7(%arg0: i32) -> (i32, i32) {
    %c0_i32 = arith.constant 0 : i32
    %c0_i32_0 = arith.constant 0 : i32
    %c0_i32_1 = arith.constant 0 : i32
    return %c0_i32, %c0_i32_0 : i32, i32
  }
  func.func @transform_8(%arg0: i32) -> (i32, i32, i32) {
    %c0_i32 = arith.constant 0 : i32
    %c0_i32_0 = arith.constant 0 : i32
    %c0_i32_1 = arith.constant 0 : i32
    %c0_i32_2 = arith.constant 0 : i32
    return %c0_i32, %c0_i32_0, %c0_i32_1 : i32, i32, i32
  }
  func.func @transform_9(%arg0: i32) -> (i32, i32, i32, i32) {
    %c0_i32 = arith.constant 0 : i32
    %c0_i32_0 = arith.constant 0 : i32
    %c0_i32_1 = arith.constant 0 : i32
    %c0_i32_2 = arith.constant 0 : i32
    return %arg0, %c0_i32, %c0_i32_0, %c0_i32_1 : i32, i32, i32, i32
  }
}

</mosaic_0001>

<llo_original>
// kernel: up_forward.1
$region0: #{up_forward.1}
  #allocation0 [shape = 'u32[]', space=smem, size = 0x4, offset = 0x4, fixed_abs, tag = 'smem constant byte address 0x4 - core index']
  #allocation1 [shape = 'u32[144,128]{1,0:T(1,128)}', space=vmem, size = 0x12000, scoped, tag = 'internal scratch']
  #allocation2 [shape = 'bf16[18,16,12]{2,1,0:T(16,128)(2,1)}', space=vmem, size = 0x12000, scoped, tag = 'scratch operand']
  #allocation3 [shape = 'bf16[18,16,384]{2,1,0:T(16,128)(2,1)}', space=vmem, size = 0x36000, scoped, tag = 'scratch operand']
  %s0 = inlined_call_operand.vmem [shape: f32[2,16,16,4], index: 0, kind: input, shape index: {}]
  %s1 = inlined_call_operand.vmem [shape: bf16[3,12,128], index: 1, kind: input, shape index: {}]
  %s2 = inlined_call_operand.vmem [shape: f32[1,128], index: 2, kind: input, shape index: {}]
  %s3 = inlined_call_operand.vmem [shape: bf16[3,384,128], index: 3, kind: input, shape index: {}]
  %s4 = inlined_call_operand.vmem [shape: f32[1,128], index: 4, kind: input, shape index: {}]
  %s5 = inlined_call_operand.vmem [shape: bf16[3,384,128], index: 5, kind: input, shape index: {}]
  %s6 = inlined_call_operand.vmem [shape: f32[1,128], index: 6, kind: input, shape index: {}]
  %s7 = inlined_call_operand.vmem [shape: bf16[32,16], index: 7, kind: input, shape index: {}]
  %s8 = inlined_call_operand.vmem [shape: f32[4,16,128], index: 8, kind: input, shape index: {}]
  %s9 = inlined_call_operand.vmem [shape: f32[2,32,32,128], index: 9, kind: output, shape index: {}]
  %s10 = sld [smem:[#allocation0]]
  $region69: #{up_forward.1} parent=0
    _
  %s12 = ssub.s32 1, %s10
  %s13 = scalar_select 0, %s12, %s10
  loop: start=0, step=1, limit=4
  $region2: #{up_forward.1} parent=0 // loop_pre_header
    _
  $region3: #{up_forward.1} parent=0 // loop_header
    %s15 = sphi 0, %s19
    %p16 = scmp.ge.s32.totalorder %s15, 4
    %s25 = sphi 0, %s27
    %s28 = sphi 0, %s25
    %s29 = sphi 0, %s28
    %s45 = sphi 0, %s29
    %s49 = sphi 0, %s49
    %s51 = sphi 0, %s49
    %s52 = sphi 0, %s51
    %s66 = sphi 0, %s52
    %s70 = sphi 0, %s70
    %s72 = sphi 0, %s70
    %s73 = sphi 0, %s72
    %s87 = sphi 0, %s73
    %s91 = sphi 0, %s91
    %s93 = sphi 0, %s91
    %s94 = sphi 0, %s93
    %s108 = sphi 0, %s94
    %s112 = sphi 0, %s112
    %s114 = sphi 0, %s112
    %s115 = sphi 0, %s114
    %s129 = sphi 0, %s115
    %s133 = sphi 0, %s133
    %s135 = sphi 0, %s133
    %s136 = sphi 0, %s135
    %s150 = sphi 0, %s136
    %s154 = sphi 0, %s154
    %s156 = sphi 0, %s154
    %s157 = sphi 0, %s156
    %s171 = sphi 0, %s157
    %s175 = sphi 0, %s175
    %s177 = sphi 0, %s175
    %s178 = sphi 0, %s177
    %s192 = sphi 0, %s178
    %s196 = sphi 0, %s196
    %s198 = sphi 0, %s196
    %s199 = sphi 0, %s198
    %s213 = sphi 0, %s199
    %s219 = sphi 0, %s221
    %s222 = sphi 0, %s219
    %s223 = sphi 0, %s222
    %s239 = sphi 0, %s223
  $region4: #{up_forward.1} parent=0 // loop_header_branch
    %18 = sbr.rel (%p16) target = $region8
  $region5: #{up_forward.1} parent=0 // loop_body
    %s20 = ssub.s32 %s15, 1
    %s21 = ssub.s32 %s15, 2
    %s22 = sadd.s32 %s15, 1
    %s23 = ssub.s32 %s15, %s22
    %p24 = scmp.eq.s32.totalorder %s23, 0
    %s26 = sadd.s32 %s25, 1
    %s27 = scalar_select %p24, %s25, %s26
    %p30 = pneg %p24
    %p31 = scmp.eq.s32.totalorder %s15, 1
    %p32 = por %p30, %p31
    %p33 = scmp.ne.s32.totalorder %s25, %s28
    %p34 = scmp.eq.s32.totalorder %s15, 0
    %p35 = por %p33, %p34
    %p36 = scmp.ne.s32.totalorder %s25, %s28
    %p37 = scmp.eq.s32.totalorder %s20, 1
    %p38 = por %p36, %p37
    %p39 = scmp.ne.s32.totalorder %s28, %s29
    %p40 = scmp.eq.s32.totalorder %s20, 0
    %p41 = por %p39, %p40
    %p42 = scmp.ne.s32.totalorder %s28, %s29
    %p43 = scmp.eq.s32.totalorder %s21, 1
    %p44 = por %p42, %p43
    %p46 = scmp.ne.s32.totalorder %s29, %s45
    %p47 = scmp.eq.s32.totalorder %s21, 0
    %p48 = por %p46, %p47
    %s50 = sadd.s32 %s49, 1
    %p53 = scmp.eq.s32.totalorder %s15, 1
    %p54 = scmp.ne.s32.totalorder %s49, %s51
    %p55 = scmp.eq.s32.totalorder %s15, 0
    %p56 = por %p54, %p55
    %p57 = scmp.ne.s32.totalorder %s49, %s51
    %p58 = scmp.eq.s32.totalorder %s20, 1
    %p59 = por %p57, %p58
    %p60 = scmp.ne.s32.totalorder %s51, %s52
    %p61 = scmp.eq.s32.totalorder %s20, 0
    %p62 = por %p60, %p61
    %p63 = scmp.ne.s32.totalorder %s51, %s52
    %p64 = scmp.eq.s32.totalorder %s21, 1
    %p65 = por %p63, %p64
    %p67 = scmp.ne.s32.totalorder %s52, %s66
    %p68 = scmp.eq.s32.totalorder %s21, 0
    %p69 = por %p67, %p68
    %s71 = sadd.s32 %s70, 1
    %p74 = scmp.eq.s32.totalorder %s15, 1
    %p75 = scmp.ne.s32.totalorder %s70, %s72
    %p76 = scmp.eq.s32.totalorder %s15, 0
    %p77 = por %p75, %p76
    %p78 = scmp.ne.s32.totalorder %s70, %s72
    %p79 = scmp.eq.s32.totalorder %s20, 1
    %p80 = por %p78, %p79
    %p81 = scmp.ne.s32.totalorder %s72, %s73
    %p82 = scmp.eq.s32.totalorder %s20, 0
    %p83 = por %p81, %p82
    %p84 = scmp.ne.s32.totalorder %s72, %s73
    %p85 = scmp.eq.s32.totalorder %s21, 1
    %p86 = por %p84, %p85
    %p88 = scmp.ne.s32.totalorder %s73, %s87
    %p89 = scmp.eq.s32.totalorder %s21, 0
    %p90 = por %p88, %p89
    %s92 = sadd.s32 %s91, 1
    %p95 = scmp.eq.s32.totalorder %s15, 1
    %p96 = scmp.ne.s32.totalorder %s91, %s93
    %p97 = scmp.eq.s32.totalorder %s15, 0
    %p98 = por %p96, %p97
    %p99 = scmp.ne.s32.totalorder %s91, %s93
    %p100 = scmp.eq.s32.totalorder %s20, 1
    %p101 = por %p99, %p100
    %p102 = scmp.ne.s32.totalorder %s93, %s94
    %p103 = scmp.eq.s32.totalorder %s20, 0
    %p104 = por %p102, %p103
    %p105 = scmp.ne.s32.totalorder %s93, %s94
    %p106 = scmp.eq.s32.totalorder %s21, 1
    %p107 = por %p105, %p106
    %p109 = scmp.ne.s32.totalorder %s94, %s108
    %p110 = scmp.eq.s32.totalorder %s21, 0
    %p111 = por %p109, %p110
    %s113 = sadd.s32 %s112, 1
    %p116 = scmp.eq.s32.totalorder %s15, 1
    %p117 = scmp.ne.s32.totalorder %s112, %s114
    %p118 = scmp.eq.s32.totalorder %s15, 0
    %p119 = por %p117, %p118
    %p120 = scmp.ne.s32.totalorder %s112, %s114
    %p121 = scmp.eq.s32.totalorder %s20, 1
    %p122 = por %p120, %p121
    %p123 = scmp.ne.s32.totalorder %s114, %s115
    %p124 = scmp.eq.s32.totalorder %s20, 0
    %p125 = por %p123, %p124
    %p126 = scmp.ne.s32.totalorder %s114, %s115
    %p127 = scmp.eq.s32.totalorder %s21, 1
    %p128 = por %p126, %p127
    %p130 = scmp.ne.s32.totalorder %s115, %s129
    %p131 = scmp.eq.s32.totalorder %s21, 0
    %p132 = por %p130, %p131
    %s134 = sadd.s32 %s133, 1
    %p137 = scmp.eq.s32.totalorder %s15, 1
    %p138 = scmp.ne.s32.totalorder %s133, %s135
    %p139 = scmp.eq.s32.totalorder %s15, 0
    %p140 = por %p138, %p139
    %p141 = scmp.ne.s32.totalorder %s133, %s135
    %p142 = scmp.eq.s32.totalorder %s20, 1
    %p143 = por %p141, %p142
    %p144 = scmp.ne.s32.totalorder %s135, %s136
    %p145 = scmp.eq.s32.totalorder %s20, 0
    %p146 = por %p144, %p145
    %p147 = scmp.ne.s32.totalorder %s135, %s136
    %p148 = scmp.eq.s32.totalorder %s21, 1
    %p149 = por %p147, %p148
    %p151 = scmp.ne.s32.totalorder %s136, %s150
    %p152 = scmp.eq.s32.totalorder %s21, 0
    %p153 = por %p151, %p152
    %s155 = sadd.s32 %s154, 1
    %p158 = scmp.eq.s32.totalorder %s15, 1
    %p159 = scmp.ne.s32.totalorder %s154, %s156
    %p160 = scmp.eq.s32.totalorder %s15, 0
    %p161 = por %p159, %p160
    %p162 = scmp.ne.s32.totalorder %s154, %s156
    %p163 = scmp.eq.s32.totalorder %s20, 1
    %p164 = por %p162, %p163
    %p165 = scmp.ne.s32.totalorder %s156, %s157
    %p166 = scmp.eq.s32.totalorder %s20, 0
    %p167 = por %p165, %p166
    %p168 = scmp.ne.s32.totalorder %s156, %s157
    %p169 = scmp.eq.s32.totalorder %s21, 1
    %p170 = por %p168, %p169
    %p172 = scmp.ne.s32.totalorder %s157, %s171
    %p173 = scmp.eq.s32.totalorder %s21, 0
    %p174 = por %p172, %p173
    %s176 = sadd.s32 %s175, 1
    %p179 = scmp.eq.s32.totalorder %s15, 1
    %p180 = scmp.ne.s32.totalorder %s175, %s177
    %p181 = scmp.eq.s32.totalorder %s15, 0
    %p182 = por %p180, %p181
    %p183 = scmp.ne.s32.totalorder %s175, %s177
    %p184 = scmp.eq.s32.totalorder %s20, 1
    %p185 = por %p183, %p184
    %p186 = scmp.ne.s32.totalorder %s177, %s178
    %p187 = scmp.eq.s32.totalorder %s20, 0
    %p188 = por %p186, %p187
    %p189 = scmp.ne.s32.totalorder %s177, %s178
    %p190 = scmp.eq.s32.totalorder %s21, 1
    %p191 = por %p189, %p190
    %p193 = scmp.ne.s32.totalorder %s178, %s192
    %p194 = scmp.eq.s32.totalorder %s21, 0
    %p195 = por %p193, %p194
    %s197 = sadd.s32 %s196, 1
    %p200 = scmp.eq.s32.totalorder %s15, 1
    %p201 = scmp.ne.s32.totalorder %s196, %s198
    %p202 = scmp.eq.s32.totalorder %s15, 0
    %p203 = por %p201, %p202
    %p204 = scmp.ne.s32.totalorder %s196, %s198
    %p205 = scmp.eq.s32.totalorder %s20, 1
    %p206 = por %p204, %p205
    %p207 = scmp.ne.s32.totalorder %s198, %s199
    %p208 = scmp.eq.s32.totalorder %s20, 0
    %p209 = por %p207, %p208
    %p210 = scmp.ne.s32.totalorder %s198, %s199
    %p211 = scmp.eq.s32.totalorder %s21, 1
    %p212 = por %p210, %p211
    %p214 = scmp.ne.s32.totalorder %s199, %s213
    %p215 = scmp.eq.s32.totalorder %s21, 0
    %p216 = por %p214, %p215
    %s217 = ssub.s32 %s15, %s22
    %p218 = scmp.eq.s32.totalorder %s217, 0
    %s220 = sadd.s32 %s219, 1
    %s221 = scalar_select %p218, %s219, %s220
    %p224 = pneg %p218
    %p225 = scmp.eq.s32.totalorder %s15, 1
    %p226 = por %p224, %p225
    %p227 = scmp.ne.s32.totalorder %s219, %s222
    %p228 = scmp.eq.s32.totalorder %s15, 0
    %p229 = por %p227, %p228
    %p230 = scmp.ne.s32.totalorder %s219, %s222
    %p231 = scmp.eq.s32.totalorder %s20, 1
    %p232 = por %p230, %p231
    %p233 = scmp.ne.s32.totalorder %s222, %s223
    %p234 = scmp.eq.s32.totalorder %s20, 0
    %p235 = por %p233, %p234
    %p236 = scmp.ne.s32.totalorder %s222, %s223
    %p237 = scmp.eq.s32.totalorder %s21, 1
    %p238 = por %p236, %p237
    %p240 = scmp.ne.s32.totalorder %s223, %s239
    %p241 = scmp.eq.s32.totalorder %s21, 0
    %p242 = por %p240, %p241
    %p243 = scmp.le.s32.totalorder 1, %s15
    %p244 = scmp.lt.s32.totalorder %s15, 3
    %p245 = pnand %p243, %p244
    %p246 = pneg %p245
    // Predicated region
    $region9: #{up_forward.1} parent=5 // pred_check
      _
    $region10: #{up_forward.1} parent=5 // pred_check_branch
      %248 = sbr.rel (%p245) target = $region12
    $region11: #{up_forward.1} parent=5 // pred_region
      %s249 = ssub.s32 %s15, 1
      // Predicated region
      $region13: #{up_forward.1} parent=11 // pred_check
        %p250 = pneg %p62
      $region14: #{up_forward.1} parent=11 // pred_check_branch
        %252 = sbr.rel (%p250) target = $region16
      $region15: #{up_forward.1} parent=11 // pred_region
        _
      $region16: #{up_forward.1} parent=11 // pred_fallthru
        _
      // Predicated region
      $region17: #{up_forward.1} parent=11 // pred_check
        %p253 = pneg %p83
      $region18: #{up_forward.1} parent=11 // pred_check_branch
        %255 = sbr.rel (%p253) target = $region20
      $region19: #{up_forward.1} parent=11 // pred_region
        _
      $region20: #{up_forward.1} parent=11 // pred_fallthru
        _
      // Predicated region
      $region21: #{up_forward.1} parent=11 // pred_check
        %p256 = pneg %p104
      $region22: #{up_forward.1} parent=11 // pred_check_branch
        %258 = sbr.rel (%p256) target = $region24
      $region23: #{up_forward.1} parent=11 // pred_region
        _
      $region24: #{up_forward.1} parent=11 // pred_fallthru
        _
      // Predicated region
      $region25: #{up_forward.1} parent=11 // pred_check
        %p259 = pneg %p125
      $region26: #{up_forward.1} parent=11 // pred_check_branch
        %261 = sbr.rel (%p259) target = $region28
      $region27: #{up_forward.1} parent=11 // pred_region
        _
      $region28: #{up_forward.1} parent=11 // pred_fallthru
        _
      // Predicated region
      $region29: #{up_forward.1} parent=11 // pred_check
        %p262 = pneg %p146
      $region30: #{up_forward.1} parent=11 // pred_check_branch
        %264 = sbr.rel (%p262) target = $region32
      $region31: #{up_forward.1} parent=11 // pred_region
        _
      $region32: #{up_forward.1} parent=11 // pred_fallthru
        _
      // Predicated region
      $region33: #{up_forward.1} parent=11 // pred_check
        %p265 = pneg %p167
      $region34: #{up_forward.1} parent=11 // pred_check_branch
        %267 = sbr.rel (%p265) target = $region36
      $region35: #{up_forward.1} parent=11 // pred_region
        _
      $region36: #{up_forward.1} parent=11 // pred_fallthru
        _
      // Predicated region
      $region37: #{up_forward.1} parent=11 // pred_check
        %p268 = pneg %p188
      $region38: #{up_forward.1} parent=11 // pred_check_branch
        %270 = sbr.rel (%p268) target = $region40
      $region39: #{up_forward.1} parent=11 // pred_region
        _
      $region40: #{up_forward.1} parent=11 // pred_fallthru
        _
      // Predicated region
      $region41: #{up_forward.1} parent=11 // pred_check
        %p271 = pneg %p209
      $region42: #{up_forward.1} parent=11 // pred_check_branch
        %273 = sbr.rel (%p271) target = $region44
      $region43: #{up_forward.1} parent=11 // pred_region
        _
      $region44: #{up_forward.1} parent=11 // pred_fallthru
        _
    $region12: #{up_forward.1} parent=5 // pred_fallthru
      _
    %p274 = scmp.lt.s32.totalorder %s15, 2
    // Predicated region
    $region45: #{up_forward.1} parent=5 // pred_check
      %p275 = pneg %p274
    $region46: #{up_forward.1} parent=5 // pred_check_branch
      %277 = sbr.rel (%p275) target = $region48
    $region47: #{up_forward.1} parent=5 // pred_region
      // Predicated region
      $region49: #{up_forward.1} parent=47 // pred_check
        %p278 = pneg %p35
      $region50: #{up_forward.1} parent=47 // pred_check_branch
        %280 = sbr.rel (%p278) target = $region52
      $region51: #{up_forward.1} parent=47 // pred_region
        %p281 = scmp.lt.s32.totalorder %s15, 1
        %s282 = scalar_select %p281, %s15, 1
        %s283 = smul.addr %s282, 32
        %s284 = smul.addr %s283, 8
        %s285 = scalar_lea.vmem %s0, %s284
      $region52: #{up_forward.1} parent=47 // pred_fallthru
        _
    $region48: #{up_forward.1} parent=5 // pred_fallthru
      _
    %p286 = scmp.le.s32.totalorder 1, %s15
    %p287 = scmp.lt.s32.totalorder %s15, 3
    %p288 = pnand %p286, %p287
    %p289 = pneg %p288
    // Predicated region
    $region53: #{up_forward.1} parent=5 // pred_check
      _
    $region54: #{up_forward.1} parent=5 // pred_check_branch
      %291 = sbr.rel (%p288) target = $region56
    $region55: #{up_forward.1} parent=5 // pred_region
      %s292 = ssub.s32 %s15, 1
      %p293 = scmp.lt.s32.totalorder %s20, 1
      %s294 = scalar_select %p293, %s20, 1
      %s295 = smul.addr %s294, 32
      %s296 = smul.addr %s295, 8
      %s297 = scalar_lea.vmem %s0, %s296
      %p298 = pneg %p41
      %p299 = pneg %p38
      %p300 = pneg %p62
      %p301 = pneg %p59
      %p302 = pneg %p83
      %p303 = pneg %p80
      %p304 = pneg %p104
      %p305 = pneg %p101
      %p306 = pneg %p125
      %p307 = pneg %p122
      %p308 = pneg %p146
      %p309 = pneg %p143
      %p310 = pneg %p167
      %p311 = pneg %p164
      %p312 = pneg %p188
      %p313 = pneg %p185
      %p314 = pneg %p209
      %p315 = pneg %p206
      %p316 = pneg %p235
      %p317 = pneg %p232
      %p318 = scmp.lt.s32.totalorder %s20, 1
      %s319 = scalar_select %p318, %s20, 1
      %s320 = smul.addr %s319, 128
      %s321 = smul.addr %s320, 8
      %s322 = scalar_lea.vmem %s9, %s321
      %p323 = scmp.lt.s32.totalorder %s20, 1
      %s324 = scalar_select %p323, %s20, 1
      %s325 = smul.addr %s324, 32
      %s326 = smul.addr %s325, 8
      %s327 = scalar_lea.vmem %s0, %s326
      %p328 = scmp.lt.s32.totalorder %s20, 1
      %s329 = scalar_select %p328, %s20, 1
      %s330 = smul.addr %s329, 128
      %s331 = smul.addr %s330, 8
      %s332 = scalar_lea.vmem %s9, %s331
      %vm334 = vcmask 97280
      %335 = vst.msk [vmem:[#allocation2] sm:$0xff] %vm334, 0
      %s336 = scalar_lea.vmem [#allocation2], 136
      %337 = vst.msk [vmem:[%s336] sm:$0xff] %vm334, 0
      %s338 = scalar_lea.vmem [#allocation2], 8
      %vm339 = vcmask 24576
      %vm340 = vsmask.f32 256
      %vm341 = vmand %vm339, %vm340
      %v342 = vld [vmem:[%s338] sm:$0x1]
      %v343 = vsel %vm341, 0, %v342
      %344 = vst [vmem:[%s338] sm:$0x1] %v343
      %v345 = vld [vmem:[%s338 + $0x8] sm:$0x1]
      %v346 = vsel %vm341, 0, %v345
      %347 = vst [vmem:[%s338 + $0x8] sm:$0x1] %v346
      %v348 = vld [vmem:[%s338 + $0x10] sm:$0x1]
      %v349 = vsel %vm341, 0, %v348
      %350 = vst [vmem:[%s338 + $0x10] sm:$0x1] %v349
      %v351 = vld [vmem:[%s338 + $0x18] sm:$0x1]
      %v352 = vsel %vm341, 0, %v351
      %353 = vst [vmem:[%s338 + $0x18] sm:$0x1] %v352
      %v354 = vld [vmem:[%s338 + $0x20] sm:$0x1]
      %v355 = vsel %vm341, 0, %v354
      %356 = vst [vmem:[%s338 + $0x20] sm:$0x1] %v355
      %v357 = vld [vmem:[%s338 + $0x28] sm:$0x1]
      %v358 = vsel %vm341, 0, %v357
      %359 = vst [vmem:[%s338 + $0x28] sm:$0x1] %v358
      %v360 = vld [vmem:[%s338 + $0x30] sm:$0x1]
      %v361 = vsel %vm341, 0, %v360
      %362 = vst [vmem:[%s338 + $0x30] sm:$0x1] %v361
      %v363 = vld [vmem:[%s338 + $0x38] sm:$0x1]
      %v364 = vsel %vm341, 0, %v363
      %365 = vst [vmem:[%s338 + $0x38] sm:$0x1] %v364
      %v366 = vld [vmem:[%s338 + $0x40] sm:$0x1]
      %v367 = vsel %vm341, 0, %v366
      %368 = vst [vmem:[%s338 + $0x40] sm:$0x1] %v367
      %v369 = vld [vmem:[%s338 + $0x48] sm:$0x1]
      %v370 = vsel %vm341, 0, %v369
      %371 = vst [vmem:[%s338 + $0x48] sm:$0x1] %v370
      %v372 = vld [vmem:[%s338 + $0x50] sm:$0x1]
      %v373 = vsel %vm341, 0, %v372
      %374 = vst [vmem:[%s338 + $0x50] sm:$0x1] %v373
      %v375 = vld [vmem:[%s338 + $0x58] sm:$0x1]
      %v376 = vsel %vm341, 0, %v375
      %377 = vst [vmem:[%s338 + $0x58] sm:$0x1] %v376
      %v378 = vld [vmem:[%s338 + $0x60] sm:$0x1]
      %v379 = vsel %vm341, 0, %v378
      %380 = vst [vmem:[%s338 + $0x60] sm:$0x1] %v379
      %v381 = vld [vmem:[%s338 + $0x68] sm:$0x1]
      %v382 = vsel %vm341, 0, %v381
      %383 = vst [vmem:[%s338 + $0x68] sm:$0x1] %v382
      %v384 = vld [vmem:[%s338 + $0x70] sm:$0x1]
      %v385 = vsel %vm341, 0, %v384
      %386 = vst [vmem:[%s338 + $0x70] sm:$0x1] %v385
      %v387 = vld [vmem:[%s338 + $0x78] sm:$0x1]
      %v388 = vsel %vm341, 0, %v387
      %389 = vst [vmem:[%s338 + $0x78] sm:$0x1] %v388
      %vm390 = vcmask 97351
      %vm391 = vsmask.f32 7966
      %vm392 = vmand %vm390, %vm391
      %v393 = vld [vmem:[%s338] sm:$0x80]
      %v394 = vsel %vm392, 0, %v393
      %395 = vst [vmem:[%s338] sm:$0x80] %v394
      %v396 = vld [vmem:[%s338 + $0x8] sm:$0x80]
      %v397 = vsel %vm392, 0, %v396
      %398 = vst [vmem:[%s338 + $0x8] sm:$0x80] %v397
      %v399 = vld [vmem:[%s338 + $0x10] sm:$0x80]
      %v400 = vsel %vm392, 0, %v399
      %401 = vst [vmem:[%s338 + $0x10] sm:$0x80] %v400
      %v402 = vld [vmem:[%s338 + $0x18] sm:$0x80]
      %v403 = vsel %vm392, 0, %v402
      %404 = vst [vmem:[%s338 + $0x18] sm:$0x80] %v403
      %v405 = vld [vmem:[%s338 + $0x20] sm:$0x80]
      %v406 = vsel %vm392, 0, %v405
      %407 = vst [vmem:[%s338 + $0x20] sm:$0x80] %v406
      %v408 = vld [vmem:[%s338 + $0x28] sm:$0x80]
      %v409 = vsel %vm392, 0, %v408
      %410 = vst [vmem:[%s338 + $0x28] sm:$0x80] %v409
      %v411 = vld [vmem:[%s338 + $0x30] sm:$0x80]
      %v412 = vsel %vm392, 0, %v411
      %413 = vst [vmem:[%s338 + $0x30] sm:$0x80] %v412
      %v414 = vld [vmem:[%s338 + $0x38] sm:$0x80]
      %v415 = vsel %vm392, 0, %v414
      %416 = vst [vmem:[%s338 + $0x38] sm:$0x80] %v415
      %v417 = vld [vmem:[%s338 + $0x40] sm:$0x80]
      %v418 = vsel %vm392, 0, %v417
      %419 = vst [vmem:[%s338 + $0x40] sm:$0x80] %v418
      %v420 = vld [vmem:[%s338 + $0x48] sm:$0x80]
      %v421 = vsel %vm392, 0, %v420
      %422 = vst [vmem:[%s338 + $0x48] sm:$0x80] %v421
      %v423 = vld [vmem:[%s338 + $0x50] sm:$0x80]
      %v424 = vsel %vm392, 0, %v423
      %425 = vst [vmem:[%s338 + $0x50] sm:$0x80] %v424
      %v426 = vld [vmem:[%s338 + $0x58] sm:$0x80]
      %v427 = vsel %vm392, 0, %v426
      %428 = vst [vmem:[%s338 + $0x58] sm:$0x80] %v427
      %v429 = vld [vmem:[%s338 + $0x60] sm:$0x80]
      %v430 = vsel %vm392, 0, %v429
      %431 = vst [vmem:[%s338 + $0x60] sm:$0x80] %v430
      %v432 = vld [vmem:[%s338 + $0x68] sm:$0x80]
      %v433 = vsel %vm392, 0, %v432
      %434 = vst [vmem:[%s338 + $0x68] sm:$0x80] %v433
      %v435 = vld [vmem:[%s338 + $0x70] sm:$0x80]
      %v436 = vsel %vm392, 0, %v435
      %437 = vst [vmem:[%s338 + $0x70] sm:$0x80] %v436
      %v438 = vld [vmem:[%s338 + $0x78] sm:$0x80]
      %v439 = vsel %vm392, 0, %v438
      %440 = vst [vmem:[%s338 + $0x78] sm:$0x80] %v439
      %441 = vst [vmem:[#allocation3] sm:$0xff] 0
      %442 = vst [vmem:[#allocation3 + $0x8] sm:$0xff] 0
      %443 = vst [vmem:[#allocation3 + $0x10] sm:$0xff] 0
      %s444 = scalar_lea.vmem [#allocation3], 408
      %445 = vst [vmem:[%s444] sm:$0xff] 0
      %446 = vst [vmem:[%s444 + $0x8] sm:$0xff] 0
      %447 = vst [vmem:[%s444 + $0x10] sm:$0xff] 0
      %s448 = scalar_lea.vmem [#allocation3], 24
      %vm449 = vcmask 1040384
      %vm450 = vmand %vm449, %vm340
      %v451 = vld [vmem:[%s448] sm:$0x1]
      %v452 = vsel %vm450, 0, %v451
      %453 = vst [vmem:[%s448] sm:$0x1] %v452
      %v454 = vld [vmem:[%s448 + $0x18] sm:$0x1]
      %v455 = vsel %vm450, 0, %v454
      %456 = vst [vmem:[%s448 + $0x18] sm:$0x1] %v455
      %v457 = vld [vmem:[%s448 + $0x30] sm:$0x1]
      %v458 = vsel %vm450, 0, %v457
      %459 = vst [vmem:[%s448 + $0x30] sm:$0x1] %v458
      %v460 = vld [vmem:[%s448 + $0x48] sm:$0x1]
      %v461 = vsel %vm450, 0, %v460
      %462 = vst [vmem:[%s448 + $0x48] sm:$0x1] %v461
      %v463 = vld [vmem:[%s448 + $0x60] sm:$0x1]
      %v464 = vsel %vm450, 0, %v463
      %465 = vst [vmem:[%s448 + $0x60] sm:$0x1] %v464
      %v466 = vld [vmem:[%s448 + $0x78] sm:$0x1]
      %v467 = vsel %vm450, 0, %v466
      %468 = vst [vmem:[%s448 + $0x78] sm:$0x1] %v467
      %v469 = vld [vmem:[%s448 + $0x90] sm:$0x1]
      %v470 = vsel %vm450, 0, %v469
      %471 = vst [vmem:[%s448 + $0x90] sm:$0x1] %v470
      %v472 = vld [vmem:[%s448 + $0xa8] sm:$0x1]
      %v473 = vsel %vm450, 0, %v472
      %474 = vst [vmem:[%s448 + $0xa8] sm:$0x1] %v473
      %v475 = vld [vmem:[%s448 + $0xc0] sm:$0x1]
      %v476 = vsel %vm450, 0, %v475
      %477 = vst [vmem:[%s448 + $0xc0] sm:$0x1] %v476
      %v478 = vld [vmem:[%s448 + $0xd8] sm:$0x1]
      %v479 = vsel %vm450, 0, %v478
      %480 = vst [vmem:[%s448 + $0xd8] sm:$0x1] %v479
      %v481 = vld [vmem:[%s448 + $0xf0] sm:$0x1]
      %v482 = vsel %vm450, 0, %v481
      %483 = vst [vmem:[%s448 + $0xf0] sm:$0x1] %v482
      %v484 = vld [vmem:[%s448 + $0x108] sm:$0x1]
      %v485 = vsel %vm450, 0, %v484
      %486 = vst [vmem:[%s448 + $0x108] sm:$0x1] %v485
      %v487 = vld [vmem:[%s448 + $0x120] sm:$0x1]
      %v488 = vsel %vm450, 0, %v487
      %489 = vst [vmem:[%s448 + $0x120] sm:$0x1] %v488
      %v490 = vld [vmem:[%s448 + $0x138] sm:$0x1]
      %v491 = vsel %vm450, 0, %v490
      %492 = vst [vmem:[%s448 + $0x138] sm:$0x1] %v491
      %v493 = vld [vmem:[%s448 + $0x150] sm:$0x1]
      %v494 = vsel %vm450, 0, %v493
      %495 = vst [vmem:[%s448 + $0x150] sm:$0x1] %v494
      %v496 = vld [vmem:[%s448 + $0x168] sm:$0x1]
      %v497 = vsel %vm450, 0, %v496
      %498 = vst [vmem:[%s448 + $0x168] sm:$0x1] %v497
      %vm499 = vcmask 1047559
      %vm500 = vmand %vm499, %vm391
      %v501 = vld [vmem:[%s448 + $0x10] sm:$0x80]
      %v502 = vsel %vm500, 0, %v501
      %503 = vst [vmem:[%s448 + $0x10] sm:$0x80] %v502
      %v504 = vld [vmem:[%s448 + $0x28] sm:$0x80]
      %v505 = vsel %vm500, 0, %v504
      %506 = vst [vmem:[%s448 + $0x28] sm:$0x80] %v505
      %v507 = vld [vmem:[%s448 + $0x40] sm:$0x80]
      %v508 = vsel %vm500, 0, %v507
      %509 = vst [vmem:[%s448 + $0x40] sm:$0x80] %v508
      %v510 = vld [vmem:[%s448 + $0x58] sm:$0x80]
      %v511 = vsel %vm500, 0, %v510
      %512 = vst [vmem:[%s448 + $0x58] sm:$0x80] %v511
      %v513 = vld [vmem:[%s448 + $0x70] sm:$0x80]
      %v514 = vsel %vm500, 0, %v513
      %515 = vst [vmem:[%s448 + $0x70] sm:$0x80] %v514
      %v516 = vld [vmem:[%s448 + $0x88] sm:$0x80]
      %v517 = vsel %vm500, 0, %v516
      %518 = vst [vmem:[%s448 + $0x88] sm:$0x80] %v517
      %v519 = vld [vmem:[%s448 + $0xa0] sm:$0x80]
      %v520 = vsel %vm500, 0, %v519
      %521 = vst [vmem:[%s448 + $0xa0] sm:$0x80] %v520
      %v522 = vld [vmem:[%s448 + $0xb8] sm:$0x80]
      %v523 = vsel %vm500, 0, %v522
      %524 = vst [vmem:[%s448 + $0xb8] sm:$0x80] %v523
      %v525 = vld [vmem:[%s448 + $0xd0] sm:$0x80]
      %v526 = vsel %vm500, 0, %v525
      %527 = vst [vmem:[%s448 + $0xd0] sm:$0x80] %v526
      %v528 = vld [vmem:[%s448 + $0xe8] sm:$0x80]
      %v529 = vsel %vm500, 0, %v528
      %530 = vst [vmem:[%s448 + $0xe8] sm:$0x80] %v529
      %v531 = vld [vmem:[%s448 + $0x100] sm:$0x80]
      %v532 = vsel %vm500, 0, %v531
      %533 = vst [vmem:[%s448 + $0x100] sm:$0x80] %v532
      %v534 = vld [vmem:[%s448 + $0x118] sm:$0x80]
      %v535 = vsel %vm500, 0, %v534
      %536 = vst [vmem:[%s448 + $0x118] sm:$0x80] %v535
      %v537 = vld [vmem:[%s448 + $0x130] sm:$0x80]
      %v538 = vsel %vm500, 0, %v537
      %539 = vst [vmem:[%s448 + $0x130] sm:$0x80] %v538
      %v540 = vld [vmem:[%s448 + $0x148] sm:$0x80]
      %v541 = vsel %vm500, 0, %v540
      %542 = vst [vmem:[%s448 + $0x148] sm:$0x80] %v541
      %v543 = vld [vmem:[%s448 + $0x160] sm:$0x80]
      %v544 = vsel %vm500, 0, %v543
      %545 = vst [vmem:[%s448 + $0x160] sm:$0x80] %v544
      %v546 = vld [vmem:[%s448 + $0x178] sm:$0x80]
      %v547 = vsel %vm500, 0, %v546
      %548 = vst [vmem:[%s448 + $0x178] sm:$0x80] %v547
      %v549 = vld [vmem:[%s327] sm:$0xff]
      %v550 = vld [vmem:[%s327 + $0x8] sm:$0xff]
      %v551 = vld [vmem:[%s327 + $0x10] sm:$0xff]
      %v552 = vld [vmem:[%s327 + $0x18] sm:$0xff]
      %v553 = vld [vmem:[%s327 + $0x20] sm:$0xff]
      %v554 = vld [vmem:[%s327 + $0x28] sm:$0xff]
      %v555 = vld [vmem:[%s327 + $0x30] sm:$0xff]
      %v556 = vld [vmem:[%s327 + $0x38] sm:$0xff]
      %v557 = vld [vmem:[%s327 + $0x40] sm:$0xff]
      %v558 = vld [vmem:[%s327 + $0x48] sm:$0xff]
      %v559 = vld [vmem:[%s327 + $0x50] sm:$0xff]
      %v560 = vld [vmem:[%s327 + $0x58] sm:$0xff]
      %v561 = vld [vmem:[%s327 + $0x60] sm:$0xff]
      %v562 = vld [vmem:[%s327 + $0x68] sm:$0xff]
      %v563 = vld [vmem:[%s327 + $0x70] sm:$0xff]
      %v564 = vld [vmem:[%s327 + $0x78] sm:$0xff]
      %v565 = vld [vmem:[%s327 + $0x80] sm:$0xff]
      %v566 = vld [vmem:[%s327 + $0x88] sm:$0xff]
      %v567 = vld [vmem:[%s327 + $0x90] sm:$0xff]
      %v568 = vld [vmem:[%s327 + $0x98] sm:$0xff]
      %v569 = vld [vmem:[%s327 + $0xa0] sm:$0xff]
      %v570 = vld [vmem:[%s327 + $0xa8] sm:$0xff]
      %v571 = vld [vmem:[%s327 + $0xb0] sm:$0xff]
      %v572 = vld [vmem:[%s327 + $0xb8] sm:$0xff]
      %v573 = vld [vmem:[%s327 + $0xc0] sm:$0xff]
      %v574 = vld [vmem:[%s327 + $0xc8] sm:$0xff]
      %v575 = vld [vmem:[%s327 + $0xd0] sm:$0xff]
      %v576 = vld [vmem:[%s327 + $0xd8] sm:$0xff]
      %v577 = vld [vmem:[%s327 + $0xe0] sm:$0xff]
      %v578 = vld [vmem:[%s327 + $0xe8] sm:$0xff]
      %v579 = vld [vmem:[%s327 + $0xf0] sm:$0xff]
      %v580 = vld [vmem:[%s327 + $0xf8] sm:$0xff]
      %v581 = vpack.c.bf16 %v550, %v549
      %v582 = vpack.c.bf16 %v552, %v551
      %v583 = vpack.c.bf16 %v554, %v553
      %v584 = vpack.c.bf16 %v556, %v555
      %v585 = vpack.c.bf16 %v558, %v557
      %v586 = vpack.c.bf16 %v560, %v559
      %v587 = vpack.c.bf16 %v562, %v561
      %v588 = vpack.c.bf16 %v564, %v563
      %v589 = vpack.c.bf16 %v566, %v565
      %v590 = vpack.c.bf16 %v568, %v567
      %v591 = vpack.c.bf16 %v570, %v569
      %v592 = vpack.c.bf16 %v572, %v571
      %v593 = vpack.c.bf16 %v574, %v573
      %v594 = vpack.c.bf16 %v576, %v575
      %v595 = vpack.c.bf16 %v578, %v577
      %v596 = vpack.c.bf16 %v580, %v579
      %v598 = vshrl.u32 %v581, 16
      %v600 = vrot.slane %v598, 7
      %v601 = vshll.u32 %v581, 16
      %v603 = vor.u32 %v600, %v601
      %v605 = vshrl.u32 %v582, 16
      %v607 = vrot.slane %v605, 7
      %v608 = vshll.u32 %v582, 16
      %v610 = vor.u32 %v607, %v608
      %v612 = vshrl.u32 %v583, 16
      %v614 = vrot.slane %v612, 7
      %v615 = vshll.u32 %v583, 16
      %v617 = vor.u32 %v614, %v615
      %v619 = vshrl.u32 %v584, 16
      %v621 = vrot.slane %v619, 7
      %v622 = vshll.u32 %v584, 16
      %v624 = vor.u32 %v621, %v622
      %v626 = vshrl.u32 %v585, 16
      %v628 = vrot.slane %v626, 7
      %v629 = vshll.u32 %v585, 16
      %v631 = vor.u32 %v628, %v629
      %v633 = vshrl.u32 %v586, 16
      %v635 = vrot.slane %v633, 7
      %v636 = vshll.u32 %v586, 16
      %v638 = vor.u32 %v635, %v636
      %v640 = vshrl.u32 %v587, 16
      %v642 = vrot.slane %v640, 7
      %v643 = vshll.u32 %v587, 16
      %v645 = vor.u32 %v642, %v643
      %v647 = vshrl.u32 %v588, 16
      %v649 = vrot.slane %v647, 7
      %v650 = vshll.u32 %v588, 16
      %v652 = vor.u32 %v649, %v650
      %v654 = vshrl.u32 %v589, 16
      %v656 = vrot.slane %v654, 7
      %v657 = vshll.u32 %v589, 16
      %v659 = vor.u32 %v656, %v657
      %v661 = vshrl.u32 %v590, 16
      %v663 = vrot.slane %v661, 7
      %v664 = vshll.u32 %v590, 16
      %v666 = vor.u32 %v663, %v664
      %v668 = vshrl.u32 %v591, 16
      %v670 = vrot.slane %v668, 7
      %v671 = vshll.u32 %v591, 16
      %v673 = vor.u32 %v670, %v671
      %v675 = vshrl.u32 %v592, 16
      %v677 = vrot.slane %v675, 7
      %v678 = vshll.u32 %v592, 16
      %v680 = vor.u32 %v677, %v678
      %v682 = vshrl.u32 %v593, 16
      %v684 = vrot.slane %v682, 7
      %v685 = vshll.u32 %v593, 16
      %v687 = vor.u32 %v684, %v685
      %v689 = vshrl.u32 %v594, 16
      %v691 = vrot.slane %v689, 7
      %v692 = vshll.u32 %v594, 16
      %v694 = vor.u32 %v691, %v692
      %v696 = vshrl.u32 %v595, 16
      %v698 = vrot.slane %v696, 7
      %v699 = vshll.u32 %v595, 16
      %v701 = vor.u32 %v698, %v699
      %v703 = vshrl.u32 %v596, 16
      %v705 = vrot.slane %v703, 7
      %v706 = vshll.u32 %v596, 16
      %v708 = vor.u32 %v705, %v706
      %vm725 = vcmask 31744
      %vm726 = vsmask.f32 7938
      %vm727 = vmand %vm725, %vm726
      %v728 = vld [vmem:[%s338] sm:$0xff]
      %v729 = vsel %vm727, %v603, %v728
      %730 = vst [vmem:[%s338] sm:$0xff] %v729
      %v731 = vld [vmem:[%s338 + $0x8] sm:$0xff]
      %v732 = vsel %vm727, %v610, %v731
      %733 = vst [vmem:[%s338 + $0x8] sm:$0xff] %v732
      %v734 = vld [vmem:[%s338 + $0x10] sm:$0xff]
      %v735 = vsel %vm727, %v617, %v734
      %736 = vst [vmem:[%s338 + $0x10] sm:$0xff] %v735
      %v737 = vld [vmem:[%s338 + $0x18] sm:$0xff]
      %v738 = vsel %vm727, %v624, %v737
      %739 = vst [vmem:[%s338 + $0x18] sm:$0xff] %v738
      %v740 = vld [vmem:[%s338 + $0x20] sm:$0xff]
      %v741 = vsel %vm727, %v631, %v740
      %742 = vst [vmem:[%s338 + $0x20] sm:$0xff] %v741
      %v743 = vld [vmem:[%s338 + $0x28] sm:$0xff]
      %v744 = vsel %vm727, %v638, %v743
      %745 = vst [vmem:[%s338 + $0x28] sm:$0xff] %v744
      %v746 = vld [vmem:[%s338 + $0x30] sm:$0xff]
      %v747 = vsel %vm727, %v645, %v746
      %748 = vst [vmem:[%s338 + $0x30] sm:$0xff] %v747
      %v749 = vld [vmem:[%s338 + $0x38] sm:$0xff]
      %v750 = vsel %vm727, %v652, %v749
      %751 = vst [vmem:[%s338 + $0x38] sm:$0xff] %v750
      %v752 = vld [vmem:[%s338 + $0x40] sm:$0xff]
      %v753 = vsel %vm727, %v659, %v752
      %754 = vst [vmem:[%s338 + $0x40] sm:$0xff] %v753
      %v755 = vld [vmem:[%s338 + $0x48] sm:$0xff]
      %v756 = vsel %vm727, %v666, %v755
      %757 = vst [vmem:[%s338 + $0x48] sm:$0xff] %v756
      %v758 = vld [vmem:[%s338 + $0x50] sm:$0xff]
      %v759 = vsel %vm727, %v673, %v758
      %760 = vst [vmem:[%s338 + $0x50] sm:$0xff] %v759
      %v761 = vld [vmem:[%s338 + $0x58] sm:$0xff]
      %v762 = vsel %vm727, %v680, %v761
      %763 = vst [vmem:[%s338 + $0x58] sm:$0xff] %v762
      %v764 = vld [vmem:[%s338 + $0x60] sm:$0xff]
      %v765 = vsel %vm727, %v687, %v764
      %766 = vst [vmem:[%s338 + $0x60] sm:$0xff] %v765
      %v767 = vld [vmem:[%s338 + $0x68] sm:$0xff]
      %v768 = vsel %vm727, %v694, %v767
      %769 = vst [vmem:[%s338 + $0x68] sm:$0xff] %v768
      %v770 = vld [vmem:[%s338 + $0x70] sm:$0xff]
      %v771 = vsel %vm727, %v701, %v770
      %772 = vst [vmem:[%s338 + $0x70] sm:$0xff] %v771
      %v773 = vld [vmem:[%s338 + $0x78] sm:$0xff]
      %v774 = vsel %vm727, %v708, %v773
      %775 = vst [vmem:[%s338 + $0x78] sm:$0xff] %v774
      %792 = vrot.lane.b32.xlu0 %v581, 4
      %v793 = vpop.permute.xlu0 %792
      %794 = vrot.lane.b32.xlu0 %v582, 4
      %v795 = vpop.permute.xlu0 %794
      %796 = vrot.lane.b32.xlu0 %v583, 4
      %v797 = vpop.permute.xlu0 %796
      %798 = vrot.lane.b32.xlu0 %v584, 4
      %v799 = vpop.permute.xlu0 %798
      %800 = vrot.lane.b32.xlu0 %v585, 4
      %v801 = vpop.permute.xlu0 %800
      %802 = vrot.lane.b32.xlu0 %v586, 4
      %v803 = vpop.permute.xlu0 %802
      %804 = vrot.lane.b32.xlu0 %v587, 4
      %v805 = vpop.permute.xlu0 %804
      %806 = vrot.lane.b32.xlu0 %v588, 4
      %v807 = vpop.permute.xlu0 %806
      %808 = vrot.lane.b32.xlu0 %v589, 4
      %v809 = vpop.permute.xlu0 %808
      %810 = vrot.lane.b32.xlu0 %v590, 4
      %v811 = vpop.permute.xlu0 %810
      %812 = vrot.lane.b32.xlu0 %v591, 4
      %v813 = vpop.permute.xlu0 %812
      %814 = vrot.lane.b32.xlu0 %v592, 4
      %v815 = vpop.permute.xlu0 %814
      %816 = vrot.lane.b32.xlu0 %v593, 4
      %v817 = vpop.permute.xlu0 %816
      %818 = vrot.lane.b32.xlu0 %v594, 4
      %v819 = vpop.permute.xlu0 %818
      %820 = vrot.lane.b32.xlu0 %v595, 4
      %v821 = vpop.permute.xlu0 %820
      %822 = vrot.lane.b32.xlu0 %v596, 4
      %v823 = vpop.permute.xlu0 %822
      %vm840 = vcmask 64544
      %841 = vst.msk [vmem:[%s338] sm:$0xff] %vm840, %v793
      %842 = vst.msk [vmem:[%s338 + $0x8] sm:$0xff] %vm840, %v795
      %843 = vst.msk [vmem:[%s338 + $0x10] sm:$0xff] %vm840, %v797
      %844 = vst.msk [vmem:[%s338 + $0x18] sm:$0xff] %vm840, %v799
      %845 = vst.msk [vmem:[%s338 + $0x20] sm:$0xff] %vm840, %v801
      %846 = vst.msk [vmem:[%s338 + $0x28] sm:$0xff] %vm840, %v803
      %847 = vst.msk [vmem:[%s338 + $0x30] sm:$0xff] %vm840, %v805
      %848 = vst.msk [vmem:[%s338 + $0x38] sm:$0xff] %vm840, %v807
      %849 = vst.msk [vmem:[%s338 + $0x40] sm:$0xff] %vm840, %v809
      %850 = vst.msk [vmem:[%s338 + $0x48] sm:$0xff] %vm840, %v811
      %851 = vst.msk [vmem:[%s338 + $0x50] sm:$0xff] %vm840, %v813
      %852 = vst.msk [vmem:[%s338 + $0x58] sm:$0xff] %vm840, %v815
      %853 = vst.msk [vmem:[%s338 + $0x60] sm:$0xff] %vm840, %v817
      %854 = vst.msk [vmem:[%s338 + $0x68] sm:$0xff] %vm840, %v819
      %855 = vst.msk [vmem:[%s338 + $0x70] sm:$0xff] %vm840, %v821
      %856 = vst.msk [vmem:[%s338 + $0x78] sm:$0xff] %vm840, %v823
      %v857 = vrot.slane %v601, 1
      %v858 = vor.u32 %v598, %v857
      %v859 = vrot.slane %v608, 1
      %v860 = vor.u32 %v605, %v859
      %v861 = vrot.slane %v615, 1
      %v862 = vor.u32 %v612, %v861
      %v863 = vrot.slane %v622, 1
      %v864 = vor.u32 %v619, %v863
      %v865 = vrot.slane %v629, 1
      %v866 = vor.u32 %v626, %v865
      %v867 = vrot.slane %v636, 1
      %v868 = vor.u32 %v633, %v867
      %v869 = vrot.slane %v643, 1
      %v870 = vor.u32 %v640, %v869
      %v871 = vrot.slane %v650, 1
      %v872 = vor.u32 %v647, %v871
      %v873 = vrot.slane %v657, 1
      %v874 = vor.u32 %v654, %v873
      %v875 = vrot.slane %v664, 1
      %v876 = vor.u32 %v661, %v875
      %v877 = vrot.slane %v671, 1
      %v878 = vor.u32 %v668, %v877
      %v879 = vrot.slane %v678, 1
      %v880 = vor.u32 %v675, %v879
      %v881 = vrot.slane %v685, 1
      %v882 = vor.u32 %v682, %v881
      %v883 = vrot.slane %v692, 1
      %v884 = vor.u32 %v689, %v883
      %v885 = vrot.slane %v699, 1
      %v886 = vor.u32 %v696, %v885
      %v887 = vrot.slane %v706, 1
      %v888 = vor.u32 %v703, %v887
      %889 = vrot.lane.b32.xlu0 %v858, 8
      %v890 = vpop.permute.xlu0 %889
      %891 = vrot.lane.b32.xlu0 %v860, 8
      %v892 = vpop.permute.xlu0 %891
      %893 = vrot.lane.b32.xlu0 %v862, 8
      %v894 = vpop.permute.xlu0 %893
      %895 = vrot.lane.b32.xlu0 %v864, 8
      %v896 = vpop.permute.xlu0 %895
      %897 = vrot.lane.b32.xlu0 %v866, 8
      %v898 = vpop.permute.xlu0 %897
      %899 = vrot.lane.b32.xlu0 %v868, 8
      %v900 = vpop.permute.xlu0 %899
      %901 = vrot.lane.b32.xlu0 %v870, 8
      %v902 = vpop.permute.xlu0 %901
      %903 = vrot.lane.b32.xlu0 %v872, 8
      %v904 = vpop.permute.xlu0 %903
      %905 = vrot.lane.b32.xlu0 %v874, 8
      %v906 = vpop.permute.xlu0 %905
      %907 = vrot.lane.b32.xlu0 %v876, 8
      %v908 = vpop.permute.xlu0 %907
      %909 = vrot.lane.b32.xlu0 %v878, 8
      %v910 = vpop.permute.xlu0 %909
      %911 = vrot.lane.b32.xlu0 %v880, 8
      %v912 = vpop.permute.xlu0 %911
      %913 = vrot.lane.b32.xlu0 %v882, 8
      %v914 = vpop.permute.xlu0 %913
      %915 = vrot.lane.b32.xlu0 %v884, 8
      %v916 = vpop.permute.xlu0 %915
      %917 = vrot.lane.b32.xlu0 %v886, 8
      %v918 = vpop.permute.xlu0 %917
      %919 = vrot.lane.b32.xlu0 %v888, 8
      %v920 = vpop.permute.xlu0 %919
      %vm937 = vcmask 97344
      %vm938 = vsmask.f32 7424
      %vm939 = vmand %vm937, %vm938
      %v940 = vld [vmem:[%s338] sm:$0xff]
      %v941 = vsel %vm939, %v890, %v940
      %942 = vst [vmem:[%s338] sm:$0xff] %v941
      %v943 = vld [vmem:[%s338 + $0x8] sm:$0xff]
      %v944 = vsel %vm939, %v892, %v943
      %945 = vst [vmem:[%s338 + $0x8] sm:$0xff] %v944
      %v946 = vld [vmem:[%s338 + $0x10] sm:$0xff]
      %v947 = vsel %vm939, %v894, %v946
      %948 = vst [vmem:[%s338 + $0x10] sm:$0xff] %v947
      %v949 = vld [vmem:[%s338 + $0x18] sm:$0xff]
      %v950 = vsel %vm939, %v896, %v949
      %951 = vst [vmem:[%s338 + $0x18] sm:$0xff] %v950
      %v952 = vld [vmem:[%s338 + $0x20] sm:$0xff]
      %v953 = vsel %vm939, %v898, %v952
      %954 = vst [vmem:[%s338 + $0x20] sm:$0xff] %v953
      %v955 = vld [vmem:[%s338 + $0x28] sm:$0xff]
      %v956 = vsel %vm939, %v900, %v955
      %957 = vst [vmem:[%s338 + $0x28] sm:$0xff] %v956
      %v958 = vld [vmem:[%s338 + $0x30] sm:$0xff]
      %v959 = vsel %vm939, %v902, %v958
      %960 = vst [vmem:[%s338 + $0x30] sm:$0xff] %v959
      %v961 = vld [vmem:[%s338 + $0x38] sm:$0xff]
      %v962 = vsel %vm939, %v904, %v961
      %963 = vst [vmem:[%s338 + $0x38] sm:$0xff] %v962
      %v964 = vld [vmem:[%s338 + $0x40] sm:$0xff]
      %v965 = vsel %vm939, %v906, %v964
      %966 = vst [vmem:[%s338 + $0x40] sm:$0xff] %v965
      %v967 = vld [vmem:[%s338 + $0x48] sm:$0xff]
      %v968 = vsel %vm939, %v908, %v967
      %969 = vst [vmem:[%s338 + $0x48] sm:$0xff] %v968
      %v970 = vld [vmem:[%s338 + $0x50] sm:$0xff]
      %v971 = vsel %vm939, %v910, %v970
      %972 = vst [vmem:[%s338 + $0x50] sm:$0xff] %v971
      %v973 = vld [vmem:[%s338 + $0x58] sm:$0xff]
      %v974 = vsel %vm939, %v912, %v973
      %975 = vst [vmem:[%s338 + $0x58] sm:$0xff] %v974
      %v976 = vld [vmem:[%s338 + $0x60] sm:$0xff]
      %v977 = vsel %vm939, %v914, %v976
      %978 = vst [vmem:[%s338 + $0x60] sm:$0xff] %v977
      %v979 = vld [vmem:[%s338 + $0x68] sm:$0xff]
      %v980 = vsel %vm939, %v916, %v979
      %981 = vst [vmem:[%s338 + $0x68] sm:$0xff] %v980
      %v982 = vld [vmem:[%s338 + $0x70] sm:$0xff]
      %v983 = vsel %vm939, %v918, %v982
      %984 = vst [vmem:[%s338 + $0x70] sm:$0xff] %v983
      %v985 = vld [vmem:[%s338 + $0x78] sm:$0xff]
      %v986 = vsel %vm939, %v920, %v985
      %987 = vst [vmem:[%s338 + $0x78] sm:$0xff] %v986
      %v988 = vld [vmem:[#allocation2] sm:$0xff]
      %v989 = vld [vmem:[#allocation2 + $0x8] sm:$0xff]
      %v990 = vld [vmem:[#allocation2 + $0x10] sm:$0xff]
      %v991 = vld [vmem:[#allocation2 + $0x18] sm:$0xff]
      %v992 = vld [vmem:[#allocation2 + $0x20] sm:$0xff]
      %v993 = vld [vmem:[#allocation2 + $0x28] sm:$0xff]
      %v994 = vld [vmem:[#allocation2 + $0x30] sm:$0xff]
      %v995 = vld [vmem:[#allocation2 + $0x38] sm:$0xff]
      %v996 = vld [vmem:[#allocation2 + $0x40] sm:$0xff]
      %v997 = vld [vmem:[#allocation2 + $0x48] sm:$0xff]
      %v998 = vld [vmem:[#allocation2 + $0x50] sm:$0xff]
      %v999 = vld [vmem:[#allocation2 + $0x58] sm:$0xff]
      %v1000 = vld [vmem:[#allocation2 + $0x60] sm:$0xff]
      %v1001 = vld [vmem:[#allocation2 + $0x68] sm:$0xff]
      %v1002 = vld [vmem:[#allocation2 + $0x70] sm:$0xff]
      %v1003 = vld [vmem:[#allocation2 + $0x78] sm:$0xff]
      %v1004 = vld [vmem:[%s1] sm:$0xf]
      %v1005 = vld [vmem:[%s1 + $0x4] sm:$0x3]
      %v1006 = vld [vmem:[%s338] sm:$0xff]
      %v1007 = vld [vmem:[%s338 + $0x8] sm:$0xff]
      %v1008 = vld [vmem:[%s338 + $0x10] sm:$0xff]
      %v1009 = vld [vmem:[%s338 + $0x18] sm:$0xff]
      %v1010 = vld [vmem:[%s338 + $0x20] sm:$0xff]
      %v1011 = vld [vmem:[%s338 + $0x28] sm:$0xff]
      %v1012 = vld [vmem:[%s338 + $0x30] sm:$0xff]
      %v1013 = vld [vmem:[%s338 + $0x38] sm:$0xff]
      %v1014 = vld [vmem:[%s338 + $0x40] sm:$0xff]
      %v1015 = vld [vmem:[%s338 + $0x48] sm:$0xff]
      %v1016 = vld [vmem:[%s338 + $0x50] sm:$0xff]
      %v1017 = vld [vmem:[%s338 + $0x58] sm:$0xff]
      %v1018 = vld [vmem:[%s338 + $0x60] sm:$0xff]
      %v1019 = vld [vmem:[%s338 + $0x68] sm:$0xff]
      %v1020 = vld [vmem:[%s338 + $0x70] sm:$0xff]
      %v1021 = vld [vmem:[%s338 + $0x78] sm:$0xff]
      %s1022 = scalar_lea.vmem %s1, 8
      %v1023 = vld [vmem:[%s1022] sm:$0xf]
      %v1024 = vld [vmem:[%s1022 + $0x4] sm:$0x3]
      %v1027 = vunpack.c.l.b16 %v1023
      %v1028 = vunpack.c.l.b16 %v1024
      %v1029 = vpack.c.b16 %v1028, %v1027
      %v1031 = vsel %vm334, %v1006, 0
      %v1034 = vsel %vm334, %v1007, 0
      %v1037 = vsel %vm334, %v1008, 0
      %v1040 = vsel %vm334, %v1009, 0
      %v1043 = vsel %vm334, %v1010, 0
      %v1046 = vsel %vm334, %v1011, 0
      %v1049 = vsel %vm334, %v1012, 0
      %v1052 = vsel %vm334, %v1013, 0
      %v1055 = vsel %vm334, %v1014, 0
      %v1058 = vsel %vm334, %v1015, 0
      %v1061 = vsel %vm334, %v1016, 0
      %v1064 = vsel %vm334, %v1017, 0
      %v1067 = vsel %vm334, %v1018, 0
      %v1070 = vsel %vm334, %v1019, 0
      %v1073 = vsel %vm334, %v1020, 0
      %v1076 = vsel %vm334, %v1021, 0
      %vm1078 = vcmask 1045504
      %v1080 = vsel %vm1078, %v1029, 0
      %1082 = vmatprep.subr.bf16.mxu0 0
      %1083 = vmatpush1.bf16.msra.mxu0 %v1080
      %1084 = vmatprep.subr.bf16.mxu0 0
      %1085 = vmatpush1.bf16.msra.mxu0 0
      %1086 = vmatprep.subr.bf16.mxu0 0
      %1087 = vmatpush1.bf16.msra.mxu0 0
      %1088 = vmatprep.subr.bf16.mxu0 0
      %1089 = vmatpush1.bf16.msra.mxu0 0
      %1090 = vmatprep.subr.bf16.mxu0 0
      %1091 = vmatpush1.bf16.msra.mxu0 0
      %1092 = vmatprep.subr.bf16.mxu0 0
      %1093 = vmatpush1.bf16.msra.mxu0 0
      %1094 = vmatprep.subr.bf16.mxu0 0
      %1095 = vmatpush1.bf16.msra.mxu0 0
      %1096 = vmatprep.subr.bf16.mxu0 0
      %1097 = vmatpush1.bf16.msra.mxu0 0
      %1098 = vmatprep.subr.bf16.mxu0 0
      %1099 = vmatpush1.bf16.msra.mxu0 0
      %1100 = vmatprep.subr.bf16.mxu0 0
      %1101 = vmatpush1.bf16.msra.mxu0 0
      %1102 = vmatprep.subr.bf16.mxu0 0
      %1103 = vmatpush1.bf16.msra.mxu0 0
      %1104 = vmatprep.subr.bf16.mxu0 0
      %1105 = vmatpush1.bf16.msra.mxu0 0
      %1106 = vmatprep.subr.bf16.mxu0 0
      %1107 = vmatpush1.bf16.msra.mxu0 0
      %1108 = vmatprep.subr.bf16.mxu0 0
      %1109 = vmatpush1.bf16.msra.mxu0 0
      %1110 = vmatprep.subr.bf16.mxu0 0
      %1111 = vmatpush1.bf16.msra.mxu0 0
      %1112 = vmatprep.subr.bf16.mxu0 0
      %1113 = vmatpush1.bf16.msra.mxu0 0
      %1114 = vmatprep.mubr.bf16.mxu0 0
      %1115 = vmatmul.mubr.bf16.gmra.mrb[0].mxu0 %v1031
      %v1116 = vpop.f32.mrb[0].mxu0
      %v1117 = vadd.f32 0.0, %v1116
      %v1118 = vpop.f32.mrb[0].mxu0
      %v1119 = vpop.f32.mrb[0].mxu0
      %v1120 = vadd.f32 0.0, %v1119
      %v1121 = vpop.f32.mrb[0].mxu0
      %1122 = vmatprep.mubr.bf16.mxu0 0
      %1123 = vmatmul.mubr.bf16.gmra.mrb[0].mxu0 %v1034
      %v1124 = vpop.f32.mrb[0].mxu0
      %v1125 = vadd.f32 0.0, %v1124
      %v1126 = vpop.f32.mrb[0].mxu0
      %v1127 = vpop.f32.mrb[0].mxu0
      %v1128 = vadd.f32 0.0, %v1127
      %v1129 = vpop.f32.mrb[0].mxu0
      %1130 = vmatprep.mubr.bf16.mxu0 0
      %1131 = vmatmul.mubr.bf16.gmra.mrb[0].mxu0 %v1037
      %v1132 = vpop.f32.mrb[0].mxu0
      %v1133 = vadd.f32 0.0, %v1132
      %v1134 = vpop.f32.mrb[0].mxu0
      %v1135 = vpop.f32.mrb[0].mxu0
      %v1136 = vadd.f32 0.0, %v1135
      %v1137 = vpop.f32.mrb[0].mxu0
      %1138 = vmatprep.mubr.bf16.mxu0 0
      %1139 = vmatmul.mubr.bf16.gmra.mrb[0].mxu0 %v1040
      %v1140 = vpop.f32.mrb[0].mxu0
      %v1141 = vadd.f32 0.0, %v1140
      %v1142 = vpop.f32.mrb[0].mxu0
      %v1143 = vpop.f32.mrb[0].mxu0
      %v1144 = vadd.f32 0.0, %v1143
      %v1145 = vpop.f32.mrb[0].mxu0
      %1146 = vmatprep.mubr.bf16.mxu0 0
      %1147 = vmatmul.mubr.bf16.gmra.mrb[0].mxu0 %v1043
      %v1148 = vpop.f32.mrb[0].mxu0
      %v1149 = vadd.f32 0.0, %v1148
      %v1150 = vpop.f32.mrb[0].mxu0
      %v1151 = vpop.f32.mrb[0].mxu0
      %v1152 = vadd.f32 0.0, %v1151
      %v1153 = vpop.f32.mrb[0].mxu0
      %1154 = vmatprep.mubr.bf16.mxu0 0
      %1155 = vmatmul.mubr.bf16.gmra.mrb[0].mxu0 %v1046
      %v1156 = vpop.f32.mrb[0].mxu0
      %v1157 = vadd.f32 0.0, %v1156
      %v1158 = vpop.f32.mrb[0].mxu0
      %v1159 = vpop.f32.mrb[0].mxu0
      %v1160 = vadd.f32 0.0, %v1159
      %v1161 = vpop.f32.mrb[0].mxu0
      %1162 = vmatprep.mubr.bf16.mxu0 0
      %1163 = vmatmul.mubr.bf16.gmra.mrb[0].mxu0 %v1049
      %v1164 = vpop.f32.mrb[0].mxu0
      %v1165 = vadd.f32 0.0, %v1164
      %v1166 = vpop.f32.mrb[0].mxu0
      %v1167 = vpop.f32.mrb[0].mxu0
      %v1168 = vadd.f32 0.0, %v1167
      %v1169 = vpop.f32.mrb[0].mxu0
      %1170 = vmatprep.mubr.bf16.mxu0 0
      %1171 = vmatmul.mubr.bf16.gmra.mrb[0].mxu0 %v1052
      %v1172 = vpop.f32.mrb[0].mxu0
      %v1173 = vadd.f32 0.0, %v1172
      %v1174 = vpop.f32.mrb[0].mxu0
      %v1175 = vpop.f32.mrb[0].mxu0
      %v1176 = vadd.f32 0.0, %v1175
      %v1177 = vpop.f32.mrb[0].mxu0
      %1178 = vmatprep.mubr.bf16.mxu0 0
      %1179 = vmatmul.mubr.bf16.gmra.mrb[0].mxu0 %v1055
      %v1180 = vpop.f32.mrb[0].mxu0
      %v1181 = vadd.f32 0.0, %v1180
      %v1182 = vpop.f32.mrb[0].mxu0
      %v1183 = vpop.f32.mrb[0].mxu0
      %v1184 = vadd.f32 0.0, %v1183
      %v1185 = vpop.f32.mrb[0].mxu0
      %1186 = vmatprep.mubr.bf16.mxu0 0
      %1187 = vmatmul.mubr.bf16.gmra.mrb[0].mxu0 %v1058
      %v1188 = vpop.f32.mrb[0].mxu0
      %v1189 = vadd.f32 0.0, %v1188
      %v1190 = vpop.f32.mrb[0].mxu0
      %v1191 = vpop.f32.mrb[0].mxu0
      %v1192 = vadd.f32 0.0, %v1191
      %v1193 = vpop.f32.mrb[0].mxu0
      %1194 = vmatprep.mubr.bf16.mxu0 0
      %1195 = vmatmul.mubr.bf16.gmra.mrb[0].mxu0 %v1061
      %v1196 = vpop.f32.mrb[0].mxu0
      %v1197 = vadd.f32 0.0, %v1196
      %v1198 = vpop.f32.mrb[0].mxu0
      %v1199 = vpop.f32.mrb[0].mxu0
      %v1200 = vadd.f32 0.0, %v1199
      %v1201 = vpop.f32.mrb[0].mxu0
      %1202 = vmatprep.mubr.bf16.mxu0 0
      %1203 = vmatmul.mubr.bf16.gmra.mrb[0].mxu0 %v1064
      %v1204 = vpop.f32.mrb[0].mxu0
      %v1205 = vadd.f32 0.0, %v1204
      %v1206 = vpop.f32.mrb[0].mxu0
      %v1207 = vpop.f32.mrb[0].mxu0
      %v1208 = vadd.f32 0.0, %v1207
      %v1209 = vpop.f32.mrb[0].mxu0
      %1210 = vmatprep.mubr.bf16.mxu0 0
      %1211 = vmatmul.mubr.bf16.gmra.mrb[0].mxu0 %v1067
      %v1212 = vpop.f32.mrb[0].mxu0
      %v1213 = vadd.f32 0.0, %v1212
      %v1214 = vpop.f32.mrb[0].mxu0
      %v1215 = vpop.f32.mrb[0].mxu0
      %v1216 = vadd.f32 0.0, %v1215
      %v1217 = vpop.f32.mrb[0].mxu0
      %1218 = vmatprep.mubr.bf16.mxu0 0
      %1219 = vmatmul.mubr.bf16.gmra.mrb[0].mxu0 %v1070
      %v1220 = vpop.f32.mrb[0].mxu0
      %v1221 = vadd.f32 0.0, %v1220
      %v1222 = vpop.f32.mrb[0].mxu0
      %v1223 = vpop.f32.mrb[0].mxu0
      %v1224 = vadd.f32 0.0, %v1223
      %v1225 = vpop.f32.mrb[0].mxu0
      %1226 = vmatprep.mubr.bf16.mxu0 0
      %1227 = vmatmul.mubr.bf16.gmra.mrb[0].mxu0 %v1073
      %v1228 = vpop.f32.mrb[0].mxu0
      %v1229 = vadd.f32 0.0, %v1228
      %v1230 = vpop.f32.mrb[0].mxu0
      %v1231 = vpop.f32.mrb[0].mxu0
      %v1232 = vadd.f32 0.0, %v1231
      %v1233 = vpop.f32.mrb[0].mxu0
      %1234 = vmatprep.mubr.bf16.mxu0 0
      %1235 = vmatmul.mubr.bf16.gmra.mrb[0].mxu0 %v1076
      %v1236 = vpop.f32.mrb[0].mxu0
      %v1237 = vadd.f32 0.0, %v1236
      %v1238 = vpop.f32.mrb[0].mxu0
      %v1239 = vpop.f32.mrb[0].mxu0
      %v1240 = vadd.f32 0.0, %v1239
      %v1241 = vpop.f32.mrb[0].mxu0
      %1242 = vdwg.mxu0
      %v1245 = vunpack.c.l.b16 %v1004
      %v1246 = vunpack.c.l.b16 %v1005
      %v1247 = vpack.c.b16 %v1246, %v1245
      %v1249 = vsel %vm334, %v988, 0
      %v1252 = vsel %vm334, %v989, 0
      %v1255 = vsel %vm334, %v990, 0
      %v1258 = vsel %vm334, %v991, 0
      %v1261 = vsel %vm334, %v992, 0
      %v1264 = vsel %vm334, %v993, 0
      %v1267 = vsel %vm334, %v994, 0
      %v1270 = vsel %vm334, %v995, 0
      %v1273 = vsel %vm334, %v996, 0
      %v1276 = vsel %vm334, %v997, 0
      %v1279 = vsel %vm334, %v998, 0
      %v1282 = vsel %vm334, %v999, 0
      %v1285 = vsel %vm334, %v1000, 0
      %v1288 = vsel %vm334, %v1001, 0
      %v1291 = vsel %vm334, %v1002, 0
      %v1294 = vsel %vm334, %v1003, 0
      %v1297 = vsel %vm1078, %v1247, 0
      %1299 = vmatprep.subr.bf16.mxu0 0
      %1300 = vmatpush1.bf16.msra.mxu0 %v1297
      %1301 = vmatprep.subr.bf16.mxu0 0
      %1302 = vmatpush1.bf16.msra.mxu0 0
      %1303 = vmatprep.subr.bf16.mxu0 0
      %1304 = vmatpush1.bf16.msra.mxu0 0
      %1305 = vmatprep.subr.bf16.mxu0 0
      %1306 = vmatpush1.bf16.msra.mxu0 0
      %1307 = vmatprep.subr.bf16.mxu0 0
      %1308 = vmatpush1.bf16.msra.mxu0 0
      %1309 = vmatprep.subr.bf16.mxu0 0
      %1310 = vmatpush1.bf16.msra.mxu0 0
      %1311 = vmatprep.subr.bf16.mxu0 0
      %1312 = vmatpush1.bf16.msra.mxu0 0
      %1313 = vmatprep.subr.bf16.mxu0 0
      %1314 = vmatpush1.bf16.msra.mxu0 0
      %1315 = vmatprep.subr.bf16.mxu0 0
      %1316 = vmatpush1.bf16.msra.mxu0 0
      %1317 = vmatprep.subr.bf16.mxu0 0
      %1318 = vmatpush1.bf16.msra.mxu0 0
      %1319 = vmatprep.subr.bf16.mxu0 0
      %1320 = vmatpush1.bf16.msra.mxu0 0
      %1321 = vmatprep.subr.bf16.mxu0 0
      %1322 = vmatpush1.bf16.msra.mxu0 0
      %1323 = vmatprep.subr.bf16.mxu0 0
      %1324 = vmatpush1.bf16.msra.mxu0 0
      %1325 = vmatprep.subr.bf16.mxu0 0
      %1326 = vmatpush1.bf16.msra.mxu0 0
      %1327 = vmatprep.subr.bf16.mxu0 0
      %1328 = vmatpush1.bf16.msra.mxu0 0
      %1329 = vmatprep.subr.bf16.mxu0 0
      %1330 = vmatpush1.bf16.msra.mxu0 0
      %1331 = vmatprep.mubr.bf16.mxu0 0
      %1332 = vmatmul.mubr.bf16.gmra.mrb[0].mxu0 %v1249
      %v1333 = vpop.f32.mrb[0].mxu0
      %v1334 = vadd.f32 %v1117, %v1333
      %v1335 = vpop.f32.mrb[0].mxu0
      %v1336 = vpop.f32.mrb[0].mxu0
      %v1337 = vadd.f32 %v1120, %v1336
      %v1338 = vpop.f32.mrb[0].mxu0
      %1339 = vmatprep.mubr.bf16.mxu0 0
      %1340 = vmatmul.mubr.bf16.gmra.mrb[0].mxu0 %v1252
      %v1341 = vpop.f32.mrb[0].mxu0
      %v1342 = vadd.f32 %v1125, %v1341
      %v1343 = vpop.f32.mrb[0].mxu0
      %v1344 = vpop.f32.mrb[0].mxu0
      %v1345 = vadd.f32 %v1128, %v1344
      %v1346 = vpop.f32.mrb[0].mxu0
      %1347 = vmatprep.mubr.bf16.mxu0 0
      %1348 = vmatmul.mubr.bf16.gmra.mrb[0].mxu0 %v1255
      %v1349 = vpop.f32.mrb[0].mxu0
      %v1350 = vadd.f32 %v1133, %v1349
      %v1351 = vpop.f32.mrb[0].mxu0
      %v1352 = vpop.f32.mrb[0].mxu0
      %v1353 = vadd.f32 %v1136, %v1352
      %v1354 = vpop.f32.mrb[0].mxu0
      %1355 = vmatprep.mubr.bf16.mxu0 0
      %1356 = vmatmul.mubr.bf16.gmra.mrb[0].mxu0 %v1258
      %v1357 = vpop.f32.mrb[0].mxu0
      %v1358 = vadd.f32 %v1141, %v1357
      %v1359 = vpop.f32.mrb[0].mxu0
      %v1360 = vpop.f32.mrb[0].mxu0
      %v1361 = vadd.f32 %v1144, %v1360
      %v1362 = vpop.f32.mrb[0].mxu0
      %1363 = vmatprep.mubr.bf16.mxu0 0
      %1364 = vmatmul.mubr.bf16.gmra.mrb[0].mxu0 %v1261
      %v1365 = vpop.f32.mrb[0].mxu0
      %v1366 = vadd.f32 %v1149, %v1365
      %v1367 = vpop.f32.mrb[0].mxu0
      %v1368 = vpop.f32.mrb[0].mxu0
      %v1369 = vadd.f32 %v1152, %v1368
      %v1370 = vpop.f32.mrb[0].mxu0
      %1371 = vmatprep.mubr.bf16.mxu0 0
      %1372 = vmatmul.mubr.bf16.gmra.mrb[0].mxu0 %v1264
      %v1373 = vpop.f32.mrb[0].mxu0
      %v1374 = vadd.f32 %v1157, %v1373
      %v1375 = vpop.f32.mrb[0].mxu0
      %v1376 = vpop.f32.mrb[0].mxu0
      %v1377 = vadd.f32 %v1160, %v1376
      %v1378 = vpop.f32.mrb[0].mxu0
      %1379 = vmatprep.mubr.bf16.mxu0 0
      %1380 = vmatmul.mubr.bf16.gmra.mrb[0].mxu0 %v1267
      %v1381 = vpop.f32.mrb[0].mxu0
      %v1382 = vadd.f32 %v1165, %v1381
      %v1383 = vpop.f32.mrb[0].mxu0
      %v1384 = vpop.f32.mrb[0].mxu0
      %v1385 = vadd.f32 %v1168, %v1384
      %v1386 = vpop.f32.mrb[0].mxu0
      %1387 = vmatprep.mubr.bf16.mxu0 0
      %1388 = vmatmul.mubr.bf16.gmra.mrb[0].mxu0 %v1270
      %v1389 = vpop.f32.mrb[0].mxu0
      %v1390 = vadd.f32 %v1173, %v1389
      %v1391 = vpop.f32.mrb[0].mxu0
      %v1392 = vpop.f32.mrb[0].mxu0
      %v1393 = vadd.f32 %v1176, %v1392
      %v1394 = vpop.f32.mrb[0].mxu0
      %1395 = vmatprep.mubr.bf16.mxu0 0
      %1396 = vmatmul.mubr.bf16.gmra.mrb[0].mxu0 %v1273
      %v1397 = vpop.f32.mrb[0].mxu0
      %v1398 = vadd.f32 %v1181, %v1397
      %v1399 = vpop.f32.mrb[0].mxu0
      %v1400 = vpop.f32.mrb[0].mxu0
      %v1401 = vadd.f32 %v1184, %v1400
      %v1402 = vpop.f32.mrb[0].mxu0
      %1403 = vmatprep.mubr.bf16.mxu0 0
      %1404 = vmatmul.mubr.bf16.gmra.mrb[0].mxu0 %v1276
      %v1405 = vpop.f32.mrb[0].mxu0
      %v1406 = vadd.f32 %v1189, %v1405
      %v1407 = vpop.f32.mrb[0].mxu0
      %v1408 = vpop.f32.mrb[0].mxu0
      %v1409 = vadd.f32 %v1192, %v1408
      %v1410 = vpop.f32.mrb[0].mxu0
      %1411 = vmatprep.mubr.bf16.mxu0 0
      %1412 = vmatmul.mubr.bf16.gmra.mrb[0].mxu0 %v1279
      %v1413 = vpop.f32.mrb[0].mxu0
      %v1414 = vadd.f32 %v1197, %v1413
      %v1415 = vpop.f32.mrb[0].mxu0
      %v1416 = vpop.f32.mrb[0].mxu0
      %v1417 = vadd.f32 %v1200, %v1416
      %v1418 = vpop.f32.mrb[0].mxu0
      %1419 = vmatprep.mubr.bf16.mxu0 0
      %1420 = vmatmul.mubr.bf16.gmra.mrb[0].mxu0 %v1282
      %v1421 = vpop.f32.mrb[0].mxu0
      %v1422 = vadd.f32 %v1205, %v1421
      %v1423 = vpop.f32.mrb[0].mxu0
      %v1424 = vpop.f32.mrb[0].mxu0
      %v1425 = vadd.f32 %v1208, %v1424
      %v1426 = vpop.f32.mrb[0].mxu0
      %1427 = vmatprep.mubr.bf16.mxu0 0
      %1428 = vmatmul.mubr.bf16.gmra.mrb[0].mxu0 %v1285
      %v1429 = vpop.f32.mrb[0].mxu0
      %v1430 = vadd.f32 %v1213, %v1429
      %v1431 = vpop.f32.mrb[0].mxu0
      %v1432 = vpop.f32.mrb[0].mxu0
      %v1433 = vadd.f32 %v1216, %v1432
      %v1434 = vpop.f32.mrb[0].mxu0
      %1435 = vmatprep.mubr.bf16.mxu0 0
      %1436 = vmatmul.mubr.bf16.gmra.mrb[0].mxu0 %v1288
      %v1437 = vpop.f32.mrb[0].mxu0
      %v1438 = vadd.f32 %v1221, %v1437
      %v1439 = vpop.f32.mrb[0].mxu0
      %v1440 = vpop.f32.mrb[0].mxu0
      %v1441 = vadd.f32 %v1224, %v1440
      %v1442 = vpop.f32.mrb[0].mxu0
      %1443 = vmatprep.mubr.bf16.mxu0 0
      %1444 = vmatmul.mubr.bf16.gmra.mrb[0].mxu0 %v1291
      %v1445 = vpop.f32.mrb[0].mxu0
      %v1446 = vadd.f32 %v1229, %v1445
      %v1447 = vpop.f32.mrb[0].mxu0
      %v1448 = vpop.f32.mrb[0].mxu0
      %v1449 = vadd.f32 %v1232, %v1448
      %v1450 = vpop.f32.mrb[0].mxu0
      %1451 = vmatprep.mubr.bf16.mxu0 0
      %1452 = vmatmul.mubr.bf16.gmra.mrb[0].mxu0 %v1294
      %v1453 = vpop.f32.mrb[0].mxu0
      %v1454 = vadd.f32 %v1237, %v1453
      %v1455 = vpop.f32.mrb[0].mxu0
      %v1456 = vpop.f32.mrb[0].mxu0
      %v1457 = vadd.f32 %v1240, %v1456
      %v1458 = vpop.f32.mrb[0].mxu0
      %1459 = vdwg.mxu0
      %s1460 = scalar_lea.vmem [#allocation2], 16
      %v1461 = vld [vmem:[%s1460] sm:$0xff]
      %v1462 = vld [vmem:[%s1460 + $0x8] sm:$0xff]
      %v1463 = vld [vmem:[%s1460 + $0x10] sm:$0xff]
      %v1464 = vld [vmem:[%s1460 + $0x18] sm:$0xff]
      %v1465 = vld [vmem:[%s1460 + $0x20] sm:$0xff]
      %v1466 = vld [vmem:[%s1460 + $0x28] sm:$0xff]
      %v1467 = vld [vmem:[%s1460 + $0x30] sm:$0xff]
      %v1468 = vld [vmem:[%s1460 + $0x38] sm:$0xff]
      %v1469 = vld [vmem:[%s1460 + $0x40] sm:$0xff]
      %v1470 = vld [vmem:[%s1460 + $0x48] sm:$0xff]
      %v1471 = vld [vmem:[%s1460 + $0x50] sm:$0xff]
      %v1472 = vld [vmem:[%s1460 + $0x58] sm:$0xff]
      %v1473 = vld [vmem:[%s1460 + $0x60] sm:$0xff]
      %v1474 = vld [vmem:[%s1460 + $0x68] sm:$0xff]
      %v1475 = vld [vmem:[%s1460 + $0x70] sm:$0xff]
      %v1476 = vld [vmem:[%s1460 + $0x78] sm:$0xff]
      %s1477 = scalar_lea.vmem %s1, 16
      %v1478 = vld [vmem:[%s1477] sm:$0xf]
      %v1479 = vld [vmem:[%s1477 + $0x4] sm:$0x3]
      %v1482 = vunpack.c.l.b16 %v1478
      %v1483 = vunpack.c.l.b16 %v1479
      %v1484 = vpack.c.b16 %v1483, %v1482
      %v1486 = vsel %vm334, %v1461, 0
      %v1489 = vsel %vm334, %v1462, 0
      %v1492 = vsel %vm334, %v1463, 0
      %v1495 = vsel %vm334, %v1464, 0
      %v1498 = vsel %vm334, %v1465, 0
      %v1501 = vsel %vm334, %v1466, 0
      %v1504 = vsel %vm334, %v1467, 0
      %v1507 = vsel %vm334, %v1468, 0
      %v1510 = vsel %vm334, %v1469, 0
      %v1513 = vsel %vm334, %v1470, 0
      %v1516 = vsel %vm334, %v1471, 0
      %v1519 = vsel %vm334, %v1472, 0
      %v1522 = vsel %vm334, %v1473, 0
      %v1525 = vsel %vm334, %v1474, 0
      %v1528 = vsel %vm334, %v1475, 0
      %v1531 = vsel %vm334, %v1476, 0
      %v1534 = vsel %vm1078, %v1484, 0
      %1536 = vmatprep.subr.bf16.mxu0 0
      %1537 = vmatpush1.bf16.msra.mxu0 %v1534
      %1538 = vmatprep.subr.bf16.mxu0 0
      %1539 = vmatpush1.bf16.msra.mxu0 0
      %1540 = vmatprep.subr.bf16.mxu0 0
      %1541 = vmatpush1.bf16.msra.mxu0 0
      %1542 = vmatprep.subr.bf16.mxu0 0
      %1543 = vmatpush1.bf16.msra.mxu0 0
      %1544 = vmatprep.subr.bf16.mxu0 0
      %1545 = vmatpush1.bf16.msra.mxu0 0
      %1546 = vmatprep.subr.bf16.mxu0 0
      %1547 = vmatpush1.bf16.msra.mxu0 0
      %1548 = vmatprep.subr.bf16.mxu0 0
      %1549 = vmatpush1.bf16.msra.mxu0 0
      %1550 = vmatprep.subr.bf16.mxu0 0
      %1551 = vmatpush1.bf16.msra.mxu0 0
      %1552 = vmatprep.subr.bf16.mxu0 0
      %1553 = vmatpush1.bf16.msra.mxu0 0
      %1554 = vmatprep.subr.bf16.mxu0 0
      %1555 = vmatpush1.bf16.msra.mxu0 0
      %1556 = vmatprep.subr.bf16.mxu0 0
      %1557 = vmatpush1.bf16.msra.mxu0 0
      %1558 = vmatprep.subr.bf16.mxu0 0
      %1559 = vmatpush1.bf16.msra.mxu0 0
      %1560 = vmatprep.subr.bf16.mxu0 0
      %1561 = vmatpush1.bf16.msra.mxu0 0
      %1562 = vmatprep.subr.bf16.mxu0 0
      %1563 = vmatpush1.bf16.msra.mxu0 0
      %1564 = vmatprep.subr.bf16.mxu0 0
      %1565 = vmatpush1.bf16.msra.mxu0 0
      %1566 = vmatprep.subr.bf16.mxu0 0
      %1567 = vmatpush1.bf16.msra.mxu0 0
      %1568 = vmatprep.mubr.bf16.mxu0 0
      %1569 = vmatmul.mubr.bf16.gmra.mrb[0].mxu0 %v1486
      %v1570 = vpop.f32.mrb[0].mxu0
      %v1571 = vadd.f32 0.0, %v1570
      %v1572 = vpop.f32.mrb[0].mxu0
      %v1573 = vpop.f32.mrb[0].mxu0
      %v1574 = vadd.f32 0.0, %v1573
      %v1575 = vpop.f32.mrb[0].mxu0
      %1576 = vmatprep.mubr.bf16.mxu0 0
      %1577 = vmatmul.mubr.bf16.gmra.mrb[0].mxu0 %v1489
      %v1578 = vpop.f32.mrb[0].mxu0
      %v1579 = vadd.f32 0.0, %v1578
      %v1580 = vpop.f32.mrb[0].mxu0
      %v1581 = vpop.f32.mrb[0].mxu0
      %v1582 = vadd.f32 0.0, %v1581
      %v1583 = vpop.f32.mrb[0].mxu0
      %1584 = vmatprep.mubr.bf16.mxu0 0
      %1585 = vmatmul.mubr.bf16.gmra.mrb[0].mxu0 %v1492
      %v1586 = vpop.f32.mrb[0].mxu0
      %v1587 = vadd.f32 0.0, %v1586
      %v1588 = vpop.f32.mrb[0].mxu0
      %v1589 = vpop.f32.mrb[0].mxu0
      %v1590 = vadd.f32 0.0, %v1589
      %v1591 = vpop.f32.mrb[0].mxu0
      %1592 = vmatprep.mubr.bf16.mxu0 0
      %1593 = vmatmul.mubr.bf16.gmra.mrb[0].mxu0 %v1495
      %v1594 = vpop.f32.mrb[0].mxu0
      %v1595 = vadd.f32 0.0, %v1594
      %v1596 = vpop.f32.mrb[0].mxu0
      %v1597 = vpop.f32.mrb[0].mxu0
      %v1598 = vadd.f32 0.0, %v1597
      %v1599 = vpop.f32.mrb[0].mxu0
      %1600 = vmatprep.mubr.bf16.mxu0 0
      %1601 = vmatmul.mubr.bf16.gmra.mrb[0].mxu0 %v1498
      %v1602 = vpop.f32.mrb[0].mxu0
      %v1603 = vadd.f32 0.0, %v1602
      %v1604 = vpop.f32.mrb[0].mxu0
      %v1605 = vpop.f32.mrb[0].mxu0
      %v1606 = vadd.f32 0.0, %v1605
      %v1607 = vpop.f32.mrb[0].mxu0
      %1608 = vmatprep.mubr.bf16.mxu0 0
      %1609 = vmatmul.mubr.bf16.gmra.mrb[0].mxu0 %v1501
      %v1610 = vpop.f32.mrb[0].mxu0
      %v1611 = vadd.f32 0.0, %v1610
      %v1612 = vpop.f32.mrb[0].mxu0
      %v1613 = vpop.f32.mrb[0].mxu0
      %v1614 = vadd.f32 0.0, %v1613
      %v1615 = vpop.f32.mrb[0].mxu0
      %1616 = vmatprep.mubr.bf16.mxu0 0
      %1617 = vmatmul.mubr.bf16.gmra.mrb[0].mxu0 %v1504
      %v1618 = vpop.f32.mrb[0].mxu0
      %v1619 = vadd.f32 0.0, %v1618
      %v1620 = vpop.f32.mrb[0].mxu0
      %v1621 = vpop.f32.mrb[0].mxu0
      %v1622 = vadd.f32 0.0, %v1621
      %v1623 = vpop.f32.mrb[0].mxu0
      %1624 = vmatprep.mubr.bf16.mxu0 0
      %1625 = vmatmul.mubr.bf16.gmra.mrb[0].mxu0 %v1507
      %v1626 = vpop.f32.mrb[0].mxu0
      %v1627 = vadd.f32 0.0, %v1626
      %v1628 = vpop.f32.mrb[0].mxu0
      %v1629 = vpop.f32.mrb[0].mxu0
      %v1630 = vadd.f32 0.0, %v1629
      %v1631 = vpop.f32.mrb[0].mxu0
      %1632 = vmatprep.mubr.bf16.mxu0 0
      %1633 = vmatmul.mubr.bf16.gmra.mrb[0].mxu0 %v1510
      %v1634 = vpop.f32.mrb[0].mxu0
      %v1635 = vadd.f32 0.0, %v1634
      %v1636 = vpop.f32.mrb[0].mxu0
      %v1637 = vpop.f32.mrb[0].mxu0
      %v1638 = vadd.f32 0.0, %v1637
      %v1639 = vpop.f32.mrb[0].mxu0
      %1640 = vmatprep.mubr.bf16.mxu0 0
      %1641 = vmatmul.mubr.bf16.gmra.mrb[0].mxu0 %v1513
      %v1642 = vpop.f32.mrb[0].mxu0
      %v1643 = vadd.f32 0.0, %v1642
      %v1644 = vpop.f32.mrb[0].mxu0
      %v1645 = vpop.f32.mrb[0].mxu0
      %v1646 = vadd.f32 0.0, %v1645
      %v1647 = vpop.f32.mrb[0].mxu0
      %1648 = vmatprep.mubr.bf16.mxu0 0
      %1649 = vmatmul.mubr.bf16.gmra.mrb[0].mxu0 %v1516
      %v1650 = vpop.f32.mrb[0].mxu0
      %v1651 = vadd.f32 0.0, %v1650
      %v1652 = vpop.f32.mrb[0].mxu0
      %v1653 = vpop.f32.mrb[0].mxu0
      %v1654 = vadd.f32 0.0, %v1653
      %v1655 = vpop.f32.mrb[0].mxu0
      %1656 = vmatprep.mubr.bf16.mxu0 0
      %1657 = vmatmul.mubr.bf16.gmra.mrb[0].mxu0 %v1519
      %v1658 = vpop.f32.mrb[0].mxu0
      %v1659 = vadd.f32 0.0, %v1658
      %v1660 = vpop.f32.mrb[0].mxu0
      %v1661 = vpop.f32.mrb[0].mxu0
      %v1662 = vadd.f32 0.0, %v1661
      %v1663 = vpop.f32.mrb[0].mxu0
      %1664 = vmatprep.mubr.bf16.mxu0 0
      %1665 = vmatmul.mubr.bf16.gmra.mrb[0].mxu0 %v1522
      %v1666 = vpop.f32.mrb[0].mxu0
      %v1667 = vadd.f32 0.0, %v1666
      %v1668 = vpop.f32.mrb[0].mxu0
      %v1669 = vpop.f32.mrb[0].mxu0
      %v1670 = vadd.f32 0.0, %v1669
      %v1671 = vpop.f32.mrb[0].mxu0
      %1672 = vmatprep.mubr.bf16.mxu0 0
      %1673 = vmatmul.mubr.bf16.gmra.mrb[0].mxu0 %v1525
      %v1674 = vpop.f32.mrb[0].mxu0
      %v1675 = vadd.f32 0.0, %v1674
      %v1676 = vpop.f32.mrb[0].mxu0
      %v1677 = vpop.f32.mrb[0].mxu0
      %v1678 = vadd.f32 0.0, %v1677
      %v1679 = vpop.f32.mrb[0].mxu0
      %1680 = vmatprep.mubr.bf16.mxu0 0
      %1681 = vmatmul.mubr.bf16.gmra.mrb[0].mxu0 %v1528
      %v1682 = vpop.f32.mrb[0].mxu0
      %v1683 = vadd.f32 0.0, %v1682
      %v1684 = vpop.f32.mrb[0].mxu0
      %v1685 = vpop.f32.mrb[0].mxu0
      %v1686 = vadd.f32 0.0, %v1685
      %v1687 = vpop.f32.mrb[0].mxu0
      %1688 = vmatprep.mubr.bf16.mxu0 0
      %1689 = vmatmul.mubr.bf16.gmra.mrb[0].mxu0 %v1531
      %v1690 = vpop.f32.mrb[0].mxu0
      %v1691 = vadd.f32 0.0, %v1690
      %v1692 = vpop.f32.mrb[0].mxu0
      %v1693 = vpop.f32.mrb[0].mxu0
      %v1694 = vadd.f32 0.0, %v1693
      %v1695 = vpop.f32.mrb[0].mxu0
      %1696 = vdwg.mxu0
      %v1697 = vadd.f32 %v1334, %v1571
      %v1698 = vadd.f32 %v1337, %v1574
      %v1699 = vadd.f32 %v1342, %v1579
      %v1700 = vadd.f32 %v1345, %v1582
      %v1701 = vadd.f32 %v1350, %v1587
      %v1702 = vadd.f32 %v1353, %v1590
      %v1703 = vadd.f32 %v1358, %v1595
      %v1704 = vadd.f32 %v1361, %v1598
      %v1705 = vadd.f32 %v1366, %v1603
      %v1706 = vadd.f32 %v1369, %v1606
      %v1707 = vadd.f32 %v1374, %v1611
      %v1708 = vadd.f32 %v1377, %v1614
      %v1709 = vadd.f32 %v1382, %v1619
      %v1710 = vadd.f32 %v1385, %v1622
      %v1711 = vadd.f32 %v1390, %v1627
      %v1712 = vadd.f32 %v1393, %v1630
      %v1713 = vadd.f32 %v1398, %v1635
      %v1714 = vadd.f32 %v1401, %v1638
      %v1715 = vadd.f32 %v1406, %v1643
      %v1716 = vadd.f32 %v1409, %v1646
      %v1717 = vadd.f32 %v1414, %v1651
      %v1718 = vadd.f32 %v1417, %v1654
      %v1719 = vadd.f32 %v1422, %v1659
      %v1720 = vadd.f32 %v1425, %v1662
      %v1721 = vadd.f32 %v1430, %v1667
      %v1722 = vadd.f32 %v1433, %v1670
      %v1723 = vadd.f32 %v1438, %v1675
      %v1724 = vadd.f32 %v1441, %v1678
      %v1725 = vadd.f32 %v1446, %v1683
      %v1726 = vadd.f32 %v1449, %v1686
      %v1727 = vadd.f32 %v1454, %v1691
      %v1728 = vadd.f32 %v1457, %v1694
      %v1729 = vld [vmem:[%s2] sm:$0x1]
      %v1731 = vlaneseq
      %v1732 = vshrl.u32 %v1731, 7
      %v1733 = vsub.s32 0, %v1732
      %v1734 = vrot.slane %v1729, %v1733
      %v1736 = vadd.f32 %v1697, %v1734
      %v1737 = vadd.f32 %v1698, %v1734
      %v1738 = vadd.f32 %v1699, %v1734
      %v1739 = vadd.f32 %v1700, %v1734
      %v1740 = vadd.f32 %v1701, %v1734
      %v1741 = vadd.f32 %v1702, %v1734
      %v1742 = vadd.f32 %v1703, %v1734
      %v1743 = vadd.f32 %v1704, %v1734
      %v1744 = vadd.f32 %v1705, %v1734
      %v1745 = vadd.f32 %v1706, %v1734
      %v1746 = vadd.f32 %v1707, %v1734
      %v1747 = vadd.f32 %v1708, %v1734
      %v1748 = vadd.f32 %v1709, %v1734
      %v1749 = vadd.f32 %v1710, %v1734
      %v1750 = vadd.f32 %v1711, %v1734
      %v1751 = vadd.f32 %v1712, %v1734
      %v1752 = vadd.f32 %v1713, %v1734
      %v1753 = vadd.f32 %v1714, %v1734
      %v1754 = vadd.f32 %v1715, %v1734
      %v1755 = vadd.f32 %v1716, %v1734
      %v1756 = vadd.f32 %v1717, %v1734
      %v1757 = vadd.f32 %v1718, %v1734
      %v1758 = vadd.f32 %v1719, %v1734
      %v1759 = vadd.f32 %v1720, %v1734
      %v1760 = vadd.f32 %v1721, %v1734
      %v1761 = vadd.f32 %v1722, %v1734
      %v1762 = vadd.f32 %v1723, %v1734
      %v1763 = vadd.f32 %v1724, %v1734
      %v1764 = vadd.f32 %v1725, %v1734
      %v1765 = vadd.f32 %v1726, %v1734
      %v1766 = vadd.f32 %v1727, %v1734
      %v1767 = vadd.f32 %v1728, %v1734
      %v1768 = vmax.f32 %v1736, 0.0
      %v1769 = vmax.f32 %v1737, 0.0
      %v1770 = vmax.f32 %v1738, 0.0
      %v1771 = vmax.f32 %v1739, 0.0
      %v1772 = vmax.f32 %v1740, 0.0
      %v1773 = vmax.f32 %v1741, 0.0
      %v1774 = vmax.f32 %v1742, 0.0
      %v1775 = vmax.f32 %v1743, 0.0
      %v1776 = vmax.f32 %v1744, 0.0
      %v1777 = vmax.f32 %v1745, 0.0
      %v1778 = vmax.f32 %v1746, 0.0
      %v1779 = vmax.f32 %v1747, 0.0
      %v1780 = vmax.f32 %v1748, 0.0
      %v1781 = vmax.f32 %v1749, 0.0
      %v1782 = vmax.f32 %v1750, 0.0
      %v1783 = vmax.f32 %v1751, 0.0
      %v1784 = vmax.f32 %v1752, 0.0
      %v1785 = vmax.f32 %v1753, 0.0
      %v1786 = vmax.f32 %v1754, 0.0
      %v1787 = vmax.f32 %v1755, 0.0
      %v1788 = vmax.f32 %v1756, 0.0
      %v1789 = vmax.f32 %v1757, 0.0
      %v1790 = vmax.f32 %v1758, 0.0
      %v1791 = vmax.f32 %v1759, 0.0
      %v1792 = vmax.f32 %v1760, 0.0
      %v1793 = vmax.f32 %v1761, 0.0
      %v1794 = vmax.f32 %v1762, 0.0
      %v1795 = vmax.f32 %v1763, 0.0
      %v1796 = vmax.f32 %v1764, 0.0
      %v1797 = vmax.f32 %v1765, 0.0
      %v1798 = vmax.f32 %v1766, 0.0
      %v1799 = vmax.f32 %v1767, 0.0
      %v1800 = vadd.f32 %v1768, %v1769
      %v1801 = vadd.f32 %v1800, %v1770
      %v1802 = vadd.f32 %v1801, %v1771
      %v1803 = vadd.f32 %v1802, %v1772
      %v1804 = vadd.f32 %v1803, %v1773
      %v1805 = vadd.f32 %v1804, %v1774
      %v1806 = vadd.f32 %v1805, %v1775
      %v1807 = vadd.f32 %v1806, %v1776
      %v1808 = vadd.f32 %v1807, %v1777
      %v1809 = vadd.f32 %v1808, %v1778
      %v1810 = vadd.f32 %v1809, %v1779
      %v1811 = vadd.f32 %v1810, %v1780
      %v1812 = vadd.f32 %v1811, %v1781
      %v1813 = vadd.f32 %v1812, %v1782
      %v1814 = vadd.f32 %v1813, %v1783
      %v1815 = vadd.f32 %v1814, %v1784
      %v1816 = vadd.f32 %v1815, %v1785
      %v1817 = vadd.f32 %v1816, %v1786
      %v1818 = vadd.f32 %v1817, %v1787
      %v1819 = vadd.f32 %v1818, %v1788
      %v1820 = vadd.f32 %v1819, %v1789
      %v1821 = vadd.f32 %v1820, %v1790
      %v1822 = vadd.f32 %v1821, %v1791
      %v1823 = vadd.f32 %v1822, %v1792
      %v1824 = vadd.f32 %v1823, %v1793
      %v1825 = vadd.f32 %v1824, %v1794
      %v1826 = vadd.f32 %v1825, %v1795
      %v1827 = vadd.f32 %v1826, %v1796
      %v1828 = vadd.f32 %v1827, %v1797
      %v1829 = vadd.f32 %v1828, %v1798
      %v1830 = vadd.f32 %v1829, %v1799
      %v1831 = vrot.slane %v1830, 4
      %v1832 = vadd.f32 %v1830, %v1831
      %v1833 = vrot.slane %v1832, 2
      %v1834 = vadd.f32 %v1832, %v1833
      %v1835 = vrot.slane %v1834, 1
      %v1836 = vadd.f32 %v1834, %v1835
      %v1837 = vmul.f32 %v1836, 0.00390625
      %v1838 = vmul.f32 %v1768, %v1768
      %v1839 = vmul.f32 %v1769, %v1769
      %v1840 = vmul.f32 %v1770, %v1770
      %v1841 = vmul.f32 %v1771, %v1771
      %v1842 = vmul.f32 %v1772, %v1772
      %v1843 = vmul.f32 %v1773, %v1773
      %v1844 = vmul.f32 %v1774, %v1774
      %v1845 = vmul.f32 %v1775, %v1775
      %v1846 = vmul.f32 %v1776, %v1776
      %v1847 = vmul.f32 %v1777, %v1777
      %v1848 = vmul.f32 %v1778, %v1778
      %v1849 = vmul.f32 %v1779, %v1779
      %v1850 = vmul.f32 %v1780, %v1780
      %v1851 = vmul.f32 %v1781, %v1781
      %v1852 = vmul.f32 %v1782, %v1782
      %v1853 = vmul.f32 %v1783, %v1783
      %v1854 = vmul.f32 %v1784, %v1784
      %v1855 = vmul.f32 %v1785, %v1785
      %v1856 = vmul.f32 %v1786, %v1786
      %v1857 = vmul.f32 %v1787, %v1787
      %v1858 = vmul.f32 %v1788, %v1788
      %v1859 = vmul.f32 %v1789, %v1789
      %v1860 = vmul.f32 %v1790, %v1790
      %v1861 = vmul.f32 %v1791, %v1791
      %v1862 = vmul.f32 %v1792, %v1792
      %v1863 = vmul.f32 %v1793, %v1793
      %v1864 = vmul.f32 %v1794, %v1794
      %v1865 = vmul.f32 %v1795, %v1795
      %v1866 = vmul.f32 %v1796, %v1796
      %v1867 = vmul.f32 %v1797, %v1797
      %v1868 = vmul.f32 %v1798, %v1798
      %v1869 = vmul.f32 %v1799, %v1799
      %v1870 = vadd.f32 %v1838, %v1839
      %v1871 = vadd.f32 %v1870, %v1840
      %v1872 = vadd.f32 %v1871, %v1841
      %v1873 = vadd.f32 %v1872, %v1842
      %v1874 = vadd.f32 %v1873, %v1843
      %v1875 = vadd.f32 %v1874, %v1844
      %v1876 = vadd.f32 %v1875, %v1845
      %v1877 = vadd.f32 %v1876, %v1846
      %v1878 = vadd.f32 %v1877, %v1847
      %v1879 = vadd.f32 %v1878, %v1848
      %v1880 = vadd.f32 %v1879, %v1849
      %v1881 = vadd.f32 %v1880, %v1850
      %v1882 = vadd.f32 %v1881, %v1851
      %v1883 = vadd.f32 %v1882, %v1852
      %v1884 = vadd.f32 %v1883, %v1853
      %v1885 = vadd.f32 %v1884, %v1854
      %v1886 = vadd.f32 %v1885, %v1855
      %v1887 = vadd.f32 %v1886, %v1856
      %v1888 = vadd.f32 %v1887, %v1857
      %v1889 = vadd.f32 %v1888, %v1858
      %v1890 = vadd.f32 %v1889, %v1859
      %v1891 = vadd.f32 %v1890, %v1860
      %v1892 = vadd.f32 %v1891, %v1861
      %v1893 = vadd.f32 %v1892, %v1862
      %v1894 = vadd.f32 %v1893, %v1863
      %v1895 = vadd.f32 %v1894, %v1864
      %v1896 = vadd.f32 %v1895, %v1865
      %v1897 = vadd.f32 %v1896, %v1866
      %v1898 = vadd.f32 %v1897, %v1867
      %v1899 = vadd.f32 %v1898, %v1868
      %v1900 = vadd.f32 %v1899, %v1869
      %v1901 = vrot.slane %v1900, 4
      %v1902 = vadd.f32 %v1900, %v1901
      %v1903 = vrot.slane %v1902, 2
      %v1904 = vadd.f32 %v1902, %v1903
      %v1905 = vrot.slane %v1904, 1
      %v1906 = vadd.f32 %v1904, %v1905
      %v1907 = vmul.f32 %v1906, 0.00390625
      %v1908 = vmul.f32 %v1837, %v1837
      %v1909 = vsub.f32 %v1907, %v1908
      %v1910 = vmax.f32 %v1909, 0.0
      %v1911 = vsub.f32 %v1768, %v1837
      %v1912 = vsub.f32 %v1769, %v1837
      %v1913 = vsub.f32 %v1770, %v1837
      %v1914 = vsub.f32 %v1771, %v1837
      %v1915 = vsub.f32 %v1772, %v1837
      %v1916 = vsub.f32 %v1773, %v1837
      %v1917 = vsub.f32 %v1774, %v1837
      %v1918 = vsub.f32 %v1775, %v1837
      %v1919 = vsub.f32 %v1776, %v1837
      %v1920 = vsub.f32 %v1777, %v1837
      %v1921 = vsub.f32 %v1778, %v1837
      %v1922 = vsub.f32 %v1779, %v1837
      %v1923 = vsub.f32 %v1780, %v1837
      %v1924 = vsub.f32 %v1781, %v1837
      %v1925 = vsub.f32 %v1782, %v1837
      %v1926 = vsub.f32 %v1783, %v1837
      %v1927 = vsub.f32 %v1784, %v1837
      %v1928 = vsub.f32 %v1785, %v1837
      %v1929 = vsub.f32 %v1786, %v1837
      %v1930 = vsub.f32 %v1787, %v1837
      %v1931 = vsub.f32 %v1788, %v1837
      %v1932 = vsub.f32 %v1789, %v1837
      %v1933 = vsub.f32 %v1790, %v1837
      %v1934 = vsub.f32 %v1791, %v1837
      %v1935 = vsub.f32 %v1792, %v1837
      %v1936 = vsub.f32 %v1793, %v1837
      %v1937 = vsub.f32 %v1794, %v1837
      %v1938 = vsub.f32 %v1795, %v1837
      %v1939 = vsub.f32 %v1796, %v1837
      %v1940 = vsub.f32 %v1797, %v1837
      %v1941 = vsub.f32 %v1798, %v1837
      %v1942 = vsub.f32 %v1799, %v1837
      %v1943 = vadd.f32 %v1910, 1e-05
      %v1944 = vrsqrt.pop %v1943
      %v1945 = vmul.f32 %v1911, %v1944
      %v1946 = vmul.f32 %v1912, %v1944
      %v1947 = vmul.f32 %v1913, %v1944
      %v1948 = vmul.f32 %v1914, %v1944
      %v1949 = vmul.f32 %v1915, %v1944
      %v1950 = vmul.f32 %v1916, %v1944
      %v1951 = vmul.f32 %v1917, %v1944
      %v1952 = vmul.f32 %v1918, %v1944
      %v1953 = vmul.f32 %v1919, %v1944
      %v1954 = vmul.f32 %v1920, %v1944
      %v1955 = vmul.f32 %v1921, %v1944
      %v1956 = vmul.f32 %v1922, %v1944
      %v1957 = vmul.f32 %v1923, %v1944
      %v1958 = vmul.f32 %v1924, %v1944
      %v1959 = vmul.f32 %v1925, %v1944
      %v1960 = vmul.f32 %v1926, %v1944
      %v1961 = vmul.f32 %v1927, %v1944
      %v1962 = vmul.f32 %v1928, %v1944
      %v1963 = vmul.f32 %v1929, %v1944
      %v1964 = vmul.f32 %v1930, %v1944
      %v1965 = vmul.f32 %v1931, %v1944
      %v1966 = vmul.f32 %v1932, %v1944
      %v1967 = vmul.f32 %v1933, %v1944
      %v1968 = vmul.f32 %v1934, %v1944
      %v1969 = vmul.f32 %v1935, %v1944
      %v1970 = vmul.f32 %v1936, %v1944
      %v1971 = vmul.f32 %v1937, %v1944
      %v1972 = vmul.f32 %v1938, %v1944
      %v1973 = vmul.f32 %v1939, %v1944
      %v1974 = vmul.f32 %v1940, %v1944
      %v1975 = vmul.f32 %v1941, %v1944
      %v1976 = vmul.f32 %v1942, %v1944
      %v1977 = vpack.c.bf16 %v1946, %v1945
      %v1978 = vpack.c.bf16 %v1948, %v1947
      %v1979 = vpack.c.bf16 %v1950, %v1949
      %v1980 = vpack.c.bf16 %v1952, %v1951
      %v1981 = vpack.c.bf16 %v1954, %v1953
      %v1982 = vpack.c.bf16 %v1956, %v1955
      %v1983 = vpack.c.bf16 %v1958, %v1957
      %v1984 = vpack.c.bf16 %v1960, %v1959
      %v1985 = vpack.c.bf16 %v1962, %v1961
      %v1986 = vpack.c.bf16 %v1964, %v1963
      %v1987 = vpack.c.bf16 %v1966, %v1965
      %v1988 = vpack.c.bf16 %v1968, %v1967
      %v1989 = vpack.c.bf16 %v1970, %v1969
      %v1990 = vpack.c.bf16 %v1972, %v1971
      %v1991 = vpack.c.bf16 %v1974, %v1973
      %v1992 = vpack.c.bf16 %v1976, %v1975
      %v1994 = vshrl.u32 %v1977, 16
      %v1996 = vrot.slane %v1994, 7
      %v1997 = vshll.u32 %v1977, 16
      %v1999 = vor.u32 %v1996, %v1997
      %v2001 = vshrl.u32 %v1978, 16
      %v2003 = vrot.slane %v2001, 7
      %v2004 = vshll.u32 %v1978, 16
      %v2006 = vor.u32 %v2003, %v2004
      %v2008 = vshrl.u32 %v1979, 16
      %v2010 = vrot.slane %v2008, 7
      %v2011 = vshll.u32 %v1979, 16
      %v2013 = vor.u32 %v2010, %v2011
      %v2015 = vshrl.u32 %v1980, 16
      %v2017 = vrot.slane %v2015, 7
      %v2018 = vshll.u32 %v1980, 16
      %v2020 = vor.u32 %v2017, %v2018
      %v2022 = vshrl.u32 %v1981, 16
      %v2024 = vrot.slane %v2022, 7
      %v2025 = vshll.u32 %v1981, 16
      %v2027 = vor.u32 %v2024, %v2025
      %v2029 = vshrl.u32 %v1982, 16
      %v2031 = vrot.slane %v2029, 7
      %v2032 = vshll.u32 %v1982, 16
      %v2034 = vor.u32 %v2031, %v2032
      %v2036 = vshrl.u32 %v1983, 16
      %v2038 = vrot.slane %v2036, 7
      %v2039 = vshll.u32 %v1983, 16
      %v2041 = vor.u32 %v2038, %v2039
      %v2043 = vshrl.u32 %v1984, 16
      %v2045 = vrot.slane %v2043, 7
      %v2046 = vshll.u32 %v1984, 16
      %v2048 = vor.u32 %v2045, %v2046
      %v2050 = vshrl.u32 %v1985, 16
      %v2052 = vrot.slane %v2050, 7
      %v2053 = vshll.u32 %v1985, 16
      %v2055 = vor.u32 %v2052, %v2053
      %v2057 = vshrl.u32 %v1986, 16
      %v2059 = vrot.slane %v2057, 7
      %v2060 = vshll.u32 %v1986, 16
      %v2062 = vor.u32 %v2059, %v2060
      %v2064 = vshrl.u32 %v1987, 16
      %v2066 = vrot.slane %v2064, 7
      %v2067 = vshll.u32 %v1987, 16
      %v2069 = vor.u32 %v2066, %v2067
      %v2071 = vshrl.u32 %v1988, 16
      %v2073 = vrot.slane %v2071, 7
      %v2074 = vshll.u32 %v1988, 16
      %v2076 = vor.u32 %v2073, %v2074
      %v2078 = vshrl.u32 %v1989, 16
      %v2080 = vrot.slane %v2078, 7
      %v2081 = vshll.u32 %v1989, 16
      %v2083 = vor.u32 %v2080, %v2081
      %v2085 = vshrl.u32 %v1990, 16
      %v2087 = vrot.slane %v2085, 7
      %v2088 = vshll.u32 %v1990, 16
      %v2090 = vor.u32 %v2087, %v2088
      %v2092 = vshrl.u32 %v1991, 16
      %v2094 = vrot.slane %v2092, 7
      %v2095 = vshll.u32 %v1991, 16
      %v2097 = vor.u32 %v2094, %v2095
      %v2099 = vshrl.u32 %v1992, 16
      %v2101 = vrot.slane %v2099, 7
      %v2102 = vshll.u32 %v1992, 16
      %v2104 = vor.u32 %v2101, %v2102
      %vm2121 = vcmask 1047552
      %vm2122 = vmand %vm2121, %vm726
      %v2123 = vld [vmem:[%s448] sm:$0xff]
      %v2124 = vsel %vm2122, %v1999, %v2123
      %2125 = vst [vmem:[%s448] sm:$0xff] %v2124
      %v2126 = vld [vmem:[%s448 + $0x18] sm:$0xff]
      %v2127 = vsel %vm2122, %v2006, %v2126
      %2128 = vst [vmem:[%s448 + $0x18] sm:$0xff] %v2127
      %v2129 = vld [vmem:[%s448 + $0x30] sm:$0xff]
      %v2130 = vsel %vm2122, %v2013, %v2129
      %2131 = vst [vmem:[%s448 + $0x30] sm:$0xff] %v2130
      %v2132 = vld [vmem:[%s448 + $0x48] sm:$0xff]
      %v2133 = vsel %vm2122, %v2020, %v2132
      %2134 = vst [vmem:[%s448 + $0x48] sm:$0xff] %v2133
      %v2135 = vld [vmem:[%s448 + $0x60] sm:$0xff]
      %v2136 = vsel %vm2122, %v2027, %v2135
      %2137 = vst [vmem:[%s448 + $0x60] sm:$0xff] %v2136
      %v2138 = vld [vmem:[%s448 + $0x78] sm:$0xff]
      %v2139 = vsel %vm2122, %v2034, %v2138
      %2140 = vst [vmem:[%s448 + $0x78] sm:$0xff] %v2139
      %v2141 = vld [vmem:[%s448 + $0x90] sm:$0xff]
      %v2142 = vsel %vm2122, %v2041, %v2141
      %2143 = vst [vmem:[%s448 + $0x90] sm:$0xff] %v2142
      %v2144 = vld [vmem:[%s448 + $0xa8] sm:$0xff]
      %v2145 = vsel %vm2122, %v2048, %v2144
      %2146 = vst [vmem:[%s448 + $0xa8] sm:$0xff] %v2145
      %v2147 = vld [vmem:[%s448 + $0xc0] sm:$0xff]
      %v2148 = vsel %vm2122, %v2055, %v2147
      %2149 = vst [vmem:[%s448 + $0xc0] sm:$0xff] %v2148
      %v2150 = vld [vmem:[%s448 + $0xd8] sm:$0xff]
      %v2151 = vsel %vm2122, %v2062, %v2150
      %2152 = vst [vmem:[%s448 + $0xd8] sm:$0xff] %v2151
      %v2153 = vld [vmem:[%s448 + $0xf0] sm:$0xff]
      %v2154 = vsel %vm2122, %v2069, %v2153
      %2155 = vst [vmem:[%s448 + $0xf0] sm:$0xff] %v2154
      %v2156 = vld [vmem:[%s448 + $0x108] sm:$0xff]
      %v2157 = vsel %vm2122, %v2076, %v2156
      %2158 = vst [vmem:[%s448 + $0x108] sm:$0xff] %v2157
      %v2159 = vld [vmem:[%s448 + $0x120] sm:$0xff]
      %v2160 = vsel %vm2122, %v2083, %v2159
      %2161 = vst [vmem:[%s448 + $0x120] sm:$0xff] %v2160
      %v2162 = vld [vmem:[%s448 + $0x138] sm:$0xff]
      %v2163 = vsel %vm2122, %v2090, %v2162
      %2164 = vst [vmem:[%s448 + $0x138] sm:$0xff] %v2163
      %v2165 = vld [vmem:[%s448 + $0x150] sm:$0xff]
      %v2166 = vsel %vm2122, %v2097, %v2165
      %2167 = vst [vmem:[%s448 + $0x150] sm:$0xff] %v2166
      %v2168 = vld [vmem:[%s448 + $0x168] sm:$0xff]
      %v2169 = vsel %vm2122, %v2104, %v2168
      %2170 = vst [vmem:[%s448 + $0x168] sm:$0xff] %v2169
      %2171 = vst [vmem:[%s448 + $0x8] sm:$0xff] %v1977
      %2172 = vst [vmem:[%s448 + $0x20] sm:$0xff] %v1978
      %2173 = vst [vmem:[%s448 + $0x38] sm:$0xff] %v1979
      %2174 = vst [vmem:[%s448 + $0x50] sm:$0xff] %v1980
      %2175 = vst [vmem:[%s448 + $0x68] sm:$0xff] %v1981
      %2176 = vst [vmem:[%s448 + $0x80] sm:$0xff] %v1982
      %2177 = vst [vmem:[%s448 + $0x98] sm:$0xff] %v1983
      %2178 = vst [vmem:[%s448 + $0xb0] sm:$0xff] %v1984
      %2179 = vst [vmem:[%s448 + $0xc8] sm:$0xff] %v1985
      %2180 = vst [vmem:[%s448 + $0xe0] sm:$0xff] %v1986
      %2181 = vst [vmem:[%s448 + $0xf8] sm:$0xff] %v1987
      %2182 = vst [vmem:[%s448 + $0x110] sm:$0xff] %v1988
      %2183 = vst [vmem:[%s448 + $0x128] sm:$0xff] %v1989
      %2184 = vst [vmem:[%s448 + $0x140] sm:$0xff] %v1990
      %2185 = vst [vmem:[%s448 + $0x158] sm:$0xff] %v1991
      %2186 = vst [vmem:[%s448 + $0x170] sm:$0xff] %v1992
      %v2187 = vrot.slane %v1997, 1
      %v2188 = vor.u32 %v1994, %v2187
      %v2189 = vrot.slane %v2004, 1
      %v2190 = vor.u32 %v2001, %v2189
      %v2191 = vrot.slane %v2011, 1
      %v2192 = vor.u32 %v2008, %v2191
      %v2193 = vrot.slane %v2018, 1
      %v2194 = vor.u32 %v2015, %v2193
      %v2195 = vrot.slane %v2025, 1
      %v2196 = vor.u32 %v2022, %v2195
      %v2197 = vrot.slane %v2032, 1
      %v2198 = vor.u32 %v2029, %v2197
      %v2199 = vrot.slane %v2039, 1
      %v2200 = vor.u32 %v2036, %v2199
      %v2201 = vrot.slane %v2046, 1
      %v2202 = vor.u32 %v2043, %v2201
      %v2203 = vrot.slane %v2053, 1
      %v2204 = vor.u32 %v2050, %v2203
      %v2205 = vrot.slane %v2060, 1
      %v2206 = vor.u32 %v2057, %v2205
      %v2207 = vrot.slane %v2067, 1
      %v2208 = vor.u32 %v2064, %v2207
      %v2209 = vrot.slane %v2074, 1
      %v2210 = vor.u32 %v2071, %v2209
      %v2211 = vrot.slane %v2081, 1
      %v2212 = vor.u32 %v2078, %v2211
      %v2213 = vrot.slane %v2088, 1
      %v2214 = vor.u32 %v2085, %v2213
      %v2215 = vrot.slane %v2095, 1
      %v2216 = vor.u32 %v2092, %v2215
      %v2217 = vrot.slane %v2102, 1
      %v2218 = vor.u32 %v2099, %v2217
      %vm2235 = vmand %vm2121, %vm938
      %v2236 = vld [vmem:[%s448 + $0x10] sm:$0xff]
      %v2237 = vsel %vm2235, %v2188, %v2236
      %2238 = vst [vmem:[%s448 + $0x10] sm:$0xff] %v2237
      %v2239 = vld [vmem:[%s448 + $0x28] sm:$0xff]
      %v2240 = vsel %vm2235, %v2190, %v2239
      %2241 = vst [vmem:[%s448 + $0x28] sm:$0xff] %v2240
      %v2242 = vld [vmem:[%s448 + $0x40] sm:$0xff]
      %v2243 = vsel %vm2235, %v2192, %v2242
      %2244 = vst [vmem:[%s448 + $0x40] sm:$0xff] %v2243
      %v2245 = vld [vmem:[%s448 + $0x58] sm:$0xff]
      %v2246 = vsel %vm2235, %v2194, %v2245
      %2247 = vst [vmem:[%s448 + $0x58] sm:$0xff] %v2246
      %v2248 = vld [vmem:[%s448 + $0x70] sm:$0xff]
      %v2249 = vsel %vm2235, %v2196, %v2248
      %2250 = vst [vmem:[%s448 + $0x70] sm:$0xff] %v2249
      %v2251 = vld [vmem:[%s448 + $0x88] sm:$0xff]
      %v2252 = vsel %vm2235, %v2198, %v2251
      %2253 = vst [vmem:[%s448 + $0x88] sm:$0xff] %v2252
      %v2254 = vld [vmem:[%s448 + $0xa0] sm:$0xff]
      %v2255 = vsel %vm2235, %v2200, %v2254
      %2256 = vst [vmem:[%s448 + $0xa0] sm:$0xff] %v2255
      %v2257 = vld [vmem:[%s448 + $0xb8] sm:$0xff]
      %v2258 = vsel %vm2235, %v2202, %v2257
      %2259 = vst [vmem:[%s448 + $0xb8] sm:$0xff] %v2258
      %v2260 = vld [vmem:[%s448 + $0xd0] sm:$0xff]
      %v2261 = vsel %vm2235, %v2204, %v2260
      %2262 = vst [vmem:[%s448 + $0xd0] sm:$0xff] %v2261
      %v2263 = vld [vmem:[%s448 + $0xe8] sm:$0xff]
      %v2264 = vsel %vm2235, %v2206, %v2263
      %2265 = vst [vmem:[%s448 + $0xe8] sm:$0xff] %v2264
      %v2266 = vld [vmem:[%s448 + $0x100] sm:$0xff]
      %v2267 = vsel %vm2235, %v2208, %v2266
      %2268 = vst [vmem:[%s448 + $0x100] sm:$0xff] %v2267
      %v2269 = vld [vmem:[%s448 + $0x118] sm:$0xff]
      %v2270 = vsel %vm2235, %v2210, %v2269
      %2271 = vst [vmem:[%s448 + $0x118] sm:$0xff] %v2270
      %v2272 = vld [vmem:[%s448 + $0x130] sm:$0xff]
      %v2273 = vsel %vm2235, %v2212, %v2272
      %2274 = vst [vmem:[%s448 + $0x130] sm:$0xff] %v2273
      %v2275 = vld [vmem:[%s448 + $0x148] sm:$0xff]
      %v2276 = vsel %vm2235, %v2214, %v2275
      %2277 = vst [vmem:[%s448 + $0x148] sm:$0xff] %v2276
      %v2278 = vld [vmem:[%s448 + $0x160] sm:$0xff]
      %v2279 = vsel %vm2235, %v2216, %v2278
      %2280 = vst [vmem:[%s448 + $0x160] sm:$0xff] %v2279
      %v2281 = vld [vmem:[%s448 + $0x178] sm:$0xff]
      %v2282 = vsel %vm2235, %v2218, %v2281
      %2283 = vst [vmem:[%s448 + $0x178] sm:$0xff] %v2282
      %v2284 = vld [vmem:[#allocation3] sm:$0xff]
      %v2285 = vld [vmem:[#allocation3 + $0x8] sm:$0xff]
      %v2286 = vld [vmem:[#allocation3 + $0x10] sm:$0xff]
      %v2287 = vld [vmem:[#allocation3 + $0x18] sm:$0xff]
      %v2288 = vld [vmem:[#allocation3 + $0x20] sm:$0xff]
      %v2289 = vld [vmem:[#allocation3 + $0x28] sm:$0xff]
      %v2290 = vld [vmem:[#allocation3 + $0x30] sm:$0xff]
      %v2291 = vld [vmem:[#allocation3 + $0x38] sm:$0xff]
      %v2292 = vld [vmem:[#allocation3 + $0x40] sm:$0xff]
      %v2293 = vld [vmem:[#allocation3 + $0x48] sm:$0xff]
      %v2294 = vld [vmem:[#allocation3 + $0x50] sm:$0xff]
      %v2295 = vld [vmem:[#allocation3 + $0x58] sm:$0xff]
      %v2296 = vld [vmem:[#allocation3 + $0x60] sm:$0xff]
      %v2297 = vld [vmem:[#allocation3 + $0x68] sm:$0xff]
      %v2298 = vld [vmem:[#allocation3 + $0x70] sm:$0xff]
      %v2299 = vld [vmem:[#allocation3 + $0x78] sm:$0xff]
      %v2300 = vld [vmem:[#allocation3 + $0x80] sm:$0xff]
      %v2301 = vld [vmem:[#allocation3 + $0x88] sm:$0xff]
      %v2302 = vld [vmem:[#allocation3 + $0x90] sm:$0xff]
      %v2303 = vld [vmem:[#allocation3 + $0x98] sm:$0xff]
      %v2304 = vld [vmem:[#allocation3 + $0xa0] sm:$0xff]
      %v2305 = vld [vmem:[#allocation3 + $0xa8] sm:$0xff]
      %v2306 = vld [vmem:[#allocation3 + $0xb0] sm:$0xff]
      %v2307 = vld [vmem:[#allocation3 + $0xb8] sm:$0xff]
      %v2308 = vld [vmem:[#allocation3 + $0xc0] sm:$0xff]
      %v2309 = vld [vmem:[#allocation3 + $0xc8] sm:$0xff]
      %v2310 = vld [vmem:[#allocation3 + $0xd0] sm:$0xff]
      %v2311 = vld [vmem:[#allocation3 + $0xd8] sm:$0xff]
      %v2312 = vld [vmem:[#allocation3 + $0xe0] sm:$0xff]
      %v2313 = vld [vmem:[#allocation3 + $0xe8] sm:$0xff]
      %v2314 = vld [vmem:[#allocation3 + $0xf0] sm:$0xff]
      %v2315 = vld [vmem:[#allocation3 + $0xf8] sm:$0xff]
      %v2316 = vld [vmem:[#allocation3 + $0x100] sm:$0xff]
      %v2317 = vld [vmem:[#allocation3 + $0x108] sm:$0xff]
      %v2318 = vld [vmem:[#allocation3 + $0x110] sm:$0xff]
      %v2319 = vld [vmem:[#allocation3 + $0x118] sm:$0xff]
      %v2320 = vld [vmem:[#allocation3 + $0x120] sm:$0xff]
      %v2321 = vld [vmem:[#allocation3 + $0x128] sm:$0xff]
      %v2322 = vld [vmem:[#allocation3 + $0x130] sm:$0xff]
      %v2323 = vld [vmem:[#allocation3 + $0x138] sm:$0xff]
      %v2324 = vld [vmem:[#allocation3 + $0x140] sm:$0xff]
      %v2325 = vld [vmem:[#allocation3 + $0x148] sm:$0xff]
      %v2326 = vld [vmem:[#allocation3 + $0x150] sm:$0xff]
      %v2327 = vld [vmem:[#allocation3 + $0x158] sm:$0xff]
      %v2328 = vld [vmem:[#allocation3 + $0x160] sm:$0xff]
      %v2329 = vld [vmem:[#allocation3 + $0x168] sm:$0xff]
      %v2330 = vld [vmem:[#allocation3 + $0x170] sm:$0xff]
      %v2331 = vld [vmem:[#allocation3 + $0x178] sm:$0xff]
      %v2332 = vld [vmem:[%s3] sm:$0xf]
      %v2333 = vld [vmem:[%s3 + $0x4] sm:$0xf]
      %v2334 = vld [vmem:[%s3 + $0x8] sm:$0xf]
      %v2335 = vld [vmem:[%s3 + $0xc] sm:$0xf]
      %v2336 = vld [vmem:[%s3 + $0x10] sm:$0xf]
      %v2337 = vld [vmem:[%s3 + $0x14] sm:$0xf]
      %v2338 = vld [vmem:[%s3 + $0x18] sm:$0xf]
      %v2339 = vld [vmem:[%s3 + $0x1c] sm:$0xf]
      %v2340 = vld [vmem:[%s3 + $0x20] sm:$0xf]
      %v2341 = vld [vmem:[%s3 + $0x24] sm:$0xf]
      %v2342 = vld [vmem:[%s3 + $0x28] sm:$0xf]
      %v2343 = vld [vmem:[%s3 + $0x2c] sm:$0xf]
      %v2344 = vld [vmem:[%s3 + $0x30] sm:$0xf]
      %v2345 = vld [vmem:[%s3 + $0x34] sm:$0xf]
      %v2346 = vld [vmem:[%s3 + $0x38] sm:$0xf]
      %v2347 = vld [vmem:[%s3 + $0x3c] sm:$0xf]
      %v2348 = vld [vmem:[%s3 + $0x40] sm:$0xf]
      %v2349 = vld [vmem:[%s3 + $0x44] sm:$0xf]
      %v2350 = vld [vmem:[%s3 + $0x48] sm:$0xf]
      %v2351 = vld [vmem:[%s3 + $0x4c] sm:$0xf]
      %v2352 = vld [vmem:[%s3 + $0x50] sm:$0xf]
      %v2353 = vld [vmem:[%s3 + $0x54] sm:$0xf]
      %v2354 = vld [vmem:[%s3 + $0x58] sm:$0xf]
      %v2355 = vld [vmem:[%s3 + $0x5c] sm:$0xf]
      %v2356 = vld [vmem:[%s3 + $0x60] sm:$0xf]
      %v2357 = vld [vmem:[%s3 + $0x64] sm:$0xf]
      %v2358 = vld [vmem:[%s3 + $0x68] sm:$0xf]
      %v2359 = vld [vmem:[%s3 + $0x6c] sm:$0xf]
      %v2360 = vld [vmem:[%s3 + $0x70] sm:$0xf]
      %v2361 = vld [vmem:[%s3 + $0x74] sm:$0xf]
      %v2362 = vld [vmem:[%s3 + $0x78] sm:$0xf]
      %v2363 = vld [vmem:[%s3 + $0x7c] sm:$0xf]
      %v2364 = vld [vmem:[%s3 + $0x80] sm:$0xf]
      %v2365 = vld [vmem:[%s3 + $0x84] sm:$0xf]
      %v2366 = vld [vmem:[%s3 + $0x88] sm:$0xf]
      %v2367 = vld [vmem:[%s3 + $0x8c] sm:$0xf]
      %v2368 = vld [vmem:[%s3 + $0x90] sm:$0xf]
      %v2369 = vld [vmem:[%s3 + $0x94] sm:$0xf]
      %v2370 = vld [vmem:[%s3 + $0x98] sm:$0xf]
      %v2371 = vld [vmem:[%s3 + $0x9c] sm:$0xf]
      %v2372 = vld [vmem:[%s3 + $0xa0] sm:$0xf]
      %v2373 = vld [vmem:[%s3 + $0xa4] sm:$0xf]
      %v2374 = vld [vmem:[%s3 + $0xa8] sm:$0xf]
      %v2375 = vld [vmem:[%s3 + $0xac] sm:$0xf]
      %v2376 = vld [vmem:[%s3 + $0xb0] sm:$0xf]
      %v2377 = vld [vmem:[%s3 + $0xb4] sm:$0xf]
      %v2378 = vld [vmem:[%s3 + $0xb8] sm:$0xf]
      %v2379 = vld [vmem:[%s3 + $0xbc] sm:$0xf]
      %v2380 = vld [vmem:[%s448] sm:$0xff]
      %v2381 = vld [vmem:[%s448 + $0x8] sm:$0xff]
      %v2382 = vld [vmem:[%s448 + $0x10] sm:$0xff]
      %v2383 = vld [vmem:[%s448 + $0x18] sm:$0xff]
      %v2384 = vld [vmem:[%s448 + $0x20] sm:$0xff]
      %v2385 = vld [vmem:[%s448 + $0x28] sm:$0xff]
      %v2386 = vld [vmem:[%s448 + $0x30] sm:$0xff]
      %v2387 = vld [vmem:[%s448 + $0x38] sm:$0xff]
      %v2388 = vld [vmem:[%s448 + $0x40] sm:$0xff]
      %v2389 = vld [vmem:[%s448 + $0x48] sm:$0xff]
      %v2390 = vld [vmem:[%s448 + $0x50] sm:$0xff]
      %v2391 = vld [vmem:[%s448 + $0x58] sm:$0xff]
      %v2392 = vld [vmem:[%s448 + $0x60] sm:$0xff]
      %v2393 = vld [vmem:[%s448 + $0x68] sm:$0xff]
      %v2394 = vld [vmem:[%s448 + $0x70] sm:$0xff]
      %v2395 = vld [vmem:[%s448 + $0x78] sm:$0xff]
      %v2396 = vld [vmem:[%s448 + $0x80] sm:$0xff]
      %v2397 = vld [vmem:[%s448 + $0x88] sm:$0xff]
      %v2398 = vld [vmem:[%s448 + $0x90] sm:$0xff]
      %v2399 = vld [vmem:[%s448 + $0x98] sm:$0xff]
      %v2400 = vld [vmem:[%s448 + $0xa0] sm:$0xff]
      %v2401 = vld [vmem:[%s448 + $0xa8] sm:$0xff]
      %v2402 = vld [vmem:[%s448 + $0xb0] sm:$0xff]
      %v2403 = vld [vmem:[%s448 + $0xb8] sm:$0xff]
      %v2404 = vld [vmem:[%s448 + $0xc0] sm:$0xff]
      %v2405 = vld [vmem:[%s448 + $0xc8] sm:$0xff]
      %v2406 = vld [vmem:[%s448 + $0xd0] sm:$0xff]
      %v2407 = vld [vmem:[%s448 + $0xd8] sm:$0xff]
      %v2408 = vld [vmem:[%s448 + $0xe0] sm:$0xff]
      %v2409 = vld [vmem:[%s448 + $0xe8] sm:$0xff]
      %v2410 = vld [vmem:[%s448 + $0xf0] sm:$0xff]
      %v2411 = vld [vmem:[%s448 + $0xf8] sm:$0xff]
      %v2412 = vld [vmem:[%s448 + $0x100] sm:$0xff]
      %v2413 = vld [vmem:[%s448 + $0x108] sm:$0xff]
      %v2414 = vld [vmem:[%s448 + $0x110] sm:$0xff]
      %v2415 = vld [vmem:[%s448 + $0x118] sm:$0xff]
      %v2416 = vld [vmem:[%s448 + $0x120] sm:$0xff]
      %v2417 = vld [vmem:[%s448 + $0x128] sm:$0xff]
      %v2418 = vld [vmem:[%s448 + $0x130] sm:$0xff]
      %v2419 = vld [vmem:[%s448 + $0x138] sm:$0xff]
      %v2420 = vld [vmem:[%s448 + $0x140] sm:$0xff]
      %v2421 = vld [vmem:[%s448 + $0x148] sm:$0xff]
      %v2422 = vld [vmem:[%s448 + $0x150] sm:$0xff]
      %v2423 = vld [vmem:[%s448 + $0x158] sm:$0xff]
      %v2424 = vld [vmem:[%s448 + $0x160] sm:$0xff]
      %v2425 = vld [vmem:[%s448 + $0x168] sm:$0xff]
      %v2426 = vld [vmem:[%s448 + $0x170] sm:$0xff]
      %v2427 = vld [vmem:[%s448 + $0x178] sm:$0xff]
      %s2428 = scalar_lea.vmem %s3, 192
      %v2429 = vld [vmem:[%s2428] sm:$0xf]
      %v2430 = vld [vmem:[%s2428 + $0x4] sm:$0xf]
      %v2431 = vld [vmem:[%s2428 + $0x8] sm:$0xf]
      %v2432 = vld [vmem:[%s2428 + $0xc] sm:$0xf]
      %v2433 = vld [vmem:[%s2428 + $0x10] sm:$0xf]
      %v2434 = vld [vmem:[%s2428 + $0x14] sm:$0xf]
      %v2435 = vld [vmem:[%s2428 + $0x18] sm:$0xf]
      %v2436 = vld [vmem:[%s2428 + $0x1c] sm:$0xf]
      %v2437 = vld [vmem:[%s2428 + $0x20] sm:$0xf]
      %v2438 = vld [vmem:[%s2428 + $0x24] sm:$0xf]
      %v2439 = vld [vmem:[%s2428 + $0x28] sm:$0xf]
      %v2440 = vld [vmem:[%s2428 + $0x2c] sm:$0xf]
      %v2441 = vld [vmem:[%s2428 + $0x30] sm:$0xf]
      %v2442 = vld [vmem:[%s2428 + $0x34] sm:$0xf]
      %v2443 = vld [vmem:[%s2428 + $0x38] sm:$0xf]
      %v2444 = vld [vmem:[%s2428 + $0x3c] sm:$0xf]
      %v2445 = vld [vmem:[%s2428 + $0x40] sm:$0xf]
      %v2446 = vld [vmem:[%s2428 + $0x44] sm:$0xf]
      %v2447 = vld [vmem:[%s2428 + $0x48] sm:$0xf]
      %v2448 = vld [vmem:[%s2428 + $0x4c] sm:$0xf]
      %v2449 = vld [vmem:[%s2428 + $0x50] sm:$0xf]
      %v2450 = vld [vmem:[%s2428 + $0x54] sm:$0xf]
      %v2451 = vld [vmem:[%s2428 + $0x58] sm:$0xf]
      %v2452 = vld [vmem:[%s2428 + $0x5c] sm:$0xf]
      %v2453 = vld [vmem:[%s2428 + $0x60] sm:$0xf]
      %v2454 = vld [vmem:[%s2428 + $0x64] sm:$0xf]
      %v2455 = vld [vmem:[%s2428 + $0x68] sm:$0xf]
      %v2456 = vld [vmem:[%s2428 + $0x6c] sm:$0xf]
      %v2457 = vld [vmem:[%s2428 + $0x70] sm:$0xf]
      %v2458 = vld [vmem:[%s2428 + $0x74] sm:$0xf]
      %v2459 = vld [vmem:[%s2428 + $0x78] sm:$0xf]
      %v2460 = vld [vmem:[%s2428 + $0x7c] sm:$0xf]
      %v2461 = vld [vmem:[%s2428 + $0x80] sm:$0xf]
      %v2462 = vld [vmem:[%s2428 + $0x84] sm:$0xf]
      %v2463 = vld [vmem:[%s2428 + $0x88] sm:$0xf]
      %v2464 = vld [vmem:[%s2428 + $0x8c] sm:$0xf]
      %v2465 = vld [vmem:[%s2428 + $0x90] sm:$0xf]
      %v2466 = vld [vmem:[%s2428 + $0x94] sm:$0xf]
      %v2467 = vld [vmem:[%s2428 + $0x98] sm:$0xf]
      %v2468 = vld [vmem:[%s2428 + $0x9c] sm:$0xf]
      %v2469 = vld [vmem:[%s2428 + $0xa0] sm:$0xf]
      %v2470 = vld [vmem:[%s2428 + $0xa4] sm:$0xf]
      %v2471 = vld [vmem:[%s2428 + $0xa8] sm:$0xf]
      %v2472 = vld [vmem:[%s2428 + $0xac] sm:$0xf]
      %v2473 = vld [vmem:[%s2428 + $0xb0] sm:$0xf]
      %v2474 = vld [vmem:[%s2428 + $0xb4] sm:$0xf]
      %v2475 = vld [vmem:[%s2428 + $0xb8] sm:$0xf]
      %v2476 = vld [vmem:[%s2428 + $0xbc] sm:$0xf]
      %v2525 = vunpack.c.l.b16 %v2429
      %v2526 = vunpack.c.l.b16 %v2430
      %v2527 = vunpack.c.l.b16 %v2431
      %v2528 = vunpack.c.l.b16 %v2432
      %v2529 = vunpack.c.l.b16 %v2433
      %v2530 = vunpack.c.l.b16 %v2434
      %v2531 = vunpack.c.l.b16 %v2435
      %v2532 = vunpack.c.l.b16 %v2436
      %v2533 = vunpack.c.l.b16 %v2437
      %v2534 = vunpack.c.l.b16 %v2438
      %v2535 = vunpack.c.l.b16 %v2439
      %v2536 = vunpack.c.l.b16 %v2440
      %v2537 = vunpack.c.l.b16 %v2441
      %v2538 = vunpack.c.l.b16 %v2442
      %v2539 = vunpack.c.l.b16 %v2443
      %v2540 = vunpack.c.l.b16 %v2444
      %v2541 = vunpack.c.l.b16 %v2445
      %v2542 = vunpack.c.l.b16 %v2446
      %v2543 = vunpack.c.l.b16 %v2447
      %v2544 = vunpack.c.l.b16 %v2448
      %v2545 = vunpack.c.l.b16 %v2449
      %v2546 = vunpack.c.l.b16 %v2450
      %v2547 = vunpack.c.l.b16 %v2451
      %v2548 = vunpack.c.l.b16 %v2452
      %v2549 = vunpack.c.l.b16 %v2453
      %v2550 = vunpack.c.l.b16 %v2454
      %v2551 = vunpack.c.l.b16 %v2455
      %v2552 = vunpack.c.l.b16 %v2456
      %v2553 = vunpack.c.l.b16 %v2457
      %v2554 = vunpack.c.l.b16 %v2458
      %v2555 = vunpack.c.l.b16 %v2459
      %v2556 = vunpack.c.l.b16 %v2460
      %v2557 = vunpack.c.l.b16 %v2461
      %v2558 = vunpack.c.l.b16 %v2462
      %v2559 = vunpack.c.l.b16 %v2463
      %v2560 = vunpack.c.l.b16 %v2464
      %v2561 = vunpack.c.l.b16 %v2465
      %v2562 = vunpack.c.l.b16 %v2466
      %v2563 = vunpack.c.l.b16 %v2467
      %v2564 = vunpack.c.l.b16 %v2468
      %v2565 = vunpack.c.l.b16 %v2469
      %v2566 = vunpack.c.l.b16 %v2470
      %v2567 = vunpack.c.l.b16 %v2471
      %v2568 = vunpack.c.l.b16 %v2472
      %v2569 = vunpack.c.l.b16 %v2473
      %v2570 = vunpack.c.l.b16 %v2474
      %v2571 = vunpack.c.l.b16 %v2475
      %v2572 = vunpack.c.l.b16 %v2476
      %v2573 = vpack.c.b16 %v2526, %v2525
      %v2574 = vpack.c.b16 %v2528, %v2527
      %v2575 = vpack.c.b16 %v2530, %v2529
      %v2576 = vpack.c.b16 %v2532, %v2531
      %v2577 = vpack.c.b16 %v2534, %v2533
      %v2578 = vpack.c.b16 %v2536, %v2535
      %v2579 = vpack.c.b16 %v2538, %v2537
      %v2580 = vpack.c.b16 %v2540, %v2539
      %v2581 = vpack.c.b16 %v2542, %v2541
      %v2582 = vpack.c.b16 %v2544, %v2543
      %v2583 = vpack.c.b16 %v2546, %v2545
      %v2584 = vpack.c.b16 %v2548, %v2547
      %v2585 = vpack.c.b16 %v2550, %v2549
      %v2586 = vpack.c.b16 %v2552, %v2551
      %v2587 = vpack.c.b16 %v2554, %v2553
      %v2588 = vpack.c.b16 %v2556, %v2555
      %v2589 = vpack.c.b16 %v2558, %v2557
      %v2590 = vpack.c.b16 %v2560, %v2559
      %v2591 = vpack.c.b16 %v2562, %v2561
      %v2592 = vpack.c.b16 %v2564, %v2563
      %v2593 = vpack.c.b16 %v2566, %v2565
      %v2594 = vpack.c.b16 %v2568, %v2567
      %v2595 = vpack.c.b16 %v2570, %v2569
      %v2596 = vpack.c.b16 %v2572, %v2571
      %2621 = vmatprep.subr.bf16.mxu0 0
      %2622 = vmatpush1.bf16.msra.mxu0 %v2573
      %2623 = vmatprep.subr.bf16.mxu0 0
      %2624 = vmatpush1.bf16.msra.mxu0 %v2574
      %2625 = vmatprep.subr.bf16.mxu0 0
      %2626 = vmatpush1.bf16.msra.mxu0 %v2575
      %2627 = vmatprep.subr.bf16.mxu0 0
      %2628 = vmatpush1.bf16.msra.mxu0 %v2576
      %2629 = vmatprep.subr.bf16.mxu0 0
      %2630 = vmatpush1.bf16.msra.mxu0 %v2577
      %2631 = vmatprep.subr.bf16.mxu0 0
      %2632 = vmatpush1.bf16.msra.mxu0 %v2578
      %2633 = vmatprep.subr.bf16.mxu0 0
      %2634 = vmatpush1.bf16.msra.mxu0 %v2579
      %2635 = vmatprep.subr.bf16.mxu0 0
      %2636 = vmatpush1.bf16.msra.mxu0 %v2580
      %2637 = vmatprep.subr.bf16.mxu0 0
      %2638 = vmatpush1.bf16.msra.mxu0 %v2581
      %2639 = vmatprep.subr.bf16.mxu0 0
      %2640 = vmatpush1.bf16.msra.mxu0 %v2582
      %2641 = vmatprep.subr.bf16.mxu0 0
      %2642 = vmatpush1.bf16.msra.mxu0 %v2583
      %2643 = vmatprep.subr.bf16.mxu0 0
      %2644 = vmatpush1.bf16.msra.mxu0 %v2584
      %2645 = vmatprep.subr.bf16.mxu0 0
      %2646 = vmatpush1.bf16.msra.mxu0 %v2585
      %2647 = vmatprep.subr.bf16.mxu0 0
      %2648 = vmatpush1.bf16.msra.mxu0 %v2586
      %2649 = vmatprep.subr.bf16.mxu0 0
      %2650 = vmatpush1.bf16.msra.mxu0 %v2587
      %2651 = vmatprep.subr.bf16.mxu0 0
      %2652 = vmatpush1.bf16.msra.mxu0 %v2588
      %2653 = vmatprep.mubr.bf16.mxu0 %v2381
      %2654 = vmatmul.mubr.bf16.gmra.mrb[0].mxu0 %v2380
      %v2655 = vpop.f32.mrb[0].mxu0
      %v2656 = vadd.f32 0.0, %v2655
      %v2657 = vpop.f32.mrb[0].mxu0
      %v2658 = vpop.f32.mrb[0].mxu0
      %v2659 = vadd.f32 0.0, %v2658
      %v2660 = vpop.f32.mrb[0].mxu0
      %2661 = vmatprep.mubr.bf16.mxu0 %v2384
      %2662 = vmatmul.mubr.bf16.gmra.mrb[0].mxu0 %v2383
      %v2663 = vpop.f32.mrb[0].mxu0
      %v2664 = vadd.f32 0.0, %v2663
      %v2665 = vpop.f32.mrb[0].mxu0
      %v2666 = vpop.f32.mrb[0].mxu0
      %v2667 = vadd.f32 0.0, %v2666
      %v2668 = vpop.f32.mrb[0].mxu0
      %2669 = vmatprep.mubr.bf16.mxu0 %v2387
      %2670 = vmatmul.mubr.bf16.gmra.mrb[0].mxu0 %v2386
      %v2671 = vpop.f32.mrb[0].mxu0
      %v2672 = vadd.f32 0.0, %v2671
      %v2673 = vpop.f32.mrb[0].mxu0
      %v2674 = vpop.f32.mrb[0].mxu0
      %v2675 = vadd.f32 0.0, %v2674
      %v2676 = vpop.f32.mrb[0].mxu0
      %2677 = vmatprep.mubr.bf16.mxu0 %v2390
      %2678 = vmatmul.mubr.bf16.gmra.mrb[0].mxu0 %v2389
      %v2679 = vpop.f32.mrb[0].mxu0
      %v2680 = vadd.f32 0.0, %v2679
      %v2681 = vpop.f32.mrb[0].mxu0
      %v2682 = vpop.f32.mrb[0].mxu0
      %v2683 = vadd.f32 0.0, %v2682
      %v2684 = vpop.f32.mrb[0].mxu0
      %2685 = vmatprep.mubr.bf16.mxu0 %v2393
      %2686 = vmatmul.mubr.bf16.gmra.mrb[0].mxu0 %v2392
      %v2687 = vpop.f32.mrb[0].mxu0
      %v2688 = vadd.f32 0.0, %v2687
      %v2689 = vpop.f32.mrb[0].mxu0
      %v2690 = vpop.f32.mrb[0].mxu0
      %v2691 = vadd.f32 0.0, %v2690
      %v2692 = vpop.f32.mrb[0].mxu0
      %2693 = vmatprep.mubr.bf16.mxu0 %v2396
      %2694 = vmatmul.mubr.bf16.gmra.mrb[0].mxu0 %v2395
      %v2695 = vpop.f32.mrb[0].mxu0
      %v2696 = vadd.f32 0.0, %v2695
      %v2697 = vpop.f32.mrb[0].mxu0
      %v2698 = vpop.f32.mrb[0].mxu0
      %v2699 = vadd.f32 0.0, %v2698
      %v2700 = vpop.f32.mrb[0].mxu0
      %2701 = vmatprep.mubr.bf16.mxu0 %v2399
      %2702 = vmatmul.mubr.bf16.gmra.mrb[0].mxu0 %v2398
      %v2703 = vpop.f32.mrb[0].mxu0
      %v2704 = vadd.f32 0.0, %v2703
      %v2705 = vpop.f32.mrb[0].mxu0
      %v2706 = vpop.f32.mrb[0].mxu0
      %v2707 = vadd.f32 0.0, %v2706
      %v2708 = vpop.f32.mrb[0].mxu0
      %2709 = vmatprep.mubr.bf16.mxu0 %v2402
      %2710 = vmatmul.mubr.bf16.gmra.mrb[0].mxu0 %v2401
      %v2711 = vpop.f32.mrb[0].mxu0
      %v2712 = vadd.f32 0.0, %v2711
      %v2713 = vpop.f32.mrb[0].mxu0
      %v2714 = vpop.f32.mrb[0].mxu0
      %v2715 = vadd.f32 0.0, %v2714
      %v2716 = vpop.f32.mrb[0].mxu0
      %2717 = vmatprep.mubr.bf16.mxu0 %v2405
      %2718 = vmatmul.mubr.bf16.gmra.mrb[0].mxu0 %v2404
      %v2719 = vpop.f32.mrb[0].mxu0
      %v2720 = vadd.f32 0.0, %v2719
      %v2721 = vpop.f32.mrb[0].mxu0
      %v2722 = vpop.f32.mrb[0].mxu0
      %v2723 = vadd.f32 0.0, %v2722
      %v2724 = vpop.f32.mrb[0].mxu0
      %2725 = vmatprep.mubr.bf16.mxu0 %v2408
      %2726 = vmatmul.mubr.bf16.gmra.mrb[0].mxu0 %v2407
      %v2727 = vpop.f32.mrb[0].mxu0
      %v2728 = vadd.f32 0.0, %v2727
      %v2729 = vpop.f32.mrb[0].mxu0
      %v2730 = vpop.f32.mrb[0].mxu0
      %v2731 = vadd.f32 0.0, %v2730
      %v2732 = vpop.f32.mrb[0].mxu0
      %2733 = vmatprep.mubr.bf16.mxu0 %v2411
      %2734 = vmatmul.mubr.bf16.gmra.mrb[0].mxu0 %v2410
      %v2735 = vpop.f32.mrb[0].mxu0
      %v2736 = vadd.f32 0.0, %v2735
      %v2737 = vpop.f32.mrb[0].mxu0
      %v2738 = vpop.f32.mrb[0].mxu0
      %v2739 = vadd.f32 0.0, %v2738
      %v2740 = vpop.f32.mrb[0].mxu0
      %2741 = vmatprep.mubr.bf16.mxu0 %v2414
      %2742 = vmatmul.mubr.bf16.gmra.mrb[0].mxu0 %v2413
      %v2743 = vpop.f32.mrb[0].mxu0
      %v2744 = vadd.f32 0.0, %v2743
      %v2745 = vpop.f32.mrb[0].mxu0
      %v2746 = vpop.f32.mrb[0].mxu0
      %v2747 = vadd.f32 0.0, %v2746
      %v2748 = vpop.f32.mrb[0].mxu0
      %2749 = vmatprep.mubr.bf16.mxu0 %v2417
      %2750 = vmatmul.mubr.bf16.gmra.mrb[0].mxu0 %v2416
      %v2751 = vpop.f32.mrb[0].mxu0
      %v2752 = vadd.f32 0.0, %v2751
      %v2753 = vpop.f32.mrb[0].mxu0
      %v2754 = vpop.f32.mrb[0].mxu0
      %v2755 = vadd.f32 0.0, %v2754
      %v2756 = vpop.f32.mrb[0].mxu0
      %2757 = vmatprep.mubr.bf16.mxu0 %v2420
      %2758 = vmatmul.mubr.bf16.gmra.mrb[0].mxu0 %v2419
      %v2759 = vpop.f32.mrb[0].mxu0
      %v2760 = vadd.f32 0.0, %v2759
      %v2761 = vpop.f32.mrb[0].mxu0
      %v2762 = vpop.f32.mrb[0].mxu0
      %v2763 = vadd.f32 0.0, %v2762
      %v2764 = vpop.f32.mrb[0].mxu0
      %2765 = vmatprep.mubr.bf16.mxu0 %v2423
      %2766 = vmatmul.mubr.bf16.gmra.mrb[0].mxu0 %v2422
      %v2767 = vpop.f32.mrb[0].mxu0
      %v2768 = vadd.f32 0.0, %v2767
      %v2769 = vpop.f32.mrb[0].mxu0
      %v2770 = vpop.f32.mrb[0].mxu0
      %v2771 = vadd.f32 0.0, %v2770
      %v2772 = vpop.f32.mrb[0].mxu0
      %2773 = vmatprep.mubr.bf16.mxu0 %v2426
      %2774 = vmatmul.mubr.bf16.gmra.mrb[0].mxu0 %v2425
      %v2775 = vpop.f32.mrb[0].mxu0
      %v2776 = vadd.f32 0.0, %v2775
      %v2777 = vpop.f32.mrb[0].mxu0
      %v2778 = vpop.f32.mrb[0].mxu0
      %v2779 = vadd.f32 0.0, %v2778
      %v2780 = vpop.f32.mrb[0].mxu0
      %2781 = vdwg.mxu0
      %2782 = vmatprep.subr.bf16.mxu0 0
      %2783 = vmatpush1.bf16.msra.mxu0 %v2589
      %2784 = vmatprep.subr.bf16.mxu0 0
      %2785 = vmatpush1.bf16.msra.mxu0 %v2590
      %2786 = vmatprep.subr.bf16.mxu0 0
      %2787 = vmatpush1.bf16.msra.mxu0 %v2591
      %2788 = vmatprep.subr.bf16.mxu0 0
      %2789 = vmatpush1.bf16.msra.mxu0 %v2592
      %2790 = vmatprep.subr.bf16.mxu0 0
      %2791 = vmatpush1.bf16.msra.mxu0 %v2593
      %2792 = vmatprep.subr.bf16.mxu0 0
      %2793 = vmatpush1.bf16.msra.mxu0 %v2594
      %2794 = vmatprep.subr.bf16.mxu0 0
      %2795 = vmatpush1.bf16.msra.mxu0 %v2595
      %2796 = vmatprep.subr.bf16.mxu0 0
      %2797 = vmatpush1.bf16.msra.mxu0 %v2596
      %2798 = vmatprep.subr.bf16.mxu0 0
      %2799 = vmatpush1.bf16.msra.mxu0 0
      %2800 = vmatprep.subr.bf16.mxu0 0
      %2801 = vmatpush1.bf16.msra.mxu0 0
      %2802 = vmatprep.subr.bf16.mxu0 0
      %2803 = vmatpush1.bf16.msra.mxu0 0
      %2804 = vmatprep.subr.bf16.mxu0 0
      %2805 = vmatpush1.bf16.msra.mxu0 0
      %2806 = vmatprep.subr.bf16.mxu0 0
      %2807 = vmatpush1.bf16.msra.mxu0 0
      %2808 = vmatprep.subr.bf16.mxu0 0
      %2809 = vmatpush1.bf16.msra.mxu0 0
      %2810 = vmatprep.subr.bf16.mxu0 0
      %2811 = vmatpush1.bf16.msra.mxu0 0
      %2812 = vmatprep.subr.bf16.mxu0 0
      %2813 = vmatpush1.bf16.msra.mxu0 0
      %2814 = vmatprep.mubr.bf16.mxu0 0
      %2815 = vmatmul.mubr.bf16.gmra.mrb[0].mxu0 %v2382
      %v2816 = vpop.f32.mrb[0].mxu0
      %v2817 = vadd.f32 %v2656, %v2816
      %v2818 = vpop.f32.mrb[0].mxu0
      %v2819 = vpop.f32.mrb[0].mxu0
      %v2820 = vadd.f32 %v2659, %v2819
      %v2821 = vpop.f32.mrb[0].mxu0
      %2822 = vmatprep.mubr.bf16.mxu0 0
      %2823 = vmatmul.mubr.bf16.gmra.mrb[0].mxu0 %v2385
      %v2824 = vpop.f32.mrb[0].mxu0
      %v2825 = vadd.f32 %v2664, %v2824
      %v2826 = vpop.f32.mrb[0].mxu0
      %v2827 = vpop.f32.mrb[0].mxu0
      %v2828 = vadd.f32 %v2667, %v2827
      %v2829 = vpop.f32.mrb[0].mxu0
      %2830 = vmatprep.mubr.bf16.mxu0 0
      %2831 = vmatmul.mubr.bf16.gmra.mrb[0].mxu0 %v2388
      %v2832 = vpop.f32.mrb[0].mxu0
      %v2833 = vadd.f32 %v2672, %v2832
      %v2834 = vpop.f32.mrb[0].mxu0
      %v2835 = vpop.f32.mrb[0].mxu0
      %v2836 = vadd.f32 %v2675, %v2835
      %v2837 = vpop.f32.mrb[0].mxu0
      %2838 = vmatprep.mubr.bf16.mxu0 0
      %2839 = vmatmul.mubr.bf16.gmra.mrb[0].mxu0 %v2391
      %v2840 = vpop.f32.mrb[0].mxu0
      %v2841 = vadd.f32 %v2680, %v2840
      %v2842 = vpop.f32.mrb[0].mxu0
      %v2843 = vpop.f32.mrb[0].mxu0
      %v2844 = vadd.f32 %v2683, %v2843
      %v2845 = vpop.f32.mrb[0].mxu0
      %2846 = vmatprep.mubr.bf16.mxu0 0
      %2847 = vmatmul.mubr.bf16.gmra.mrb[0].mxu0 %v2394
      %v2848 = vpop.f32.mrb[0].mxu0
      %v2849 = vadd.f32 %v2688, %v2848
      %v2850 = vpop.f32.mrb[0].mxu0
      %v2851 = vpop.f32.mrb[0].mxu0
      %v2852 = vadd.f32 %v2691, %v2851
      %v2853 = vpop.f32.mrb[0].mxu0
      %2854 = vmatprep.mubr.bf16.mxu0 0
      %2855 = vmatmul.mubr.bf16.gmra.mrb[0].mxu0 %v2397
      %v2856 = vpop.f32.mrb[0].mxu0
      %v2857 = vadd.f32 %v2696, %v2856
      %v2858 = vpop.f32.mrb[0].mxu0
      %v2859 = vpop.f32.mrb[0].mxu0
      %v2860 = vadd.f32 %v2699, %v2859
      %v2861 = vpop.f32.mrb[0].mxu0
      %2862 = vmatprep.mubr.bf16.mxu0 0
      %2863 = vmatmul.mubr.bf16.gmra.mrb[0].mxu0 %v2400
      %v2864 = vpop.f32.mrb[0].mxu0
      %v2865 = vadd.f32 %v2704, %v2864
      %v2866 = vpop.f32.mrb[0].mxu0
      %v2867 = vpop.f32.mrb[0].mxu0
      %v2868 = vadd.f32 %v2707, %v2867
      %v2869 = vpop.f32.mrb[0].mxu0
      %2870 = vmatprep.mubr.bf16.mxu0 0
      %2871 = vmatmul.mubr.bf16.gmra.mrb[0].mxu0 %v2403
      %v2872 = vpop.f32.mrb[0].mxu0
      %v2873 = vadd.f32 %v2712, %v2872
      %v2874 = vpop.f32.mrb[0].mxu0
      %v2875 = vpop.f32.mrb[0].mxu0
      %v2876 = vadd.f32 %v2715, %v2875
      %v2877 = vpop.f32.mrb[0].mxu0
      %2878 = vmatprep.mubr.bf16.mxu0 0
      %2879 = vmatmul.mubr.bf16.gmra.mrb[0].mxu0 %v2406
      %v2880 = vpop.f32.mrb[0].mxu0
      %v2881 = vadd.f32 %v2720, %v2880
      %v2882 = vpop.f32.mrb[0].mxu0
      %v2883 = vpop.f32.mrb[0].mxu0
      %v2884 = vadd.f32 %v2723, %v2883
      %v2885 = vpop.f32.mrb[0].mxu0
      %2886 = vmatprep.mubr.bf16.mxu0 0
      %2887 = vmatmul.mubr.bf16.gmra.mrb[0].mxu0 %v2409
      %v2888 = vpop.f32.mrb[0].mxu0
      %v2889 = vadd.f32 %v2728, %v2888
      %v2890 = vpop.f32.mrb[0].mxu0
      %v2891 = vpop.f32.mrb[0].mxu0
      %v2892 = vadd.f32 %v2731, %v2891
      %v2893 = vpop.f32.mrb[0].mxu0
      %2894 = vmatprep.mubr.bf16.mxu0 0
      %2895 = vmatmul.mubr.bf16.gmra.mrb[0].mxu0 %v2412
      %v2896 = vpop.f32.mrb[0].mxu0
      %v2897 = vadd.f32 %v2736, %v2896
      %v2898 = vpop.f32.mrb[0].mxu0
      %v2899 = vpop.f32.mrb[0].mxu0
      %v2900 = vadd.f32 %v2739, %v2899
      %v2901 = vpop.f32.mrb[0].mxu0
      %2902 = vmatprep.mubr.bf16.mxu0 0
      %2903 = vmatmul.mubr.bf16.gmra.mrb[0].mxu0 %v2415
      %v2904 = vpop.f32.mrb[0].mxu0
      %v2905 = vadd.f32 %v2744, %v2904
      %v2906 = vpop.f32.mrb[0].mxu0
      %v2907 = vpop.f32.mrb[0].mxu0
      %v2908 = vadd.f32 %v2747, %v2907
      %v2909 = vpop.f32.mrb[0].mxu0
      %2910 = vmatprep.mubr.bf16.mxu0 0
      %2911 = vmatmul.mubr.bf16.gmra.mrb[0].mxu0 %v2418
      %v2912 = vpop.f32.mrb[0].mxu0
      %v2913 = vadd.f32 %v2752, %v2912
      %v2914 = vpop.f32.mrb[0].mxu0
      %v2915 = vpop.f32.mrb[0].mxu0
      %v2916 = vadd.f32 %v2755, %v2915
      %v2917 = vpop.f32.mrb[0].mxu0
      %2918 = vmatprep.mubr.bf16.mxu0 0
      %2919 = vmatmul.mubr.bf16.gmra.mrb[0].mxu0 %v2421
      %v2920 = vpop.f32.mrb[0].mxu0
      %v2921 = vadd.f32 %v2760, %v2920
      %v2922 = vpop.f32.mrb[0].mxu0
      %v2923 = vpop.f32.mrb[0].mxu0
      %v2924 = vadd.f32 %v2763, %v2923
      %v2925 = vpop.f32.mrb[0].mxu0
      %2926 = vmatprep.mubr.bf16.mxu0 0
      %2927 = vmatmul.mubr.bf16.gmra.mrb[0].mxu0 %v2424
      %v2928 = vpop.f32.mrb[0].mxu0
      %v2929 = vadd.f32 %v2768, %v2928
      %v2930 = vpop.f32.mrb[0].mxu0
      %v2931 = vpop.f32.mrb[0].mxu0
      %v2932 = vadd.f32 %v2771, %v2931
      %v2933 = vpop.f32.mrb[0].mxu0
      %2934 = vmatprep.mubr.bf16.mxu0 0
      %2935 = vmatmul.mubr.bf16.gmra.mrb[0].mxu0 %v2427
      %v2936 = vpop.f32.mrb[0].mxu0
      %v2937 = vadd.f32 %v2776, %v2936
      %v2938 = vpop.f32.mrb[0].mxu0
      %v2939 = vpop.f32.mrb[0].mxu0
      %v2940 = vadd.f32 %v2779, %v2939
      %v2941 = vpop.f32.mrb[0].mxu0
      %2942 = vdwg.mxu0
      %v2991 = vunpack.c.l.b16 %v2332
      %v2992 = vunpack.c.l.b16 %v2333
      %v2993 = vunpack.c.l.b16 %v2334
      %v2994 = vunpack.c.l.b16 %v2335
      %v2995 = vunpack.c.l.b16 %v2336
      %v2996 = vunpack.c.l.b16 %v2337
      %v2997 = vunpack.c.l.b16 %v2338
      %v2998 = vunpack.c.l.b16 %v2339
      %v2999 = vunpack.c.l.b16 %v2340
      %v3000 = vunpack.c.l.b16 %v2341
      %v3001 = vunpack.c.l.b16 %v2342
      %v3002 = vunpack.c.l.b16 %v2343
      %v3003 = vunpack.c.l.b16 %v2344
      %v3004 = vunpack.c.l.b16 %v2345
      %v3005 = vunpack.c.l.b16 %v2346
      %v3006 = vunpack.c.l.b16 %v2347
      %v3007 = vunpack.c.l.b16 %v2348
      %v3008 = vunpack.c.l.b16 %v2349
      %v3009 = vunpack.c.l.b16 %v2350
      %v3010 = vunpack.c.l.b16 %v2351
      %v3011 = vunpack.c.l.b16 %v2352
      %v3012 = vunpack.c.l.b16 %v2353
      %v3013 = vunpack.c.l.b16 %v2354
      %v3014 = vunpack.c.l.b16 %v2355
      %v3015 = vunpack.c.l.b16 %v2356
      %v3016 = vunpack.c.l.b16 %v2357
      %v3017 = vunpack.c.l.b16 %v2358
      %v3018 = vunpack.c.l.b16 %v2359
      %v3019 = vunpack.c.l.b16 %v2360
      %v3020 = vunpack.c.l.b16 %v2361
      %v3021 = vunpack.c.l.b16 %v2362
      %v3022 = vunpack.c.l.b16 %v2363
      %v3023 = vunpack.c.l.b16 %v2364
      %v3024 = vunpack.c.l.b16 %v2365
      %v3025 = vunpack.c.l.b16 %v2366
      %v3026 = vunpack.c.l.b16 %v2367
      %v3027 = vunpack.c.l.b16 %v2368
      %v3028 = vunpack.c.l.b16 %v2369
      %v3029 = vunpack.c.l.b16 %v2370
      %v3030 = vunpack.c.l.b16 %v2371
      %v3031 = vunpack.c.l.b16 %v2372
      %v3032 = vunpack.c.l.b16 %v2373
      %v3033 = vunpack.c.l.b16 %v2374
      %v3034 = vunpack.c.l.b16 %v2375
      %v3035 = vunpack.c.l.b16 %v2376
      %v3036 = vunpack.c.l.b16 %v2377
      %v3037 = vunpack.c.l.b16 %v2378
      %v3038 = vunpack.c.l.b16 %v2379
      %v3039 = vpack.c.b16 %v2992, %v2991
      %v3040 = vpack.c.b16 %v2994, %v2993
      %v3041 = vpack.c.b16 %v2996, %v2995
      %v3042 = vpack.c.b16 %v2998, %v2997
      %v3043 = vpack.c.b16 %v3000, %v2999
      %v3044 = vpack.c.b16 %v3002, %v3001
      %v3045 = vpack.c.b16 %v3004, %v3003
      %v3046 = vpack.c.b16 %v3006, %v3005
      %v3047 = vpack.c.b16 %v3008, %v3007
      %v3048 = vpack.c.b16 %v3010, %v3009
      %v3049 = vpack.c.b16 %v3012, %v3011
      %v3050 = vpack.c.b16 %v3014, %v3013
      %v3051 = vpack.c.b16 %v3016, %v3015
      %v3052 = vpack.c.b16 %v3018, %v3017
      %v3053 = vpack.c.b16 %v3020, %v3019
      %v3054 = vpack.c.b16 %v3022, %v3021
      %v3055 = vpack.c.b16 %v3024, %v3023
      %v3056 = vpack.c.b16 %v3026, %v3025
      %v3057 = vpack.c.b16 %v3028, %v3027
      %v3058 = vpack.c.b16 %v3030, %v3029
      %v3059 = vpack.c.b16 %v3032, %v3031
      %v3060 = vpack.c.b16 %v3034, %v3033
      %v3061 = vpack.c.b16 %v3036, %v3035
      %v3062 = vpack.c.b16 %v3038, %v3037
      %3087 = vmatprep.subr.bf16.mxu0 0
      %3088 = vmatpush1.bf16.msra.mxu0 %v3039
      %3089 = vmatprep.subr.bf16.mxu0 0
      %3090 = vmatpush1.bf16.msra.mxu0 %v3040
      %3091 = vmatprep.subr.bf16.mxu0 0
      %3092 = vmatpush1.bf16.msra.mxu0 %v3041
      %3093 = vmatprep.subr.bf16.mxu0 0
      %3094 = vmatpush1.bf16.msra.mxu0 %v3042
      %3095 = vmatprep.subr.bf16.mxu0 0
      %3096 = vmatpush1.bf16.msra.mxu0 %v3043
      %3097 = vmatprep.subr.bf16.mxu0 0
      %3098 = vmatpush1.bf16.msra.mxu0 %v3044
      %3099 = vmatprep.subr.bf16.mxu0 0
      %3100 = vmatpush1.bf16.msra.mxu0 %v3045
      %3101 = vmatprep.subr.bf16.mxu0 0
      %3102 = vmatpush1.bf16.msra.mxu0 %v3046
      %3103 = vmatprep.subr.bf16.mxu0 0
      %3104 = vmatpush1.bf16.msra.mxu0 %v3047
      %3105 = vmatprep.subr.bf16.mxu0 0
      %3106 = vmatpush1.bf16.msra.mxu0 %v3048
      %3107 = vmatprep.subr.bf16.mxu0 0
      %3108 = vmatpush1.bf16.msra.mxu0 %v3049
      %3109 = vmatprep.subr.bf16.mxu0 0
      %3110 = vmatpush1.bf16.msra.mxu0 %v3050
      %3111 = vmatprep.subr.bf16.mxu0 0
      %3112 = vmatpush1.bf16.msra.mxu0 %v3051
      %3113 = vmatprep.subr.bf16.mxu0 0
      %3114 = vmatpush1.bf16.msra.mxu0 %v3052
      %3115 = vmatprep.subr.bf16.mxu0 0
      %3116 = vmatpush1.bf16.msra.mxu0 %v3053
      %3117 = vmatprep.subr.bf16.mxu0 0
      %3118 = vmatpush1.bf16.msra.mxu0 %v3054
      %3119 = vmatprep.mubr.bf16.mxu0 %v2285
      %3120 = vmatmul.mubr.bf16.gmra.mrb[0].mxu0 %v2284
      %v3121 = vpop.f32.mrb[0].mxu0
      %v3122 = vadd.f32 %v2817, %v3121
      %v3123 = vpop.f32.mrb[0].mxu0
      %v3124 = vpop.f32.mrb[0].mxu0
      %v3125 = vadd.f32 %v2820, %v3124
      %v3126 = vpop.f32.mrb[0].mxu0
      %3127 = vmatprep.mubr.bf16.mxu0 %v2288
      %3128 = vmatmul.mubr.bf16.gmra.mrb[0].mxu0 %v2287
      %v3129 = vpop.f32.mrb[0].mxu0
      %v3130 = vadd.f32 %v2825, %v3129
      %v3131 = vpop.f32.mrb[0].mxu0
      %v3132 = vpop.f32.mrb[0].mxu0
      %v3133 = vadd.f32 %v2828, %v3132
      %v3134 = vpop.f32.mrb[0].mxu0
      %3135 = vmatprep.mubr.bf16.mxu0 %v2291
      %3136 = vmatmul.mubr.bf16.gmra.mrb[0].mxu0 %v2290
      %v3137 = vpop.f32.mrb[0].mxu0
      %v3138 = vadd.f32 %v2833, %v3137
      %v3139 = vpop.f32.mrb[0].mxu0
      %v3140 = vpop.f32.mrb[0].mxu0
      %v3141 = vadd.f32 %v2836, %v3140
      %v3142 = vpop.f32.mrb[0].mxu0
      %3143 = vmatprep.mubr.bf16.mxu0 %v2294
      %3144 = vmatmul.mubr.bf16.gmra.mrb[0].mxu0 %v2293
      %v3145 = vpop.f32.mrb[0].mxu0
      %v3146 = vadd.f32 %v2841, %v3145
      %v3147 = vpop.f32.mrb[0].mxu0
      %v3148 = vpop.f32.mrb[0].mxu0
      %v3149 = vadd.f32 %v2844, %v3148
      %v3150 = vpop.f32.mrb[0].mxu0
      %3151 = vmatprep.mubr.bf16.mxu0 %v2297
      %3152 = vmatmul.mubr.bf16.gmra.mrb[0].mxu0 %v2296
      %v3153 = vpop.f32.mrb[0].mxu0
      %v3154 = vadd.f32 %v2849, %v3153
      %v3155 = vpop.f32.mrb[0].mxu0
      %v3156 = vpop.f32.mrb[0].mxu0
      %v3157 = vadd.f32 %v2852, %v3156
      %v3158 = vpop.f32.mrb[0].mxu0
      %3159 = vmatprep.mubr.bf16.mxu0 %v2300
      %3160 = vmatmul.mubr.bf16.gmra.mrb[0].mxu0 %v2299
      %v3161 = vpop.f32.mrb[0].mxu0
      %v3162 = vadd.f32 %v2857, %v3161
      %v3163 = vpop.f32.mrb[0].mxu0
      %v3164 = vpop.f32.mrb[0].mxu0
      %v3165 = vadd.f32 %v2860, %v3164
      %v3166 = vpop.f32.mrb[0].mxu0
      %3167 = vmatprep.mubr.bf16.mxu0 %v2303
      %3168 = vmatmul.mubr.bf16.gmra.mrb[0].mxu0 %v2302
      %v3169 = vpop.f32.mrb[0].mxu0
      %v3170 = vadd.f32 %v2865, %v3169
      %v3171 = vpop.f32.mrb[0].mxu0
      %v3172 = vpop.f32.mrb[0].mxu0
      %v3173 = vadd.f32 %v2868, %v3172
      %v3174 = vpop.f32.mrb[0].mxu0
      %3175 = vmatprep.mubr.bf16.mxu0 %v2306
      %3176 = vmatmul.mubr.bf16.gmra.mrb[0].mxu0 %v2305
      %v3177 = vpop.f32.mrb[0].mxu0
      %v3178 = vadd.f32 %v2873, %v3177
      %v3179 = vpop.f32.mrb[0].mxu0
      %v3180 = vpop.f32.mrb[0].mxu0
      %v3181 = vadd.f32 %v2876, %v3180
      %v3182 = vpop.f32.mrb[0].mxu0
      %3183 = vmatprep.mubr.bf16.mxu0 %v2309
      %3184 = vmatmul.mubr.bf16.gmra.mrb[0].mxu0 %v2308
      %v3185 = vpop.f32.mrb[0].mxu0
      %v3186 = vadd.f32 %v2881, %v3185
      %v3187 = vpop.f32.mrb[0].mxu0
      %v3188 = vpop.f32.mrb[0].mxu0
      %v3189 = vadd.f32 %v2884, %v3188
      %v3190 = vpop.f32.mrb[0].mxu0
      %3191 = vmatprep.mubr.bf16.mxu0 %v2312
      %3192 = vmatmul.mubr.bf16.gmra.mrb[0].mxu0 %v2311
      %v3193 = vpop.f32.mrb[0].mxu0
      %v3194 = vadd.f32 %v2889, %v3193
      %v3195 = vpop.f32.mrb[0].mxu0
      %v3196 = vpop.f32.mrb[0].mxu0
      %v3197 = vadd.f32 %v2892, %v3196
      %v3198 = vpop.f32.mrb[0].mxu0
      %3199 = vmatprep.mubr.bf16.mxu0 %v2315
      %3200 = vmatmul.mubr.bf16.gmra.mrb[0].mxu0 %v2314
      %v3201 = vpop.f32.mrb[0].mxu0
      %v3202 = vadd.f32 %v2897, %v3201
      %v3203 = vpop.f32.mrb[0].mxu0
      %v3204 = vpop.f32.mrb[0].mxu0
      %v3205 = vadd.f32 %v2900, %v3204
      %v3206 = vpop.f32.mrb[0].mxu0
      %3207 = vmatprep.mubr.bf16.mxu0 %v2318
      %3208 = vmatmul.mubr.bf16.gmra.mrb[0].mxu0 %v2317
      %v3209 = vpop.f32.mrb[0].mxu0
      %v3210 = vadd.f32 %v2905, %v3209
      %v3211 = vpop.f32.mrb[0].mxu0
      %v3212 = vpop.f32.mrb[0].mxu0
      %v3213 = vadd.f32 %v2908, %v3212
      %v3214 = vpop.f32.mrb[0].mxu0
      %3215 = vmatprep.mubr.bf16.mxu0 %v2321
      %3216 = vmatmul.mubr.bf16.gmra.mrb[0].mxu0 %v2320
      %v3217 = vpop.f32.mrb[0].mxu0
      %v3218 = vadd.f32 %v2913, %v3217
      %v3219 = vpop.f32.mrb[0].mxu0
      %v3220 = vpop.f32.mrb[0].mxu0
      %v3221 = vadd.f32 %v2916, %v3220
      %v3222 = vpop.f32.mrb[0].mxu0
      %3223 = vmatprep.mubr.bf16.mxu0 %v2324
      %3224 = vmatmul.mubr.bf16.gmra.mrb[0].mxu0 %v2323
      %v3225 = vpop.f32.mrb[0].mxu0
      %v3226 = vadd.f32 %v2921, %v3225
      %v3227 = vpop.f32.mrb[0].mxu0
      %v3228 = vpop.f32.mrb[0].mxu0
      %v3229 = vadd.f32 %v2924, %v3228
      %v3230 = vpop.f32.mrb[0].mxu0
      %3231 = vmatprep.mubr.bf16.mxu0 %v2327
      %3232 = vmatmul.mubr.bf16.gmra.mrb[0].mxu0 %v2326
      %v3233 = vpop.f32.mrb[0].mxu0
      %v3234 = vadd.f32 %v2929, %v3233
      %v3235 = vpop.f32.mrb[0].mxu0
      %v3236 = vpop.f32.mrb[0].mxu0
      %v3237 = vadd.f32 %v2932, %v3236
      %v3238 = vpop.f32.mrb[0].mxu0
      %3239 = vmatprep.mubr.bf16.mxu0 %v2330
      %3240 = vmatmul.mubr.bf16.gmra.mrb[0].mxu0 %v2329
      %v3241 = vpop.f32.mrb[0].mxu0
      %v3242 = vadd.f32 %v2937, %v3241
      %v3243 = vpop.f32.mrb[0].mxu0
      %v3244 = vpop.f32.mrb[0].mxu0
      %v3245 = vadd.f32 %v2940, %v3244
      %v3246 = vpop.f32.mrb[0].mxu0
      %3247 = vdwg.mxu0
      %3248 = vmatprep.subr.bf16.mxu0 0
      %3249 = vmatpush1.bf16.msra.mxu0 %v3055
      %3250 = vmatprep.subr.bf16.mxu0 0
      %3251 = vmatpush1.bf16.msra.mxu0 %v3056
      %3252 = vmatprep.subr.bf16.mxu0 0
      %3253 = vmatpush1.bf16.msra.mxu0 %v3057
      %3254 = vmatprep.subr.bf16.mxu0 0
      %3255 = vmatpush1.bf16.msra.mxu0 %v3058
      %3256 = vmatprep.subr.bf16.mxu0 0
      %3257 = vmatpush1.bf16.msra.mxu0 %v3059
      %3258 = vmatprep.subr.bf16.mxu0 0
      %3259 = vmatpush1.bf16.msra.mxu0 %v3060
      %3260 = vmatprep.subr.bf16.mxu0 0
      %3261 = vmatpush1.bf16.msra.mxu0 %v3061
      %3262 = vmatprep.subr.bf16.mxu0 0
      %3263 = vmatpush1.bf16.msra.mxu0 %v3062
      %3264 = vmatprep.subr.bf16.mxu0 0
      %3265 = vmatpush1.bf16.msra.mxu0 0
      %3266 = vmatprep.subr.bf16.mxu0 0
      %3267 = vmatpush1.bf16.msra.mxu0 0
      %3268 = vmatprep.subr.bf16.mxu0 0
      %3269 = vmatpush1.bf16.msra.mxu0 0
      %3270 = vmatprep.subr.bf16.mxu0 0
      %3271 = vmatpush1.bf16.msra.mxu0 0
      %3272 = vmatprep.subr.bf16.mxu0 0
      %3273 = vmatpush1.bf16.msra.mxu0 0
      %3274 = vmatprep.subr.bf16.mxu0 0
      %3275 = vmatpush1.bf16.msra.mxu0 0
      %3276 = vmatprep.subr.bf16.mxu0 0
      %3277 = vmatpush1.bf16.msra.mxu0 0
      %3278 = vmatprep.subr.bf16.mxu0 0
      %3279 = vmatpush1.bf16.msra.mxu0 0
      %3280 = vmatprep.mubr.bf16.mxu0 0
      %3281 = vmatmul.mubr.bf16.gmra.mrb[0].mxu0 %v2286
      %v3282 = vpop.f32.mrb[0].mxu0
      %v3283 = vadd.f32 %v3122, %v3282
      %v3284 = vpop.f32.mrb[0].mxu0
      %v3285 = vpop.f32.mrb[0].mxu0
      %v3286 = vadd.f32 %v3125, %v3285
      %v3287 = vpop.f32.mrb[0].mxu0
      %3288 = vmatprep.mubr.bf16.mxu0 0
      %3289 = vmatmul.mubr.bf16.gmra.mrb[0].mxu0 %v2289
      %v3290 = vpop.f32.mrb[0].mxu0
      %v3291 = vadd.f32 %v3130, %v3290
      %v3292 = vpop.f32.mrb[0].mxu0
      %v3293 = vpop.f32.mrb[0].mxu0
      %v3294 = vadd.f32 %v3133, %v3293
      %v3295 = vpop.f32.mrb[0].mxu0
      %3296 = vmatprep.mubr.bf16.mxu0 0
      %3297 = vmatmul.mubr.bf16.gmra.mrb[0].mxu0 %v2292
      %v3298 = vpop.f32.mrb[0].mxu0
      %v3299 = vadd.f32 %v3138, %v3298
      %v3300 = vpop.f32.mrb[0].mxu0
      %v3301 = vpop.f32.mrb[0].mxu0
      %v3302 = vadd.f32 %v3141, %v3301
      %v3303 = vpop.f32.mrb[0].mxu0
      %3304 = vmatprep.mubr.bf16.mxu0 0
      %3305 = vmatmul.mubr.bf16.gmra.mrb[0].mxu0 %v2295
      %v3306 = vpop.f32.mrb[0].mxu0
      %v3307 = vadd.f32 %v3146, %v3306
      %v3308 = vpop.f32.mrb[0].mxu0
      %v3309 = vpop.f32.mrb[0].mxu0
      %v3310 = vadd.f32 %v3149, %v3309
      %v3311 = vpop.f32.mrb[0].mxu0
      %3312 = vmatprep.mubr.bf16.mxu0 0
      %3313 = vmatmul.mubr.bf16.gmra.mrb[0].mxu0 %v2298
      %v3314 = vpop.f32.mrb[0].mxu0
      %v3315 = vadd.f32 %v3154, %v3314
      %v3316 = vpop.f32.mrb[0].mxu0
      %v3317 = vpop.f32.mrb[0].mxu0
      %v3318 = vadd.f32 %v3157, %v3317
      %v3319 = vpop.f32.mrb[0].mxu0
      %3320 = vmatprep.mubr.bf16.mxu0 0
      %3321 = vmatmul.mubr.bf16.gmra.mrb[0].mxu0 %v2301
      %v3322 = vpop.f32.mrb[0].mxu0
      %v3323 = vadd.f32 %v3162, %v3322
      %v3324 = vpop.f32.mrb[0].mxu0
      %v3325 = vpop.f32.mrb[0].mxu0
      %v3326 = vadd.f32 %v3165, %v3325
      %v3327 = vpop.f32.mrb[0].mxu0
      %3328 = vmatprep.mubr.bf16.mxu0 0
      %3329 = vmatmul.mubr.bf16.gmra.mrb[0].mxu0 %v2304
      %v3330 = vpop.f32.mrb[0].mxu0
      %v3331 = vadd.f32 %v3170, %v3330
      %v3332 = vpop.f32.mrb[0].mxu0
      %v3333 = vpop.f32.mrb[0].mxu0
      %v3334 = vadd.f32 %v3173, %v3333
      %v3335 = vpop.f32.mrb[0].mxu0
      %3336 = vmatprep.mubr.bf16.mxu0 0
      %3337 = vmatmul.mubr.bf16.gmra.mrb[0].mxu0 %v2307
      %v3338 = vpop.f32.mrb[0].mxu0
      %v3339 = vadd.f32 %v3178, %v3338
      %v3340 = vpop.f32.mrb[0].mxu0
      %v3341 = vpop.f32.mrb[0].mxu0
      %v3342 = vadd.f32 %v3181, %v3341
      %v3343 = vpop.f32.mrb[0].mxu0
      %3344 = vmatprep.mubr.bf16.mxu0 0
      %3345 = vmatmul.mubr.bf16.gmra.mrb[0].mxu0 %v2310
      %v3346 = vpop.f32.mrb[0].mxu0
      %v3347 = vadd.f32 %v3186, %v3346
      %v3348 = vpop.f32.mrb[0].mxu0
      %v3349 = vpop.f32.mrb[0].mxu0
      %v3350 = vadd.f32 %v3189, %v3349
      %v3351 = vpop.f32.mrb[0].mxu0
      %3352 = vmatprep.mubr.bf16.mxu0 0
      %3353 = vmatmul.mubr.bf16.gmra.mrb[0].mxu0 %v2313
      %v3354 = vpop.f32.mrb[0].mxu0
      %v3355 = vadd.f32 %v3194, %v3354
      %v3356 = vpop.f32.mrb[0].mxu0
      %v3357 = vpop.f32.mrb[0].mxu0
      %v3358 = vadd.f32 %v3197, %v3357
      %v3359 = vpop.f32.mrb[0].mxu0
      %3360 = vmatprep.mubr.bf16.mxu0 0
      %3361 = vmatmul.mubr.bf16.gmra.mrb[0].mxu0 %v2316
      %v3362 = vpop.f32.mrb[0].mxu0
      %v3363 = vadd.f32 %v3202, %v3362
      %v3364 = vpop.f32.mrb[0].mxu0
      %v3365 = vpop.f32.mrb[0].mxu0
      %v3366 = vadd.f32 %v3205, %v3365
      %v3367 = vpop.f32.mrb[0].mxu0
      %3368 = vmatprep.mubr.bf16.mxu0 0
      %3369 = vmatmul.mubr.bf16.gmra.mrb[0].mxu0 %v2319
      %v3370 = vpop.f32.mrb[0].mxu0
      %v3371 = vadd.f32 %v3210, %v3370
      %v3372 = vpop.f32.mrb[0].mxu0
      %v3373 = vpop.f32.mrb[0].mxu0
      %v3374 = vadd.f32 %v3213, %v3373
      %v3375 = vpop.f32.mrb[0].mxu0
      %3376 = vmatprep.mubr.bf16.mxu0 0
      %3377 = vmatmul.mubr.bf16.gmra.mrb[0].mxu0 %v2322
      %v3378 = vpop.f32.mrb[0].mxu0
      %v3379 = vadd.f32 %v3218, %v3378
      %v3380 = vpop.f32.mrb[0].mxu0
      %v3381 = vpop.f32.mrb[0].mxu0
      %v3382 = vadd.f32 %v3221, %v3381
      %v3383 = vpop.f32.mrb[0].mxu0
      %3384 = vmatprep.mubr.bf16.mxu0 0
      %3385 = vmatmul.mubr.bf16.gmra.mrb[0].mxu0 %v2325
      %v3386 = vpop.f32.mrb[0].mxu0
      %v3387 = vadd.f32 %v3226, %v3386
      %v3388 = vpop.f32.mrb[0].mxu0
      %v3389 = vpop.f32.mrb[0].mxu0
      %v3390 = vadd.f32 %v3229, %v3389
      %v3391 = vpop.f32.mrb[0].mxu0
      %3392 = vmatprep.mubr.bf16.mxu0 0
      %3393 = vmatmul.mubr.bf16.gmra.mrb[0].mxu0 %v2328
      %v3394 = vpop.f32.mrb[0].mxu0
      %v3395 = vadd.f32 %v3234, %v3394
      %v3396 = vpop.f32.mrb[0].mxu0
      %v3397 = vpop.f32.mrb[0].mxu0
      %v3398 = vadd.f32 %v3237, %v3397
      %v3399 = vpop.f32.mrb[0].mxu0
      %3400 = vmatprep.mubr.bf16.mxu0 0
      %3401 = vmatmul.mubr.bf16.gmra.mrb[0].mxu0 %v2331
      %v3402 = vpop.f32.mrb[0].mxu0
      %v3403 = vadd.f32 %v3242, %v3402
      %v3404 = vpop.f32.mrb[0].mxu0
      %v3405 = vpop.f32.mrb[0].mxu0
      %v3406 = vadd.f32 %v3245, %v3405
      %v3407 = vpop.f32.mrb[0].mxu0
      %3408 = vdwg.mxu0
      %s3409 = scalar_lea.vmem [#allocation3], 48
      %v3410 = vld [vmem:[%s3409] sm:$0xff]
      %v3411 = vld [vmem:[%s3409 + $0x8] sm:$0xff]
      %v3412 = vld [vmem:[%s3409 + $0x10] sm:$0xff]
      %v3413 = vld [vmem:[%s3409 + $0x18] sm:$0xff]
      %v3414 = vld [vmem:[%s3409 + $0x20] sm:$0xff]
      %v3415 = vld [vmem:[%s3409 + $0x28] sm:$0xff]
      %v3416 = vld [vmem:[%s3409 + $0x30] sm:$0xff]
      %v3417 = vld [vmem:[%s3409 + $0x38] sm:$0xff]
      %v3418 = vld [vmem:[%s3409 + $0x40] sm:$0xff]
      %v3419 = vld [vmem:[%s3409 + $0x48] sm:$0xff]
      %v3420 = vld [vmem:[%s3409 + $0x50] sm:$0xff]
      %v3421 = vld [vmem:[%s3409 + $0x58] sm:$0xff]
      %v3422 = vld [vmem:[%s3409 + $0x60] sm:$0xff]
      %v3423 = vld [vmem:[%s3409 + $0x68] sm:$0xff]
      %v3424 = vld [vmem:[%s3409 + $0x70] sm:$0xff]
      %v3425 = vld [vmem:[%s3409 + $0x78] sm:$0xff]
      %v3426 = vld [vmem:[%s3409 + $0x80] sm:$0xff]
      %v3427 = vld [vmem:[%s3409 + $0x88] sm:$0xff]
      %v3428 = vld [vmem:[%s3409 + $0x90] sm:$0xff]
      %v3429 = vld [vmem:[%s3409 + $0x98] sm:$0xff]
      %v3430 = vld [vmem:[%s3409 + $0xa0] sm:$0xff]
      %v3431 = vld [vmem:[%s3409 + $0xa8] sm:$0xff]
      %v3432 = vld [vmem:[%s3409 + $0xb0] sm:$0xff]
      %v3433 = vld [vmem:[%s3409 + $0xb8] sm:$0xff]
      %v3434 = vld [vmem:[%s3409 + $0xc0] sm:$0xff]
      %v3435 = vld [vmem:[%s3409 + $0xc8] sm:$0xff]
      %v3436 = vld [vmem:[%s3409 + $0xd0] sm:$0xff]
      %v3437 = vld [vmem:[%s3409 + $0xd8] sm:$0xff]
      %v3438 = vld [vmem:[%s3409 + $0xe0] sm:$0xff]
      %v3439 = vld [vmem:[%s3409 + $0xe8] sm:$0xff]
      %v3440 = vld [vmem:[%s3409 + $0xf0] sm:$0xff]
      %v3441 = vld [vmem:[%s3409 + $0xf8] sm:$0xff]
      %v3442 = vld [vmem:[%s3409 + $0x100] sm:$0xff]
      %v3443 = vld [vmem:[%s3409 + $0x108] sm:$0xff]
      %v3444 = vld [vmem:[%s3409 + $0x110] sm:$0xff]
      %v3445 = vld [vmem:[%s3409 + $0x118] sm:$0xff]
      %v3446 = vld [vmem:[%s3409 + $0x120] sm:$0xff]
      %v3447 = vld [vmem:[%s3409 + $0x128] sm:$0xff]
      %v3448 = vld [vmem:[%s3409 + $0x130] sm:$0xff]
      %v3449 = vld [vmem:[%s3409 + $0x138] sm:$0xff]
      %v3450 = vld [vmem:[%s3409 + $0x140] sm:$0xff]
      %v3451 = vld [vmem:[%s3409 + $0x148] sm:$0xff]
      %v3452 = vld [vmem:[%s3409 + $0x150] sm:$0xff]
      %v3453 = vld [vmem:[%s3409 + $0x158] sm:$0xff]
      %v3454 = vld [vmem:[%s3409 + $0x160] sm:$0xff]
      %v3455 = vld [vmem:[%s3409 + $0x168] sm:$0xff]
      %v3456 = vld [vmem:[%s3409 + $0x170] sm:$0xff]
      %v3457 = vld [vmem:[%s3409 + $0x178] sm:$0xff]
      %s3458 = scalar_lea.vmem %s3, 384
      %v3459 = vld [vmem:[%s3458] sm:$0xf]
      %v3460 = vld [vmem:[%s3458 + $0x4] sm:$0xf]
      %v3461 = vld [vmem:[%s3458 + $0x8] sm:$0xf]
      %v3462 = vld [vmem:[%s3458 + $0xc] sm:$0xf]
      %v3463 = vld [vmem:[%s3458 + $0x10] sm:$0xf]
      %v3464 = vld [vmem:[%s3458 + $0x14] sm:$0xf]
      %v3465 = vld [vmem:[%s3458 + $0x18] sm:$0xf]
      %v3466 = vld [vmem:[%s3458 + $0x1c] sm:$0xf]
      %v3467 = vld [vmem:[%s3458 + $0x20] sm:$0xf]
      %v3468 = vld [vmem:[%s3458 + $0x24] sm:$0xf]
      %v3469 = vld [vmem:[%s3458 + $0x28] sm:$0xf]
      %v3470 = vld [vmem:[%s3458 + $0x2c] sm:$0xf]
      %v3471 = vld [vmem:[%s3458 + $0x30] sm:$0xf]
      %v3472 = vld [vmem:[%s3458 + $0x34] sm:$0xf]
      %v3473 = vld [vmem:[%s3458 + $0x38] sm:$0xf]
      %v3474 = vld [vmem:[%s3458 + $0x3c] sm:$0xf]
      %v3475 = vld [vmem:[%s3458 + $0x40] sm:$0xf]
      %v3476 = vld [vmem:[%s3458 + $0x44] sm:$0xf]
      %v3477 = vld [vmem:[%s3458 + $0x48] sm:$0xf]
      %v3478 = vld [vmem:[%s3458 + $0x4c] sm:$0xf]
      %v3479 = vld [vmem:[%s3458 + $0x50] sm:$0xf]
      %v3480 = vld [vmem:[%s3458 + $0x54] sm:$0xf]
      %v3481 = vld [vmem:[%s3458 + $0x58] sm:$0xf]
      %v3482 = vld [vmem:[%s3458 + $0x5c] sm:$0xf]
      %v3483 = vld [vmem:[%s3458 + $0x60] sm:$0xf]
      %v3484 = vld [vmem:[%s3458 + $0x64] sm:$0xf]
      %v3485 = vld [vmem:[%s3458 + $0x68] sm:$0xf]
      %v3486 = vld [vmem:[%s3458 + $0x6c] sm:$0xf]
      %v3487 = vld [vmem:[%s3458 + $0x70] sm:$0xf]
      %v3488 = vld [vmem:[%s3458 + $0x74] sm:$0xf]
      %v3489 = vld [vmem:[%s3458 + $0x78] sm:$0xf]
      %v3490 = vld [vmem:[%s3458 + $0x7c] sm:$0xf]
      %v3491 = vld [vmem:[%s3458 + $0x80] sm:$0xf]
      %v3492 = vld [vmem:[%s3458 + $0x84] sm:$0xf]
      %v3493 = vld [vmem:[%s3458 + $0x88] sm:$0xf]
      %v3494 = vld [vmem:[%s3458 + $0x8c] sm:$0xf]
      %v3495 = vld [vmem:[%s3458 + $0x90] sm:$0xf]
      %v3496 = vld [vmem:[%s3458 + $0x94] sm:$0xf]
      %v3497 = vld [vmem:[%s3458 + $0x98] sm:$0xf]
      %v3498 = vld [vmem:[%s3458 + $0x9c] sm:$0xf]
      %v3499 = vld [vmem:[%s3458 + $0xa0] sm:$0xf]
      %v3500 = vld [vmem:[%s3458 + $0xa4] sm:$0xf]
      %v3501 = vld [vmem:[%s3458 + $0xa8] sm:$0xf]
      %v3502 = vld [vmem:[%s3458 + $0xac] sm:$0xf]
      %v3503 = vld [vmem:[%s3458 + $0xb0] sm:$0xf]
      %v3504 = vld [vmem:[%s3458 + $0xb4] sm:$0xf]
      %v3505 = vld [vmem:[%s3458 + $0xb8] sm:$0xf]
      %v3506 = vld [vmem:[%s3458 + $0xbc] sm:$0xf]
      %v3555 = vunpack.c.l.b16 %v3459
      %v3556 = vunpack.c.l.b16 %v3460
      %v3557 = vunpack.c.l.b16 %v3461
      %v3558 = vunpack.c.l.b16 %v3462
      %v3559 = vunpack.c.l.b16 %v3463
      %v3560 = vunpack.c.l.b16 %v3464
      %v3561 = vunpack.c.l.b16 %v3465
      %v3562 = vunpack.c.l.b16 %v3466
      %v3563 = vunpack.c.l.b16 %v3467
      %v3564 = vunpack.c.l.b16 %v3468
      %v3565 = vunpack.c.l.b16 %v3469
      %v3566 = vunpack.c.l.b16 %v3470
      %v3567 = vunpack.c.l.b16 %v3471
      %v3568 = vunpack.c.l.b16 %v3472
      %v3569 = vunpack.c.l.b16 %v3473
      %v3570 = vunpack.c.l.b16 %v3474
      %v3571 = vunpack.c.l.b16 %v3475
      %v3572 = vunpack.c.l.b16 %v3476
      %v3573 = vunpack.c.l.b16 %v3477
      %v3574 = vunpack.c.l.b16 %v3478
      %v3575 = vunpack.c.l.b16 %v3479
      %v3576 = vunpack.c.l.b16 %v3480
      %v3577 = vunpack.c.l.b16 %v3481
      %v3578 = vunpack.c.l.b16 %v3482
      %v3579 = vunpack.c.l.b16 %v3483
      %v3580 = vunpack.c.l.b16 %v3484
      %v3581 = vunpack.c.l.b16 %v3485
      %v3582 = vunpack.c.l.b16 %v3486
      %v3583 = vunpack.c.l.b16 %v3487
      %v3584 = vunpack.c.l.b16 %v3488
      %v3585 = vunpack.c.l.b16 %v3489
      %v3586 = vunpack.c.l.b16 %v3490
      %v3587 = vunpack.c.l.b16 %v3491
      %v3588 = vunpack.c.l.b16 %v3492
      %v3589 = vunpack.c.l.b16 %v3493
      %v3590 = vunpack.c.l.b16 %v3494
      %v3591 = vunpack.c.l.b16 %v3495
      %v3592 = vunpack.c.l.b16 %v3496
      %v3593 = vunpack.c.l.b16 %v3497
      %v3594 = vunpack.c.l.b16 %v3498
      %v3595 = vunpack.c.l.b16 %v3499
      %v3596 = vunpack.c.l.b16 %v3500
      %v3597 = vunpack.c.l.b16 %v3501
      %v3598 = vunpack.c.l.b16 %v3502
      %v3599 = vunpack.c.l.b16 %v3503
      %v3600 = vunpack.c.l.b16 %v3504
      %v3601 = vunpack.c.l.b16 %v3505
      %v3602 = vunpack.c.l.b16 %v3506
      %v3603 = vpack.c.b16 %v3556, %v3555
      %v3604 = vpack.c.b16 %v3558, %v3557
      %v3605 = vpack.c.b16 %v3560, %v3559
      %v3606 = vpack.c.b16 %v3562, %v3561
      %v3607 = vpack.c.b16 %v3564, %v3563
      %v3608 = vpack.c.b16 %v3566, %v3565
      %v3609 = vpack.c.b16 %v3568, %v3567
      %v3610 = vpack.c.b16 %v3570, %v3569
      %v3611 = vpack.c.b16 %v3572, %v3571
      %v3612 = vpack.c.b16 %v3574, %v3573
      %v3613 = vpack.c.b16 %v3576, %v3575
      %v3614 = vpack.c.b16 %v3578, %v3577
      %v3615 = vpack.c.b16 %v3580, %v3579
      %v3616 = vpack.c.b16 %v3582, %v3581
      %v3617 = vpack.c.b16 %v3584, %v3583
      %v3618 = vpack.c.b16 %v3586, %v3585
      %v3619 = vpack.c.b16 %v3588, %v3587
      %v3620 = vpack.c.b16 %v3590, %v3589
      %v3621 = vpack.c.b16 %v3592, %v3591
      %v3622 = vpack.c.b16 %v3594, %v3593
      %v3623 = vpack.c.b16 %v3596, %v3595
      %v3624 = vpack.c.b16 %v3598, %v3597
      %v3625 = vpack.c.b16 %v3600, %v3599
      %v3626 = vpack.c.b16 %v3602, %v3601
      %3651 = vmatprep.subr.bf16.mxu0 0
      %3652 = vmatpush1.bf16.msra.mxu0 %v3603
      %3653 = vmatprep.subr.bf16.mxu0 0
      %3654 = vmatpush1.bf16.msra.mxu0 %v3604
      %3655 = vmatprep.subr.bf16.mxu0 0
      %3656 = vmatpush1.bf16.msra.mxu0 %v3605
      %3657 = vmatprep.subr.bf16.mxu0 0
      %3658 = vmatpush1.bf16.msra.mxu0 %v3606
      %3659 = vmatprep.subr.bf16.mxu0 0
      %3660 = vmatpush1.bf16.msra.mxu0 %v3607
      %3661 = vmatprep.subr.bf16.mxu0 0
      %3662 = vmatpush1.bf16.msra.mxu0 %v3608
      %3663 = vmatprep.subr.bf16.mxu0 0
      %3664 = vmatpush1.bf16.msra.mxu0 %v3609
      %3665 = vmatprep.subr.bf16.mxu0 0
      %3666 = vmatpush1.bf16.msra.mxu0 %v3610
      %3667 = vmatprep.subr.bf16.mxu0 0
      %3668 = vmatpush1.bf16.msra.mxu0 %v3611
      %3669 = vmatprep.subr.bf16.mxu0 0
      %3670 = vmatpush1.bf16.msra.mxu0 %v3612
      %3671 = vmatprep.subr.bf16.mxu0 0
      %3672 = vmatpush1.bf16.msra.mxu0 %v3613
      %3673 = vmatprep.subr.bf16.mxu0 0
      %3674 = vmatpush1.bf16.msra.mxu0 %v3614
      %3675 = vmatprep.subr.bf16.mxu0 0
      %3676 = vmatpush1.bf16.msra.mxu0 %v3615
      %3677 = vmatprep.subr.bf16.mxu0 0
      %3678 = vmatpush1.bf16.msra.mxu0 %v3616
      %3679 = vmatprep.subr.bf16.mxu0 0
      %3680 = vmatpush1.bf16.msra.mxu0 %v3617
      %3681 = vmatprep.subr.bf16.mxu0 0
      %3682 = vmatpush1.bf16.msra.mxu0 %v3618
      %3683 = vmatprep.mubr.bf16.mxu0 %v3411
      %3684 = vmatmul.mubr.bf16.gmra.mrb[0].mxu0 %v3410
      %v3685 = vpop.f32.mrb[0].mxu0
      %v3686 = vadd.f32 0.0, %v3685
      %v3687 = vpop.f32.mrb[0].mxu0
      %v3688 = vpop.f32.mrb[0].mxu0
      %v3689 = vadd.f32 0.0, %v3688
      %v3690 = vpop.f32.mrb[0].mxu0
      %3691 = vmatprep.mubr.bf16.mxu0 %v3414
      %3692 = vmatmul.mubr.bf16.gmra.mrb[0].mxu0 %v3413
      %v3693 = vpop.f32.mrb[0].mxu0
      %v3694 = vadd.f32 0.0, %v3693
      %v3695 = vpop.f32.mrb[0].mxu0
      %v3696 = vpop.f32.mrb[0].mxu0
      %v3697 = vadd.f32 0.0, %v3696
      %v3698 = vpop.f32.mrb[0].mxu0
      %3699 = vmatprep.mubr.bf16.mxu0 %v3417
      %3700 = vmatmul.mubr.bf16.gmra.mrb[0].mxu0 %v3416
      %v3701 = vpop.f32.mrb[0].mxu0
      %v3702 = vadd.f32 0.0, %v3701
      %v3703 = vpop.f32.mrb[0].mxu0
      %v3704 = vpop.f32.mrb[0].mxu0
      %v3705 = vadd.f32 0.0, %v3704
      %v3706 = vpop.f32.mrb[0].mxu0
      %3707 = vmatprep.mubr.bf16.mxu0 %v3420
      %3708 = vmatmul.mubr.bf16.gmra.mrb[0].mxu0 %v3419
      %v3709 = vpop.f32.mrb[0].mxu0
      %v3710 = vadd.f32 0.0, %v3709
      %v3711 = vpop.f32.mrb[0].mxu0
      %v3712 = vpop.f32.mrb[0].mxu0
      %v3713 = vadd.f32 0.0, %v3712
      %v3714 = vpop.f32.mrb[0].mxu0
      %3715 = vmatprep.mubr.bf16.mxu0 %v3423
      %3716 = vmatmul.mubr.bf16.gmra.mrb[0].mxu0 %v3422
      %v3717 = vpop.f32.mrb[0].mxu0
      %v3718 = vadd.f32 0.0, %v3717
      %v3719 = vpop.f32.mrb[0].mxu0
      %v3720 = vpop.f32.mrb[0].mxu0
      %v3721 = vadd.f32 0.0, %v3720
      %v3722 = vpop.f32.mrb[0].mxu0
      %3723 = vmatprep.mubr.bf16.mxu0 %v3426
      %3724 = vmatmul.mubr.bf16.gmra.mrb[0].mxu0 %v3425
      %v3725 = vpop.f32.mrb[0].mxu0
      %v3726 = vadd.f32 0.0, %v3725
      %v3727 = vpop.f32.mrb[0].mxu0
      %v3728 = vpop.f32.mrb[0].mxu0
      %v3729 = vadd.f32 0.0, %v3728
      %v3730 = vpop.f32.mrb[0].mxu0
      %3731 = vmatprep.mubr.bf16.mxu0 %v3429
      %3732 = vmatmul.mubr.bf16.gmra.mrb[0].mxu0 %v3428
      %v3733 = vpop.f32.mrb[0].mxu0
      %v3734 = vadd.f32 0.0, %v3733
      %v3735 = vpop.f32.mrb[0].mxu0
      %v3736 = vpop.f32.mrb[0].mxu0
      %v3737 = vadd.f32 0.0, %v3736
      %v3738 = vpop.f32.mrb[0].mxu0
      %3739 = vmatprep.mubr.bf16.mxu0 %v3432
      %3740 = vmatmul.mubr.bf16.gmra.mrb[0].mxu0 %v3431
      %v3741 = vpop.f32.mrb[0].mxu0
      %v3742 = vadd.f32 0.0, %v3741
      %v3743 = vpop.f32.mrb[0].mxu0
      %v3744 = vpop.f32.mrb[0].mxu0
      %v3745 = vadd.f32 0.0, %v3744
      %v3746 = vpop.f32.mrb[0].mxu0
      %3747 = vmatprep.mubr.bf16.mxu0 %v3435
      %3748 = vmatmul.mubr.bf16.gmra.mrb[0].mxu0 %v3434
      %v3749 = vpop.f32.mrb[0].mxu0
      %v3750 = vadd.f32 0.0, %v3749
      %v3751 = vpop.f32.mrb[0].mxu0
      %v3752 = vpop.f32.mrb[0].mxu0
      %v3753 = vadd.f32 0.0, %v3752
      %v3754 = vpop.f32.mrb[0].mxu0
      %3755 = vmatprep.mubr.bf16.mxu0 %v3438
      %3756 = vmatmul.mubr.bf16.gmra.mrb[0].mxu0 %v3437
      %v3757 = vpop.f32.mrb[0].mxu0
      %v3758 = vadd.f32 0.0, %v3757
      %v3759 = vpop.f32.mrb[0].mxu0
      %v3760 = vpop.f32.mrb[0].mxu0
      %v3761 = vadd.f32 0.0, %v3760
      %v3762 = vpop.f32.mrb[0].mxu0
      %3763 = vmatprep.mubr.bf16.mxu0 %v3441
      %3764 = vmatmul.mubr.bf16.gmra.mrb[0].mxu0 %v3440
      %v3765 = vpop.f32.mrb[0].mxu0
      %v3766 = vadd.f32 0.0, %v3765
      %v3767 = vpop.f32.mrb[0].mxu0
      %v3768 = vpop.f32.mrb[0].mxu0
      %v3769 = vadd.f32 0.0, %v3768
      %v3770 = vpop.f32.mrb[0].mxu0
      %3771 = vmatprep.mubr.bf16.mxu0 %v3444
      %3772 = vmatmul.mubr.bf16.gmra.mrb[0].mxu0 %v3443
      %v3773 = vpop.f32.mrb[0].mxu0
      %v3774 = vadd.f32 0.0, %v3773
      %v3775 = vpop.f32.mrb[0].mxu0
      %v3776 = vpop.f32.mrb[0].mxu0
      %v3777 = vadd.f32 0.0, %v3776
      %v3778 = vpop.f32.mrb[0].mxu0
      %3779 = vmatprep.mubr.bf16.mxu0 %v3447
      %3780 = vmatmul.mubr.bf16.gmra.mrb[0].mxu0 %v3446
      %v3781 = vpop.f32.mrb[0].mxu0
      %v3782 = vadd.f32 0.0, %v3781
      %v3783 = vpop.f32.mrb[0].mxu0
      %v3784 = vpop.f32.mrb[0].mxu0
      %v3785 = vadd.f32 0.0, %v3784
      %v3786 = vpop.f32.mrb[0].mxu0
      %3787 = vmatprep.mubr.bf16.mxu0 %v3450
      %3788 = vmatmul.mubr.bf16.gmra.mrb[0].mxu0 %v3449
      %v3789 = vpop.f32.mrb[0].mxu0
      %v3790 = vadd.f32 0.0, %v3789
      %v3791 = vpop.f32.mrb[0].mxu0
      %v3792 = vpop.f32.mrb[0].mxu0
      %v3793 = vadd.f32 0.0, %v3792
      %v3794 = vpop.f32.mrb[0].mxu0
      %3795 = vmatprep.mubr.bf16.mxu0 %v3453
      %3796 = vmatmul.mubr.bf16.gmra.mrb[0].mxu0 %v3452
      %v3797 = vpop.f32.mrb[0].mxu0
      %v3798 = vadd.f32 0.0, %v3797
      %v3799 = vpop.f32.mrb[0].mxu0
      %v3800 = vpop.f32.mrb[0].mxu0
      %v3801 = vadd.f32 0.0, %v3800
      %v3802 = vpop.f32.mrb[0].mxu0
      %3803 = vmatprep.mubr.bf16.mxu0 %v3456
      %3804 = vmatmul.mubr.bf16.gmra.mrb[0].mxu0 %v3455
      %v3805 = vpop.f32.mrb[0].mxu0
      %v3806 = vadd.f32 0.0, %v3805
      %v3807 = vpop.f32.mrb[0].mxu0
      %v3808 = vpop.f32.mrb[0].mxu0
      %v3809 = vadd.f32 0.0, %v3808
      %v3810 = vpop.f32.mrb[0].mxu0
      %3811 = vdwg.mxu0
      %3812 = vmatprep.subr.bf16.mxu0 0
      %3813 = vmatpush1.bf16.msra.mxu0 %v3619
      %3814 = vmatprep.subr.bf16.mxu0 0
      %3815 = vmatpush1.bf16.msra.mxu0 %v3620
      %3816 = vmatprep.subr.bf16.mxu0 0
      %3817 = vmatpush1.bf16.msra.mxu0 %v3621
      %3818 = vmatprep.subr.bf16.mxu0 0
      %3819 = vmatpush1.bf16.msra.mxu0 %v3622
      %3820 = vmatprep.subr.bf16.mxu0 0
      %3821 = vmatpush1.bf16.msra.mxu0 %v3623
      %3822 = vmatprep.subr.bf16.mxu0 0
      %3823 = vmatpush1.bf16.msra.mxu0 %v3624
      %3824 = vmatprep.subr.bf16.mxu0 0
      %3825 = vmatpush1.bf16.msra.mxu0 %v3625
      %3826 = vmatprep.subr.bf16.mxu0 0
      %3827 = vmatpush1.bf16.msra.mxu0 %v3626
      %3828 = vmatprep.subr.bf16.mxu0 0
      %3829 = vmatpush1.bf16.msra.mxu0 0
      %3830 = vmatprep.subr.bf16.mxu0 0
      %3831 = vmatpush1.bf16.msra.mxu0 0
      %3832 = vmatprep.subr.bf16.mxu0 0
      %3833 = vmatpush1.bf16.msra.mxu0 0
      %3834 = vmatprep.subr.bf16.mxu0 0
      %3835 = vmatpush1.bf16.msra.mxu0 0
      %3836 = vmatprep.subr.bf16.mxu0 0
      %3837 = vmatpush1.bf16.msra.mxu0 0
      %3838 = vmatprep.subr.bf16.mxu0 0
      %3839 = vmatpush1.bf16.msra.mxu0 0
      %3840 = vmatprep.subr.bf16.mxu0 0
      %3841 = vmatpush1.bf16.msra.mxu0 0
      %3842 = vmatprep.subr.bf16.mxu0 0
      %3843 = vmatpush1.bf16.msra.mxu0 0
      %3844 = vmatprep.mubr.bf16.mxu0 0
      %3845 = vmatmul.mubr.bf16.gmra.mrb[0].mxu0 %v3412
      %v3846 = vpop.f32.mrb[0].mxu0
      %v3847 = vadd.f32 %v3686, %v3846
      %v3848 = vpop.f32.mrb[0].mxu0
      %v3849 = vpop.f32.mrb[0].mxu0
      %v3850 = vadd.f32 %v3689, %v3849
      %v3851 = vpop.f32.mrb[0].mxu0
      %3852 = vmatprep.mubr.bf16.mxu0 0
      %3853 = vmatmul.mubr.bf16.gmra.mrb[0].mxu0 %v3415
      %v3854 = vpop.f32.mrb[0].mxu0
      %v3855 = vadd.f32 %v3694, %v3854
      %v3856 = vpop.f32.mrb[0].mxu0
      %v3857 = vpop.f32.mrb[0].mxu0
      %v3858 = vadd.f32 %v3697, %v3857
      %v3859 = vpop.f32.mrb[0].mxu0
      %3860 = vmatprep.mubr.bf16.mxu0 0
      %3861 = vmatmul.mubr.bf16.gmra.mrb[0].mxu0 %v3418
      %v3862 = vpop.f32.mrb[0].mxu0
      %v3863 = vadd.f32 %v3702, %v3862
      %v3864 = vpop.f32.mrb[0].mxu0
      %v3865 = vpop.f32.mrb[0].mxu0
      %v3866 = vadd.f32 %v3705, %v3865
      %v3867 = vpop.f32.mrb[0].mxu0
      %3868 = vmatprep.mubr.bf16.mxu0 0
      %3869 = vmatmul.mubr.bf16.gmra.mrb[0].mxu0 %v3421
      %v3870 = vpop.f32.mrb[0].mxu0
      %v3871 = vadd.f32 %v3710, %v3870
      %v3872 = vpop.f32.mrb[0].mxu0
      %v3873 = vpop.f32.mrb[0].mxu0
      %v3874 = vadd.f32 %v3713, %v3873
      %v3875 = vpop.f32.mrb[0].mxu0
      %3876 = vmatprep.mubr.bf16.mxu0 0
      %3877 = vmatmul.mubr.bf16.gmra.mrb[0].mxu0 %v3424
      %v3878 = vpop.f32.mrb[0].mxu0
      %v3879 = vadd.f32 %v3718, %v3878
      %v3880 = vpop.f32.mrb[0].mxu0
      %v3881 = vpop.f32.mrb[0].mxu0
      %v3882 = vadd.f32 %v3721, %v3881
      %v3883 = vpop.f32.mrb[0].mxu0
      %3884 = vmatprep.mubr.bf16.mxu0 0
      %3885 = vmatmul.mubr.bf16.gmra.mrb[0].mxu0 %v3427
      %v3886 = vpop.f32.mrb[0].mxu0
      %v3887 = vadd.f32 %v3726, %v3886
      %v3888 = vpop.f32.mrb[0].mxu0
      %v3889 = vpop.f32.mrb[0].mxu0
      %v3890 = vadd.f32 %v3729, %v3889
      %v3891 = vpop.f32.mrb[0].mxu0
      %3892 = vmatprep.mubr.bf16.mxu0 0
      %3893 = vmatmul.mubr.bf16.gmra.mrb[0].mxu0 %v3430
      %v3894 = vpop.f32.mrb[0].mxu0
      %v3895 = vadd.f32 %v3734, %v3894
      %v3896 = vpop.f32.mrb[0].mxu0
      %v3897 = vpop.f32.mrb[0].mxu0
      %v3898 = vadd.f32 %v3737, %v3897
      %v3899 = vpop.f32.mrb[0].mxu0
      %3900 = vmatprep.mubr.bf16.mxu0 0
      %3901 = vmatmul.mubr.bf16.gmra.mrb[0].mxu0 %v3433
      %v3902 = vpop.f32.mrb[0].mxu0
      %v3903 = vadd.f32 %v3742, %v3902
      %v3904 = vpop.f32.mrb[0].mxu0
      %v3905 = vpop.f32.mrb[0].mxu0
      %v3906 = vadd.f32 %v3745, %v3905
      %v3907 = vpop.f32.mrb[0].mxu0
      %3908 = vmatprep.mubr.bf16.mxu0 0
      %3909 = vmatmul.mubr.bf16.gmra.mrb[0].mxu0 %v3436
      %v3910 = vpop.f32.mrb[0].mxu0
      %v3911 = vadd.f32 %v3750, %v3910
      %v3912 = vpop.f32.mrb[0].mxu0
      %v3913 = vpop.f32.mrb[0].mxu0
      %v3914 = vadd.f32 %v3753, %v3913
      %v3915 = vpop.f32.mrb[0].mxu0
      %3916 = vmatprep.mubr.bf16.mxu0 0
      %3917 = vmatmul.mubr.bf16.gmra.mrb[0].mxu0 %v3439
      %v3918 = vpop.f32.mrb[0].mxu0
      %v3919 = vadd.f32 %v3758, %v3918
      %v3920 = vpop.f32.mrb[0].mxu0
      %v3921 = vpop.f32.mrb[0].mxu0
      %v3922 = vadd.f32 %v3761, %v3921
      %v3923 = vpop.f32.mrb[0].mxu0
      %3924 = vmatprep.mubr.bf16.mxu0 0
      %3925 = vmatmul.mubr.bf16.gmra.mrb[0].mxu0 %v3442
      %v3926 = vpop.f32.mrb[0].mxu0
      %v3927 = vadd.f32 %v3766, %v3926
      %v3928 = vpop.f32.mrb[0].mxu0
      %v3929 = vpop.f32.mrb[0].mxu0
      %v3930 = vadd.f32 %v3769, %v3929
      %v3931 = vpop.f32.mrb[0].mxu0
      %3932 = vmatprep.mubr.bf16.mxu0 0
      %3933 = vmatmul.mubr.bf16.gmra.mrb[0].mxu0 %v3445
      %v3934 = vpop.f32.mrb[0].mxu0
      %v3935 = vadd.f32 %v3774, %v3934
      %v3936 = vpop.f32.mrb[0].mxu0
      %v3937 = vpop.f32.mrb[0].mxu0
      %v3938 = vadd.f32 %v3777, %v3937
      %v3939 = vpop.f32.mrb[0].mxu0
      %3940 = vmatprep.mubr.bf16.mxu0 0
      %3941 = vmatmul.mubr.bf16.gmra.mrb[0].mxu0 %v3448
      %v3942 = vpop.f32.mrb[0].mxu0
      %v3943 = vadd.f32 %v3782, %v3942
      %v3944 = vpop.f32.mrb[0].mxu0
      %v3945 = vpop.f32.mrb[0].mxu0
      %v3946 = vadd.f32 %v3785, %v3945
      %v3947 = vpop.f32.mrb[0].mxu0
      %3948 = vmatprep.mubr.bf16.mxu0 0
      %3949 = vmatmul.mubr.bf16.gmra.mrb[0].mxu0 %v3451
      %v3950 = vpop.f32.mrb[0].mxu0
      %v3951 = vadd.f32 %v3790, %v3950
      %v3952 = vpop.f32.mrb[0].mxu0
      %v3953 = vpop.f32.mrb[0].mxu0
      %v3954 = vadd.f32 %v3793, %v3953
      %v3955 = vpop.f32.mrb[0].mxu0
      %3956 = vmatprep.mubr.bf16.mxu0 0
      %3957 = vmatmul.mubr.bf16.gmra.mrb[0].mxu0 %v3454
      %v3958 = vpop.f32.mrb[0].mxu0
      %v3959 = vadd.f32 %v3798, %v3958
      %v3960 = vpop.f32.mrb[0].mxu0
      %v3961 = vpop.f32.mrb[0].mxu0
      %v3962 = vadd.f32 %v3801, %v3961
      %v3963 = vpop.f32.mrb[0].mxu0
      %3964 = vmatprep.mubr.bf16.mxu0 0
      %3965 = vmatmul.mubr.bf16.gmra.mrb[0].mxu0 %v3457
      %v3966 = vpop.f32.mrb[0].mxu0
      %v3967 = vadd.f32 %v3806, %v3966
      %v3968 = vpop.f32.mrb[0].mxu0
      %v3969 = vpop.f32.mrb[0].mxu0
      %v3970 = vadd.f32 %v3809, %v3969
      %v3971 = vpop.f32.mrb[0].mxu0
      %3972 = vdwg.mxu0
      %v3973 = vadd.f32 %v3283, %v3847
      %v3974 = vadd.f32 %v3286, %v3850
      %v3975 = vadd.f32 %v3291, %v3855
      %v3976 = vadd.f32 %v3294, %v3858
      %v3977 = vadd.f32 %v3299, %v3863
      %v3978 = vadd.f32 %v3302, %v3866
      %v3979 = vadd.f32 %v3307, %v3871
      %v3980 = vadd.f32 %v3310, %v3874
      %v3981 = vadd.f32 %v3315, %v3879
      %v3982 = vadd.f32 %v3318, %v3882
      %v3983 = vadd.f32 %v3323, %v3887
      %v3984 = vadd.f32 %v3326, %v3890
      %v3985 = vadd.f32 %v3331, %v3895
      %v3986 = vadd.f32 %v3334, %v3898
      %v3987 = vadd.f32 %v3339, %v3903
      %v3988 = vadd.f32 %v3342, %v3906
      %v3989 = vadd.f32 %v3347, %v3911
      %v3990 = vadd.f32 %v3350, %v3914
      %v3991 = vadd.f32 %v3355, %v3919
      %v3992 = vadd.f32 %v3358, %v3922
      %v3993 = vadd.f32 %v3363, %v3927
      %v3994 = vadd.f32 %v3366, %v3930
      %v3995 = vadd.f32 %v3371, %v3935
      %v3996 = vadd.f32 %v3374, %v3938
      %v3997 = vadd.f32 %v3379, %v3943
      %v3998 = vadd.f32 %v3382, %v3946
      %v3999 = vadd.f32 %v3387, %v3951
      %v4000 = vadd.f32 %v3390, %v3954
      %v4001 = vadd.f32 %v3395, %v3959
      %v4002 = vadd.f32 %v3398, %v3962
      %v4003 = vadd.f32 %v3403, %v3967
      %v4004 = vadd.f32 %v3406, %v3970
      %v4005 = vld [vmem:[%s4] sm:$0x1]
      %v4007 = vlaneseq
      %v4008 = vshrl.u32 %v4007, 7
      %v4009 = vsub.s32 0, %v4008
      %v4010 = vrot.slane %v4005, %v4009
      %v4012 = vadd.f32 %v3973, %v4010
      %v4013 = vadd.f32 %v3974, %v4010
      %v4014 = vadd.f32 %v3975, %v4010
      %v4015 = vadd.f32 %v3976, %v4010
      %v4016 = vadd.f32 %v3977, %v4010
      %v4017 = vadd.f32 %v3978, %v4010
      %v4018 = vadd.f32 %v3979, %v4010
      %v4019 = vadd.f32 %v3980, %v4010
      %v4020 = vadd.f32 %v3981, %v4010
      %v4021 = vadd.f32 %v3982, %v4010
      %v4022 = vadd.f32 %v3983, %v4010
      %v4023 = vadd.f32 %v3984, %v4010
      %v4024 = vadd.f32 %v3985, %v4010
      %v4025 = vadd.f32 %v3986, %v4010
      %v4026 = vadd.f32 %v3987, %v4010
      %v4027 = vadd.f32 %v3988, %v4010
      %v4028 = vadd.f32 %v3989, %v4010
      %v4029 = vadd.f32 %v3990, %v4010
      %v4030 = vadd.f32 %v3991, %v4010
      %v4031 = vadd.f32 %v3992, %v4010
      %v4032 = vadd.f32 %v3993, %v4010
      %v4033 = vadd.f32 %v3994, %v4010
      %v4034 = vadd.f32 %v3995, %v4010
      %v4035 = vadd.f32 %v3996, %v4010
      %v4036 = vadd.f32 %v3997, %v4010
      %v4037 = vadd.f32 %v3998, %v4010
      %v4038 = vadd.f32 %v3999, %v4010
      %v4039 = vadd.f32 %v4000, %v4010
      %v4040 = vadd.f32 %v4001, %v4010
      %v4041 = vadd.f32 %v4002, %v4010
      %v4042 = vadd.f32 %v4003, %v4010
      %v4043 = vadd.f32 %v4004, %v4010
      %v4044 = vmax.f32 %v4012, 0.0
      %v4045 = vmax.f32 %v4013, 0.0
      %v4046 = vmax.f32 %v4014, 0.0
      %v4047 = vmax.f32 %v4015, 0.0
      %v4048 = vmax.f32 %v4016, 0.0
      %v4049 = vmax.f32 %v4017, 0.0
      %v4050 = vmax.f32 %v4018, 0.0
      %v4051 = vmax.f32 %v4019, 0.0
      %v4052 = vmax.f32 %v4020, 0.0
      %v4053 = vmax.f32 %v4021, 0.0
      %v4054 = vmax.f32 %v4022, 0.0
      %v4055 = vmax.f32 %v4023, 0.0
      %v4056 = vmax.f32 %v4024, 0.0
      %v4057 = vmax.f32 %v4025, 0.0
      %v4058 = vmax.f32 %v4026, 0.0
      %v4059 = vmax.f32 %v4027, 0.0
      %v4060 = vmax.f32 %v4028, 0.0
      %v4061 = vmax.f32 %v4029, 0.0
      %v4062 = vmax.f32 %v4030, 0.0
      %v4063 = vmax.f32 %v4031, 0.0
      %v4064 = vmax.f32 %v4032, 0.0
      %v4065 = vmax.f32 %v4033, 0.0
      %v4066 = vmax.f32 %v4034, 0.0
      %v4067 = vmax.f32 %v4035, 0.0
      %v4068 = vmax.f32 %v4036, 0.0
      %v4069 = vmax.f32 %v4037, 0.0
      %v4070 = vmax.f32 %v4038, 0.0
      %v4071 = vmax.f32 %v4039, 0.0
      %v4072 = vmax.f32 %v4040, 0.0
      %v4073 = vmax.f32 %v4041, 0.0
      %v4074 = vmax.f32 %v4042, 0.0
      %v4075 = vmax.f32 %v4043, 0.0
      %v4076 = vadd.f32 %v4044, %v4045
      %v4077 = vadd.f32 %v4076, %v4046
      %v4078 = vadd.f32 %v4077, %v4047
      %v4079 = vadd.f32 %v4078, %v4048
      %v4080 = vadd.f32 %v4079, %v4049
      %v4081 = vadd.f32 %v4080, %v4050
      %v4082 = vadd.f32 %v4081, %v4051
      %v4083 = vadd.f32 %v4082, %v4052
      %v4084 = vadd.f32 %v4083, %v4053
      %v4085 = vadd.f32 %v4084, %v4054
      %v4086 = vadd.f32 %v4085, %v4055
      %v4087 = vadd.f32 %v4086, %v4056
      %v4088 = vadd.f32 %v4087, %v4057
      %v4089 = vadd.f32 %v4088, %v4058
      %v4090 = vadd.f32 %v4089, %v4059
      %v4091 = vadd.f32 %v4090, %v4060
      %v4092 = vadd.f32 %v4091, %v4061
      %v4093 = vadd.f32 %v4092, %v4062
      %v4094 = vadd.f32 %v4093, %v4063
      %v4095 = vadd.f32 %v4094, %v4064
      %v4096 = vadd.f32 %v4095, %v4065
      %v4097 = vadd.f32 %v4096, %v4066
      %v4098 = vadd.f32 %v4097, %v4067
      %v4099 = vadd.f32 %v4098, %v4068
      %v4100 = vadd.f32 %v4099, %v4069
      %v4101 = vadd.f32 %v4100, %v4070
      %v4102 = vadd.f32 %v4101, %v4071
      %v4103 = vadd.f32 %v4102, %v4072
      %v4104 = vadd.f32 %v4103, %v4073
      %v4105 = vadd.f32 %v4104, %v4074
      %v4106 = vadd.f32 %v4105, %v4075
      %v4107 = vrot.slane %v4106, 4
      %v4108 = vadd.f32 %v4106, %v4107
      %v4109 = vrot.slane %v4108, 2
      %v4110 = vadd.f32 %v4108, %v4109
      %v4111 = vrot.slane %v4110, 1
      %v4112 = vadd.f32 %v4110, %v4111
      %v4113 = vmul.f32 %v4112, 0.00390625
      %v4114 = vmul.f32 %v4044, %v4044
      %v4115 = vmul.f32 %v4045, %v4045
      %v4116 = vmul.f32 %v4046, %v4046
      %v4117 = vmul.f32 %v4047, %v4047
      %v4118 = vmul.f32 %v4048, %v4048
      %v4119 = vmul.f32 %v4049, %v4049
      %v4120 = vmul.f32 %v4050, %v4050
      %v4121 = vmul.f32 %v4051, %v4051
      %v4122 = vmul.f32 %v4052, %v4052
      %v4123 = vmul.f32 %v4053, %v4053
      %v4124 = vmul.f32 %v4054, %v4054
      %v4125 = vmul.f32 %v4055, %v4055
      %v4126 = vmul.f32 %v4056, %v4056
      %v4127 = vmul.f32 %v4057, %v4057
      %v4128 = vmul.f32 %v4058, %v4058
      %v4129 = vmul.f32 %v4059, %v4059
      %v4130 = vmul.f32 %v4060, %v4060
      %v4131 = vmul.f32 %v4061, %v4061
      %v4132 = vmul.f32 %v4062, %v4062
      %v4133 = vmul.f32 %v4063, %v4063
      %v4134 = vmul.f32 %v4064, %v4064
      %v4135 = vmul.f32 %v4065, %v4065
      %v4136 = vmul.f32 %v4066, %v4066
      %v4137 = vmul.f32 %v4067, %v4067
      %v4138 = vmul.f32 %v4068, %v4068
      %v4139 = vmul.f32 %v4069, %v4069
      %v4140 = vmul.f32 %v4070, %v4070
      %v4141 = vmul.f32 %v4071, %v4071
      %v4142 = vmul.f32 %v4072, %v4072
      %v4143 = vmul.f32 %v4073, %v4073
      %v4144 = vmul.f32 %v4074, %v4074
      %v4145 = vmul.f32 %v4075, %v4075
      %v4146 = vadd.f32 %v4114, %v4115
      %v4147 = vadd.f32 %v4146, %v4116
      %v4148 = vadd.f32 %v4147, %v4117
      %v4149 = vadd.f32 %v4148, %v4118
      %v4150 = vadd.f32 %v4149, %v4119
      %v4151 = vadd.f32 %v4150, %v4120
      %v4152 = vadd.f32 %v4151, %v4121
      %v4153 = vadd.f32 %v4152, %v4122
      %v4154 = vadd.f32 %v4153, %v4123
      %v4155 = vadd.f32 %v4154, %v4124
      %v4156 = vadd.f32 %v4155, %v4125
      %v4157 = vadd.f32 %v4156, %v4126
      %v4158 = vadd.f32 %v4157, %v4127
      %v4159 = vadd.f32 %v4158, %v4128
      %v4160 = vadd.f32 %v4159, %v4129
      %v4161 = vadd.f32 %v4160, %v4130
      %v4162 = vadd.f32 %v4161, %v4131
      %v4163 = vadd.f32 %v4162, %v4132
      %v4164 = vadd.f32 %v4163, %v4133
      %v4165 = vadd.f32 %v4164, %v4134
      %v4166 = vadd.f32 %v4165, %v4135
      %v4167 = vadd.f32 %v4166, %v4136
      %v4168 = vadd.f32 %v4167, %v4137
      %v4169 = vadd.f32 %v4168, %v4138
      %v4170 = vadd.f32 %v4169, %v4139
      %v4171 = vadd.f32 %v4170, %v4140
      %v4172 = vadd.f32 %v4171, %v4141
      %v4173 = vadd.f32 %v4172, %v4142
      %v4174 = vadd.f32 %v4173, %v4143
      %v4175 = vadd.f32 %v4174, %v4144
      %v4176 = vadd.f32 %v4175, %v4145
      %v4177 = vrot.slane %v4176, 4
      %v4178 = vadd.f32 %v4176, %v4177
      %v4179 = vrot.slane %v4178, 2
      %v4180 = vadd.f32 %v4178, %v4179
      %v4181 = vrot.slane %v4180, 1
      %v4182 = vadd.f32 %v4180, %v4181
      %v4183 = vmul.f32 %v4182, 0.00390625
      %v4184 = vmul.f32 %v4113, %v4113
      %v4185 = vsub.f32 %v4183, %v4184
      %v4186 = vmax.f32 %v4185, 0.0
      %v4187 = vsub.f32 %v4044, %v4113
      %v4188 = vsub.f32 %v4045, %v4113
      %v4189 = vsub.f32 %v4046, %v4113
      %v4190 = vsub.f32 %v4047, %v4113
      %v4191 = vsub.f32 %v4048, %v4113
      %v4192 = vsub.f32 %v4049, %v4113
      %v4193 = vsub.f32 %v4050, %v4113
      %v4194 = vsub.f32 %v4051, %v4113
      %v4195 = vsub.f32 %v4052, %v4113
      %v4196 = vsub.f32 %v4053, %v4113
      %v4197 = vsub.f32 %v4054, %v4113
      %v4198 = vsub.f32 %v4055, %v4113
      %v4199 = vsub.f32 %v4056, %v4113
      %v4200 = vsub.f32 %v4057, %v4113
      %v4201 = vsub.f32 %v4058, %v4113
      %v4202 = vsub.f32 %v4059, %v4113
      %v4203 = vsub.f32 %v4060, %v4113
      %v4204 = vsub.f32 %v4061, %v4113
      %v4205 = vsub.f32 %v4062, %v4113
      %v4206 = vsub.f32 %v4063, %v4113
      %v4207 = vsub.f32 %v4064, %v4113
      %v4208 = vsub.f32 %v4065, %v4113
      %v4209 = vsub.f32 %v4066, %v4113
      %v4210 = vsub.f32 %v4067, %v4113
      %v4211 = vsub.f32 %v4068, %v4113
      %v4212 = vsub.f32 %v4069, %v4113
      %v4213 = vsub.f32 %v4070, %v4113
      %v4214 = vsub.f32 %v4071, %v4113
      %v4215 = vsub.f32 %v4072, %v4113
      %v4216 = vsub.f32 %v4073, %v4113
      %v4217 = vsub.f32 %v4074, %v4113
      %v4218 = vsub.f32 %v4075, %v4113
      %v4219 = vadd.f32 %v4186, 1e-05
      %v4220 = vrsqrt.pop %v4219
      %v4221 = vmul.f32 %v4187, %v4220
      %v4222 = vmul.f32 %v4188, %v4220
      %v4223 = vmul.f32 %v4189, %v4220
      %v4224 = vmul.f32 %v4190, %v4220
      %v4225 = vmul.f32 %v4191, %v4220
      %v4226 = vmul.f32 %v4192, %v4220
      %v4227 = vmul.f32 %v4193, %v4220
      %v4228 = vmul.f32 %v4194, %v4220
      %v4229 = vmul.f32 %v4195, %v4220
      %v4230 = vmul.f32 %v4196, %v4220
      %v4231 = vmul.f32 %v4197, %v4220
      %v4232 = vmul.f32 %v4198, %v4220
      %v4233 = vmul.f32 %v4199, %v4220
      %v4234 = vmul.f32 %v4200, %v4220
      %v4235 = vmul.f32 %v4201, %v4220
      %v4236 = vmul.f32 %v4202, %v4220
      %v4237 = vmul.f32 %v4203, %v4220
      %v4238 = vmul.f32 %v4204, %v4220
      %v4239 = vmul.f32 %v4205, %v4220
      %v4240 = vmul.f32 %v4206, %v4220
      %v4241 = vmul.f32 %v4207, %v4220
      %v4242 = vmul.f32 %v4208, %v4220
      %v4243 = vmul.f32 %v4209, %v4220
      %v4244 = vmul.f32 %v4210, %v4220
      %v4245 = vmul.f32 %v4211, %v4220
      %v4246 = vmul.f32 %v4212, %v4220
      %v4247 = vmul.f32 %v4213, %v4220
      %v4248 = vmul.f32 %v4214, %v4220
      %v4249 = vmul.f32 %v4215, %v4220
      %v4250 = vmul.f32 %v4216, %v4220
      %v4251 = vmul.f32 %v4217, %v4220
      %v4252 = vmul.f32 %v4218, %v4220
      %v4253 = vpack.c.bf16 %v4222, %v4221
      %v4254 = vpack.c.bf16 %v4224, %v4223
      %v4255 = vpack.c.bf16 %v4226, %v4225
      %v4256 = vpack.c.bf16 %v4228, %v4227
      %v4257 = vpack.c.bf16 %v4230, %v4229
      %v4258 = vpack.c.bf16 %v4232, %v4231
      %v4259 = vpack.c.bf16 %v4234, %v4233
      %v4260 = vpack.c.bf16 %v4236, %v4235
      %v4261 = vpack.c.bf16 %v4238, %v4237
      %v4262 = vpack.c.bf16 %v4240, %v4239
      %v4263 = vpack.c.bf16 %v4242, %v4241
      %v4264 = vpack.c.bf16 %v4244, %v4243
      %v4265 = vpack.c.bf16 %v4246, %v4245
      %v4266 = vpack.c.bf16 %v4248, %v4247
      %v4267 = vpack.c.bf16 %v4250, %v4249
      %v4268 = vpack.c.bf16 %v4252, %v4251
      %v4270 = vshrl.u32 %v4253, 16
      %v4272 = vrot.slane %v4270, 7
      %v4273 = vshll.u32 %v4253, 16
      %v4275 = vor.u32 %v4272, %v4273
      %v4277 = vshrl.u32 %v4254, 16
      %v4279 = vrot.slane %v4277, 7
      %v4280 = vshll.u32 %v4254, 16
      %v4282 = vor.u32 %v4279, %v4280
      %v4284 = vshrl.u32 %v4255, 16
      %v4286 = vrot.slane %v4284, 7
      %v4287 = vshll.u32 %v4255, 16
      %v4289 = vor.u32 %v4286, %v4287
      %v4291 = vshrl.u32 %v4256, 16
      %v4293 = vrot.slane %v4291, 7
      %v4294 = vshll.u32 %v4256, 16
      %v4296 = vor.u32 %v4293, %v4294
      %v4298 = vshrl.u32 %v4257, 16
      %v4300 = vrot.slane %v4298, 7
      %v4301 = vshll.u32 %v4257, 16
      %v4303 = vor.u32 %v4300, %v4301
      %v4305 = vshrl.u32 %v4258, 16
      %v4307 = vrot.slane %v4305, 7
      %v4308 = vshll.u32 %v4258, 16
      %v4310 = vor.u32 %v4307, %v4308
      %v4312 = vshrl.u32 %v4259, 16
      %v4314 = vrot.slane %v4312, 7
      %v4315 = vshll.u32 %v4259, 16
      %v4317 = vor.u32 %v4314, %v4315
      %v4319 = vshrl.u32 %v4260, 16
      %v4321 = vrot.slane %v4319, 7
      %v4322 = vshll.u32 %v4260, 16
      %v4324 = vor.u32 %v4321, %v4322
      %v4326 = vshrl.u32 %v4261, 16
      %v4328 = vrot.slane %v4326, 7
      %v4329 = vshll.u32 %v4261, 16
      %v4331 = vor.u32 %v4328, %v4329
      %v4333 = vshrl.u32 %v4262, 16
      %v4335 = vrot.slane %v4333, 7
      %v4336 = vshll.u32 %v4262, 16
      %v4338 = vor.u32 %v4335, %v4336
      %v4340 = vshrl.u32 %v4263, 16
      %v4342 = vrot.slane %v4340, 7
      %v4343 = vshll.u32 %v4263, 16
      %v4345 = vor.u32 %v4342, %v4343
      %v4347 = vshrl.u32 %v4264, 16
      %v4349 = vrot.slane %v4347, 7
      %v4350 = vshll.u32 %v4264, 16
      %v4352 = vor.u32 %v4349, %v4350
      %v4354 = vshrl.u32 %v4265, 16
      %v4356 = vrot.slane %v4354, 7
      %v4357 = vshll.u32 %v4265, 16
      %v4359 = vor.u32 %v4356, %v4357
      %v4361 = vshrl.u32 %v4266, 16
      %v4363 = vrot.slane %v4361, 7
      %v4364 = vshll.u32 %v4266, 16
      %v4366 = vor.u32 %v4363, %v4364
      %v4368 = vshrl.u32 %v4267, 16
      %v4370 = vrot.slane %v4368, 7
      %v4371 = vshll.u32 %v4267, 16
      %v4373 = vor.u32 %v4370, %v4371
      %v4375 = vshrl.u32 %v4268, 16
      %v4377 = vrot.slane %v4375, 7
      %v4378 = vshll.u32 %v4268, 16
      %v4380 = vor.u32 %v4377, %v4378
      %v4397 = vld [vmem:[%s448] sm:$0xff]
      %v4398 = vsel %vm2122, %v4275, %v4397
      %4399 = vst [vmem:[%s448] sm:$0xff] %v4398
      %v4400 = vld [vmem:[%s448 + $0x18] sm:$0xff]
      %v4401 = vsel %vm2122, %v4282, %v4400
      %4402 = vst [vmem:[%s448 + $0x18] sm:$0xff] %v4401
      %v4403 = vld [vmem:[%s448 + $0x30] sm:$0xff]
      %v4404 = vsel %vm2122, %v4289, %v4403
      %4405 = vst [vmem:[%s448 + $0x30] sm:$0xff] %v4404
      %v4406 = vld [vmem:[%s448 + $0x48] sm:$0xff]
      %v4407 = vsel %vm2122, %v4296, %v4406
      %4408 = vst [vmem:[%s448 + $0x48] sm:$0xff] %v4407
      %v4409 = vld [vmem:[%s448 + $0x60] sm:$0xff]
      %v4410 = vsel %vm2122, %v4303, %v4409
      %4411 = vst [vmem:[%s448 + $0x60] sm:$0xff] %v4410
      %v4412 = vld [vmem:[%s448 + $0x78] sm:$0xff]
      %v4413 = vsel %vm2122, %v4310, %v4412
      %4414 = vst [vmem:[%s448 + $0x78] sm:$0xff] %v4413
      %v4415 = vld [vmem:[%s448 + $0x90] sm:$0xff]
      %v4416 = vsel %vm2122, %v4317, %v4415
      %4417 = vst [vmem:[%s448 + $0x90] sm:$0xff] %v4416
      %v4418 = vld [vmem:[%s448 + $0xa8] sm:$0xff]
      %v4419 = vsel %vm2122, %v4324, %v4418
      %4420 = vst [vmem:[%s448 + $0xa8] sm:$0xff] %v4419
      %v4421 = vld [vmem:[%s448 + $0xc0] sm:$0xff]
      %v4422 = vsel %vm2122, %v4331, %v4421
      %4423 = vst [vmem:[%s448 + $0xc0] sm:$0xff] %v4422
      %v4424 = vld [vmem:[%s448 + $0xd8] sm:$0xff]
      %v4425 = vsel %vm2122, %v4338, %v4424
      %4426 = vst [vmem:[%s448 + $0xd8] sm:$0xff] %v4425
      %v4427 = vld [vmem:[%s448 + $0xf0] sm:$0xff]
      %v4428 = vsel %vm2122, %v4345, %v4427
      %4429 = vst [vmem:[%s448 + $0xf0] sm:$0xff] %v4428
      %v4430 = vld [vmem:[%s448 + $0x108] sm:$0xff]
      %v4431 = vsel %vm2122, %v4352, %v4430
      %4432 = vst [vmem:[%s448 + $0x108] sm:$0xff] %v4431
      %v4433 = vld [vmem:[%s448 + $0x120] sm:$0xff]
      %v4434 = vsel %vm2122, %v4359, %v4433
      %4435 = vst [vmem:[%s448 + $0x120] sm:$0xff] %v4434
      %v4436 = vld [vmem:[%s448 + $0x138] sm:$0xff]
      %v4437 = vsel %vm2122, %v4366, %v4436
      %4438 = vst [vmem:[%s448 + $0x138] sm:$0xff] %v4437
      %v4439 = vld [vmem:[%s448 + $0x150] sm:$0xff]
      %v4440 = vsel %vm2122, %v4373, %v4439
      %4441 = vst [vmem:[%s448 + $0x150] sm:$0xff] %v4440
      %v4442 = vld [vmem:[%s448 + $0x168] sm:$0xff]
      %v4443 = vsel %vm2122, %v4380, %v4442
      %4444 = vst [vmem:[%s448 + $0x168] sm:$0xff] %v4443
      %4445 = vst [vmem:[%s448 + $0x8] sm:$0xff] %v4253
      %4446 = vst [vmem:[%s448 + $0x20] sm:$0xff] %v4254
      %4447 = vst [vmem:[%s448 + $0x38] sm:$0xff] %v4255
      %4448 = vst [vmem:[%s448 + $0x50] sm:$0xff] %v4256
      %4449 = vst [vmem:[%s448 + $0x68] sm:$0xff] %v4257
      %4450 = vst [vmem:[%s448 + $0x80] sm:$0xff] %v4258
      %4451 = vst [vmem:[%s448 + $0x98] sm:$0xff] %v4259
      %4452 = vst [vmem:[%s448 + $0xb0] sm:$0xff] %v4260
      %4453 = vst [vmem:[%s448 + $0xc8] sm:$0xff] %v4261
      %4454 = vst [vmem:[%s448 + $0xe0] sm:$0xff] %v4262
      %4455 = vst [vmem:[%s448 + $0xf8] sm:$0xff] %v4263
      %4456 = vst [vmem:[%s448 + $0x110] sm:$0xff] %v4264
      %4457 = vst [vmem:[%s448 + $0x128] sm:$0xff] %v4265
      %4458 = vst [vmem:[%s448 + $0x140] sm:$0xff] %v4266
      %4459 = vst [vmem:[%s448 + $0x158] sm:$0xff] %v4267
      %4460 = vst [vmem:[%s448 + $0x170] sm:$0xff] %v4268
      %v4461 = vrot.slane %v4273, 1
      %v4462 = vor.u32 %v4270, %v4461
      %v4463 = vrot.slane %v4280, 1
      %v4464 = vor.u32 %v4277, %v4463
      %v4465 = vrot.slane %v4287, 1
      %v4466 = vor.u32 %v4284, %v4465
      %v4467 = vrot.slane %v4294, 1
      %v4468 = vor.u32 %v4291, %v4467
      %v4469 = vrot.slane %v4301, 1
      %v4470 = vor.u32 %v4298, %v4469
      %v4471 = vrot.slane %v4308, 1
      %v4472 = vor.u32 %v4305, %v4471
      %v4473 = vrot.slane %v4315, 1
      %v4474 = vor.u32 %v4312, %v4473
      %v4475 = vrot.slane %v4322, 1
      %v4476 = vor.u32 %v4319, %v4475
      %v4477 = vrot.slane %v4329, 1
      %v4478 = vor.u32 %v4326, %v4477
      %v4479 = vrot.slane %v4336, 1
      %v4480 = vor.u32 %v4333, %v4479
      %v4481 = vrot.slane %v4343, 1
      %v4482 = vor.u32 %v4340, %v4481
      %v4483 = vrot.slane %v4350, 1
      %v4484 = vor.u32 %v4347, %v4483
      %v4485 = vrot.slane %v4357, 1
      %v4486 = vor.u32 %v4354, %v4485
      %v4487 = vrot.slane %v4364, 1
      %v4488 = vor.u32 %v4361, %v4487
      %v4489 = vrot.slane %v4371, 1
      %v4490 = vor.u32 %v4368, %v4489
      %v4491 = vrot.slane %v4378, 1
      %v4492 = vor.u32 %v4375, %v4491
      %v4509 = vld [vmem:[%s448 + $0x10] sm:$0xff]
      %v4510 = vsel %vm2235, %v4462, %v4509
      %4511 = vst [vmem:[%s448 + $0x10] sm:$0xff] %v4510
      %v4512 = vld [vmem:[%s448 + $0x28] sm:$0xff]
      %v4513 = vsel %vm2235, %v4464, %v4512
      %4514 = vst [vmem:[%s448 + $0x28] sm:$0xff] %v4513
      %v4515 = vld [vmem:[%s448 + $0x40] sm:$0xff]
      %v4516 = vsel %vm2235, %v4466, %v4515
      %4517 = vst [vmem:[%s448 + $0x40] sm:$0xff] %v4516
      %v4518 = vld [vmem:[%s448 + $0x58] sm:$0xff]
      %v4519 = vsel %vm2235, %v4468, %v4518
      %4520 = vst [vmem:[%s448 + $0x58] sm:$0xff] %v4519
      %v4521 = vld [vmem:[%s448 + $0x70] sm:$0xff]
      %v4522 = vsel %vm2235, %v4470, %v4521
      %4523 = vst [vmem:[%s448 + $0x70] sm:$0xff] %v4522
      %v4524 = vld [vmem:[%s448 + $0x88] sm:$0xff]
      %v4525 = vsel %vm2235, %v4472, %v4524
      %4526 = vst [vmem:[%s448 + $0x88] sm:$0xff] %v4525
      %v4527 = vld [vmem:[%s448 + $0xa0] sm:$0xff]
      %v4528 = vsel %vm2235, %v4474, %v4527
      %4529 = vst [vmem:[%s448 + $0xa0] sm:$0xff] %v4528
      %v4530 = vld [vmem:[%s448 + $0xb8] sm:$0xff]
      %v4531 = vsel %vm2235, %v4476, %v4530
      %4532 = vst [vmem:[%s448 + $0xb8] sm:$0xff] %v4531
      %v4533 = vld [vmem:[%s448 + $0xd0] sm:$0xff]
      %v4534 = vsel %vm2235, %v4478, %v4533
      %4535 = vst [vmem:[%s448 + $0xd0] sm:$0xff] %v4534
      %v4536 = vld [vmem:[%s448 + $0xe8] sm:$0xff]
      %v4537 = vsel %vm2235, %v4480, %v4536
      %4538 = vst [vmem:[%s448 + $0xe8] sm:$0xff] %v4537
      %v4539 = vld [vmem:[%s448 + $0x100] sm:$0xff]
      %v4540 = vsel %vm2235, %v4482, %v4539
      %4541 = vst [vmem:[%s448 + $0x100] sm:$0xff] %v4540
      %v4542 = vld [vmem:[%s448 + $0x118] sm:$0xff]
      %v4543 = vsel %vm2235, %v4484, %v4542
      %4544 = vst [vmem:[%s448 + $0x118] sm:$0xff] %v4543
      %v4545 = vld [vmem:[%s448 + $0x130] sm:$0xff]
      %v4546 = vsel %vm2235, %v4486, %v4545
      %4547 = vst [vmem:[%s448 + $0x130] sm:$0xff] %v4546
      %v4548 = vld [vmem:[%s448 + $0x148] sm:$0xff]
      %v4549 = vsel %vm2235, %v4488, %v4548
      %4550 = vst [vmem:[%s448 + $0x148] sm:$0xff] %v4549
      %v4551 = vld [vmem:[%s448 + $0x160] sm:$0xff]
      %v4552 = vsel %vm2235, %v4490, %v4551
      %4553 = vst [vmem:[%s448 + $0x160] sm:$0xff] %v4552
      %v4554 = vld [vmem:[%s448 + $0x178] sm:$0xff]
      %v4555 = vsel %vm2235, %v4492, %v4554
      %4556 = vst [vmem:[%s448 + $0x178] sm:$0xff] %v4555
      %v4557 = vld [vmem:[#allocation3] sm:$0xff]
      %v4558 = vld [vmem:[#allocation3 + $0x8] sm:$0xff]
      %v4559 = vld [vmem:[#allocation3 + $0x10] sm:$0xff]
      %v4560 = vld [vmem:[#allocation3 + $0x18] sm:$0xff]
      %v4561 = vld [vmem:[#allocation3 + $0x20] sm:$0xff]
      %v4562 = vld [vmem:[#allocation3 + $0x28] sm:$0xff]
      %v4563 = vld [vmem:[#allocation3 + $0x30] sm:$0xff]
      %v4564 = vld [vmem:[#allocation3 + $0x38] sm:$0xff]
      %v4565 = vld [vmem:[#allocation3 + $0x40] sm:$0xff]
      %v4566 = vld [vmem:[#allocation3 + $0x48] sm:$0xff]
      %v4567 = vld [vmem:[#allocation3 + $0x50] sm:$0xff]
      %v4568 = vld [vmem:[#allocation3 + $0x58] sm:$0xff]
      %v4569 = vld [vmem:[#allocation3 + $0x60] sm:$0xff]
      %v4570 = vld [vmem:[#allocation3 + $0x68] sm:$0xff]
      %v4571 = vld [vmem:[#allocation3 + $0x70] sm:$0xff]
      %v4572 = vld [vmem:[#allocation3 + $0x78] sm:$0xff]
      %v4573 = vld [vmem:[#allocation3 + $0x80] sm:$0xff]
      %v4574 = vld [vmem:[#allocation3 + $0x88] sm:$0xff]
      %v4575 = vld [vmem:[#allocation3 + $0x90] sm:$0xff]
      %v4576 = vld [vmem:[#allocation3 + $0x98] sm:$0xff]
      %v4577 = vld [vmem:[#allocation3 + $0xa0] sm:$0xff]
      %v4578 = vld [vmem:[#allocation3 + $0xa8] sm:$0xff]
      %v4579 = vld [vmem:[#allocation3 + $0xb0] sm:$0xff]
      %v4580 = vld [vmem:[#allocation3 + $0xb8] sm:$0xff]
      %v4581 = vld [vmem:[#allocation3 + $0xc0] sm:$0xff]
      %v4582 = vld [vmem:[#allocation3 + $0xc8] sm:$0xff]
      %v4583 = vld [vmem:[#allocation3 + $0xd0] sm:$0xff]
      %v4584 = vld [vmem:[#allocation3 + $0xd8] sm:$0xff]
      %v4585 = vld [vmem:[#allocation3 + $0xe0] sm:$0xff]
      %v4586 = vld [vmem:[#allocation3 + $0xe8] sm:$0xff]
      %v4587 = vld [vmem:[#allocation3 + $0xf0] sm:$0xff]
      %v4588 = vld [vmem:[#allocation3 + $0xf8] sm:$0xff]
      %v4589 = vld [vmem:[#allocation3 + $0x100] sm:$0xff]
      %v4590 = vld [vmem:[#allocation3 + $0x108] sm:$0xff]
      %v4591 = vld [vmem:[#allocation3 + $0x110] sm:$0xff]
      %v4592 = vld [vmem:[#allocation3 + $0x118] sm:$0xff]
      %v4593 = vld [vmem:[#allocation3 + $0x120] sm:$0xff]
      %v4594 = vld [vmem:[#allocation3 + $0x128] sm:$0xff]
      %v4595 = vld [vmem:[#allocation3 + $0x130] sm:$0xff]
      %v4596 = vld [vmem:[#allocation3 + $0x138] sm:$0xff]
      %v4597 = vld [vmem:[#allocation3 + $0x140] sm:$0xff]
      %v4598 = vld [vmem:[#allocation3 + $0x148] sm:$0xff]
      %v4599 = vld [vmem:[#allocation3 + $0x150] sm:$0xff]
      %v4600 = vld [vmem:[#allocation3 + $0x158] sm:$0xff]
      %v4601 = vld [vmem:[#allocation3 + $0x160] sm:$0xff]
      %v4602 = vld [vmem:[#allocation3 + $0x168] sm:$0xff]
      %v4603 = vld [vmem:[#allocation3 + $0x170] sm:$0xff]
      %v4604 = vld [vmem:[#allocation3 + $0x178] sm:$0xff]
      %v4605 = vld [vmem:[%s5] sm:$0xf]
      %v4606 = vld [vmem:[%s5 + $0x4] sm:$0xf]
      %v4607 = vld [vmem:[%s5 + $0x8] sm:$0xf]
      %v4608 = vld [vmem:[%s5 + $0xc] sm:$0xf]
      %v4609 = vld [vmem:[%s5 + $0x10] sm:$0xf]
      %v4610 = vld [vmem:[%s5 + $0x14] sm:$0xf]
      %v4611 = vld [vmem:[%s5 + $0x18] sm:$0xf]
      %v4612 = vld [vmem:[%s5 + $0x1c] sm:$0xf]
      %v4613 = vld [vmem:[%s5 + $0x20] sm:$0xf]
      %v4614 = vld [vmem:[%s5 + $0x24] sm:$0xf]
      %v4615 = vld [vmem:[%s5 + $0x28] sm:$0xf]
      %v4616 = vld [vmem:[%s5 + $0x2c] sm:$0xf]
      %v4617 = vld [vmem:[%s5 + $0x30] sm:$0xf]
      %v4618 = vld [vmem:[%s5 + $0x34] sm:$0xf]
      %v4619 = vld [vmem:[%s5 + $0x38] sm:$0xf]
      %v4620 = vld [vmem:[%s5 + $0x3c] sm:$0xf]
      %v4621 = vld [vmem:[%s5 + $0x40] sm:$0xf]
      %v4622 = vld [vmem:[%s5 + $0x44] sm:$0xf]
      %v4623 = vld [vmem:[%s5 + $0x48] sm:$0xf]
      %v4624 = vld [vmem:[%s5 + $0x4c] sm:$0xf]
      %v4625 = vld [vmem:[%s5 + $0x50] sm:$0xf]
      %v4626 = vld [vmem:[%s5 + $0x54] sm:$0xf]
      %v4627 = vld [vmem:[%s5 + $0x58] sm:$0xf]
      %v4628 = vld [vmem:[%s5 + $0x5c] sm:$0xf]
      %v4629 = vld [vmem:[%s5 + $0x60] sm:$0xf]
      %v4630 = vld [vmem:[%s5 + $0x64] sm:$0xf]
      %v4631 = vld [vmem:[%s5 + $0x68] sm:$0xf]
      %v4632 = vld [vmem:[%s5 + $0x6c] sm:$0xf]
      %v4633 = vld [vmem:[%s5 + $0x70] sm:$0xf]
      %v4634 = vld [vmem:[%s5 + $0x74] sm:$0xf]
      %v4635 = vld [vmem:[%s5 + $0x78] sm:$0xf]
      %v4636 = vld [vmem:[%s5 + $0x7c] sm:$0xf]
      %v4637 = vld [vmem:[%s5 + $0x80] sm:$0xf]
      %v4638 = vld [vmem:[%s5 + $0x84] sm:$0xf]
      %v4639 = vld [vmem:[%s5 + $0x88] sm:$0xf]
      %v4640 = vld [vmem:[%s5 + $0x8c] sm:$0xf]
      %v4641 = vld [vmem:[%s5 + $0x90] sm:$0xf]
      %v4642 = vld [vmem:[%s5 + $0x94] sm:$0xf]
      %v4643 = vld [vmem:[%s5 + $0x98] sm:$0xf]
      %v4644 = vld [vmem:[%s5 + $0x9c] sm:$0xf]
      %v4645 = vld [vmem:[%s5 + $0xa0] sm:$0xf]
      %v4646 = vld [vmem:[%s5 + $0xa4] sm:$0xf]
      %v4647 = vld [vmem:[%s5 + $0xa8] sm:$0xf]
      %v4648 = vld [vmem:[%s5 + $0xac] sm:$0xf]
      %v4649 = vld [vmem:[%s5 + $0xb0] sm:$0xf]
      %v4650 = vld [vmem:[%s5 + $0xb4] sm:$0xf]
      %v4651 = vld [vmem:[%s5 + $0xb8] sm:$0xf]
      %v4652 = vld [vmem:[%s5 + $0xbc] sm:$0xf]
      %v4653 = vld [vmem:[%s448] sm:$0xff]
      %v4654 = vld [vmem:[%s448 + $0x8] sm:$0xff]
      %v4655 = vld [vmem:[%s448 + $0x10] sm:$0xff]
      %v4656 = vld [vmem:[%s448 + $0x18] sm:$0xff]
      %v4657 = vld [vmem:[%s448 + $0x20] sm:$0xff]
      %v4658 = vld [vmem:[%s448 + $0x28] sm:$0xff]
      %v4659 = vld [vmem:[%s448 + $0x30] sm:$0xff]
      %v4660 = vld [vmem:[%s448 + $0x38] sm:$0xff]
      %v4661 = vld [vmem:[%s448 + $0x40] sm:$0xff]
      %v4662 = vld [vmem:[%s448 + $0x48] sm:$0xff]
      %v4663 = vld [vmem:[%s448 + $0x50] sm:$0xff]
      %v4664 = vld [vmem:[%s448 + $0x58] sm:$0xff]
      %v4665 = vld [vmem:[%s448 + $0x60] sm:$0xff]
      %v4666 = vld [vmem:[%s448 + $0x68] sm:$0xff]
      %v4667 = vld [vmem:[%s448 + $0x70] sm:$0xff]
      %v4668 = vld [vmem:[%s448 + $0x78] sm:$0xff]
      %v4669 = vld [vmem:[%s448 + $0x80] sm:$0xff]
      %v4670 = vld [vmem:[%s448 + $0x88] sm:$0xff]
      %v4671 = vld [vmem:[%s448 + $0x90] sm:$0xff]
      %v4672 = vld [vmem:[%s448 + $0x98] sm:$0xff]
      %v4673 = vld [vmem:[%s448 + $0xa0] sm:$0xff]
      %v4674 = vld [vmem:[%s448 + $0xa8] sm:$0xff]
      %v4675 = vld [vmem:[%s448 + $0xb0] sm:$0xff]
      %v4676 = vld [vmem:[%s448 + $0xb8] sm:$0xff]
      %v4677 = vld [vmem:[%s448 + $0xc0] sm:$0xff]
      %v4678 = vld [vmem:[%s448 + $0xc8] sm:$0xff]
      %v4679 = vld [vmem:[%s448 + $0xd0] sm:$0xff]
      %v4680 = vld [vmem:[%s448 + $0xd8] sm:$0xff]
      %v4681 = vld [vmem:[%s448 + $0xe0] sm:$0xff]
      %v4682 = vld [vmem:[%s448 + $0xe8] sm:$0xff]
      %v4683 = vld [vmem:[%s448 + $0xf0] sm:$0xff]
      %v4684 = vld [vmem:[%s448 + $0xf8] sm:$0xff]
      %v4685 = vld [vmem:[%s448 + $0x100] sm:$0xff]
      %v4686 = vld [vmem:[%s448 + $0x108] sm:$0xff]
      %v4687 = vld [vmem:[%s448 + $0x110] sm:$0xff]
      %v4688 = vld [vmem:[%s448 + $0x118] sm:$0xff]
      %v4689 = vld [vmem:[%s448 + $0x120] sm:$0xff]
      %v4690 = vld [vmem:[%s448 + $0x128] sm:$0xff]
      %v4691 = vld [vmem:[%s448 + $0x130] sm:$0xff]
      %v4692 = vld [vmem:[%s448 + $0x138] sm:$0xff]
      %v4693 = vld [vmem:[%s448 + $0x140] sm:$0xff]
      %v4694 = vld [vmem:[%s448 + $0x148] sm:$0xff]
      %v4695 = vld [vmem:[%s448 + $0x150] sm:$0xff]
      %v4696 = vld [vmem:[%s448 + $0x158] sm:$0xff]
      %v4697 = vld [vmem:[%s448 + $0x160] sm:$0xff]
      %v4698 = vld [vmem:[%s448 + $0x168] sm:$0xff]
      %v4699 = vld [vmem:[%s448 + $0x170] sm:$0xff]
      %v4700 = vld [vmem:[%s448 + $0x178] sm:$0xff]
      %s4701 = scalar_lea.vmem %s5, 192
      %v4702 = vld [vmem:[%s4701] sm:$0xf]
      %v4703 = vld [vmem:[%s4701 + $0x4] sm:$0xf]
      %v4704 = vld [vmem:[%s4701 + $0x8] sm:$0xf]
      %v4705 = vld [vmem:[%s4701 + $0xc] sm:$0xf]
      %v4706 = vld [vmem:[%s4701 + $0x10] sm:$0xf]
      %v4707 = vld [vmem:[%s4701 + $0x14] sm:$0xf]
      %v4708 = vld [vmem:[%s4701 + $0x18] sm:$0xf]
      %v4709 = vld [vmem:[%s4701 + $0x1c] sm:$0xf]
      %v4710 = vld [vmem:[%s4701 + $0x20] sm:$0xf]
      %v4711 = vld [vmem:[%s4701 + $0x24] sm:$0xf]
      %v4712 = vld [vmem:[%s4701 + $0x28] sm:$0xf]
      %v4713 = vld [vmem:[%s4701 + $0x2c] sm:$0xf]
      %v4714 = vld [vmem:[%s4701 + $0x30] sm:$0xf]
      %v4715 = vld [vmem:[%s4701 + $0x34] sm:$0xf]
      %v4716 = vld [vmem:[%s4701 + $0x38] sm:$0xf]
      %v4717 = vld [vmem:[%s4701 + $0x3c] sm:$0xf]
      %v4718 = vld [vmem:[%s4701 + $0x40] sm:$0xf]
      %v4719 = vld [vmem:[%s4701 + $0x44] sm:$0xf]
      %v4720 = vld [vmem:[%s4701 + $0x48] sm:$0xf]
      %v4721 = vld [vmem:[%s4701 + $0x4c] sm:$0xf]
      %v4722 = vld [vmem:[%s4701 + $0x50] sm:$0xf]
      %v4723 = vld [vmem:[%s4701 + $0x54] sm:$0xf]
      %v4724 = vld [vmem:[%s4701 + $0x58] sm:$0xf]
      %v4725 = vld [vmem:[%s4701 + $0x5c] sm:$0xf]
      %v4726 = vld [vmem:[%s4701 + $0x60] sm:$0xf]
      %v4727 = vld [vmem:[%s4701 + $0x64] sm:$0xf]
      %v4728 = vld [vmem:[%s4701 + $0x68] sm:$0xf]
      %v4729 = vld [vmem:[%s4701 + $0x6c] sm:$0xf]
      %v4730 = vld [vmem:[%s4701 + $0x70] sm:$0xf]
      %v4731 = vld [vmem:[%s4701 + $0x74] sm:$0xf]
      %v4732 = vld [vmem:[%s4701 + $0x78] sm:$0xf]
      %v4733 = vld [vmem:[%s4701 + $0x7c] sm:$0xf]
      %v4734 = vld [vmem:[%s4701 + $0x80] sm:$0xf]
      %v4735 = vld [vmem:[%s4701 + $0x84] sm:$0xf]
      %v4736 = vld [vmem:[%s4701 + $0x88] sm:$0xf]
      %v4737 = vld [vmem:[%s4701 + $0x8c] sm:$0xf]
      %v4738 = vld [vmem:[%s4701 + $0x90] sm:$0xf]
      %v4739 = vld [vmem:[%s4701 + $0x94] sm:$0xf]
      %v4740 = vld [vmem:[%s4701 + $0x98] sm:$0xf]
      %v4741 = vld [vmem:[%s4701 + $0x9c] sm:$0xf]
      %v4742 = vld [vmem:[%s4701 + $0xa0] sm:$0xf]
      %v4743 = vld [vmem:[%s4701 + $0xa4] sm:$0xf]
      %v4744 = vld [vmem:[%s4701 + $0xa8] sm:$0xf]
      %v4745 = vld [vmem:[%s4701 + $0xac] sm:$0xf]
      %v4746 = vld [vmem:[%s4701 + $0xb0] sm:$0xf]
      %v4747 = vld [vmem:[%s4701 + $0xb4] sm:$0xf]
      %v4748 = vld [vmem:[%s4701 + $0xb8] sm:$0xf]
      %v4749 = vld [vmem:[%s4701 + $0xbc] sm:$0xf]
      %v4798 = vunpack.c.l.b16 %v4702
      %v4799 = vunpack.c.l.b16 %v4703
      %v4800 = vunpack.c.l.b16 %v4704
      %v4801 = vunpack.c.l.b16 %v4705
      %v4802 = vunpack.c.l.b16 %v4706
      %v4803 = vunpack.c.l.b16 %v4707
      %v4804 = vunpack.c.l.b16 %v4708
      %v4805 = vunpack.c.l.b16 %v4709
      %v4806 = vunpack.c.l.b16 %v4710
      %v4807 = vunpack.c.l.b16 %v4711
      %v4808 = vunpack.c.l.b16 %v4712
      %v4809 = vunpack.c.l.b16 %v4713
      %v4810 = vunpack.c.l.b16 %v4714
      %v4811 = vunpack.c.l.b16 %v4715
      %v4812 = vunpack.c.l.b16 %v4716
      %v4813 = vunpack.c.l.b16 %v4717
      %v4814 = vunpack.c.l.b16 %v4718
      %v4815 = vunpack.c.l.b16 %v4719
      %v4816 = vunpack.c.l.b16 %v4720
      %v4817 = vunpack.c.l.b16 %v4721
      %v4818 = vunpack.c.l.b16 %v4722
      %v4819 = vunpack.c.l.b16 %v4723
      %v4820 = vunpack.c.l.b16 %v4724
      %v4821 = vunpack.c.l.b16 %v4725
      %v4822 = vunpack.c.l.b16 %v4726
      %v4823 = vunpack.c.l.b16 %v4727
      %v4824 = vunpack.c.l.b16 %v4728
      %v4825 = vunpack.c.l.b16 %v4729
      %v4826 = vunpack.c.l.b16 %v4730
      %v4827 = vunpack.c.l.b16 %v4731
      %v4828 = vunpack.c.l.b16 %v4732
      %v4829 = vunpack.c.l.b16 %v4733
      %v4830 = vunpack.c.l.b16 %v4734
      %v4831 = vunpack.c.l.b16 %v4735
      %v4832 = vunpack.c.l.b16 %v4736
      %v4833 = vunpack.c.l.b16 %v4737
      %v4834 = vunpack.c.l.b16 %v4738
      %v4835 = vunpack.c.l.b16 %v4739
      %v4836 = vunpack.c.l.b16 %v4740
      %v4837 = vunpack.c.l.b16 %v4741
      %v4838 = vunpack.c.l.b16 %v4742
      %v4839 = vunpack.c.l.b16 %v4743
      %v4840 = vunpack.c.l.b16 %v4744
      %v4841 = vunpack.c.l.b16 %v4745
      %v4842 = vunpack.c.l.b16 %v4746
      %v4843 = vunpack.c.l.b16 %v4747
      %v4844 = vunpack.c.l.b16 %v4748
      %v4845 = vunpack.c.l.b16 %v4749
      %v4846 = vpack.c.b16 %v4799, %v4798
      %v4847 = vpack.c.b16 %v4801, %v4800
      %v4848 = vpack.c.b16 %v4803, %v4802
      %v4849 = vpack.c.b16 %v4805, %v4804
      %v4850 = vpack.c.b16 %v4807, %v4806
      %v4851 = vpack.c.b16 %v4809, %v4808
      %v4852 = vpack.c.b16 %v4811, %v4810
      %v4853 = vpack.c.b16 %v4813, %v4812
      %v4854 = vpack.c.b16 %v4815, %v4814
      %v4855 = vpack.c.b16 %v4817, %v4816
      %v4856 = vpack.c.b16 %v4819, %v4818
      %v4857 = vpack.c.b16 %v4821, %v4820
      %v4858 = vpack.c.b16 %v4823, %v4822
      %v4859 = vpack.c.b16 %v4825, %v4824
      %v4860 = vpack.c.b16 %v4827, %v4826
      %v4861 = vpack.c.b16 %v4829, %v4828
      %v4862 = vpack.c.b16 %v4831, %v4830
      %v4863 = vpack.c.b16 %v4833, %v4832
      %v4864 = vpack.c.b16 %v4835, %v4834
      %v4865 = vpack.c.b16 %v4837, %v4836
      %v4866 = vpack.c.b16 %v4839, %v4838
      %v4867 = vpack.c.b16 %v4841, %v4840
      %v4868 = vpack.c.b16 %v4843, %v4842
      %v4869 = vpack.c.b16 %v4845, %v4844
      %4894 = vmatprep.subr.bf16.mxu0 0
      %4895 = vmatpush1.bf16.msra.mxu0 %v4846
      %4896 = vmatprep.subr.bf16.mxu0 0
      %4897 = vmatpush1.bf16.msra.mxu0 %v4847
      %4898 = vmatprep.subr.bf16.mxu0 0
      %4899 = vmatpush1.bf16.msra.mxu0 %v4848
      %4900 = vmatprep.subr.bf16.mxu0 0
      %4901 = vmatpush1.bf16.msra.mxu0 %v4849
      %4902 = vmatprep.subr.bf16.mxu0 0
      %4903 = vmatpush1.bf16.msra.mxu0 %v4850
      %4904 = vmatprep.subr.bf16.mxu0 0
      %4905 = vmatpush1.bf16.msra.mxu0 %v4851
      %4906 = vmatprep.subr.bf16.mxu0 0
      %4907 = vmatpush1.bf16.msra.mxu0 %v4852
      %4908 = vmatprep.subr.bf16.mxu0 0
      %4909 = vmatpush1.bf16.msra.mxu0 %v4853
      %4910 = vmatprep.subr.bf16.mxu0 0
      %4911 = vmatpush1.bf16.msra.mxu0 %v4854
      %4912 = vmatprep.subr.bf16.mxu0 0
      %4913 = vmatpush1.bf16.msra.mxu0 %v4855
      %4914 = vmatprep.subr.bf16.mxu0 0
      %4915 = vmatpush1.bf16.msra.mxu0 %v4856
      %4916 = vmatprep.subr.bf16.mxu0 0
      %4917 = vmatpush1.bf16.msra.mxu0 %v4857
      %4918 = vmatprep.subr.bf16.mxu0 0
      %4919 = vmatpush1.bf16.msra.mxu0 %v4858
      %4920 = vmatprep.subr.bf16.mxu0 0
      %4921 = vmatpush1.bf16.msra.mxu0 %v4859
      %4922 = vmatprep.subr.bf16.mxu0 0
      %4923 = vmatpush1.bf16.msra.mxu0 %v4860
      %4924 = vmatprep.subr.bf16.mxu0 0
      %4925 = vmatpush1.bf16.msra.mxu0 %v4861
      %4926 = vmatprep.mubr.bf16.mxu0 %v4654
      %4927 = vmatmul.mubr.bf16.gmra.mrb[0].mxu0 %v4653
      %v4928 = vpop.f32.mrb[0].mxu0
      %v4929 = vadd.f32 0.0, %v4928
      %v4930 = vpop.f32.mrb[0].mxu0
      %v4931 = vpop.f32.mrb[0].mxu0
      %v4932 = vadd.f32 0.0, %v4931
      %v4933 = vpop.f32.mrb[0].mxu0
      %4934 = vmatprep.mubr.bf16.mxu0 %v4657
      %4935 = vmatmul.mubr.bf16.gmra.mrb[0].mxu0 %v4656
      %v4936 = vpop.f32.mrb[0].mxu0
      %v4937 = vadd.f32 0.0, %v4936
      %v4938 = vpop.f32.mrb[0].mxu0
      %v4939 = vpop.f32.mrb[0].mxu0
      %v4940 = vadd.f32 0.0, %v4939
      %v4941 = vpop.f32.mrb[0].mxu0
      %4942 = vmatprep.mubr.bf16.mxu0 %v4660
      %4943 = vmatmul.mubr.bf16.gmra.mrb[0].mxu0 %v4659
      %v4944 = vpop.f32.mrb[0].mxu0
      %v4945 = vadd.f32 0.0, %v4944
      %v4946 = vpop.f32.mrb[0].mxu0
      %v4947 = vpop.f32.mrb[0].mxu0
      %v4948 = vadd.f32 0.0, %v4947
      %v4949 = vpop.f32.mrb[0].mxu0
      %4950 = vmatprep.mubr.bf16.mxu0 %v4663
      %4951 = vmatmul.mubr.bf16.gmra.mrb[0].mxu0 %v4662
      %v4952 = vpop.f32.mrb[0].mxu0
      %v4953 = vadd.f32 0.0, %v4952
      %v4954 = vpop.f32.mrb[0].mxu0
      %v4955 = vpop.f32.mrb[0].mxu0
      %v4956 = vadd.f32 0.0, %v4955
      %v4957 = vpop.f32.mrb[0].mxu0
      %4958 = vmatprep.mubr.bf16.mxu0 %v4666
      %4959 = vmatmul.mubr.bf16.gmra.mrb[0].mxu0 %v4665
      %v4960 = vpop.f32.mrb[0].mxu0
      %v4961 = vadd.f32 0.0, %v4960
      %v4962 = vpop.f32.mrb[0].mxu0
      %v4963 = vpop.f32.mrb[0].mxu0
      %v4964 = vadd.f32 0.0, %v4963
      %v4965 = vpop.f32.mrb[0].mxu0
      %4966 = vmatprep.mubr.bf16.mxu0 %v4669
      %4967 = vmatmul.mubr.bf16.gmra.mrb[0].mxu0 %v4668
      %v4968 = vpop.f32.mrb[0].mxu0
      %v4969 = vadd.f32 0.0, %v4968
      %v4970 = vpop.f32.mrb[0].mxu0
      %v4971 = vpop.f32.mrb[0].mxu0
      %v4972 = vadd.f32 0.0, %v4971
      %v4973 = vpop.f32.mrb[0].mxu0
      %4974 = vmatprep.mubr.bf16.mxu0 %v4672
      %4975 = vmatmul.mubr.bf16.gmra.mrb[0].mxu0 %v4671
      %v4976 = vpop.f32.mrb[0].mxu0
      %v4977 = vadd.f32 0.0, %v4976
      %v4978 = vpop.f32.mrb[0].mxu0
      %v4979 = vpop.f32.mrb[0].mxu0
      %v4980 = vadd.f32 0.0, %v4979
      %v4981 = vpop.f32.mrb[0].mxu0
      %4982 = vmatprep.mubr.bf16.mxu0 %v4675
      %4983 = vmatmul.mubr.bf16.gmra.mrb[0].mxu0 %v4674
      %v4984 = vpop.f32.mrb[0].mxu0
      %v4985 = vadd.f32 0.0, %v4984
      %v4986 = vpop.f32.mrb[0].mxu0
      %v4987 = vpop.f32.mrb[0].mxu0
      %v4988 = vadd.f32 0.0, %v4987
      %v4989 = vpop.f32.mrb[0].mxu0
      %4990 = vmatprep.mubr.bf16.mxu0 %v4678
      %4991 = vmatmul.mubr.bf16.gmra.mrb[0].mxu0 %v4677
      %v4992 = vpop.f32.mrb[0].mxu0
      %v4993 = vadd.f32 0.0, %v4992
      %v4994 = vpop.f32.mrb[0].mxu0
      %v4995 = vpop.f32.mrb[0].mxu0
      %v4996 = vadd.f32 0.0, %v4995
      %v4997 = vpop.f32.mrb[0].mxu0
      %4998 = vmatprep.mubr.bf16.mxu0 %v4681
      %4999 = vmatmul.mubr.bf16.gmra.mrb[0].mxu0 %v4680
      %v5000 = vpop.f32.mrb[0].mxu0
      %v5001 = vadd.f32 0.0, %v5000
      %v5002 = vpop.f32.mrb[0].mxu0
      %v5003 = vpop.f32.mrb[0].mxu0
      %v5004 = vadd.f32 0.0, %v5003
      %v5005 = vpop.f32.mrb[0].mxu0
      %5006 = vmatprep.mubr.bf16.mxu0 %v4684
      %5007 = vmatmul.mubr.bf16.gmra.mrb[0].mxu0 %v4683
      %v5008 = vpop.f32.mrb[0].mxu0
      %v5009 = vadd.f32 0.0, %v5008
      %v5010 = vpop.f32.mrb[0].mxu0
      %v5011 = vpop.f32.mrb[0].mxu0
      %v5012 = vadd.f32 0.0, %v5011
      %v5013 = vpop.f32.mrb[0].mxu0
      %5014 = vmatprep.mubr.bf16.mxu0 %v4687
      %5015 = vmatmul.mubr.bf16.gmra.mrb[0].mxu0 %v4686
      %v5016 = vpop.f32.mrb[0].mxu0
      %v5017 = vadd.f32 0.0, %v5016
      %v5018 = vpop.f32.mrb[0].mxu0
      %v5019 = vpop.f32.mrb[0].mxu0
      %v5020 = vadd.f32 0.0, %v5019
      %v5021 = vpop.f32.mrb[0].mxu0
      %5022 = vmatprep.mubr.bf16.mxu0 %v4690
      %5023 = vmatmul.mubr.bf16.gmra.mrb[0].mxu0 %v4689
      %v5024 = vpop.f32.mrb[0].mxu0
      %v5025 = vadd.f32 0.0, %v5024
      %v5026 = vpop.f32.mrb[0].mxu0
      %v5027 = vpop.f32.mrb[0].mxu0
      %v5028 = vadd.f32 0.0, %v5027
      %v5029 = vpop.f32.mrb[0].mxu0
      %5030 = vmatprep.mubr.bf16.mxu0 %v4693
      %5031 = vmatmul.mubr.bf16.gmra.mrb[0].mxu0 %v4692
      %v5032 = vpop.f32.mrb[0].mxu0
      %v5033 = vadd.f32 0.0, %v5032
      %v5034 = vpop.f32.mrb[0].mxu0
      %v5035 = vpop.f32.mrb[0].mxu0
      %v5036 = vadd.f32 0.0, %v5035
      %v5037 = vpop.f32.mrb[0].mxu0
      %5038 = vmatprep.mubr.bf16.mxu0 %v4696
      %5039 = vmatmul.mubr.bf16.gmra.mrb[0].mxu0 %v4695
      %v5040 = vpop.f32.mrb[0].mxu0
      %v5041 = vadd.f32 0.0, %v5040
      %v5042 = vpop.f32.mrb[0].mxu0
      %v5043 = vpop.f32.mrb[0].mxu0
      %v5044 = vadd.f32 0.0, %v5043
      %v5045 = vpop.f32.mrb[0].mxu0
      %5046 = vmatprep.mubr.bf16.mxu0 %v4699
      %5047 = vmatmul.mubr.bf16.gmra.mrb[0].mxu0 %v4698
      %v5048 = vpop.f32.mrb[0].mxu0
      %v5049 = vadd.f32 0.0, %v5048
      %v5050 = vpop.f32.mrb[0].mxu0
      %v5051 = vpop.f32.mrb[0].mxu0
      %v5052 = vadd.f32 0.0, %v5051
      %v5053 = vpop.f32.mrb[0].mxu0
      %5054 = vdwg.mxu0
      %5055 = vmatprep.subr.bf16.mxu0 0
      %5056 = vmatpush1.bf16.msra.mxu0 %v4862
      %5057 = vmatprep.subr.bf16.mxu0 0
      %5058 = vmatpush1.bf16.msra.mxu0 %v4863
      %5059 = vmatprep.subr.bf16.mxu0 0
      %5060 = vmatpush1.bf16.msra.mxu0 %v4864
      %5061 = vmatprep.subr.bf16.mxu0 0
      %5062 = vmatpush1.bf16.msra.mxu0 %v4865
      %5063 = vmatprep.subr.bf16.mxu0 0
      %5064 = vmatpush1.bf16.msra.mxu0 %v4866
      %5065 = vmatprep.subr.bf16.mxu0 0
      %5066 = vmatpush1.bf16.msra.mxu0 %v4867
      %5067 = vmatprep.subr.bf16.mxu0 0
      %5068 = vmatpush1.bf16.msra.mxu0 %v4868
      %5069 = vmatprep.subr.bf16.mxu0 0
      %5070 = vmatpush1.bf16.msra.mxu0 %v4869
      %5071 = vmatprep.subr.bf16.mxu0 0
      %5072 = vmatpush1.bf16.msra.mxu0 0
      %5073 = vmatprep.subr.bf16.mxu0 0
      %5074 = vmatpush1.bf16.msra.mxu0 0
      %5075 = vmatprep.subr.bf16.mxu0 0
      %5076 = vmatpush1.bf16.msra.mxu0 0
      %5077 = vmatprep.subr.bf16.mxu0 0
      %5078 = vmatpush1.bf16.msra.mxu0 0
      %5079 = vmatprep.subr.bf16.mxu0 0
      %5080 = vmatpush1.bf16.msra.mxu0 0
      %5081 = vmatprep.subr.bf16.mxu0 0
      %5082 = vmatpush1.bf16.msra.mxu0 0
      %5083 = vmatprep.subr.bf16.mxu0 0
      %5084 = vmatpush1.bf16.msra.mxu0 0
      %5085 = vmatprep.subr.bf16.mxu0 0
      %5086 = vmatpush1.bf16.msra.mxu0 0
      %5087 = vmatprep.mubr.bf16.mxu0 0
      %5088 = vmatmul.mubr.bf16.gmra.mrb[0].mxu0 %v4655
      %v5089 = vpop.f32.mrb[0].mxu0
      %v5090 = vadd.f32 %v4929, %v5089
      %v5091 = vpop.f32.mrb[0].mxu0
      %v5092 = vpop.f32.mrb[0].mxu0
      %v5093 = vadd.f32 %v4932, %v5092
      %v5094 = vpop.f32.mrb[0].mxu0
      %5095 = vmatprep.mubr.bf16.mxu0 0
      %5096 = vmatmul.mubr.bf16.gmra.mrb[0].mxu0 %v4658
      %v5097 = vpop.f32.mrb[0].mxu0
      %v5098 = vadd.f32 %v4937, %v5097
      %v5099 = vpop.f32.mrb[0].mxu0
      %v5100 = vpop.f32.mrb[0].mxu0
      %v5101 = vadd.f32 %v4940, %v5100
      %v5102 = vpop.f32.mrb[0].mxu0
      %5103 = vmatprep.mubr.bf16.mxu0 0
      %5104 = vmatmul.mubr.bf16.gmra.mrb[0].mxu0 %v4661
      %v5105 = vpop.f32.mrb[0].mxu0
      %v5106 = vadd.f32 %v4945, %v5105
      %v5107 = vpop.f32.mrb[0].mxu0
      %v5108 = vpop.f32.mrb[0].mxu0
      %v5109 = vadd.f32 %v4948, %v5108
      %v5110 = vpop.f32.mrb[0].mxu0
      %5111 = vmatprep.mubr.bf16.mxu0 0
      %5112 = vmatmul.mubr.bf16.gmra.mrb[0].mxu0 %v4664
      %v5113 = vpop.f32.mrb[0].mxu0
      %v5114 = vadd.f32 %v4953, %v5113
      %v5115 = vpop.f32.mrb[0].mxu0
      %v5116 = vpop.f32.mrb[0].mxu0
      %v5117 = vadd.f32 %v4956, %v5116
      %v5118 = vpop.f32.mrb[0].mxu0
      %5119 = vmatprep.mubr.bf16.mxu0 0
      %5120 = vmatmul.mubr.bf16.gmra.mrb[0].mxu0 %v4667
      %v5121 = vpop.f32.mrb[0].mxu0
      %v5122 = vadd.f32 %v4961, %v5121
      %v5123 = vpop.f32.mrb[0].mxu0
      %v5124 = vpop.f32.mrb[0].mxu0
      %v5125 = vadd.f32 %v4964, %v5124
      %v5126 = vpop.f32.mrb[0].mxu0
      %5127 = vmatprep.mubr.bf16.mxu0 0
      %5128 = vmatmul.mubr.bf16.gmra.mrb[0].mxu0 %v4670
      %v5129 = vpop.f32.mrb[0].mxu0
      %v5130 = vadd.f32 %v4969, %v5129
      %v5131 = vpop.f32.mrb[0].mxu0
      %v5132 = vpop.f32.mrb[0].mxu0
      %v5133 = vadd.f32 %v4972, %v5132
      %v5134 = vpop.f32.mrb[0].mxu0
      %5135 = vmatprep.mubr.bf16.mxu0 0
      %5136 = vmatmul.mubr.bf16.gmra.mrb[0].mxu0 %v4673
      %v5137 = vpop.f32.mrb[0].mxu0
      %v5138 = vadd.f32 %v4977, %v5137
      %v5139 = vpop.f32.mrb[0].mxu0
      %v5140 = vpop.f32.mrb[0].mxu0
      %v5141 = vadd.f32 %v4980, %v5140
      %v5142 = vpop.f32.mrb[0].mxu0
      %5143 = vmatprep.mubr.bf16.mxu0 0
      %5144 = vmatmul.mubr.bf16.gmra.mrb[0].mxu0 %v4676
      %v5145 = vpop.f32.mrb[0].mxu0
      %v5146 = vadd.f32 %v4985, %v5145
      %v5147 = vpop.f32.mrb[0].mxu0
      %v5148 = vpop.f32.mrb[0].mxu0
      %v5149 = vadd.f32 %v4988, %v5148
      %v5150 = vpop.f32.mrb[0].mxu0
      %5151 = vmatprep.mubr.bf16.mxu0 0
      %5152 = vmatmul.mubr.bf16.gmra.mrb[0].mxu0 %v4679
      %v5153 = vpop.f32.mrb[0].mxu0
      %v5154 = vadd.f32 %v4993, %v5153
      %v5155 = vpop.f32.mrb[0].mxu0
      %v5156 = vpop.f32.mrb[0].mxu0
      %v5157 = vadd.f32 %v4996, %v5156
      %v5158 = vpop.f32.mrb[0].mxu0
      %5159 = vmatprep.mubr.bf16.mxu0 0
      %5160 = vmatmul.mubr.bf16.gmra.mrb[0].mxu0 %v4682
      %v5161 = vpop.f32.mrb[0].mxu0
      %v5162 = vadd.f32 %v5001, %v5161
      %v5163 = vpop.f32.mrb[0].mxu0
      %v5164 = vpop.f32.mrb[0].mxu0
      %v5165 = vadd.f32 %v5004, %v5164
      %v5166 = vpop.f32.mrb[0].mxu0
      %5167 = vmatprep.mubr.bf16.mxu0 0
      %5168 = vmatmul.mubr.bf16.gmra.mrb[0].mxu0 %v4685
      %v5169 = vpop.f32.mrb[0].mxu0
      %v5170 = vadd.f32 %v5009, %v5169
      %v5171 = vpop.f32.mrb[0].mxu0
      %v5172 = vpop.f32.mrb[0].mxu0
      %v5173 = vadd.f32 %v5012, %v5172
      %v5174 = vpop.f32.mrb[0].mxu0
      %5175 = vmatprep.mubr.bf16.mxu0 0
      %5176 = vmatmul.mubr.bf16.gmra.mrb[0].mxu0 %v4688
      %v5177 = vpop.f32.mrb[0].mxu0
      %v5178 = vadd.f32 %v5017, %v5177
      %v5179 = vpop.f32.mrb[0].mxu0
      %v5180 = vpop.f32.mrb[0].mxu0
      %v5181 = vadd.f32 %v5020, %v5180
      %v5182 = vpop.f32.mrb[0].mxu0
      %5183 = vmatprep.mubr.bf16.mxu0 0
      %5184 = vmatmul.mubr.bf16.gmra.mrb[0].mxu0 %v4691
      %v5185 = vpop.f32.mrb[0].mxu0
      %v5186 = vadd.f32 %v5025, %v5185
      %v5187 = vpop.f32.mrb[0].mxu0
      %v5188 = vpop.f32.mrb[0].mxu0
      %v5189 = vadd.f32 %v5028, %v5188
      %v5190 = vpop.f32.mrb[0].mxu0
      %5191 = vmatprep.mubr.bf16.mxu0 0
      %5192 = vmatmul.mubr.bf16.gmra.mrb[0].mxu0 %v4694
      %v5193 = vpop.f32.mrb[0].mxu0
      %v5194 = vadd.f32 %v5033, %v5193
      %v5195 = vpop.f32.mrb[0].mxu0
      %v5196 = vpop.f32.mrb[0].mxu0
      %v5197 = vadd.f32 %v5036, %v5196
      %v5198 = vpop.f32.mrb[0].mxu0
      %5199 = vmatprep.mubr.bf16.mxu0 0
      %5200 = vmatmul.mubr.bf16.gmra.mrb[0].mxu0 %v4697
      %v5201 = vpop.f32.mrb[0].mxu0
      %v5202 = vadd.f32 %v5041, %v5201
      %v5203 = vpop.f32.mrb[0].mxu0
      %v5204 = vpop.f32.mrb[0].mxu0
      %v5205 = vadd.f32 %v5044, %v5204
      %v5206 = vpop.f32.mrb[0].mxu0
      %5207 = vmatprep.mubr.bf16.mxu0 0
      %5208 = vmatmul.mubr.bf16.gmra.mrb[0].mxu0 %v4700
      %v5209 = vpop.f32.mrb[0].mxu0
      %v5210 = vadd.f32 %v5049, %v5209
      %v5211 = vpop.f32.mrb[0].mxu0
      %v5212 = vpop.f32.mrb[0].mxu0
      %v5213 = vadd.f32 %v5052, %v5212
      %v5214 = vpop.f32.mrb[0].mxu0
      %5215 = vdwg.mxu0
      %v5264 = vunpack.c.l.b16 %v4605
      %v5265 = vunpack.c.l.b16 %v4606
      %v5266 = vunpack.c.l.b16 %v4607
      %v5267 = vunpack.c.l.b16 %v4608
      %v5268 = vunpack.c.l.b16 %v4609
      %v5269 = vunpack.c.l.b16 %v4610
      %v5270 = vunpack.c.l.b16 %v4611
      %v5271 = vunpack.c.l.b16 %v4612
      %v5272 = vunpack.c.l.b16 %v4613
      %v5273 = vunpack.c.l.b16 %v4614
      %v5274 = vunpack.c.l.b16 %v4615
      %v5275 = vunpack.c.l.b16 %v4616
      %v5276 = vunpack.c.l.b16 %v4617
      %v5277 = vunpack.c.l.b16 %v4618
      %v5278 = vunpack.c.l.b16 %v4619
      %v5279 = vunpack.c.l.b16 %v4620
      %v5280 = vunpack.c.l.b16 %v4621
      %v5281 = vunpack.c.l.b16 %v4622
      %v5282 = vunpack.c.l.b16 %v4623
      %v5283 = vunpack.c.l.b16 %v4624
      %v5284 = vunpack.c.l.b16 %v4625
      %v5285 = vunpack.c.l.b16 %v4626
      %v5286 = vunpack.c.l.b16 %v4627
      %v5287 = vunpack.c.l.b16 %v4628
      %v5288 = vunpack.c.l.b16 %v4629
      %v5289 = vunpack.c.l.b16 %v4630
      %v5290 = vunpack.c.l.b16 %v4631
      %v5291 = vunpack.c.l.b16 %v4632
      %v5292 = vunpack.c.l.b16 %v4633
      %v5293 = vunpack.c.l.b16 %v4634
      %v5294 = vunpack.c.l.b16 %v4635
      %v5295 = vunpack.c.l.b16 %v4636
      %v5296 = vunpack.c.l.b16 %v4637
      %v5297 = vunpack.c.l.b16 %v4638
      %v5298 = vunpack.c.l.b16 %v4639
      %v5299 = vunpack.c.l.b16 %v4640
      %v5300 = vunpack.c.l.b16 %v4641
      %v5301 = vunpack.c.l.b16 %v4642
      %v5302 = vunpack.c.l.b16 %v4643
      %v5303 = vunpack.c.l.b16 %v4644
      %v5304 = vunpack.c.l.b16 %v4645
      %v5305 = vunpack.c.l.b16 %v4646
      %v5306 = vunpack.c.l.b16 %v4647
      %v5307 = vunpack.c.l.b16 %v4648
      %v5308 = vunpack.c.l.b16 %v4649
      %v5309 = vunpack.c.l.b16 %v4650
      %v5310 = vunpack.c.l.b16 %v4651
      %v5311 = vunpack.c.l.b16 %v4652
      %v5312 = vpack.c.b16 %v5265, %v5264
      %v5313 = vpack.c.b16 %v5267, %v5266
      %v5314 = vpack.c.b16 %v5269, %v5268
      %v5315 = vpack.c.b16 %v5271, %v5270
      %v5316 = vpack.c.b16 %v5273, %v5272
      %v5317 = vpack.c.b16 %v5275, %v5274
      %v5318 = vpack.c.b16 %v5277, %v5276
      %v5319 = vpack.c.b16 %v5279, %v5278
      %v5320 = vpack.c.b16 %v5281, %v5280
      %v5321 = vpack.c.b16 %v5283, %v5282
      %v5322 = vpack.c.b16 %v5285, %v5284
      %v5323 = vpack.c.b16 %v5287, %v5286
      %v5324 = vpack.c.b16 %v5289, %v5288
      %v5325 = vpack.c.b16 %v5291, %v5290
      %v5326 = vpack.c.b16 %v5293, %v5292
      %v5327 = vpack.c.b16 %v5295, %v5294
      %v5328 = vpack.c.b16 %v5297, %v5296
      %v5329 = vpack.c.b16 %v5299, %v5298
      %v5330 = vpack.c.b16 %v5301, %v5300
      %v5331 = vpack.c.b16 %v5303, %v5302
      %v5332 = vpack.c.b16 %v5305, %v5304
      %v5333 = vpack.c.b16 %v5307, %v5306
      %v5334 = vpack.c.b16 %v5309, %v5308
      %v5335 = vpack.c.b16 %v5311, %v5310
      %5360 = vmatprep.subr.bf16.mxu0 0
      %5361 = vmatpush1.bf16.msra.mxu0 %v5312
      %5362 = vmatprep.subr.bf16.mxu0 0
      %5363 = vmatpush1.bf16.msra.mxu0 %v5313
      %5364 = vmatprep.subr.bf16.mxu0 0
      %5365 = vmatpush1.bf16.msra.mxu0 %v5314
      %5366 = vmatprep.subr.bf16.mxu0 0
      %5367 = vmatpush1.bf16.msra.mxu0 %v5315
      %5368 = vmatprep.subr.bf16.mxu0 0
      %5369 = vmatpush1.bf16.msra.mxu0 %v5316
      %5370 = vmatprep.subr.bf16.mxu0 0
      %5371 = vmatpush1.bf16.msra.mxu0 %v5317
      %5372 = vmatprep.subr.bf16.mxu0 0
      %5373 = vmatpush1.bf16.msra.mxu0 %v5318
      %5374 = vmatprep.subr.bf16.mxu0 0
      %5375 = vmatpush1.bf16.msra.mxu0 %v5319
      %5376 = vmatprep.subr.bf16.mxu0 0
      %5377 = vmatpush1.bf16.msra.mxu0 %v5320
      %5378 = vmatprep.subr.bf16.mxu0 0
      %5379 = vmatpush1.bf16.msra.mxu0 %v5321
      %5380 = vmatprep.subr.bf16.mxu0 0
      %5381 = vmatpush1.bf16.msra.mxu0 %v5322
      %5382 = vmatprep.subr.bf16.mxu0 0
      %5383 = vmatpush1.bf16.msra.mxu0 %v5323
      %5384 = vmatprep.subr.bf16.mxu0 0
      %5385 = vmatpush1.bf16.msra.mxu0 %v5324
      %5386 = vmatprep.subr.bf16.mxu0 0
      %5387 = vmatpush1.bf16.msra.mxu0 %v5325
      %5388 = vmatprep.subr.bf16.mxu0 0
      %5389 = vmatpush1.bf16.msra.mxu0 %v5326
      %5390 = vmatprep.subr.bf16.mxu0 0
      %5391 = vmatpush1.bf16.msra.mxu0 %v5327
      %5392 = vmatprep.mubr.bf16.mxu0 %v4558
      %5393 = vmatmul.mubr.bf16.gmra.mrb[0].mxu0 %v4557
      %v5394 = vpop.f32.mrb[0].mxu0
      %v5395 = vadd.f32 %v5090, %v5394
      %v5396 = vpop.f32.mrb[0].mxu0
      %v5397 = vpop.f32.mrb[0].mxu0
      %v5398 = vadd.f32 %v5093, %v5397
      %v5399 = vpop.f32.mrb[0].mxu0
      %5400 = vmatprep.mubr.bf16.mxu0 %v4561
      %5401 = vmatmul.mubr.bf16.gmra.mrb[0].mxu0 %v4560
      %v5402 = vpop.f32.mrb[0].mxu0
      %v5403 = vadd.f32 %v5098, %v5402
      %v5404 = vpop.f32.mrb[0].mxu0
      %v5405 = vpop.f32.mrb[0].mxu0
      %v5406 = vadd.f32 %v5101, %v5405
      %v5407 = vpop.f32.mrb[0].mxu0
      %5408 = vmatprep.mubr.bf16.mxu0 %v4564
      %5409 = vmatmul.mubr.bf16.gmra.mrb[0].mxu0 %v4563
      %v5410 = vpop.f32.mrb[0].mxu0
      %v5411 = vadd.f32 %v5106, %v5410
      %v5412 = vpop.f32.mrb[0].mxu0
      %v5413 = vpop.f32.mrb[0].mxu0
      %v5414 = vadd.f32 %v5109, %v5413
      %v5415 = vpop.f32.mrb[0].mxu0
      %5416 = vmatprep.mubr.bf16.mxu0 %v4567
      %5417 = vmatmul.mubr.bf16.gmra.mrb[0].mxu0 %v4566
      %v5418 = vpop.f32.mrb[0].mxu0
      %v5419 = vadd.f32 %v5114, %v5418
      %v5420 = vpop.f32.mrb[0].mxu0
      %v5421 = vpop.f32.mrb[0].mxu0
      %v5422 = vadd.f32 %v5117, %v5421
      %v5423 = vpop.f32.mrb[0].mxu0
      %5424 = vmatprep.mubr.bf16.mxu0 %v4570
      %5425 = vmatmul.mubr.bf16.gmra.mrb[0].mxu0 %v4569
      %v5426 = vpop.f32.mrb[0].mxu0
      %v5427 = vadd.f32 %v5122, %v5426
      %v5428 = vpop.f32.mrb[0].mxu0
      %v5429 = vpop.f32.mrb[0].mxu0
      %v5430 = vadd.f32 %v5125, %v5429
      %v5431 = vpop.f32.mrb[0].mxu0
      %5432 = vmatprep.mubr.bf16.mxu0 %v4573
      %5433 = vmatmul.mubr.bf16.gmra.mrb[0].mxu0 %v4572
      %v5434 = vpop.f32.mrb[0].mxu0
      %v5435 = vadd.f32 %v5130, %v5434
      %v5436 = vpop.f32.mrb[0].mxu0
      %v5437 = vpop.f32.mrb[0].mxu0
      %v5438 = vadd.f32 %v5133, %v5437
      %v5439 = vpop.f32.mrb[0].mxu0
      %5440 = vmatprep.mubr.bf16.mxu0 %v4576
      %5441 = vmatmul.mubr.bf16.gmra.mrb[0].mxu0 %v4575
      %v5442 = vpop.f32.mrb[0].mxu0
      %v5443 = vadd.f32 %v5138, %v5442
      %v5444 = vpop.f32.mrb[0].mxu0
      %v5445 = vpop.f32.mrb[0].mxu0
      %v5446 = vadd.f32 %v5141, %v5445
      %v5447 = vpop.f32.mrb[0].mxu0
      %5448 = vmatprep.mubr.bf16.mxu0 %v4579
      %5449 = vmatmul.mubr.bf16.gmra.mrb[0].mxu0 %v4578
      %v5450 = vpop.f32.mrb[0].mxu0
      %v5451 = vadd.f32 %v5146, %v5450
      %v5452 = vpop.f32.mrb[0].mxu0
      %v5453 = vpop.f32.mrb[0].mxu0
      %v5454 = vadd.f32 %v5149, %v5453
      %v5455 = vpop.f32.mrb[0].mxu0
      %5456 = vmatprep.mubr.bf16.mxu0 %v4582
      %5457 = vmatmul.mubr.bf16.gmra.mrb[0].mxu0 %v4581
      %v5458 = vpop.f32.mrb[0].mxu0
      %v5459 = vadd.f32 %v5154, %v5458
      %v5460 = vpop.f32.mrb[0].mxu0
      %v5461 = vpop.f32.mrb[0].mxu0
      %v5462 = vadd.f32 %v5157, %v5461
      %v5463 = vpop.f32.mrb[0].mxu0
      %5464 = vmatprep.mubr.bf16.mxu0 %v4585
      %5465 = vmatmul.mubr.bf16.gmra.mrb[0].mxu0 %v4584
      %v5466 = vpop.f32.mrb[0].mxu0
      %v5467 = vadd.f32 %v5162, %v5466
      %v5468 = vpop.f32.mrb[0].mxu0
      %v5469 = vpop.f32.mrb[0].mxu0
      %v5470 = vadd.f32 %v5165, %v5469
      %v5471 = vpop.f32.mrb[0].mxu0
      %5472 = vmatprep.mubr.bf16.mxu0 %v4588
      %5473 = vmatmul.mubr.bf16.gmra.mrb[0].mxu0 %v4587
      %v5474 = vpop.f32.mrb[0].mxu0
      %v5475 = vadd.f32 %v5170, %v5474
      %v5476 = vpop.f32.mrb[0].mxu0
      %v5477 = vpop.f32.mrb[0].mxu0
      %v5478 = vadd.f32 %v5173, %v5477
      %v5479 = vpop.f32.mrb[0].mxu0
      %5480 = vmatprep.mubr.bf16.mxu0 %v4591
      %5481 = vmatmul.mubr.bf16.gmra.mrb[0].mxu0 %v4590
      %v5482 = vpop.f32.mrb[0].mxu0
      %v5483 = vadd.f32 %v5178, %v5482
      %v5484 = vpop.f32.mrb[0].mxu0
      %v5485 = vpop.f32.mrb[0].mxu0
      %v5486 = vadd.f32 %v5181, %v5485
      %v5487 = vpop.f32.mrb[0].mxu0
      %5488 = vmatprep.mubr.bf16.mxu0 %v4594
      %5489 = vmatmul.mubr.bf16.gmra.mrb[0].mxu0 %v4593
      %v5490 = vpop.f32.mrb[0].mxu0
      %v5491 = vadd.f32 %v5186, %v5490
      %v5492 = vpop.f32.mrb[0].mxu0
      %v5493 = vpop.f32.mrb[0].mxu0
      %v5494 = vadd.f32 %v5189, %v5493
      %v5495 = vpop.f32.mrb[0].mxu0
      %5496 = vmatprep.mubr.bf16.mxu0 %v4597
      %5497 = vmatmul.mubr.bf16.gmra.mrb[0].mxu0 %v4596
      %v5498 = vpop.f32.mrb[0].mxu0
      %v5499 = vadd.f32 %v5194, %v5498
      %v5500 = vpop.f32.mrb[0].mxu0
      %v5501 = vpop.f32.mrb[0].mxu0
      %v5502 = vadd.f32 %v5197, %v5501
      %v5503 = vpop.f32.mrb[0].mxu0
      %5504 = vmatprep.mubr.bf16.mxu0 %v4600
      %5505 = vmatmul.mubr.bf16.gmra.mrb[0].mxu0 %v4599
      %v5506 = vpop.f32.mrb[0].mxu0
      %v5507 = vadd.f32 %v5202, %v5506
      %v5508 = vpop.f32.mrb[0].mxu0
      %v5509 = vpop.f32.mrb[0].mxu0
      %v5510 = vadd.f32 %v5205, %v5509
      %v5511 = vpop.f32.mrb[0].mxu0
      %5512 = vmatprep.mubr.bf16.mxu0 %v4603
      %5513 = vmatmul.mubr.bf16.gmra.mrb[0].mxu0 %v4602
      %v5514 = vpop.f32.mrb[0].mxu0
      %v5515 = vadd.f32 %v5210, %v5514
      %v5516 = vpop.f32.mrb[0].mxu0
      %v5517 = vpop.f32.mrb[0].mxu0
      %v5518 = vadd.f32 %v5213, %v5517
      %v5519 = vpop.f32.mrb[0].mxu0
      %5520 = vdwg.mxu0
      %5521 = vmatprep.subr.bf16.mxu0 0
      %5522 = vmatpush1.bf16.msra.mxu0 %v5328
      %5523 = vmatprep.subr.bf16.mxu0 0
      %5524 = vmatpush1.bf16.msra.mxu0 %v5329
      %5525 = vmatprep.subr.bf16.mxu0 0
      %5526 = vmatpush1.bf16.msra.mxu0 %v5330
      %5527 = vmatprep.subr.bf16.mxu0 0
      %5528 = vmatpush1.bf16.msra.mxu0 %v5331
      %5529 = vmatprep.subr.bf16.mxu0 0
      %5530 = vmatpush1.bf16.msra.mxu0 %v5332
      %5531 = vmatprep.subr.bf16.mxu0 0
      %5532 = vmatpush1.bf16.msra.mxu0 %v5333
      %5533 = vmatprep.subr.bf16.mxu0 0
      %5534 = vmatpush1.bf16.msra.mxu0 %v5334
      %5535 = vmatprep.subr.bf16.mxu0 0
      %5536 = vmatpush1.bf16.msra.mxu0 %v5335
      %5537 = vmatprep.subr.bf16.mxu0 0
      %5538 = vmatpush1.bf16.msra.mxu0 0
      %5539 = vmatprep.subr.bf16.mxu0 0
      %5540 = vmatpush1.bf16.msra.mxu0 0
      %5541 = vmatprep.subr.bf16.mxu0 0
      %5542 = vmatpush1.bf16.msra.mxu0 0
      %5543 = vmatprep.subr.bf16.mxu0 0
      %5544 = vmatpush1.bf16.msra.mxu0 0
      %5545 = vmatprep.subr.bf16.mxu0 0
      %5546 = vmatpush1.bf16.msra.mxu0 0
      %5547 = vmatprep.subr.bf16.mxu0 0
      %5548 = vmatpush1.bf16.msra.mxu0 0
      %5549 = vmatprep.subr.bf16.mxu0 0
      %5550 = vmatpush1.bf16.msra.mxu0 0
      %5551 = vmatprep.subr.bf16.mxu0 0
      %5552 = vmatpush1.bf16.msra.mxu0 0
      %5553 = vmatprep.mubr.bf16.mxu0 0
      %5554 = vmatmul.mubr.bf16.gmra.mrb[0].mxu0 %v4559
      %v5555 = vpop.f32.mrb[0].mxu0
      %v5556 = vadd.f32 %v5395, %v5555
      %v5557 = vpop.f32.mrb[0].mxu0
      %v5558 = vpop.f32.mrb[0].mxu0
      %v5559 = vadd.f32 %v5398, %v5558
      %v5560 = vpop.f32.mrb[0].mxu0
      %5561 = vmatprep.mubr.bf16.mxu0 0
      %5562 = vmatmul.mubr.bf16.gmra.mrb[0].mxu0 %v4562
      %v5563 = vpop.f32.mrb[0].mxu0
      %v5564 = vadd.f32 %v5403, %v5563
      %v5565 = vpop.f32.mrb[0].mxu0
      %v5566 = vpop.f32.mrb[0].mxu0
      %v5567 = vadd.f32 %v5406, %v5566
      %v5568 = vpop.f32.mrb[0].mxu0
      %5569 = vmatprep.mubr.bf16.mxu0 0
      %5570 = vmatmul.mubr.bf16.gmra.mrb[0].mxu0 %v4565
      %v5571 = vpop.f32.mrb[0].mxu0
      %v5572 = vadd.f32 %v5411, %v5571
      %v5573 = vpop.f32.mrb[0].mxu0
      %v5574 = vpop.f32.mrb[0].mxu0
      %v5575 = vadd.f32 %v5414, %v5574
      %v5576 = vpop.f32.mrb[0].mxu0
      %5577 = vmatprep.mubr.bf16.mxu0 0
      %5578 = vmatmul.mubr.bf16.gmra.mrb[0].mxu0 %v4568
      %v5579 = vpop.f32.mrb[0].mxu0
      %v5580 = vadd.f32 %v5419, %v5579
      %v5581 = vpop.f32.mrb[0].mxu0
      %v5582 = vpop.f32.mrb[0].mxu0
      %v5583 = vadd.f32 %v5422, %v5582
      %v5584 = vpop.f32.mrb[0].mxu0
      %5585 = vmatprep.mubr.bf16.mxu0 0
      %5586 = vmatmul.mubr.bf16.gmra.mrb[0].mxu0 %v4571
      %v5587 = vpop.f32.mrb[0].mxu0
      %v5588 = vadd.f32 %v5427, %v5587
      %v5589 = vpop.f32.mrb[0].mxu0
      %v5590 = vpop.f32.mrb[0].mxu0
      %v5591 = vadd.f32 %v5430, %v5590
      %v5592 = vpop.f32.mrb[0].mxu0
      %5593 = vmatprep.mubr.bf16.mxu0 0
      %5594 = vmatmul.mubr.bf16.gmra.mrb[0].mxu0 %v4574
      %v5595 = vpop.f32.mrb[0].mxu0
      %v5596 = vadd.f32 %v5435, %v5595
      %v5597 = vpop.f32.mrb[0].mxu0
      %v5598 = vpop.f32.mrb[0].mxu0
      %v5599 = vadd.f32 %v5438, %v5598
      %v5600 = vpop.f32.mrb[0].mxu0
      %5601 = vmatprep.mubr.bf16.mxu0 0
      %5602 = vmatmul.mubr.bf16.gmra.mrb[0].mxu0 %v4577
      %v5603 = vpop.f32.mrb[0].mxu0
      %v5604 = vadd.f32 %v5443, %v5603
      %v5605 = vpop.f32.mrb[0].mxu0
      %v5606 = vpop.f32.mrb[0].mxu0
      %v5607 = vadd.f32 %v5446, %v5606
      %v5608 = vpop.f32.mrb[0].mxu0
      %5609 = vmatprep.mubr.bf16.mxu0 0
      %5610 = vmatmul.mubr.bf16.gmra.mrb[0].mxu0 %v4580
      %v5611 = vpop.f32.mrb[0].mxu0
      %v5612 = vadd.f32 %v5451, %v5611
      %v5613 = vpop.f32.mrb[0].mxu0
      %v5614 = vpop.f32.mrb[0].mxu0
      %v5615 = vadd.f32 %v5454, %v5614
      %v5616 = vpop.f32.mrb[0].mxu0
      %5617 = vmatprep.mubr.bf16.mxu0 0
      %5618 = vmatmul.mubr.bf16.gmra.mrb[0].mxu0 %v4583
      %v5619 = vpop.f32.mrb[0].mxu0
      %v5620 = vadd.f32 %v5459, %v5619
      %v5621 = vpop.f32.mrb[0].mxu0
      %v5622 = vpop.f32.mrb[0].mxu0
      %v5623 = vadd.f32 %v5462, %v5622
      %v5624 = vpop.f32.mrb[0].mxu0
      %5625 = vmatprep.mubr.bf16.mxu0 0
      %5626 = vmatmul.mubr.bf16.gmra.mrb[0].mxu0 %v4586
      %v5627 = vpop.f32.mrb[0].mxu0
      %v5628 = vadd.f32 %v5467, %v5627
      %v5629 = vpop.f32.mrb[0].mxu0
      %v5630 = vpop.f32.mrb[0].mxu0
      %v5631 = vadd.f32 %v5470, %v5630
      %v5632 = vpop.f32.mrb[0].mxu0
      %5633 = vmatprep.mubr.bf16.mxu0 0
      %5634 = vmatmul.mubr.bf16.gmra.mrb[0].mxu0 %v4589
      %v5635 = vpop.f32.mrb[0].mxu0
      %v5636 = vadd.f32 %v5475, %v5635
      %v5637 = vpop.f32.mrb[0].mxu0
      %v5638 = vpop.f32.mrb[0].mxu0
      %v5639 = vadd.f32 %v5478, %v5638
      %v5640 = vpop.f32.mrb[0].mxu0
      %5641 = vmatprep.mubr.bf16.mxu0 0
      %5642 = vmatmul.mubr.bf16.gmra.mrb[0].mxu0 %v4592
      %v5643 = vpop.f32.mrb[0].mxu0
      %v5644 = vadd.f32 %v5483, %v5643
      %v5645 = vpop.f32.mrb[0].mxu0
      %v5646 = vpop.f32.mrb[0].mxu0
      %v5647 = vadd.f32 %v5486, %v5646
      %v5648 = vpop.f32.mrb[0].mxu0
      %5649 = vmatprep.mubr.bf16.mxu0 0
      %5650 = vmatmul.mubr.bf16.gmra.mrb[0].mxu0 %v4595
      %v5651 = vpop.f32.mrb[0].mxu0
      %v5652 = vadd.f32 %v5491, %v5651
      %v5653 = vpop.f32.mrb[0].mxu0
      %v5654 = vpop.f32.mrb[0].mxu0
      %v5655 = vadd.f32 %v5494, %v5654
      %v5656 = vpop.f32.mrb[0].mxu0
      %5657 = vmatprep.mubr.bf16.mxu0 0
      %5658 = vmatmul.mubr.bf16.gmra.mrb[0].mxu0 %v4598
      %v5659 = vpop.f32.mrb[0].mxu0
      %v5660 = vadd.f32 %v5499, %v5659
      %v5661 = vpop.f32.mrb[0].mxu0
      %v5662 = vpop.f32.mrb[0].mxu0
      %v5663 = vadd.f32 %v5502, %v5662
      %v5664 = vpop.f32.mrb[0].mxu0
      %5665 = vmatprep.mubr.bf16.mxu0 0
      %5666 = vmatmul.mubr.bf16.gmra.mrb[0].mxu0 %v4601
      %v5667 = vpop.f32.mrb[0].mxu0
      %v5668 = vadd.f32 %v5507, %v5667
      %v5669 = vpop.f32.mrb[0].mxu0
      %v5670 = vpop.f32.mrb[0].mxu0
      %v5671 = vadd.f32 %v5510, %v5670
      %v5672 = vpop.f32.mrb[0].mxu0
      %5673 = vmatprep.mubr.bf16.mxu0 0
      %5674 = vmatmul.mubr.bf16.gmra.mrb[0].mxu0 %v4604
      %v5675 = vpop.f32.mrb[0].mxu0
      %v5676 = vadd.f32 %v5515, %v5675
      %v5677 = vpop.f32.mrb[0].mxu0
      %v5678 = vpop.f32.mrb[0].mxu0
      %v5679 = vadd.f32 %v5518, %v5678
      %v5680 = vpop.f32.mrb[0].mxu0
      %5681 = vdwg.mxu0
      %v5682 = vld [vmem:[%s3409] sm:$0xff]
      %v5683 = vld [vmem:[%s3409 + $0x8] sm:$0xff]
      %v5684 = vld [vmem:[%s3409 + $0x10] sm:$0xff]
      %v5685 = vld [vmem:[%s3409 + $0x18] sm:$0xff]
      %v5686 = vld [vmem:[%s3409 + $0x20] sm:$0xff]
      %v5687 = vld [vmem:[%s3409 + $0x28] sm:$0xff]
      %v5688 = vld [vmem:[%s3409 + $0x30] sm:$0xff]
      %v5689 = vld [vmem:[%s3409 + $0x38] sm:$0xff]
      %v5690 = vld [vmem:[%s3409 + $0x40] sm:$0xff]
      %v5691 = vld [vmem:[%s3409 + $0x48] sm:$0xff]
      %v5692 = vld [vmem:[%s3409 + $0x50] sm:$0xff]
      %v5693 = vld [vmem:[%s3409 + $0x58] sm:$0xff]
      %v5694 = vld [vmem:[%s3409 + $0x60] sm:$0xff]
      %v5695 = vld [vmem:[%s3409 + $0x68] sm:$0xff]
      %v5696 = vld [vmem:[%s3409 + $0x70] sm:$0xff]
      %v5697 = vld [vmem:[%s3409 + $0x78] sm:$0xff]
      %v5698 = vld [vmem:[%s3409 + $0x80] sm:$0xff]
      %v5699 = vld [vmem:[%s3409 + $0x88] sm:$0xff]
      %v5700 = vld [vmem:[%s3409 + $0x90] sm:$0xff]
      %v5701 = vld [vmem:[%s3409 + $0x98] sm:$0xff]
      %v5702 = vld [vmem:[%s3409 + $0xa0] sm:$0xff]
      %v5703 = vld [vmem:[%s3409 + $0xa8] sm:$0xff]
      %v5704 = vld [vmem:[%s3409 + $0xb0] sm:$0xff]
      %v5705 = vld [vmem:[%s3409 + $0xb8] sm:$0xff]
      %v5706 = vld [vmem:[%s3409 + $0xc0] sm:$0xff]
      %v5707 = vld [vmem:[%s3409 + $0xc8] sm:$0xff]
      %v5708 = vld [vmem:[%s3409 + $0xd0] sm:$0xff]
      %v5709 = vld [vmem:[%s3409 + $0xd8] sm:$0xff]
      %v5710 = vld [vmem:[%s3409 + $0xe0] sm:$0xff]
      %v5711 = vld [vmem:[%s3409 + $0xe8] sm:$0xff]
      %v5712 = vld [vmem:[%s3409 + $0xf0] sm:$0xff]
      %v5713 = vld [vmem:[%s3409 + $0xf8] sm:$0xff]
      %v5714 = vld [vmem:[%s3409 + $0x100] sm:$0xff]
      %v5715 = vld [vmem:[%s3409 + $0x108] sm:$0xff]
      %v5716 = vld [vmem:[%s3409 + $0x110] sm:$0xff]
      %v5717 = vld [vmem:[%s3409 + $0x118] sm:$0xff]
      %v5718 = vld [vmem:[%s3409 + $0x120] sm:$0xff]
      %v5719 = vld [vmem:[%s3409 + $0x128] sm:$0xff]
      %v5720 = vld [vmem:[%s3409 + $0x130] sm:$0xff]
      %v5721 = vld [vmem:[%s3409 + $0x138] sm:$0xff]
      %v5722 = vld [vmem:[%s3409 + $0x140] sm:$0xff]
      %v5723 = vld [vmem:[%s3409 + $0x148] sm:$0xff]
      %v5724 = vld [vmem:[%s3409 + $0x150] sm:$0xff]
      %v5725 = vld [vmem:[%s3409 + $0x158] sm:$0xff]
      %v5726 = vld [vmem:[%s3409 + $0x160] sm:$0xff]
      %v5727 = vld [vmem:[%s3409 + $0x168] sm:$0xff]
      %v5728 = vld [vmem:[%s3409 + $0x170] sm:$0xff]
      %v5729 = vld [vmem:[%s3409 + $0x178] sm:$0xff]
      %s5730 = scalar_lea.vmem %s5, 384
      %v5731 = vld [vmem:[%s5730] sm:$0xf]
      %v5732 = vld [vmem:[%s5730 + $0x4] sm:$0xf]
      %v5733 = vld [vmem:[%s5730 + $0x8] sm:$0xf]
      %v5734 = vld [vmem:[%s5730 + $0xc] sm:$0xf]
      %v5735 = vld [vmem:[%s5730 + $0x10] sm:$0xf]
      %v5736 = vld [vmem:[%s5730 + $0x14] sm:$0xf]
      %v5737 = vld [vmem:[%s5730 + $0x18] sm:$0xf]
      %v5738 = vld [vmem:[%s5730 + $0x1c] sm:$0xf]
      %v5739 = vld [vmem:[%s5730 + $0x20] sm:$0xf]
      %v5740 = vld [vmem:[%s5730 + $0x24] sm:$0xf]
      %v5741 = vld [vmem:[%s5730 + $0x28] sm:$0xf]
      %v5742 = vld [vmem:[%s5730 + $0x2c] sm:$0xf]
      %v5743 = vld [vmem:[%s5730 + $0x30] sm:$0xf]
      %v5744 = vld [vmem:[%s5730 + $0x34] sm:$0xf]
      %v5745 = vld [vmem:[%s5730 + $0x38] sm:$0xf]
      %v5746 = vld [vmem:[%s5730 + $0x3c] sm:$0xf]
      %v5747 = vld [vmem:[%s5730 + $0x40] sm:$0xf]
      %v5748 = vld [vmem:[%s5730 + $0x44] sm:$0xf]
      %v5749 = vld [vmem:[%s5730 + $0x48] sm:$0xf]
      %v5750 = vld [vmem:[%s5730 + $0x4c] sm:$0xf]
      %v5751 = vld [vmem:[%s5730 + $0x50] sm:$0xf]
      %v5752 = vld [vmem:[%s5730 + $0x54] sm:$0xf]
      %v5753 = vld [vmem:[%s5730 + $0x58] sm:$0xf]
      %v5754 = vld [vmem:[%s5730 + $0x5c] sm:$0xf]
      %v5755 = vld [vmem:[%s5730 + $0x60] sm:$0xf]
      %v5756 = vld [vmem:[%s5730 + $0x64] sm:$0xf]
      %v5757 = vld [vmem:[%s5730 + $0x68] sm:$0xf]
      %v5758 = vld [vmem:[%s5730 + $0x6c] sm:$0xf]
      %v5759 = vld [vmem:[%s5730 + $0x70] sm:$0xf]
      %v5760 = vld [vmem:[%s5730 + $0x74] sm:$0xf]
      %v5761 = vld [vmem:[%s5730 + $0x78] sm:$0xf]
      %v5762 = vld [vmem:[%s5730 + $0x7c] sm:$0xf]
      %v5763 = vld [vmem:[%s5730 + $0x80] sm:$0xf]
      %v5764 = vld [vmem:[%s5730 + $0x84] sm:$0xf]
      %v5765 = vld [vmem:[%s5730 + $0x88] sm:$0xf]
      %v5766 = vld [vmem:[%s5730 + $0x8c] sm:$0xf]
      %v5767 = vld [vmem:[%s5730 + $0x90] sm:$0xf]
      %v5768 = vld [vmem:[%s5730 + $0x94] sm:$0xf]
      %v5769 = vld [vmem:[%s5730 + $0x98] sm:$0xf]
      %v5770 = vld [vmem:[%s5730 + $0x9c] sm:$0xf]
      %v5771 = vld [vmem:[%s5730 + $0xa0] sm:$0xf]
      %v5772 = vld [vmem:[%s5730 + $0xa4] sm:$0xf]
      %v5773 = vld [vmem:[%s5730 + $0xa8] sm:$0xf]
      %v5774 = vld [vmem:[%s5730 + $0xac] sm:$0xf]
      %v5775 = vld [vmem:[%s5730 + $0xb0] sm:$0xf]
      %v5776 = vld [vmem:[%s5730 + $0xb4] sm:$0xf]
      %v5777 = vld [vmem:[%s5730 + $0xb8] sm:$0xf]
      %v5778 = vld [vmem:[%s5730 + $0xbc] sm:$0xf]
      %v5827 = vunpack.c.l.b16 %v5731
      %v5828 = vunpack.c.l.b16 %v5732
      %v5829 = vunpack.c.l.b16 %v5733
      %v5830 = vunpack.c.l.b16 %v5734
      %v5831 = vunpack.c.l.b16 %v5735
      %v5832 = vunpack.c.l.b16 %v5736
      %v5833 = vunpack.c.l.b16 %v5737
      %v5834 = vunpack.c.l.b16 %v5738
      %v5835 = vunpack.c.l.b16 %v5739
      %v5836 = vunpack.c.l.b16 %v5740
      %v5837 = vunpack.c.l.b16 %v5741
      %v5838 = vunpack.c.l.b16 %v5742
      %v5839 = vunpack.c.l.b16 %v5743
      %v5840 = vunpack.c.l.b16 %v5744
      %v5841 = vunpack.c.l.b16 %v5745
      %v5842 = vunpack.c.l.b16 %v5746
      %v5843 = vunpack.c.l.b16 %v5747
      %v5844 = vunpack.c.l.b16 %v5748
      %v5845 = vunpack.c.l.b16 %v5749
      %v5846 = vunpack.c.l.b16 %v5750
      %v5847 = vunpack.c.l.b16 %v5751
      %v5848 = vunpack.c.l.b16 %v5752
      %v5849 = vunpack.c.l.b16 %v5753
      %v5850 = vunpack.c.l.b16 %v5754
      %v5851 = vunpack.c.l.b16 %v5755
      %v5852 = vunpack.c.l.b16 %v5756
      %v5853 = vunpack.c.l.b16 %v5757
      %v5854 = vunpack.c.l.b16 %v5758
      %v5855 = vunpack.c.l.b16 %v5759
      %v5856 = vunpack.c.l.b16 %v5760
      %v5857 = vunpack.c.l.b16 %v5761
      %v5858 = vunpack.c.l.b16 %v5762
      %v5859 = vunpack.c.l.b16 %v5763
      %v5860 = vunpack.c.l.b16 %v5764
      %v5861 = vunpack.c.l.b16 %v5765
      %v5862 = vunpack.c.l.b16 %v5766
      %v5863 = vunpack.c.l.b16 %v5767
      %v5864 = vunpack.c.l.b16 %v5768
      %v5865 = vunpack.c.l.b16 %v5769
      %v5866 = vunpack.c.l.b16 %v5770
      %v5867 = vunpack.c.l.b16 %v5771
      %v5868 = vunpack.c.l.b16 %v5772
      %v5869 = vunpack.c.l.b16 %v5773
      %v5870 = vunpack.c.l.b16 %v5774
      %v5871 = vunpack.c.l.b16 %v5775
      %v5872 = vunpack.c.l.b16 %v5776
      %v5873 = vunpack.c.l.b16 %v5777
      %v5874 = vunpack.c.l.b16 %v5778
      %v5875 = vpack.c.b16 %v5828, %v5827
      %v5876 = vpack.c.b16 %v5830, %v5829
      %v5877 = vpack.c.b16 %v5832, %v5831
      %v5878 = vpack.c.b16 %v5834, %v5833
      %v5879 = vpack.c.b16 %v5836, %v5835
      %v5880 = vpack.c.b16 %v5838, %v5837
      %v5881 = vpack.c.b16 %v5840, %v5839
      %v5882 = vpack.c.b16 %v5842, %v5841
      %v5883 = vpack.c.b16 %v5844, %v5843
      %v5884 = vpack.c.b16 %v5846, %v5845
      %v5885 = vpack.c.b16 %v5848, %v5847
      %v5886 = vpack.c.b16 %v5850, %v5849
      %v5887 = vpack.c.b16 %v5852, %v5851
      %v5888 = vpack.c.b16 %v5854, %v5853
      %v5889 = vpack.c.b16 %v5856, %v5855
      %v5890 = vpack.c.b16 %v5858, %v5857
      %v5891 = vpack.c.b16 %v5860, %v5859
      %v5892 = vpack.c.b16 %v5862, %v5861
      %v5893 = vpack.c.b16 %v5864, %v5863
      %v5894 = vpack.c.b16 %v5866, %v5865
      %v5895 = vpack.c.b16 %v5868, %v5867
      %v5896 = vpack.c.b16 %v5870, %v5869
      %v5897 = vpack.c.b16 %v5872, %v5871
      %v5898 = vpack.c.b16 %v5874, %v5873
      %5923 = vmatprep.subr.bf16.mxu0 0
      %5924 = vmatpush1.bf16.msra.mxu0 %v5875
      %5925 = vmatprep.subr.bf16.mxu0 0
      %5926 = vmatpush1.bf16.msra.mxu0 %v5876
      %5927 = vmatprep.subr.bf16.mxu0 0
      %5928 = vmatpush1.bf16.msra.mxu0 %v5877
      %5929 = vmatprep.subr.bf16.mxu0 0
      %5930 = vmatpush1.bf16.msra.mxu0 %v5878
      %5931 = vmatprep.subr.bf16.mxu0 0
      %5932 = vmatpush1.bf16.msra.mxu0 %v5879
      %5933 = vmatprep.subr.bf16.mxu0 0
      %5934 = vmatpush1.bf16.msra.mxu0 %v5880
      %5935 = vmatprep.subr.bf16.mxu0 0
      %5936 = vmatpush1.bf16.msra.mxu0 %v5881
      %5937 = vmatprep.subr.bf16.mxu0 0
      %5938 = vmatpush1.bf16.msra.mxu0 %v5882
      %5939 = vmatprep.subr.bf16.mxu0 0
      %5940 = vmatpush1.bf16.msra.mxu0 %v5883
      %5941 = vmatprep.subr.bf16.mxu0 0
      %5942 = vmatpush1.bf16.msra.mxu0 %v5884
      %5943 = vmatprep.subr.bf16.mxu0 0
      %5944 = vmatpush1.bf16.msra.mxu0 %v5885
      %5945 = vmatprep.subr.bf16.mxu0 0
      %5946 = vmatpush1.bf16.msra.mxu0 %v5886
      %5947 = vmatprep.subr.bf16.mxu0 0
      %5948 = vmatpush1.bf16.msra.mxu0 %v5887
      %5949 = vmatprep.subr.bf16.mxu0 0
      %5950 = vmatpush1.bf16.msra.mxu0 %v5888
      %5951 = vmatprep.subr.bf16.mxu0 0
      %5952 = vmatpush1.bf16.msra.mxu0 %v5889
      %5953 = vmatprep.subr.bf16.mxu0 0
      %5954 = vmatpush1.bf16.msra.mxu0 %v5890
      %5955 = vmatprep.mubr.bf16.mxu0 %v5683
      %5956 = vmatmul.mubr.bf16.gmra.mrb[0].mxu0 %v5682
      %v5957 = vpop.f32.mrb[0].mxu0
      %v5958 = vadd.f32 0.0, %v5957
      %v5959 = vpop.f32.mrb[0].mxu0
      %v5960 = vpop.f32.mrb[0].mxu0
      %v5961 = vadd.f32 0.0, %v5960
      %v5962 = vpop.f32.mrb[0].mxu0
      %5963 = vmatprep.mubr.bf16.mxu0 %v5686
      %5964 = vmatmul.mubr.bf16.gmra.mrb[0].mxu0 %v5685
      %v5965 = vpop.f32.mrb[0].mxu0
      %v5966 = vadd.f32 0.0, %v5965
      %v5967 = vpop.f32.mrb[0].mxu0
      %v5968 = vpop.f32.mrb[0].mxu0
      %v5969 = vadd.f32 0.0, %v5968
      %v5970 = vpop.f32.mrb[0].mxu0
      %5971 = vmatprep.mubr.bf16.mxu0 %v5689
      %5972 = vmatmul.mubr.bf16.gmra.mrb[0].mxu0 %v5688
      %v5973 = vpop.f32.mrb[0].mxu0
      %v5974 = vadd.f32 0.0, %v5973
      %v5975 = vpop.f32.mrb[0].mxu0
      %v5976 = vpop.f32.mrb[0].mxu0
      %v5977 = vadd.f32 0.0, %v5976
      %v5978 = vpop.f32.mrb[0].mxu0
      %5979 = vmatprep.mubr.bf16.mxu0 %v5692
      %5980 = vmatmul.mubr.bf16.gmra.mrb[0].mxu0 %v5691
      %v5981 = vpop.f32.mrb[0].mxu0
      %v5982 = vadd.f32 0.0, %v5981
      %v5983 = vpop.f32.mrb[0].mxu0
      %v5984 = vpop.f32.mrb[0].mxu0
      %v5985 = vadd.f32 0.0, %v5984
      %v5986 = vpop.f32.mrb[0].mxu0
      %5987 = vmatprep.mubr.bf16.mxu0 %v5695
      %5988 = vmatmul.mubr.bf16.gmra.mrb[0].mxu0 %v5694
      %v5989 = vpop.f32.mrb[0].mxu0
      %v5990 = vadd.f32 0.0, %v5989
      %v5991 = vpop.f32.mrb[0].mxu0
      %v5992 = vpop.f32.mrb[0].mxu0
      %v5993 = vadd.f32 0.0, %v5992
      %v5994 = vpop.f32.mrb[0].mxu0
      %5995 = vmatprep.mubr.bf16.mxu0 %v5698
      %5996 = vmatmul.mubr.bf16.gmra.mrb[0].mxu0 %v5697
      %v5997 = vpop.f32.mrb[0].mxu0
      %v5998 = vadd.f32 0.0, %v5997
      %v5999 = vpop.f32.mrb[0].mxu0
      %v6000 = vpop.f32.mrb[0].mxu0
      %v6001 = vadd.f32 0.0, %v6000
      %v6002 = vpop.f32.mrb[0].mxu0
      %6003 = vmatprep.mubr.bf16.mxu0 %v5701
      %6004 = vmatmul.mubr.bf16.gmra.mrb[0].mxu0 %v5700
      %v6005 = vpop.f32.mrb[0].mxu0
      %v6006 = vadd.f32 0.0, %v6005
      %v6007 = vpop.f32.mrb[0].mxu0
      %v6008 = vpop.f32.mrb[0].mxu0
      %v6009 = vadd.f32 0.0, %v6008
      %v6010 = vpop.f32.mrb[0].mxu0
      %6011 = vmatprep.mubr.bf16.mxu0 %v5704
      %6012 = vmatmul.mubr.bf16.gmra.mrb[0].mxu0 %v5703
      %v6013 = vpop.f32.mrb[0].mxu0
      %v6014 = vadd.f32 0.0, %v6013
      %v6015 = vpop.f32.mrb[0].mxu0
      %v6016 = vpop.f32.mrb[0].mxu0
      %v6017 = vadd.f32 0.0, %v6016
      %v6018 = vpop.f32.mrb[0].mxu0
      %6019 = vmatprep.mubr.bf16.mxu0 %v5707
      %6020 = vmatmul.mubr.bf16.gmra.mrb[0].mxu0 %v5706
      %v6021 = vpop.f32.mrb[0].mxu0
      %v6022 = vadd.f32 0.0, %v6021
      %v6023 = vpop.f32.mrb[0].mxu0
      %v6024 = vpop.f32.mrb[0].mxu0
      %v6025 = vadd.f32 0.0, %v6024
      %v6026 = vpop.f32.mrb[0].mxu0
      %6027 = vmatprep.mubr.bf16.mxu0 %v5710
      %6028 = vmatmul.mubr.bf16.gmra.mrb[0].mxu0 %v5709
      %v6029 = vpop.f32.mrb[0].mxu0
      %v6030 = vadd.f32 0.0, %v6029
      %v6031 = vpop.f32.mrb[0].mxu0
      %v6032 = vpop.f32.mrb[0].mxu0
      %v6033 = vadd.f32 0.0, %v6032
      %v6034 = vpop.f32.mrb[0].mxu0
      %6035 = vmatprep.mubr.bf16.mxu0 %v5713
      %6036 = vmatmul.mubr.bf16.gmra.mrb[0].mxu0 %v5712
      %v6037 = vpop.f32.mrb[0].mxu0
      %v6038 = vadd.f32 0.0, %v6037
      %v6039 = vpop.f32.mrb[0].mxu0
      %v6040 = vpop.f32.mrb[0].mxu0
      %v6041 = vadd.f32 0.0, %v6040
      %v6042 = vpop.f32.mrb[0].mxu0
      %6043 = vmatprep.mubr.bf16.mxu0 %v5716
      %6044 = vmatmul.mubr.bf16.gmra.mrb[0].mxu0 %v5715
      %v6045 = vpop.f32.mrb[0].mxu0
      %v6046 = vadd.f32 0.0, %v6045
      %v6047 = vpop.f32.mrb[0].mxu0
      %v6048 = vpop.f32.mrb[0].mxu0
      %v6049 = vadd.f32 0.0, %v6048
      %v6050 = vpop.f32.mrb[0].mxu0
      %6051 = vmatprep.mubr.bf16.mxu0 %v5719
      %6052 = vmatmul.mubr.bf16.gmra.mrb[0].mxu0 %v5718
      %v6053 = vpop.f32.mrb[0].mxu0
      %v6054 = vadd.f32 0.0, %v6053
      %v6055 = vpop.f32.mrb[0].mxu0
      %v6056 = vpop.f32.mrb[0].mxu0
      %v6057 = vadd.f32 0.0, %v6056
      %v6058 = vpop.f32.mrb[0].mxu0
      %6059 = vmatprep.mubr.bf16.mxu0 %v5722
      %6060 = vmatmul.mubr.bf16.gmra.mrb[0].mxu0 %v5721
      %v6061 = vpop.f32.mrb[0].mxu0
      %v6062 = vadd.f32 0.0, %v6061
      %v6063 = vpop.f32.mrb[0].mxu0
      %v6064 = vpop.f32.mrb[0].mxu0
      %v6065 = vadd.f32 0.0, %v6064
      %v6066 = vpop.f32.mrb[0].mxu0
      %6067 = vmatprep.mubr.bf16.mxu0 %v5725
      %6068 = vmatmul.mubr.bf16.gmra.mrb[0].mxu0 %v5724
      %v6069 = vpop.f32.mrb[0].mxu0
      %v6070 = vadd.f32 0.0, %v6069
      %v6071 = vpop.f32.mrb[0].mxu0
      %v6072 = vpop.f32.mrb[0].mxu0
      %v6073 = vadd.f32 0.0, %v6072
      %v6074 = vpop.f32.mrb[0].mxu0
      %6075 = vmatprep.mubr.bf16.mxu0 %v5728
      %6076 = vmatmul.mubr.bf16.gmra.mrb[0].mxu0 %v5727
      %v6077 = vpop.f32.mrb[0].mxu0
      %v6078 = vadd.f32 0.0, %v6077
      %v6079 = vpop.f32.mrb[0].mxu0
      %v6080 = vpop.f32.mrb[0].mxu0
      %v6081 = vadd.f32 0.0, %v6080
      %v6082 = vpop.f32.mrb[0].mxu0
      %6083 = vdwg.mxu0
      %6084 = vmatprep.subr.bf16.mxu0 0
      %6085 = vmatpush1.bf16.msra.mxu0 %v5891
      %6086 = vmatprep.subr.bf16.mxu0 0
      %6087 = vmatpush1.bf16.msra.mxu0 %v5892
      %6088 = vmatprep.subr.bf16.mxu0 0
      %6089 = vmatpush1.bf16.msra.mxu0 %v5893
      %6090 = vmatprep.subr.bf16.mxu0 0
      %6091 = vmatpush1.bf16.msra.mxu0 %v5894
      %6092 = vmatprep.subr.bf16.mxu0 0
      %6093 = vmatpush1.bf16.msra.mxu0 %v5895
      %6094 = vmatprep.subr.bf16.mxu0 0
      %6095 = vmatpush1.bf16.msra.mxu0 %v5896
      %6096 = vmatprep.subr.bf16.mxu0 0
      %6097 = vmatpush1.bf16.msra.mxu0 %v5897
      %6098 = vmatprep.subr.bf16.mxu0 0
      %6099 = vmatpush1.bf16.msra.mxu0 %v5898
      %6100 = vmatprep.subr.bf16.mxu0 0
      %6101 = vmatpush1.bf16.msra.mxu0 0
      %6102 = vmatprep.subr.bf16.mxu0 0
      %6103 = vmatpush1.bf16.msra.mxu0 0
      %6104 = vmatprep.subr.bf16.mxu0 0
      %6105 = vmatpush1.bf16.msra.mxu0 0
      %6106 = vmatprep.subr.bf16.mxu0 0
      %6107 = vmatpush1.bf16.msra.mxu0 0
      %6108 = vmatprep.subr.bf16.mxu0 0
      %6109 = vmatpush1.bf16.msra.mxu0 0
      %6110 = vmatprep.subr.bf16.mxu0 0
      %6111 = vmatpush1.bf16.msra.mxu0 0
      %6112 = vmatprep.subr.bf16.mxu0 0
      %6113 = vmatpush1.bf16.msra.mxu0 0
      %6114 = vmatprep.subr.bf16.mxu0 0
      %6115 = vmatpush1.bf16.msra.mxu0 0
      %6116 = vmatprep.mubr.bf16.mxu0 0
      %6117 = vmatmul.mubr.bf16.gmra.mrb[0].mxu0 %v5684
      %v6118 = vpop.f32.mrb[0].mxu0
      %v6119 = vadd.f32 %v5958, %v6118
      %v6120 = vpop.f32.mrb[0].mxu0
      %v6121 = vpop.f32.mrb[0].mxu0
      %v6122 = vadd.f32 %v5961, %v6121
      %v6123 = vpop.f32.mrb[0].mxu0
      %6124 = vmatprep.mubr.bf16.mxu0 0
      %6125 = vmatmul.mubr.bf16.gmra.mrb[0].mxu0 %v5687
      %v6126 = vpop.f32.mrb[0].mxu0
      %v6127 = vadd.f32 %v5966, %v6126
      %v6128 = vpop.f32.mrb[0].mxu0
      %v6129 = vpop.f32.mrb[0].mxu0
      %v6130 = vadd.f32 %v5969, %v6129
      %v6131 = vpop.f32.mrb[0].mxu0
      %6132 = vmatprep.mubr.bf16.mxu0 0
      %6133 = vmatmul.mubr.bf16.gmra.mrb[0].mxu0 %v5690
      %v6134 = vpop.f32.mrb[0].mxu0
      %v6135 = vadd.f32 %v5974, %v6134
      %v6136 = vpop.f32.mrb[0].mxu0
      %v6137 = vpop.f32.mrb[0].mxu0
      %v6138 = vadd.f32 %v5977, %v6137
      %v6139 = vpop.f32.mrb[0].mxu0
      %6140 = vmatprep.mubr.bf16.mxu0 0
      %6141 = vmatmul.mubr.bf16.gmra.mrb[0].mxu0 %v5693
      %v6142 = vpop.f32.mrb[0].mxu0
      %v6143 = vadd.f32 %v5982, %v6142
      %v6144 = vpop.f32.mrb[0].mxu0
      %v6145 = vpop.f32.mrb[0].mxu0
      %v6146 = vadd.f32 %v5985, %v6145
      %v6147 = vpop.f32.mrb[0].mxu0
      %6148 = vmatprep.mubr.bf16.mxu0 0
      %6149 = vmatmul.mubr.bf16.gmra.mrb[0].mxu0 %v5696
      %v6150 = vpop.f32.mrb[0].mxu0
      %v6151 = vadd.f32 %v5990, %v6150
      %v6152 = vpop.f32.mrb[0].mxu0
      %v6153 = vpop.f32.mrb[0].mxu0
      %v6154 = vadd.f32 %v5993, %v6153
      %v6155 = vpop.f32.mrb[0].mxu0
      %6156 = vmatprep.mubr.bf16.mxu0 0
      %6157 = vmatmul.mubr.bf16.gmra.mrb[0].mxu0 %v5699
      %v6158 = vpop.f32.mrb[0].mxu0
      %v6159 = vadd.f32 %v5998, %v6158
      %v6160 = vpop.f32.mrb[0].mxu0
      %v6161 = vpop.f32.mrb[0].mxu0
      %v6162 = vadd.f32 %v6001, %v6161
      %v6163 = vpop.f32.mrb[0].mxu0
      %6164 = vmatprep.mubr.bf16.mxu0 0
      %6165 = vmatmul.mubr.bf16.gmra.mrb[0].mxu0 %v5702
      %v6166 = vpop.f32.mrb[0].mxu0
      %v6167 = vadd.f32 %v6006, %v6166
      %v6168 = vpop.f32.mrb[0].mxu0
      %v6169 = vpop.f32.mrb[0].mxu0
      %v6170 = vadd.f32 %v6009, %v6169
      %v6171 = vpop.f32.mrb[0].mxu0
      %6172 = vmatprep.mubr.bf16.mxu0 0
      %6173 = vmatmul.mubr.bf16.gmra.mrb[0].mxu0 %v5705
      %v6174 = vpop.f32.mrb[0].mxu0
      %v6175 = vadd.f32 %v6014, %v6174
      %v6176 = vpop.f32.mrb[0].mxu0
      %v6177 = vpop.f32.mrb[0].mxu0
      %v6178 = vadd.f32 %v6017, %v6177
      %v6179 = vpop.f32.mrb[0].mxu0
      %6180 = vmatprep.mubr.bf16.mxu0 0
      %6181 = vmatmul.mubr.bf16.gmra.mrb[0].mxu0 %v5708
      %v6182 = vpop.f32.mrb[0].mxu0
      %v6183 = vadd.f32 %v6022, %v6182
      %v6184 = vpop.f32.mrb[0].mxu0
      %v6185 = vpop.f32.mrb[0].mxu0
      %v6186 = vadd.f32 %v6025, %v6185
      %v6187 = vpop.f32.mrb[0].mxu0
      %6188 = vmatprep.mubr.bf16.mxu0 0
      %6189 = vmatmul.mubr.bf16.gmra.mrb[0].mxu0 %v5711
      %v6190 = vpop.f32.mrb[0].mxu0
      %v6191 = vadd.f32 %v6030, %v6190
      %v6192 = vpop.f32.mrb[0].mxu0
      %v6193 = vpop.f32.mrb[0].mxu0
      %v6194 = vadd.f32 %v6033, %v6193
      %v6195 = vpop.f32.mrb[0].mxu0
      %6196 = vmatprep.mubr.bf16.mxu0 0
      %6197 = vmatmul.mubr.bf16.gmra.mrb[0].mxu0 %v5714
      %v6198 = vpop.f32.mrb[0].mxu0
      %v6199 = vadd.f32 %v6038, %v6198
      %v6200 = vpop.f32.mrb[0].mxu0
      %v6201 = vpop.f32.mrb[0].mxu0
      %v6202 = vadd.f32 %v6041, %v6201
      %v6203 = vpop.f32.mrb[0].mxu0
      %6204 = vmatprep.mubr.bf16.mxu0 0
      %6205 = vmatmul.mubr.bf16.gmra.mrb[0].mxu0 %v5717
      %v6206 = vpop.f32.mrb[0].mxu0
      %v6207 = vadd.f32 %v6046, %v6206
      %v6208 = vpop.f32.mrb[0].mxu0
      %v6209 = vpop.f32.mrb[0].mxu0
      %v6210 = vadd.f32 %v6049, %v6209
      %v6211 = vpop.f32.mrb[0].mxu0
      %6212 = vmatprep.mubr.bf16.mxu0 0
      %6213 = vmatmul.mubr.bf16.gmra.mrb[0].mxu0 %v5720
      %v6214 = vpop.f32.mrb[0].mxu0
      %v6215 = vadd.f32 %v6054, %v6214
      %v6216 = vpop.f32.mrb[0].mxu0
      %v6217 = vpop.f32.mrb[0].mxu0
      %v6218 = vadd.f32 %v6057, %v6217
      %v6219 = vpop.f32.mrb[0].mxu0
      %6220 = vmatprep.mubr.bf16.mxu0 0
      %6221 = vmatmul.mubr.bf16.gmra.mrb[0].mxu0 %v5723
      %v6222 = vpop.f32.mrb[0].mxu0
      %v6223 = vadd.f32 %v6062, %v6222
      %v6224 = vpop.f32.mrb[0].mxu0
      %v6225 = vpop.f32.mrb[0].mxu0
      %v6226 = vadd.f32 %v6065, %v6225
      %v6227 = vpop.f32.mrb[0].mxu0
      %6228 = vmatprep.mubr.bf16.mxu0 0
      %6229 = vmatmul.mubr.bf16.gmra.mrb[0].mxu0 %v5726
      %v6230 = vpop.f32.mrb[0].mxu0
      %v6231 = vadd.f32 %v6070, %v6230
      %v6232 = vpop.f32.mrb[0].mxu0
      %v6233 = vpop.f32.mrb[0].mxu0
      %v6234 = vadd.f32 %v6073, %v6233
      %v6235 = vpop.f32.mrb[0].mxu0
      %6236 = vmatprep.mubr.bf16.mxu0 0
      %6237 = vmatmul.mubr.bf16.gmra.mrb[0].mxu0 %v5729
      %v6238 = vpop.f32.mrb[0].mxu0
      %v6239 = vadd.f32 %v6078, %v6238
      %v6240 = vpop.f32.mrb[0].mxu0
      %v6241 = vpop.f32.mrb[0].mxu0
      %v6242 = vadd.f32 %v6081, %v6241
      %v6243 = vpop.f32.mrb[0].mxu0
      %6244 = vdwg.mxu0
      %v6245 = vadd.f32 %v5556, %v6119
      %v6246 = vadd.f32 %v5559, %v6122
      %v6247 = vadd.f32 %v5564, %v6127
      %v6248 = vadd.f32 %v5567, %v6130
      %v6249 = vadd.f32 %v5572, %v6135
      %v6250 = vadd.f32 %v5575, %v6138
      %v6251 = vadd.f32 %v5580, %v6143
      %v6252 = vadd.f32 %v5583, %v6146
      %v6253 = vadd.f32 %v5588, %v6151
      %v6254 = vadd.f32 %v5591, %v6154
      %v6255 = vadd.f32 %v5596, %v6159
      %v6256 = vadd.f32 %v5599, %v6162
      %v6257 = vadd.f32 %v5604, %v6167
      %v6258 = vadd.f32 %v5607, %v6170
      %v6259 = vadd.f32 %v5612, %v6175
      %v6260 = vadd.f32 %v5615, %v6178
      %v6261 = vadd.f32 %v5620, %v6183
      %v6262 = vadd.f32 %v5623, %v6186
      %v6263 = vadd.f32 %v5628, %v6191
      %v6264 = vadd.f32 %v5631, %v6194
      %v6265 = vadd.f32 %v5636, %v6199
      %v6266 = vadd.f32 %v5639, %v6202
      %v6267 = vadd.f32 %v5644, %v6207
      %v6268 = vadd.f32 %v5647, %v6210
      %v6269 = vadd.f32 %v5652, %v6215
      %v6270 = vadd.f32 %v5655, %v6218
      %v6271 = vadd.f32 %v5660, %v6223
      %v6272 = vadd.f32 %v5663, %v6226
      %v6273 = vadd.f32 %v5668, %v6231
      %v6274 = vadd.f32 %v5671, %v6234
      %v6275 = vadd.f32 %v5676, %v6239
      %v6276 = vadd.f32 %v5679, %v6242
      %v6277 = vld [vmem:[%s6] sm:$0x1]
      %v6279 = vlaneseq
      %v6280 = vshrl.u32 %v6279, 7
      %v6281 = vsub.s32 0, %v6280
      %v6282 = vrot.slane %v6277, %v6281
      %v6284 = vadd.f32 %v6245, %v6282
      %v6285 = vadd.f32 %v6246, %v6282
      %v6286 = vadd.f32 %v6247, %v6282
      %v6287 = vadd.f32 %v6248, %v6282
      %v6288 = vadd.f32 %v6249, %v6282
      %v6289 = vadd.f32 %v6250, %v6282
      %v6290 = vadd.f32 %v6251, %v6282
      %v6291 = vadd.f32 %v6252, %v6282
      %v6292 = vadd.f32 %v6253, %v6282
      %v6293 = vadd.f32 %v6254, %v6282
      %v6294 = vadd.f32 %v6255, %v6282
      %v6295 = vadd.f32 %v6256, %v6282
      %v6296 = vadd.f32 %v6257, %v6282
      %v6297 = vadd.f32 %v6258, %v6282
      %v6298 = vadd.f32 %v6259, %v6282
      %v6299 = vadd.f32 %v6260, %v6282
      %v6300 = vadd.f32 %v6261, %v6282
      %v6301 = vadd.f32 %v6262, %v6282
      %v6302 = vadd.f32 %v6263, %v6282
      %v6303 = vadd.f32 %v6264, %v6282
      %v6304 = vadd.f32 %v6265, %v6282
      %v6305 = vadd.f32 %v6266, %v6282
      %v6306 = vadd.f32 %v6267, %v6282
      %v6307 = vadd.f32 %v6268, %v6282
      %v6308 = vadd.f32 %v6269, %v6282
      %v6309 = vadd.f32 %v6270, %v6282
      %v6310 = vadd.f32 %v6271, %v6282
      %v6311 = vadd.f32 %v6272, %v6282
      %v6312 = vadd.f32 %v6273, %v6282
      %v6313 = vadd.f32 %v6274, %v6282
      %v6314 = vadd.f32 %v6275, %v6282
      %v6315 = vadd.f32 %v6276, %v6282
      %v6316 = vmax.f32 %v6284, 0.0
      %v6317 = vmax.f32 %v6285, 0.0
      %v6318 = vmax.f32 %v6286, 0.0
      %v6319 = vmax.f32 %v6287, 0.0
      %v6320 = vmax.f32 %v6288, 0.0
      %v6321 = vmax.f32 %v6289, 0.0
      %v6322 = vmax.f32 %v6290, 0.0
      %v6323 = vmax.f32 %v6291, 0.0
      %v6324 = vmax.f32 %v6292, 0.0
      %v6325 = vmax.f32 %v6293, 0.0
      %v6326 = vmax.f32 %v6294, 0.0
      %v6327 = vmax.f32 %v6295, 0.0
      %v6328 = vmax.f32 %v6296, 0.0
      %v6329 = vmax.f32 %v6297, 0.0
      %v6330 = vmax.f32 %v6298, 0.0
      %v6331 = vmax.f32 %v6299, 0.0
      %v6332 = vmax.f32 %v6300, 0.0
      %v6333 = vmax.f32 %v6301, 0.0
      %v6334 = vmax.f32 %v6302, 0.0
      %v6335 = vmax.f32 %v6303, 0.0
      %v6336 = vmax.f32 %v6304, 0.0
      %v6337 = vmax.f32 %v6305, 0.0
      %v6338 = vmax.f32 %v6306, 0.0
      %v6339 = vmax.f32 %v6307, 0.0
      %v6340 = vmax.f32 %v6308, 0.0
      %v6341 = vmax.f32 %v6309, 0.0
      %v6342 = vmax.f32 %v6310, 0.0
      %v6343 = vmax.f32 %v6311, 0.0
      %v6344 = vmax.f32 %v6312, 0.0
      %v6345 = vmax.f32 %v6313, 0.0
      %v6346 = vmax.f32 %v6314, 0.0
      %v6347 = vmax.f32 %v6315, 0.0
      %v6348 = vadd.f32 %v6316, %v6317
      %v6349 = vadd.f32 %v6348, %v6318
      %v6350 = vadd.f32 %v6349, %v6319
      %v6351 = vadd.f32 %v6350, %v6320
      %v6352 = vadd.f32 %v6351, %v6321
      %v6353 = vadd.f32 %v6352, %v6322
      %v6354 = vadd.f32 %v6353, %v6323
      %v6355 = vadd.f32 %v6354, %v6324
      %v6356 = vadd.f32 %v6355, %v6325
      %v6357 = vadd.f32 %v6356, %v6326
      %v6358 = vadd.f32 %v6357, %v6327
      %v6359 = vadd.f32 %v6358, %v6328
      %v6360 = vadd.f32 %v6359, %v6329
      %v6361 = vadd.f32 %v6360, %v6330
      %v6362 = vadd.f32 %v6361, %v6331
      %v6363 = vadd.f32 %v6362, %v6332
      %v6364 = vadd.f32 %v6363, %v6333
      %v6365 = vadd.f32 %v6364, %v6334
      %v6366 = vadd.f32 %v6365, %v6335
      %v6367 = vadd.f32 %v6366, %v6336
      %v6368 = vadd.f32 %v6367, %v6337
      %v6369 = vadd.f32 %v6368, %v6338
      %v6370 = vadd.f32 %v6369, %v6339
      %v6371 = vadd.f32 %v6370, %v6340
      %v6372 = vadd.f32 %v6371, %v6341
      %v6373 = vadd.f32 %v6372, %v6342
      %v6374 = vadd.f32 %v6373, %v6343
      %v6375 = vadd.f32 %v6374, %v6344
      %v6376 = vadd.f32 %v6375, %v6345
      %v6377 = vadd.f32 %v6376, %v6346
      %v6378 = vadd.f32 %v6377, %v6347
      %v6379 = vrot.slane %v6378, 4
      %v6380 = vadd.f32 %v6378, %v6379
      %v6381 = vrot.slane %v6380, 2
      %v6382 = vadd.f32 %v6380, %v6381
      %v6383 = vrot.slane %v6382, 1
      %v6384 = vadd.f32 %v6382, %v6383
      %v6385 = vmul.f32 %v6384, 0.00390625
      %v6386 = vmul.f32 %v6316, %v6316
      %v6387 = vmul.f32 %v6317, %v6317
      %v6388 = vmul.f32 %v6318, %v6318
      %v6389 = vmul.f32 %v6319, %v6319
      %v6390 = vmul.f32 %v6320, %v6320
      %v6391 = vmul.f32 %v6321, %v6321
      %v6392 = vmul.f32 %v6322, %v6322
      %v6393 = vmul.f32 %v6323, %v6323
      %v6394 = vmul.f32 %v6324, %v6324
      %v6395 = vmul.f32 %v6325, %v6325
      %v6396 = vmul.f32 %v6326, %v6326
      %v6397 = vmul.f32 %v6327, %v6327
      %v6398 = vmul.f32 %v6328, %v6328
      %v6399 = vmul.f32 %v6329, %v6329
      %v6400 = vmul.f32 %v6330, %v6330
      %v6401 = vmul.f32 %v6331, %v6331
      %v6402 = vmul.f32 %v6332, %v6332
      %v6403 = vmul.f32 %v6333, %v6333
      %v6404 = vmul.f32 %v6334, %v6334
      %v6405 = vmul.f32 %v6335, %v6335
      %v6406 = vmul.f32 %v6336, %v6336
      %v6407 = vmul.f32 %v6337, %v6337
      %v6408 = vmul.f32 %v6338, %v6338
      %v6409 = vmul.f32 %v6339, %v6339
      %v6410 = vmul.f32 %v6340, %v6340
      %v6411 = vmul.f32 %v6341, %v6341
      %v6412 = vmul.f32 %v6342, %v6342
      %v6413 = vmul.f32 %v6343, %v6343
      %v6414 = vmul.f32 %v6344, %v6344
      %v6415 = vmul.f32 %v6345, %v6345
      %v6416 = vmul.f32 %v6346, %v6346
      %v6417 = vmul.f32 %v6347, %v6347
      %v6418 = vadd.f32 %v6386, %v6387
      %v6419 = vadd.f32 %v6418, %v6388
      %v6420 = vadd.f32 %v6419, %v6389
      %v6421 = vadd.f32 %v6420, %v6390
      %v6422 = vadd.f32 %v6421, %v6391
      %v6423 = vadd.f32 %v6422, %v6392
      %v6424 = vadd.f32 %v6423, %v6393
      %v6425 = vadd.f32 %v6424, %v6394
      %v6426 = vadd.f32 %v6425, %v6395
      %v6427 = vadd.f32 %v6426, %v6396
      %v6428 = vadd.f32 %v6427, %v6397
      %v6429 = vadd.f32 %v6428, %v6398
      %v6430 = vadd.f32 %v6429, %v6399
      %v6431 = vadd.f32 %v6430, %v6400
      %v6432 = vadd.f32 %v6431, %v6401
      %v6433 = vadd.f32 %v6432, %v6402
      %v6434 = vadd.f32 %v6433, %v6403
      %v6435 = vadd.f32 %v6434, %v6404
      %v6436 = vadd.f32 %v6435, %v6405
      %v6437 = vadd.f32 %v6436, %v6406
      %v6438 = vadd.f32 %v6437, %v6407
      %v6439 = vadd.f32 %v6438, %v6408
      %v6440 = vadd.f32 %v6439, %v6409
      %v6441 = vadd.f32 %v6440, %v6410
      %v6442 = vadd.f32 %v6441, %v6411
      %v6443 = vadd.f32 %v6442, %v6412
      %v6444 = vadd.f32 %v6443, %v6413
      %v6445 = vadd.f32 %v6444, %v6414
      %v6446 = vadd.f32 %v6445, %v6415
      %v6447 = vadd.f32 %v6446, %v6416
      %v6448 = vadd.f32 %v6447, %v6417
      %v6449 = vrot.slane %v6448, 4
      %v6450 = vadd.f32 %v6448, %v6449
      %v6451 = vrot.slane %v6450, 2
      %v6452 = vadd.f32 %v6450, %v6451
      %v6453 = vrot.slane %v6452, 1
      %v6454 = vadd.f32 %v6452, %v6453
      %v6455 = vmul.f32 %v6454, 0.00390625
      %v6456 = vmul.f32 %v6385, %v6385
      %v6457 = vsub.f32 %v6455, %v6456
      %v6458 = vmax.f32 %v6457, 0.0
      %v6459 = vsub.f32 %v6316, %v6385
      %v6460 = vsub.f32 %v6317, %v6385
      %v6461 = vsub.f32 %v6318, %v6385
      %v6462 = vsub.f32 %v6319, %v6385
      %v6463 = vsub.f32 %v6320, %v6385
      %v6464 = vsub.f32 %v6321, %v6385
      %v6465 = vsub.f32 %v6322, %v6385
      %v6466 = vsub.f32 %v6323, %v6385
      %v6467 = vsub.f32 %v6324, %v6385
      %v6468 = vsub.f32 %v6325, %v6385
      %v6469 = vsub.f32 %v6326, %v6385
      %v6470 = vsub.f32 %v6327, %v6385
      %v6471 = vsub.f32 %v6328, %v6385
      %v6472 = vsub.f32 %v6329, %v6385
      %v6473 = vsub.f32 %v6330, %v6385
      %v6474 = vsub.f32 %v6331, %v6385
      %v6475 = vsub.f32 %v6332, %v6385
      %v6476 = vsub.f32 %v6333, %v6385
      %v6477 = vsub.f32 %v6334, %v6385
      %v6478 = vsub.f32 %v6335, %v6385
      %v6479 = vsub.f32 %v6336, %v6385
      %v6480 = vsub.f32 %v6337, %v6385
      %v6481 = vsub.f32 %v6338, %v6385
      %v6482 = vsub.f32 %v6339, %v6385
      %v6483 = vsub.f32 %v6340, %v6385
      %v6484 = vsub.f32 %v6341, %v6385
      %v6485 = vsub.f32 %v6342, %v6385
      %v6486 = vsub.f32 %v6343, %v6385
      %v6487 = vsub.f32 %v6344, %v6385
      %v6488 = vsub.f32 %v6345, %v6385
      %v6489 = vsub.f32 %v6346, %v6385
      %v6490 = vsub.f32 %v6347, %v6385
      %v6491 = vadd.f32 %v6458, 1e-05
      %v6492 = vrsqrt.pop %v6491
      %v6493 = vmul.f32 %v6459, %v6492
      %v6494 = vmul.f32 %v6460, %v6492
      %v6495 = vmul.f32 %v6461, %v6492
      %v6496 = vmul.f32 %v6462, %v6492
      %v6497 = vmul.f32 %v6463, %v6492
      %v6498 = vmul.f32 %v6464, %v6492
      %v6499 = vmul.f32 %v6465, %v6492
      %v6500 = vmul.f32 %v6466, %v6492
      %v6501 = vmul.f32 %v6467, %v6492
      %v6502 = vmul.f32 %v6468, %v6492
      %v6503 = vmul.f32 %v6469, %v6492
      %v6504 = vmul.f32 %v6470, %v6492
      %v6505 = vmul.f32 %v6471, %v6492
      %v6506 = vmul.f32 %v6472, %v6492
      %v6507 = vmul.f32 %v6473, %v6492
      %v6508 = vmul.f32 %v6474, %v6492
      %v6509 = vmul.f32 %v6475, %v6492
      %v6510 = vmul.f32 %v6476, %v6492
      %v6511 = vmul.f32 %v6477, %v6492
      %v6512 = vmul.f32 %v6478, %v6492
      %v6513 = vmul.f32 %v6479, %v6492
      %v6514 = vmul.f32 %v6480, %v6492
      %v6515 = vmul.f32 %v6481, %v6492
      %v6516 = vmul.f32 %v6482, %v6492
      %v6517 = vmul.f32 %v6483, %v6492
      %v6518 = vmul.f32 %v6484, %v6492
      %v6519 = vmul.f32 %v6485, %v6492
      %v6520 = vmul.f32 %v6486, %v6492
      %v6521 = vmul.f32 %v6487, %v6492
      %v6522 = vmul.f32 %v6488, %v6492
      %v6523 = vmul.f32 %v6489, %v6492
      %v6524 = vmul.f32 %v6490, %v6492
      %v6525 = vadd.f32 %v1945, %v6493
      %v6526 = vadd.f32 %v1946, %v6494
      %v6527 = vadd.f32 %v1947, %v6495
      %v6528 = vadd.f32 %v1948, %v6496
      %v6529 = vadd.f32 %v1949, %v6497
      %v6530 = vadd.f32 %v1950, %v6498
      %v6531 = vadd.f32 %v1951, %v6499
      %v6532 = vadd.f32 %v1952, %v6500
      %v6533 = vadd.f32 %v1953, %v6501
      %v6534 = vadd.f32 %v1954, %v6502
      %v6535 = vadd.f32 %v1955, %v6503
      %v6536 = vadd.f32 %v1956, %v6504
      %v6537 = vadd.f32 %v1957, %v6505
      %v6538 = vadd.f32 %v1958, %v6506
      %v6539 = vadd.f32 %v1959, %v6507
      %v6540 = vadd.f32 %v1960, %v6508
      %v6541 = vadd.f32 %v1961, %v6509
      %v6542 = vadd.f32 %v1962, %v6510
      %v6543 = vadd.f32 %v1963, %v6511
      %v6544 = vadd.f32 %v1964, %v6512
      %v6545 = vadd.f32 %v1965, %v6513
      %v6546 = vadd.f32 %v1966, %v6514
      %v6547 = vadd.f32 %v1967, %v6515
      %v6548 = vadd.f32 %v1968, %v6516
      %v6549 = vadd.f32 %v1969, %v6517
      %v6550 = vadd.f32 %v1970, %v6518
      %v6551 = vadd.f32 %v1971, %v6519
      %v6552 = vadd.f32 %v1972, %v6520
      %v6553 = vadd.f32 %v1973, %v6521
      %v6554 = vadd.f32 %v1974, %v6522
      %v6555 = vadd.f32 %v1975, %v6523
      %v6556 = vadd.f32 %v1976, %v6524
      %v6557 = vld [vmem:[%s7] sm:$0xf]
      %v6558 = vld [vmem:[%s7 + $0x4] sm:$0xf]
      %v6559 = vld [vmem:[%s7 + $0x8] sm:$0xf]
      %v6560 = vld [vmem:[%s7 + $0xc] sm:$0xf]
      %v6561 = vpack.c.bf16 %v6526, %v6525
      %v6562 = vpack.c.bf16 %v6528, %v6527
      %v6563 = vpack.c.bf16 %v6530, %v6529
      %v6564 = vpack.c.bf16 %v6532, %v6531
      %v6565 = vpack.c.bf16 %v6534, %v6533
      %v6566 = vpack.c.bf16 %v6536, %v6535
      %v6567 = vpack.c.bf16 %v6538, %v6537
      %v6568 = vpack.c.bf16 %v6540, %v6539
      %v6569 = vpack.c.bf16 %v6542, %v6541
      %v6570 = vpack.c.bf16 %v6544, %v6543
      %v6571 = vpack.c.bf16 %v6546, %v6545
      %v6572 = vpack.c.bf16 %v6548, %v6547
      %v6573 = vpack.c.bf16 %v6550, %v6549
      %v6574 = vpack.c.bf16 %v6552, %v6551
      %v6575 = vpack.c.bf16 %v6554, %v6553
      %v6576 = vpack.c.bf16 %v6556, %v6555
      %6577 = vxpose.xlu0.c.b16.start [1/8] %v6561, 128
      %6578 = vxpose.xlu0.c.b16.cont [2/8] 0, 128
      %6579 = vxpose.xlu0.c.b16.cont [3/8] 0, 128
      %6580 = vxpose.xlu0.c.b16.cont [4/8] 0, 128
      %6581 = vxpose.xlu0.c.b16.cont [5/8] 0, 128
      %6582 = vxpose.xlu0.c.b16.cont [6/8] 0, 128
      %6583 = vxpose.xlu0.c.b16.cont [7/8] 0, 128
      %6584 = vxpose.xlu0.c.b16.end [8/8] 0, 128
      %v6585 = vpop.trf.xlu0
      %v6586 = vpop.trf.xlu0
      %v6587 = vpop.trf.xlu0
      %v6588 = vpop.trf.xlu0
      %v6589 = vpop.trf.xlu0
      %v6590 = vpop.trf.xlu0
      %v6591 = vpop.trf.xlu0
      %v6592 = vpop.trf.xlu0
      %6593 = vxpose.xlu0.c.b16.start [1/8] %v6562, 128
      %6594 = vxpose.xlu0.c.b16.cont [2/8] 0, 128
      %6595 = vxpose.xlu0.c.b16.cont [3/8] 0, 128
      %6596 = vxpose.xlu0.c.b16.cont [4/8] 0, 128
      %6597 = vxpose.xlu0.c.b16.cont [5/8] 0, 128
      %6598 = vxpose.xlu0.c.b16.cont [6/8] 0, 128
      %6599 = vxpose.xlu0.c.b16.cont [7/8] 0, 128
      %6600 = vxpose.xlu0.c.b16.end [8/8] 0, 128
      %v6601 = vpop.trf.xlu0
      %v6602 = vpop.trf.xlu0
      %v6603 = vpop.trf.xlu0
      %v6604 = vpop.trf.xlu0
      %v6605 = vpop.trf.xlu0
      %v6606 = vpop.trf.xlu0
      %v6607 = vpop.trf.xlu0
      %v6608 = vpop.trf.xlu0
      %6609 = vxpose.xlu0.c.b16.start [1/8] %v6563, 128
      %6610 = vxpose.xlu0.c.b16.cont [2/8] 0, 128
      %6611 = vxpose.xlu0.c.b16.cont [3/8] 0, 128
      %6612 = vxpose.xlu0.c.b16.cont [4/8] 0, 128
      %6613 = vxpose.xlu0.c.b16.cont [5/8] 0, 128
      %6614 = vxpose.xlu0.c.b16.cont [6/8] 0, 128
      %6615 = vxpose.xlu0.c.b16.cont [7/8] 0, 128
      %6616 = vxpose.xlu0.c.b16.end [8/8] 0, 128
      %v6617 = vpop.trf.xlu0
      %v6618 = vpop.trf.xlu0
      %v6619 = vpop.trf.xlu0
      %v6620 = vpop.trf.xlu0
      %v6621 = vpop.trf.xlu0
      %v6622 = vpop.trf.xlu0
      %v6623 = vpop.trf.xlu0
      %v6624 = vpop.trf.xlu0
      %6625 = vxpose.xlu0.c.b16.start [1/8] %v6564, 128
      %6626 = vxpose.xlu0.c.b16.cont [2/8] 0, 128
      %6627 = vxpose.xlu0.c.b16.cont [3/8] 0, 128
      %6628 = vxpose.xlu0.c.b16.cont [4/8] 0, 128
      %6629 = vxpose.xlu0.c.b16.cont [5/8] 0, 128
      %6630 = vxpose.xlu0.c.b16.cont [6/8] 0, 128
      %6631 = vxpose.xlu0.c.b16.cont [7/8] 0, 128
      %6632 = vxpose.xlu0.c.b16.end [8/8] 0, 128
      %v6633 = vpop.trf.xlu0
      %v6634 = vpop.trf.xlu0
      %v6635 = vpop.trf.xlu0
      %v6636 = vpop.trf.xlu0
      %v6637 = vpop.trf.xlu0
      %v6638 = vpop.trf.xlu0
      %v6639 = vpop.trf.xlu0
      %v6640 = vpop.trf.xlu0
      %6641 = vxpose.xlu0.c.b16.start [1/8] %v6565, 128
      %6642 = vxpose.xlu0.c.b16.cont [2/8] 0, 128
      %6643 = vxpose.xlu0.c.b16.cont [3/8] 0, 128
      %6644 = vxpose.xlu0.c.b16.cont [4/8] 0, 128
      %6645 = vxpose.xlu0.c.b16.cont [5/8] 0, 128
      %6646 = vxpose.xlu0.c.b16.cont [6/8] 0, 128
      %6647 = vxpose.xlu0.c.b16.cont [7/8] 0, 128
      %6648 = vxpose.xlu0.c.b16.end [8/8] 0, 128
      %v6649 = vpop.trf.xlu0
      %v6650 = vpop.trf.xlu0
      %v6651 = vpop.trf.xlu0
      %v6652 = vpop.trf.xlu0
      %v6653 = vpop.trf.xlu0
      %v6654 = vpop.trf.xlu0
      %v6655 = vpop.trf.xlu0
      %v6656 = vpop.trf.xlu0
      %6657 = vxpose.xlu0.c.b16.start [1/8] %v6566, 128
      %6658 = vxpose.xlu0.c.b16.cont [2/8] 0, 128
      %6659 = vxpose.xlu0.c.b16.cont [3/8] 0, 128
      %6660 = vxpose.xlu0.c.b16.cont [4/8] 0, 128
      %6661 = vxpose.xlu0.c.b16.cont [5/8] 0, 128
      %6662 = vxpose.xlu0.c.b16.cont [6/8] 0, 128
      %6663 = vxpose.xlu0.c.b16.cont [7/8] 0, 128
      %6664 = vxpose.xlu0.c.b16.end [8/8] 0, 128
      %v6665 = vpop.trf.xlu0
      %v6666 = vpop.trf.xlu0
      %v6667 = vpop.trf.xlu0
      %v6668 = vpop.trf.xlu0
      %v6669 = vpop.trf.xlu0
      %v6670 = vpop.trf.xlu0
      %v6671 = vpop.trf.xlu0
      %v6672 = vpop.trf.xlu0
      %6673 = vxpose.xlu0.c.b16.start [1/8] %v6567, 128
      %6674 = vxpose.xlu0.c.b16.cont [2/8] 0, 128
      %6675 = vxpose.xlu0.c.b16.cont [3/8] 0, 128
      %6676 = vxpose.xlu0.c.b16.cont [4/8] 0, 128
      %6677 = vxpose.xlu0.c.b16.cont [5/8] 0, 128
      %6678 = vxpose.xlu0.c.b16.cont [6/8] 0, 128
      %6679 = vxpose.xlu0.c.b16.cont [7/8] 0, 128
      %6680 = vxpose.xlu0.c.b16.end [8/8] 0, 128
      %v6681 = vpop.trf.xlu0
      %v6682 = vpop.trf.xlu0
      %v6683 = vpop.trf.xlu0
      %v6684 = vpop.trf.xlu0
      %v6685 = vpop.trf.xlu0
      %v6686 = vpop.trf.xlu0
      %v6687 = vpop.trf.xlu0
      %v6688 = vpop.trf.xlu0
      %6689 = vxpose.xlu0.c.b16.start [1/8] %v6568, 128
      %6690 = vxpose.xlu0.c.b16.cont [2/8] 0, 128
      %6691 = vxpose.xlu0.c.b16.cont [3/8] 0, 128
      %6692 = vxpose.xlu0.c.b16.cont [4/8] 0, 128
      %6693 = vxpose.xlu0.c.b16.cont [5/8] 0, 128
      %6694 = vxpose.xlu0.c.b16.cont [6/8] 0, 128
      %6695 = vxpose.xlu0.c.b16.cont [7/8] 0, 128
      %6696 = vxpose.xlu0.c.b16.end [8/8] 0, 128
      %v6697 = vpop.trf.xlu0
      %v6698 = vpop.trf.xlu0
      %v6699 = vpop.trf.xlu0
      %v6700 = vpop.trf.xlu0
      %v6701 = vpop.trf.xlu0
      %v6702 = vpop.trf.xlu0
      %v6703 = vpop.trf.xlu0
      %v6704 = vpop.trf.xlu0
      %6705 = vxpose.xlu0.c.b16.start [1/8] %v6569, 128
      %6706 = vxpose.xlu0.c.b16.cont [2/8] 0, 128
      %6707 = vxpose.xlu0.c.b16.cont [3/8] 0, 128
      %6708 = vxpose.xlu0.c.b16.cont [4/8] 0, 128
      %6709 = vxpose.xlu0.c.b16.cont [5/8] 0, 128
      %6710 = vxpose.xlu0.c.b16.cont [6/8] 0, 128
      %6711 = vxpose.xlu0.c.b16.cont [7/8] 0, 128
      %6712 = vxpose.xlu0.c.b16.end [8/8] 0, 128
      %v6713 = vpop.trf.xlu0
      %v6714 = vpop.trf.xlu0
      %v6715 = vpop.trf.xlu0
      %v6716 = vpop.trf.xlu0
      %v6717 = vpop.trf.xlu0
      %v6718 = vpop.trf.xlu0
      %v6719 = vpop.trf.xlu0
      %v6720 = vpop.trf.xlu0
      %6721 = vxpose.xlu0.c.b16.start [1/8] %v6570, 128
      %6722 = vxpose.xlu0.c.b16.cont [2/8] 0, 128
      %6723 = vxpose.xlu0.c.b16.cont [3/8] 0, 128
      %6724 = vxpose.xlu0.c.b16.cont [4/8] 0, 128
      %6725 = vxpose.xlu0.c.b16.cont [5/8] 0, 128
      %6726 = vxpose.xlu0.c.b16.cont [6/8] 0, 128
      %6727 = vxpose.xlu0.c.b16.cont [7/8] 0, 128
      %6728 = vxpose.xlu0.c.b16.end [8/8] 0, 128
      %v6729 = vpop.trf.xlu0
      %v6730 = vpop.trf.xlu0
      %v6731 = vpop.trf.xlu0
      %v6732 = vpop.trf.xlu0
      %v6733 = vpop.trf.xlu0
      %v6734 = vpop.trf.xlu0
      %v6735 = vpop.trf.xlu0
      %v6736 = vpop.trf.xlu0
      %6737 = vxpose.xlu0.c.b16.start [1/8] %v6571, 128
      %6738 = vxpose.xlu0.c.b16.cont [2/8] 0, 128
      %6739 = vxpose.xlu0.c.b16.cont [3/8] 0, 128
      %6740 = vxpose.xlu0.c.b16.cont [4/8] 0, 128
      %6741 = vxpose.xlu0.c.b16.cont [5/8] 0, 128
      %6742 = vxpose.xlu0.c.b16.cont [6/8] 0, 128
      %6743 = vxpose.xlu0.c.b16.cont [7/8] 0, 128
      %6744 = vxpose.xlu0.c.b16.end [8/8] 0, 128
      %v6745 = vpop.trf.xlu0
      %v6746 = vpop.trf.xlu0
      %v6747 = vpop.trf.xlu0
      %v6748 = vpop.trf.xlu0
      %v6749 = vpop.trf.xlu0
      %v6750 = vpop.trf.xlu0
      %v6751 = vpop.trf.xlu0
      %v6752 = vpop.trf.xlu0
      %6753 = vxpose.xlu0.c.b16.start [1/8] %v6572, 128
      %6754 = vxpose.xlu0.c.b16.cont [2/8] 0, 128
      %6755 = vxpose.xlu0.c.b16.cont [3/8] 0, 128
      %6756 = vxpose.xlu0.c.b16.cont [4/8] 0, 128
      %6757 = vxpose.xlu0.c.b16.cont [5/8] 0, 128
      %6758 = vxpose.xlu0.c.b16.cont [6/8] 0, 128
      %6759 = vxpose.xlu0.c.b16.cont [7/8] 0, 128
      %6760 = vxpose.xlu0.c.b16.end [8/8] 0, 128
      %v6761 = vpop.trf.xlu0
      %v6762 = vpop.trf.xlu0
      %v6763 = vpop.trf.xlu0
      %v6764 = vpop.trf.xlu0
      %v6765 = vpop.trf.xlu0
      %v6766 = vpop.trf.xlu0
      %v6767 = vpop.trf.xlu0
      %v6768 = vpop.trf.xlu0
      %6769 = vxpose.xlu0.c.b16.start [1/8] %v6573, 128
      %6770 = vxpose.xlu0.c.b16.cont [2/8] 0, 128
      %6771 = vxpose.xlu0.c.b16.cont [3/8] 0, 128
      %6772 = vxpose.xlu0.c.b16.cont [4/8] 0, 128
      %6773 = vxpose.xlu0.c.b16.cont [5/8] 0, 128
      %6774 = vxpose.xlu0.c.b16.cont [6/8] 0, 128
      %6775 = vxpose.xlu0.c.b16.cont [7/8] 0, 128
      %6776 = vxpose.xlu0.c.b16.end [8/8] 0, 128
      %v6777 = vpop.trf.xlu0
      %v6778 = vpop.trf.xlu0
      %v6779 = vpop.trf.xlu0
      %v6780 = vpop.trf.xlu0
      %v6781 = vpop.trf.xlu0
      %v6782 = vpop.trf.xlu0
      %v6783 = vpop.trf.xlu0
      %v6784 = vpop.trf.xlu0
      %6785 = vxpose.xlu0.c.b16.start [1/8] %v6574, 128
      %6786 = vxpose.xlu0.c.b16.cont [2/8] 0, 128
      %6787 = vxpose.xlu0.c.b16.cont [3/8] 0, 128
      %6788 = vxpose.xlu0.c.b16.cont [4/8] 0, 128
      %6789 = vxpose.xlu0.c.b16.cont [5/8] 0, 128
      %6790 = vxpose.xlu0.c.b16.cont [6/8] 0, 128
      %6791 = vxpose.xlu0.c.b16.cont [7/8] 0, 128
      %6792 = vxpose.xlu0.c.b16.end [8/8] 0, 128
      %v6793 = vpop.trf.xlu0
      %v6794 = vpop.trf.xlu0
      %v6795 = vpop.trf.xlu0
      %v6796 = vpop.trf.xlu0
      %v6797 = vpop.trf.xlu0
      %v6798 = vpop.trf.xlu0
      %v6799 = vpop.trf.xlu0
      %v6800 = vpop.trf.xlu0
      %6801 = vxpose.xlu0.c.b16.start [1/8] %v6575, 128
      %6802 = vxpose.xlu0.c.b16.cont [2/8] 0, 128
      %6803 = vxpose.xlu0.c.b16.cont [3/8] 0, 128
      %6804 = vxpose.xlu0.c.b16.cont [4/8] 0, 128
      %6805 = vxpose.xlu0.c.b16.cont [5/8] 0, 128
      %6806 = vxpose.xlu0.c.b16.cont [6/8] 0, 128
      %6807 = vxpose.xlu0.c.b16.cont [7/8] 0, 128
      %6808 = vxpose.xlu0.c.b16.end [8/8] 0, 128
      %v6809 = vpop.trf.xlu0
      %v6810 = vpop.trf.xlu0
      %v6811 = vpop.trf.xlu0
      %v6812 = vpop.trf.xlu0
      %v6813 = vpop.trf.xlu0
      %v6814 = vpop.trf.xlu0
      %v6815 = vpop.trf.xlu0
      %v6816 = vpop.trf.xlu0
      %6817 = vxpose.xlu0.c.b16.start [1/8] %v6576, 128
      %6818 = vxpose.xlu0.c.b16.cont [2/8] 0, 128
      %6819 = vxpose.xlu0.c.b16.cont [3/8] 0, 128
      %6820 = vxpose.xlu0.c.b16.cont [4/8] 0, 128
      %6821 = vxpose.xlu0.c.b16.cont [5/8] 0, 128
      %6822 = vxpose.xlu0.c.b16.cont [6/8] 0, 128
      %6823 = vxpose.xlu0.c.b16.cont [7/8] 0, 128
      %6824 = vxpose.xlu0.c.b16.end [8/8] 0, 128
      %v6825 = vpop.trf.xlu0
      %v6826 = vpop.trf.xlu0
      %v6827 = vpop.trf.xlu0
      %v6828 = vpop.trf.xlu0
      %v6829 = vpop.trf.xlu0
      %v6830 = vpop.trf.xlu0
      %v6831 = vpop.trf.xlu0
      %v6832 = vpop.trf.xlu0
      %v6837 = vunpack.c.l.b16 %v6557
      %v6838 = vunpack.c.l.b16 %v6558
      %v6839 = vunpack.c.l.b16 %v6559
      %v6840 = vunpack.c.l.b16 %v6560
      %v6841 = vpack.c.b16 %v6838, %v6837
      %v6842 = vpack.c.b16 %v6840, %v6839
      %vm6843 = vcmask 130048
      %v6845 = vsel %vm6843, %v6585, 0
      %v6848 = vsel %vm6843, %v6586, 0
      %v6851 = vsel %vm6843, %v6587, 0
      %v6854 = vsel %vm6843, %v6588, 0
      %v6857 = vsel %vm6843, %v6589, 0
      %v6860 = vsel %vm6843, %v6590, 0
      %v6863 = vsel %vm6843, %v6591, 0
      %v6866 = vsel %vm6843, %v6592, 0
      %v6869 = vsel %vm6843, %v6601, 0
      %v6872 = vsel %vm6843, %v6602, 0
      %v6875 = vsel %vm6843, %v6603, 0
      %v6878 = vsel %vm6843, %v6604, 0
      %v6881 = vsel %vm6843, %v6605, 0
      %v6884 = vsel %vm6843, %v6606, 0
      %v6887 = vsel %vm6843, %v6607, 0
      %v6890 = vsel %vm6843, %v6608, 0
      %v6893 = vsel %vm6843, %v6617, 0
      %v6896 = vsel %vm6843, %v6618, 0
      %v6899 = vsel %vm6843, %v6619, 0
      %v6902 = vsel %vm6843, %v6620, 0
      %v6905 = vsel %vm6843, %v6621, 0
      %v6908 = vsel %vm6843, %v6622, 0
      %v6911 = vsel %vm6843, %v6623, 0
      %v6914 = vsel %vm6843, %v6624, 0
      %v6917 = vsel %vm6843, %v6633, 0
      %v6920 = vsel %vm6843, %v6634, 0
      %v6923 = vsel %vm6843, %v6635, 0
      %v6926 = vsel %vm6843, %v6636, 0
      %v6929 = vsel %vm6843, %v6637, 0
      %v6932 = vsel %vm6843, %v6638, 0
      %v6935 = vsel %vm6843, %v6639, 0
      %v6938 = vsel %vm6843, %v6640, 0
      %v6941 = vsel %vm6843, %v6649, 0
      %v6944 = vsel %vm6843, %v6650, 0
      %v6947 = vsel %vm6843, %v6651, 0
      %v6950 = vsel %vm6843, %v6652, 0
      %v6953 = vsel %vm6843, %v6653, 0
      %v6956 = vsel %vm6843, %v6654, 0
      %v6959 = vsel %vm6843, %v6655, 0
      %v6962 = vsel %vm6843, %v6656, 0
      %v6965 = vsel %vm6843, %v6665, 0
      %v6968 = vsel %vm6843, %v6666, 0
      %v6971 = vsel %vm6843, %v6667, 0
      %v6974 = vsel %vm6843, %v6668, 0
      %v6977 = vsel %vm6843, %v6669, 0
      %v6980 = vsel %vm6843, %v6670, 0
      %v6983 = vsel %vm6843, %v6671, 0
      %v6986 = vsel %vm6843, %v6672, 0
      %v6989 = vsel %vm6843, %v6681, 0
      %v6992 = vsel %vm6843, %v6682, 0
      %v6995 = vsel %vm6843, %v6683, 0
      %v6998 = vsel %vm6843, %v6684, 0
      %v7001 = vsel %vm6843, %v6685, 0
      %v7004 = vsel %vm6843, %v6686, 0
      %v7007 = vsel %vm6843, %v6687, 0
      %v7010 = vsel %vm6843, %v6688, 0
      %v7013 = vsel %vm6843, %v6697, 0
      %v7016 = vsel %vm6843, %v6698, 0
      %v7019 = vsel %vm6843, %v6699, 0
      %v7022 = vsel %vm6843, %v6700, 0
      %v7025 = vsel %vm6843, %v6701, 0
      %v7028 = vsel %vm6843, %v6702, 0
      %v7031 = vsel %vm6843, %v6703, 0
      %v7034 = vsel %vm6843, %v6704, 0
      %v7037 = vsel %vm6843, %v6713, 0
      %v7040 = vsel %vm6843, %v6714, 0
      %v7043 = vsel %vm6843, %v6715, 0
      %v7046 = vsel %vm6843, %v6716, 0
      %v7049 = vsel %vm6843, %v6717, 0
      %v7052 = vsel %vm6843, %v6718, 0
      %v7055 = vsel %vm6843, %v6719, 0
      %v7058 = vsel %vm6843, %v6720, 0
      %v7061 = vsel %vm6843, %v6729, 0
      %v7064 = vsel %vm6843, %v6730, 0
      %v7067 = vsel %vm6843, %v6731, 0
      %v7070 = vsel %vm6843, %v6732, 0
      %v7073 = vsel %vm6843, %v6733, 0
      %v7076 = vsel %vm6843, %v6734, 0
      %v7079 = vsel %vm6843, %v6735, 0
      %v7082 = vsel %vm6843, %v6736, 0
      %v7085 = vsel %vm6843, %v6745, 0
      %v7088 = vsel %vm6843, %v6746, 0
      %v7091 = vsel %vm6843, %v6747, 0
      %v7094 = vsel %vm6843, %v6748, 0
      %v7097 = vsel %vm6843, %v6749, 0
      %v7100 = vsel %vm6843, %v6750, 0
      %v7103 = vsel %vm6843, %v6751, 0
      %v7106 = vsel %vm6843, %v6752, 0
      %v7109 = vsel %vm6843, %v6761, 0
      %v7112 = vsel %vm6843, %v6762, 0
      %v7115 = vsel %vm6843, %v6763, 0
      %v7118 = vsel %vm6843, %v6764, 0
      %v7121 = vsel %vm6843, %v6765, 0
      %v7124 = vsel %vm6843, %v6766, 0
      %v7127 = vsel %vm6843, %v6767, 0
      %v7130 = vsel %vm6843, %v6768, 0
      %v7133 = vsel %vm6843, %v6777, 0
      %v7136 = vsel %vm6843, %v6778, 0
      %v7139 = vsel %vm6843, %v6779, 0
      %v7142 = vsel %vm6843, %v6780, 0
      %v7145 = vsel %vm6843, %v6781, 0
      %v7148 = vsel %vm6843, %v6782, 0
      %v7151 = vsel %vm6843, %v6783, 0
      %v7154 = vsel %vm6843, %v6784, 0
      %v7157 = vsel %vm6843, %v6793, 0
      %v7160 = vsel %vm6843, %v6794, 0
      %v7163 = vsel %vm6843, %v6795, 0
      %v7166 = vsel %vm6843, %v6796, 0
      %v7169 = vsel %vm6843, %v6797, 0
      %v7172 = vsel %vm6843, %v6798, 0
      %v7175 = vsel %vm6843, %v6799, 0
      %v7178 = vsel %vm6843, %v6800, 0
      %v7181 = vsel %vm6843, %v6809, 0
      %v7184 = vsel %vm6843, %v6810, 0
      %v7187 = vsel %vm6843, %v6811, 0
      %v7190 = vsel %vm6843, %v6812, 0
      %v7193 = vsel %vm6843, %v6813, 0
      %v7196 = vsel %vm6843, %v6814, 0
      %v7199 = vsel %vm6843, %v6815, 0
      %v7202 = vsel %vm6843, %v6816, 0
      %v7205 = vsel %vm6843, %v6825, 0
      %v7208 = vsel %vm6843, %v6826, 0
      %v7211 = vsel %vm6843, %v6827, 0
      %v7214 = vsel %vm6843, %v6828, 0
      %v7217 = vsel %vm6843, %v6829, 0
      %v7220 = vsel %vm6843, %v6830, 0
      %v7223 = vsel %vm6843, %v6831, 0
      %v7226 = vsel %vm6843, %v6832, 0
      %v7229 = vsel %vm6843, %v6841, 0
      %v7232 = vsel %vm6843, %v6842, 0
      %7234 = vmatprep.subr.bf16.mxu0 0
      %7235 = vmatpush1.bf16.xpose.msra.mxu0 %v7229
      %7236 = vmatprep.subr.bf16.mxu0 0
      %7237 = vmatpush1.bf16.xpose.msra.mxu0 %v7232
      %7238 = vmatprep.subr.bf16.mxu0 0
      %7239 = vmatpush1.bf16.xpose.msra.mxu0 0
      %7240 = vmatprep.subr.bf16.mxu0 0
      %7241 = vmatpush1.bf16.xpose.msra.mxu0 0
      %7242 = vmatprep.subr.bf16.mxu0 0
      %7243 = vmatpush1.bf16.xpose.msra.mxu0 0
      %7244 = vmatprep.subr.bf16.mxu0 0
      %7245 = vmatpush1.bf16.xpose.msra.mxu0 0
      %7246 = vmatprep.subr.bf16.mxu0 0
      %7247 = vmatpush1.bf16.xpose.msra.mxu0 0
      %7248 = vmatprep.subr.bf16.mxu0 0
      %7249 = vmatpush1.bf16.xpose.msra.mxu0 0
      %7250 = vmatprep.subr.bf16.mxu0 0
      %7251 = vmatpush1.bf16.xpose.msra.mxu0 0
      %7252 = vmatprep.subr.bf16.mxu0 0
      %7253 = vmatpush1.bf16.xpose.msra.mxu0 0
      %7254 = vmatprep.subr.bf16.mxu0 0
      %7255 = vmatpush1.bf16.xpose.msra.mxu0 0
      %7256 = vmatprep.subr.bf16.mxu0 0
      %7257 = vmatpush1.bf16.xpose.msra.mxu0 0
      %7258 = vmatprep.subr.bf16.mxu0 0
      %7259 = vmatpush1.bf16.xpose.msra.mxu0 0
      %7260 = vmatprep.subr.bf16.mxu0 0
      %7261 = vmatpush1.bf16.xpose.msra.mxu0 0
      %7262 = vmatprep.subr.bf16.mxu0 0
      %7263 = vmatpush1.bf16.xpose.msra.mxu0 0
      %7264 = vmatprep.subr.bf16.mxu0 0
      %7265 = vmatpush1.bf16.xpose.msra.mxu0 0
      %7266 = vmatprep.mubr.bf16.mxu0 0
      %7267 = vmatmul.mubr.bf16.gmra.mrb[0].mxu0 %v6845
      %v7268 = vpop.f32.mrb[0].mxu0
      %v7269 = vadd.f32 0.0, %v7268
      %v7270 = vpop.f32.mrb[0].mxu0
      %v7271 = vpop.f32.mrb[0].mxu0
      %v7272 = vadd.f32 0.0, %v7271
      %v7273 = vpop.f32.mrb[0].mxu0
      %7274 = vmatprep.mubr.bf16.mxu0 0
      %7275 = vmatmul.mubr.bf16.gmra.mrb[0].mxu0 %v6848
      %v7276 = vpop.f32.mrb[0].mxu0
      %v7277 = vadd.f32 0.0, %v7276
      %v7278 = vpop.f32.mrb[0].mxu0
      %v7279 = vpop.f32.mrb[0].mxu0
      %v7280 = vadd.f32 0.0, %v7279
      %v7281 = vpop.f32.mrb[0].mxu0
      %7282 = vmatprep.mubr.bf16.mxu0 0
      %7283 = vmatmul.mubr.bf16.gmra.mrb[0].mxu0 %v6851
      %v7284 = vpop.f32.mrb[0].mxu0
      %v7285 = vadd.f32 0.0, %v7284
      %v7286 = vpop.f32.mrb[0].mxu0
      %v7287 = vpop.f32.mrb[0].mxu0
      %v7288 = vadd.f32 0.0, %v7287
      %v7289 = vpop.f32.mrb[0].mxu0
      %7290 = vmatprep.mubr.bf16.mxu0 0
      %7291 = vmatmul.mubr.bf16.gmra.mrb[0].mxu0 %v6854
      %v7292 = vpop.f32.mrb[0].mxu0
      %v7293 = vadd.f32 0.0, %v7292
      %v7294 = vpop.f32.mrb[0].mxu0
      %v7295 = vpop.f32.mrb[0].mxu0
      %v7296 = vadd.f32 0.0, %v7295
      %v7297 = vpop.f32.mrb[0].mxu0
      %7298 = vmatprep.mubr.bf16.mxu0 0
      %7299 = vmatmul.mubr.bf16.gmra.mrb[0].mxu0 %v6857
      %v7300 = vpop.f32.mrb[0].mxu0
      %v7301 = vadd.f32 0.0, %v7300
      %v7302 = vpop.f32.mrb[0].mxu0
      %v7303 = vpop.f32.mrb[0].mxu0
      %v7304 = vadd.f32 0.0, %v7303
      %v7305 = vpop.f32.mrb[0].mxu0
      %7306 = vmatprep.mubr.bf16.mxu0 0
      %7307 = vmatmul.mubr.bf16.gmra.mrb[0].mxu0 %v6860
      %v7308 = vpop.f32.mrb[0].mxu0
      %v7309 = vadd.f32 0.0, %v7308
      %v7310 = vpop.f32.mrb[0].mxu0
      %v7311 = vpop.f32.mrb[0].mxu0
      %v7312 = vadd.f32 0.0, %v7311
      %v7313 = vpop.f32.mrb[0].mxu0
      %7314 = vmatprep.mubr.bf16.mxu0 0
      %7315 = vmatmul.mubr.bf16.gmra.mrb[0].mxu0 %v6863
      %v7316 = vpop.f32.mrb[0].mxu0
      %v7317 = vadd.f32 0.0, %v7316
      %v7318 = vpop.f32.mrb[0].mxu0
      %v7319 = vpop.f32.mrb[0].mxu0
      %v7320 = vadd.f32 0.0, %v7319
      %v7321 = vpop.f32.mrb[0].mxu0
      %7322 = vmatprep.mubr.bf16.mxu0 0
      %7323 = vmatmul.mubr.bf16.gmra.mrb[0].mxu0 %v6866
      %v7324 = vpop.f32.mrb[0].mxu0
      %v7325 = vadd.f32 0.0, %v7324
      %v7326 = vpop.f32.mrb[0].mxu0
      %v7327 = vpop.f32.mrb[0].mxu0
      %v7328 = vadd.f32 0.0, %v7327
      %v7329 = vpop.f32.mrb[0].mxu0
      %7330 = vmatprep.mubr.bf16.mxu0 0
      %7331 = vmatmul.mubr.bf16.gmra.mrb[0].mxu0 %v6869
      %v7332 = vpop.f32.mrb[0].mxu0
      %v7333 = vadd.f32 0.0, %v7332
      %v7334 = vpop.f32.mrb[0].mxu0
      %v7335 = vpop.f32.mrb[0].mxu0
      %v7336 = vadd.f32 0.0, %v7335
      %v7337 = vpop.f32.mrb[0].mxu0
      %7338 = vmatprep.mubr.bf16.mxu0 0
      %7339 = vmatmul.mubr.bf16.gmra.mrb[0].mxu0 %v6872
      %v7340 = vpop.f32.mrb[0].mxu0
      %v7341 = vadd.f32 0.0, %v7340
      %v7342 = vpop.f32.mrb[0].mxu0
      %v7343 = vpop.f32.mrb[0].mxu0
      %v7344 = vadd.f32 0.0, %v7343
      %v7345 = vpop.f32.mrb[0].mxu0
      %7346 = vmatprep.mubr.bf16.mxu0 0
      %7347 = vmatmul.mubr.bf16.gmra.mrb[0].mxu0 %v6875
      %v7348 = vpop.f32.mrb[0].mxu0
      %v7349 = vadd.f32 0.0, %v7348
      %v7350 = vpop.f32.mrb[0].mxu0
      %v7351 = vpop.f32.mrb[0].mxu0
      %v7352 = vadd.f32 0.0, %v7351
      %v7353 = vpop.f32.mrb[0].mxu0
      %7354 = vmatprep.mubr.bf16.mxu0 0
      %7355 = vmatmul.mubr.bf16.gmra.mrb[0].mxu0 %v6878
      %v7356 = vpop.f32.mrb[0].mxu0
      %v7357 = vadd.f32 0.0, %v7356
      %v7358 = vpop.f32.mrb[0].mxu0
      %v7359 = vpop.f32.mrb[0].mxu0
      %v7360 = vadd.f32 0.0, %v7359
      %v7361 = vpop.f32.mrb[0].mxu0
      %7362 = vmatprep.mubr.bf16.mxu0 0
      %7363 = vmatmul.mubr.bf16.gmra.mrb[0].mxu0 %v6881
      %v7364 = vpop.f32.mrb[0].mxu0
      %v7365 = vadd.f32 0.0, %v7364
      %v7366 = vpop.f32.mrb[0].mxu0
      %v7367 = vpop.f32.mrb[0].mxu0
      %v7368 = vadd.f32 0.0, %v7367
      %v7369 = vpop.f32.mrb[0].mxu0
      %7370 = vmatprep.mubr.bf16.mxu0 0
      %7371 = vmatmul.mubr.bf16.gmra.mrb[0].mxu0 %v6884
      %v7372 = vpop.f32.mrb[0].mxu0
      %v7373 = vadd.f32 0.0, %v7372
      %v7374 = vpop.f32.mrb[0].mxu0
      %v7375 = vpop.f32.mrb[0].mxu0
      %v7376 = vadd.f32 0.0, %v7375
      %v7377 = vpop.f32.mrb[0].mxu0
      %7378 = vmatprep.mubr.bf16.mxu0 0
      %7379 = vmatmul.mubr.bf16.gmra.mrb[0].mxu0 %v6887
      %v7380 = vpop.f32.mrb[0].mxu0
      %v7381 = vadd.f32 0.0, %v7380
      %v7382 = vpop.f32.mrb[0].mxu0
      %v7383 = vpop.f32.mrb[0].mxu0
      %v7384 = vadd.f32 0.0, %v7383
      %v7385 = vpop.f32.mrb[0].mxu0
      %7386 = vmatprep.mubr.bf16.mxu0 0
      %7387 = vmatmul.mubr.bf16.gmra.mrb[0].mxu0 %v6890
      %v7388 = vpop.f32.mrb[0].mxu0
      %v7389 = vadd.f32 0.0, %v7388
      %v7390 = vpop.f32.mrb[0].mxu0
      %v7391 = vpop.f32.mrb[0].mxu0
      %v7392 = vadd.f32 0.0, %v7391
      %v7393 = vpop.f32.mrb[0].mxu0
      %7394 = vmatprep.mubr.bf16.mxu0 0
      %7395 = vmatmul.mubr.bf16.gmra.mrb[0].mxu0 %v6893
      %v7396 = vpop.f32.mrb[0].mxu0
      %v7397 = vadd.f32 0.0, %v7396
      %v7398 = vpop.f32.mrb[0].mxu0
      %v7399 = vpop.f32.mrb[0].mxu0
      %v7400 = vadd.f32 0.0, %v7399
      %v7401 = vpop.f32.mrb[0].mxu0
      %7402 = vmatprep.mubr.bf16.mxu0 0
      %7403 = vmatmul.mubr.bf16.gmra.mrb[0].mxu0 %v6896
      %v7404 = vpop.f32.mrb[0].mxu0
      %v7405 = vadd.f32 0.0, %v7404
      %v7406 = vpop.f32.mrb[0].mxu0
      %v7407 = vpop.f32.mrb[0].mxu0
      %v7408 = vadd.f32 0.0, %v7407
      %v7409 = vpop.f32.mrb[0].mxu0
      %7410 = vmatprep.mubr.bf16.mxu0 0
      %7411 = vmatmul.mubr.bf16.gmra.mrb[0].mxu0 %v6899
      %v7412 = vpop.f32.mrb[0].mxu0
      %v7413 = vadd.f32 0.0, %v7412
      %v7414 = vpop.f32.mrb[0].mxu0
      %v7415 = vpop.f32.mrb[0].mxu0
      %v7416 = vadd.f32 0.0, %v7415
      %v7417 = vpop.f32.mrb[0].mxu0
      %7418 = vmatprep.mubr.bf16.mxu0 0
      %7419 = vmatmul.mubr.bf16.gmra.mrb[0].mxu0 %v6902
      %v7420 = vpop.f32.mrb[0].mxu0
      %v7421 = vadd.f32 0.0, %v7420
      %v7422 = vpop.f32.mrb[0].mxu0
      %v7423 = vpop.f32.mrb[0].mxu0
      %v7424 = vadd.f32 0.0, %v7423
      %v7425 = vpop.f32.mrb[0].mxu0
      %7426 = vmatprep.mubr.bf16.mxu0 0
      %7427 = vmatmul.mubr.bf16.gmra.mrb[0].mxu0 %v6905
      %v7428 = vpop.f32.mrb[0].mxu0
      %v7429 = vadd.f32 0.0, %v7428
      %v7430 = vpop.f32.mrb[0].mxu0
      %v7431 = vpop.f32.mrb[0].mxu0
      %v7432 = vadd.f32 0.0, %v7431
      %v7433 = vpop.f32.mrb[0].mxu0
      %7434 = vmatprep.mubr.bf16.mxu0 0
      %7435 = vmatmul.mubr.bf16.gmra.mrb[0].mxu0 %v6908
      %v7436 = vpop.f32.mrb[0].mxu0
      %v7437 = vadd.f32 0.0, %v7436
      %v7438 = vpop.f32.mrb[0].mxu0
      %v7439 = vpop.f32.mrb[0].mxu0
      %v7440 = vadd.f32 0.0, %v7439
      %v7441 = vpop.f32.mrb[0].mxu0
      %7442 = vmatprep.mubr.bf16.mxu0 0
      %7443 = vmatmul.mubr.bf16.gmra.mrb[0].mxu0 %v6911
      %v7444 = vpop.f32.mrb[0].mxu0
      %v7445 = vadd.f32 0.0, %v7444
      %v7446 = vpop.f32.mrb[0].mxu0
      %v7447 = vpop.f32.mrb[0].mxu0
      %v7448 = vadd.f32 0.0, %v7447
      %v7449 = vpop.f32.mrb[0].mxu0
      %7450 = vmatprep.mubr.bf16.mxu0 0
      %7451 = vmatmul.mubr.bf16.gmra.mrb[0].mxu0 %v6914
      %v7452 = vpop.f32.mrb[0].mxu0
      %v7453 = vadd.f32 0.0, %v7452
      %v7454 = vpop.f32.mrb[0].mxu0
      %v7455 = vpop.f32.mrb[0].mxu0
      %v7456 = vadd.f32 0.0, %v7455
      %v7457 = vpop.f32.mrb[0].mxu0
      %7458 = vmatprep.mubr.bf16.mxu0 0
      %7459 = vmatmul.mubr.bf16.gmra.mrb[0].mxu0 %v6917
      %v7460 = vpop.f32.mrb[0].mxu0
      %v7461 = vadd.f32 0.0, %v7460
      %v7462 = vpop.f32.mrb[0].mxu0
      %v7463 = vpop.f32.mrb[0].mxu0
      %v7464 = vadd.f32 0.0, %v7463
      %v7465 = vpop.f32.mrb[0].mxu0
      %7466 = vmatprep.mubr.bf16.mxu0 0
      %7467 = vmatmul.mubr.bf16.gmra.mrb[0].mxu0 %v6920
      %v7468 = vpop.f32.mrb[0].mxu0
      %v7469 = vadd.f32 0.0, %v7468
      %v7470 = vpop.f32.mrb[0].mxu0
      %v7471 = vpop.f32.mrb[0].mxu0
      %v7472 = vadd.f32 0.0, %v7471
      %v7473 = vpop.f32.mrb[0].mxu0
      %7474 = vmatprep.mubr.bf16.mxu0 0
      %7475 = vmatmul.mubr.bf16.gmra.mrb[0].mxu0 %v6923
      %v7476 = vpop.f32.mrb[0].mxu0
      %v7477 = vadd.f32 0.0, %v7476
      %v7478 = vpop.f32.mrb[0].mxu0
      %v7479 = vpop.f32.mrb[0].mxu0
      %v7480 = vadd.f32 0.0, %v7479
      %v7481 = vpop.f32.mrb[0].mxu0
      %7482 = vmatprep.mubr.bf16.mxu0 0
      %7483 = vmatmul.mubr.bf16.gmra.mrb[0].mxu0 %v6926
      %v7484 = vpop.f32.mrb[0].mxu0
      %v7485 = vadd.f32 0.0, %v7484
      %v7486 = vpop.f32.mrb[0].mxu0
      %v7487 = vpop.f32.mrb[0].mxu0
      %v7488 = vadd.f32 0.0, %v7487
      %v7489 = vpop.f32.mrb[0].mxu0
      %7490 = vmatprep.mubr.bf16.mxu0 0
      %7491 = vmatmul.mubr.bf16.gmra.mrb[0].mxu0 %v6929
      %v7492 = vpop.f32.mrb[0].mxu0
      %v7493 = vadd.f32 0.0, %v7492
      %v7494 = vpop.f32.mrb[0].mxu0
      %v7495 = vpop.f32.mrb[0].mxu0
      %v7496 = vadd.f32 0.0, %v7495
      %v7497 = vpop.f32.mrb[0].mxu0
      %7498 = vmatprep.mubr.bf16.mxu0 0
      %7499 = vmatmul.mubr.bf16.gmra.mrb[0].mxu0 %v6932
      %v7500 = vpop.f32.mrb[0].mxu0
      %v7501 = vadd.f32 0.0, %v7500
      %v7502 = vpop.f32.mrb[0].mxu0
      %v7503 = vpop.f32.mrb[0].mxu0
      %v7504 = vadd.f32 0.0, %v7503
      %v7505 = vpop.f32.mrb[0].mxu0
      %7506 = vmatprep.mubr.bf16.mxu0 0
      %7507 = vmatmul.mubr.bf16.gmra.mrb[0].mxu0 %v6935
      %v7508 = vpop.f32.mrb[0].mxu0
      %v7509 = vadd.f32 0.0, %v7508
      %v7510 = vpop.f32.mrb[0].mxu0
      %v7511 = vpop.f32.mrb[0].mxu0
      %v7512 = vadd.f32 0.0, %v7511
      %v7513 = vpop.f32.mrb[0].mxu0
      %7514 = vmatprep.mubr.bf16.mxu0 0
      %7515 = vmatmul.mubr.bf16.gmra.mrb[0].mxu0 %v6938
      %v7516 = vpop.f32.mrb[0].mxu0
      %v7517 = vadd.f32 0.0, %v7516
      %v7518 = vpop.f32.mrb[0].mxu0
      %v7519 = vpop.f32.mrb[0].mxu0
      %v7520 = vadd.f32 0.0, %v7519
      %v7521 = vpop.f32.mrb[0].mxu0
      %7522 = vmatprep.mubr.bf16.mxu0 0
      %7523 = vmatmul.mubr.bf16.gmra.mrb[0].mxu0 %v6941
      %v7524 = vpop.f32.mrb[0].mxu0
      %v7525 = vadd.f32 0.0, %v7524
      %v7526 = vpop.f32.mrb[0].mxu0
      %v7527 = vpop.f32.mrb[0].mxu0
      %v7528 = vadd.f32 0.0, %v7527
      %v7529 = vpop.f32.mrb[0].mxu0
      %7530 = vmatprep.mubr.bf16.mxu0 0
      %7531 = vmatmul.mubr.bf16.gmra.mrb[0].mxu0 %v6944
      %v7532 = vpop.f32.mrb[0].mxu0
      %v7533 = vadd.f32 0.0, %v7532
      %v7534 = vpop.f32.mrb[0].mxu0
      %v7535 = vpop.f32.mrb[0].mxu0
      %v7536 = vadd.f32 0.0, %v7535
      %v7537 = vpop.f32.mrb[0].mxu0
      %7538 = vmatprep.mubr.bf16.mxu0 0
      %7539 = vmatmul.mubr.bf16.gmra.mrb[0].mxu0 %v6947
      %v7540 = vpop.f32.mrb[0].mxu0
      %v7541 = vadd.f32 0.0, %v7540
      %v7542 = vpop.f32.mrb[0].mxu0
      %v7543 = vpop.f32.mrb[0].mxu0
      %v7544 = vadd.f32 0.0, %v7543
      %v7545 = vpop.f32.mrb[0].mxu0
      %7546 = vmatprep.mubr.bf16.mxu0 0
      %7547 = vmatmul.mubr.bf16.gmra.mrb[0].mxu0 %v6950
      %v7548 = vpop.f32.mrb[0].mxu0
      %v7549 = vadd.f32 0.0, %v7548
      %v7550 = vpop.f32.mrb[0].mxu0
      %v7551 = vpop.f32.mrb[0].mxu0
      %v7552 = vadd.f32 0.0, %v7551
      %v7553 = vpop.f32.mrb[0].mxu0
      %7554 = vmatprep.mubr.bf16.mxu0 0
      %7555 = vmatmul.mubr.bf16.gmra.mrb[0].mxu0 %v6953
      %v7556 = vpop.f32.mrb[0].mxu0
      %v7557 = vadd.f32 0.0, %v7556
      %v7558 = vpop.f32.mrb[0].mxu0
      %v7559 = vpop.f32.mrb[0].mxu0
      %v7560 = vadd.f32 0.0, %v7559
      %v7561 = vpop.f32.mrb[0].mxu0
      %7562 = vmatprep.mubr.bf16.mxu0 0
      %7563 = vmatmul.mubr.bf16.gmra.mrb[0].mxu0 %v6956
      %v7564 = vpop.f32.mrb[0].mxu0
      %v7565 = vadd.f32 0.0, %v7564
      %v7566 = vpop.f32.mrb[0].mxu0
      %v7567 = vpop.f32.mrb[0].mxu0
      %v7568 = vadd.f32 0.0, %v7567
      %v7569 = vpop.f32.mrb[0].mxu0
      %7570 = vmatprep.mubr.bf16.mxu0 0
      %7571 = vmatmul.mubr.bf16.gmra.mrb[0].mxu0 %v6959
      %v7572 = vpop.f32.mrb[0].mxu0
      %v7573 = vadd.f32 0.0, %v7572
      %v7574 = vpop.f32.mrb[0].mxu0
      %v7575 = vpop.f32.mrb[0].mxu0
      %v7576 = vadd.f32 0.0, %v7575
      %v7577 = vpop.f32.mrb[0].mxu0
      %7578 = vmatprep.mubr.bf16.mxu0 0
      %7579 = vmatmul.mubr.bf16.gmra.mrb[0].mxu0 %v6962
      %v7580 = vpop.f32.mrb[0].mxu0
      %v7581 = vadd.f32 0.0, %v7580
      %v7582 = vpop.f32.mrb[0].mxu0
      %v7583 = vpop.f32.mrb[0].mxu0
      %v7584 = vadd.f32 0.0, %v7583
      %v7585 = vpop.f32.mrb[0].mxu0
      %7586 = vmatprep.mubr.bf16.mxu0 0
      %7587 = vmatmul.mubr.bf16.gmra.mrb[0].mxu0 %v6965
      %v7588 = vpop.f32.mrb[0].mxu0
      %v7589 = vadd.f32 0.0, %v7588
      %v7590 = vpop.f32.mrb[0].mxu0
      %v7591 = vpop.f32.mrb[0].mxu0
      %v7592 = vadd.f32 0.0, %v7591
      %v7593 = vpop.f32.mrb[0].mxu0
      %7594 = vmatprep.mubr.bf16.mxu0 0
      %7595 = vmatmul.mubr.bf16.gmra.mrb[0].mxu0 %v6968
      %v7596 = vpop.f32.mrb[0].mxu0
      %v7597 = vadd.f32 0.0, %v7596
      %v7598 = vpop.f32.mrb[0].mxu0
      %v7599 = vpop.f32.mrb[0].mxu0
      %v7600 = vadd.f32 0.0, %v7599
      %v7601 = vpop.f32.mrb[0].mxu0
      %7602 = vmatprep.mubr.bf16.mxu0 0
      %7603 = vmatmul.mubr.bf16.gmra.mrb[0].mxu0 %v6971
      %v7604 = vpop.f32.mrb[0].mxu0
      %v7605 = vadd.f32 0.0, %v7604
      %v7606 = vpop.f32.mrb[0].mxu0
      %v7607 = vpop.f32.mrb[0].mxu0
      %v7608 = vadd.f32 0.0, %v7607
      %v7609 = vpop.f32.mrb[0].mxu0
      %7610 = vmatprep.mubr.bf16.mxu0 0
      %7611 = vmatmul.mubr.bf16.gmra.mrb[0].mxu0 %v6974
      %v7612 = vpop.f32.mrb[0].mxu0
      %v7613 = vadd.f32 0.0, %v7612
      %v7614 = vpop.f32.mrb[0].mxu0
      %v7615 = vpop.f32.mrb[0].mxu0
      %v7616 = vadd.f32 0.0, %v7615
      %v7617 = vpop.f32.mrb[0].mxu0
      %7618 = vmatprep.mubr.bf16.mxu0 0
      %7619 = vmatmul.mubr.bf16.gmra.mrb[0].mxu0 %v6977
      %v7620 = vpop.f32.mrb[0].mxu0
      %v7621 = vadd.f32 0.0, %v7620
      %v7622 = vpop.f32.mrb[0].mxu0
      %v7623 = vpop.f32.mrb[0].mxu0
      %v7624 = vadd.f32 0.0, %v7623
      %v7625 = vpop.f32.mrb[0].mxu0
      %7626 = vmatprep.mubr.bf16.mxu0 0
      %7627 = vmatmul.mubr.bf16.gmra.mrb[0].mxu0 %v6980
      %v7628 = vpop.f32.mrb[0].mxu0
      %v7629 = vadd.f32 0.0, %v7628
      %v7630 = vpop.f32.mrb[0].mxu0
      %v7631 = vpop.f32.mrb[0].mxu0
      %v7632 = vadd.f32 0.0, %v7631
      %v7633 = vpop.f32.mrb[0].mxu0
      %7634 = vmatprep.mubr.bf16.mxu0 0
      %7635 = vmatmul.mubr.bf16.gmra.mrb[0].mxu0 %v6983
      %v7636 = vpop.f32.mrb[0].mxu0
      %v7637 = vadd.f32 0.0, %v7636
      %v7638 = vpop.f32.mrb[0].mxu0
      %v7639 = vpop.f32.mrb[0].mxu0
      %v7640 = vadd.f32 0.0, %v7639
      %v7641 = vpop.f32.mrb[0].mxu0
      %7642 = vmatprep.mubr.bf16.mxu0 0
      %7643 = vmatmul.mubr.bf16.gmra.mrb[0].mxu0 %v6986
      %v7644 = vpop.f32.mrb[0].mxu0
      %v7645 = vadd.f32 0.0, %v7644
      %v7646 = vpop.f32.mrb[0].mxu0
      %v7647 = vpop.f32.mrb[0].mxu0
      %v7648 = vadd.f32 0.0, %v7647
      %v7649 = vpop.f32.mrb[0].mxu0
      %7650 = vmatprep.mubr.bf16.mxu0 0
      %7651 = vmatmul.mubr.bf16.gmra.mrb[0].mxu0 %v6989
      %v7652 = vpop.f32.mrb[0].mxu0
      %v7653 = vadd.f32 0.0, %v7652
      %v7654 = vpop.f32.mrb[0].mxu0
      %v7655 = vpop.f32.mrb[0].mxu0
      %v7656 = vadd.f32 0.0, %v7655
      %v7657 = vpop.f32.mrb[0].mxu0
      %7658 = vmatprep.mubr.bf16.mxu0 0
      %7659 = vmatmul.mubr.bf16.gmra.mrb[0].mxu0 %v6992
      %v7660 = vpop.f32.mrb[0].mxu0
      %v7661 = vadd.f32 0.0, %v7660
      %v7662 = vpop.f32.mrb[0].mxu0
      %v7663 = vpop.f32.mrb[0].mxu0
      %v7664 = vadd.f32 0.0, %v7663
      %v7665 = vpop.f32.mrb[0].mxu0
      %7666 = vmatprep.mubr.bf16.mxu0 0
      %7667 = vmatmul.mubr.bf16.gmra.mrb[0].mxu0 %v6995
      %v7668 = vpop.f32.mrb[0].mxu0
      %v7669 = vadd.f32 0.0, %v7668
      %v7670 = vpop.f32.mrb[0].mxu0
      %v7671 = vpop.f32.mrb[0].mxu0
      %v7672 = vadd.f32 0.0, %v7671
      %v7673 = vpop.f32.mrb[0].mxu0
      %7674 = vmatprep.mubr.bf16.mxu0 0
      %7675 = vmatmul.mubr.bf16.gmra.mrb[0].mxu0 %v6998
      %v7676 = vpop.f32.mrb[0].mxu0
      %v7677 = vadd.f32 0.0, %v7676
      %v7678 = vpop.f32.mrb[0].mxu0
      %v7679 = vpop.f32.mrb[0].mxu0
      %v7680 = vadd.f32 0.0, %v7679
      %v7681 = vpop.f32.mrb[0].mxu0
      %7682 = vmatprep.mubr.bf16.mxu0 0
      %7683 = vmatmul.mubr.bf16.gmra.mrb[0].mxu0 %v7001
      %v7684 = vpop.f32.mrb[0].mxu0
      %v7685 = vadd.f32 0.0, %v7684
      %v7686 = vpop.f32.mrb[0].mxu0
      %v7687 = vpop.f32.mrb[0].mxu0
      %v7688 = vadd.f32 0.0, %v7687
      %v7689 = vpop.f32.mrb[0].mxu0
      %7690 = vmatprep.mubr.bf16.mxu0 0
      %7691 = vmatmul.mubr.bf16.gmra.mrb[0].mxu0 %v7004
      %v7692 = vpop.f32.mrb[0].mxu0
      %v7693 = vadd.f32 0.0, %v7692
      %v7694 = vpop.f32.mrb[0].mxu0
      %v7695 = vpop.f32.mrb[0].mxu0
      %v7696 = vadd.f32 0.0, %v7695
      %v7697 = vpop.f32.mrb[0].mxu0
      %7698 = vmatprep.mubr.bf16.mxu0 0
      %7699 = vmatmul.mubr.bf16.gmra.mrb[0].mxu0 %v7007
      %v7700 = vpop.f32.mrb[0].mxu0
      %v7701 = vadd.f32 0.0, %v7700
      %v7702 = vpop.f32.mrb[0].mxu0
      %v7703 = vpop.f32.mrb[0].mxu0
      %v7704 = vadd.f32 0.0, %v7703
      %v7705 = vpop.f32.mrb[0].mxu0
      %7706 = vmatprep.mubr.bf16.mxu0 0
      %7707 = vmatmul.mubr.bf16.gmra.mrb[0].mxu0 %v7010
      %v7708 = vpop.f32.mrb[0].mxu0
      %v7709 = vadd.f32 0.0, %v7708
      %v7710 = vpop.f32.mrb[0].mxu0
      %v7711 = vpop.f32.mrb[0].mxu0
      %v7712 = vadd.f32 0.0, %v7711
      %v7713 = vpop.f32.mrb[0].mxu0
      %7714 = vmatprep.mubr.bf16.mxu0 0
      %7715 = vmatmul.mubr.bf16.gmra.mrb[0].mxu0 %v7013
      %v7716 = vpop.f32.mrb[0].mxu0
      %v7717 = vadd.f32 0.0, %v7716
      %v7718 = vpop.f32.mrb[0].mxu0
      %v7719 = vpop.f32.mrb[0].mxu0
      %v7720 = vadd.f32 0.0, %v7719
      %v7721 = vpop.f32.mrb[0].mxu0
      %7722 = vmatprep.mubr.bf16.mxu0 0
      %7723 = vmatmul.mubr.bf16.gmra.mrb[0].mxu0 %v7016
      %v7724 = vpop.f32.mrb[0].mxu0
      %v7725 = vadd.f32 0.0, %v7724
      %v7726 = vpop.f32.mrb[0].mxu0
      %v7727 = vpop.f32.mrb[0].mxu0
      %v7728 = vadd.f32 0.0, %v7727
      %v7729 = vpop.f32.mrb[0].mxu0
      %7730 = vmatprep.mubr.bf16.mxu0 0
      %7731 = vmatmul.mubr.bf16.gmra.mrb[0].mxu0 %v7019
      %v7732 = vpop.f32.mrb[0].mxu0
      %v7733 = vadd.f32 0.0, %v7732
      %v7734 = vpop.f32.mrb[0].mxu0
      %v7735 = vpop.f32.mrb[0].mxu0
      %v7736 = vadd.f32 0.0, %v7735
      %v7737 = vpop.f32.mrb[0].mxu0
      %7738 = vmatprep.mubr.bf16.mxu0 0
      %7739 = vmatmul.mubr.bf16.gmra.mrb[0].mxu0 %v7022
      %v7740 = vpop.f32.mrb[0].mxu0
      %v7741 = vadd.f32 0.0, %v7740
      %v7742 = vpop.f32.mrb[0].mxu0
      %v7743 = vpop.f32.mrb[0].mxu0
      %v7744 = vadd.f32 0.0, %v7743
      %v7745 = vpop.f32.mrb[0].mxu0
      %7746 = vmatprep.mubr.bf16.mxu0 0
      %7747 = vmatmul.mubr.bf16.gmra.mrb[0].mxu0 %v7025
      %v7748 = vpop.f32.mrb[0].mxu0
      %v7749 = vadd.f32 0.0, %v7748
      %v7750 = vpop.f32.mrb[0].mxu0
      %v7751 = vpop.f32.mrb[0].mxu0
      %v7752 = vadd.f32 0.0, %v7751
      %v7753 = vpop.f32.mrb[0].mxu0
      %7754 = vmatprep.mubr.bf16.mxu0 0
      %7755 = vmatmul.mubr.bf16.gmra.mrb[0].mxu0 %v7028
      %v7756 = vpop.f32.mrb[0].mxu0
      %v7757 = vadd.f32 0.0, %v7756
      %v7758 = vpop.f32.mrb[0].mxu0
      %v7759 = vpop.f32.mrb[0].mxu0
      %v7760 = vadd.f32 0.0, %v7759
      %v7761 = vpop.f32.mrb[0].mxu0
      %7762 = vmatprep.mubr.bf16.mxu0 0
      %7763 = vmatmul.mubr.bf16.gmra.mrb[0].mxu0 %v7031
      %v7764 = vpop.f32.mrb[0].mxu0
      %v7765 = vadd.f32 0.0, %v7764
      %v7766 = vpop.f32.mrb[0].mxu0
      %v7767 = vpop.f32.mrb[0].mxu0
      %v7768 = vadd.f32 0.0, %v7767
      %v7769 = vpop.f32.mrb[0].mxu0
      %7770 = vmatprep.mubr.bf16.mxu0 0
      %7771 = vmatmul.mubr.bf16.gmra.mrb[0].mxu0 %v7034
      %v7772 = vpop.f32.mrb[0].mxu0
      %v7773 = vadd.f32 0.0, %v7772
      %v7774 = vpop.f32.mrb[0].mxu0
      %v7775 = vpop.f32.mrb[0].mxu0
      %v7776 = vadd.f32 0.0, %v7775
      %v7777 = vpop.f32.mrb[0].mxu0
      %7778 = vmatprep.mubr.bf16.mxu0 0
      %7779 = vmatmul.mubr.bf16.gmra.mrb[0].mxu0 %v7037
      %v7780 = vpop.f32.mrb[0].mxu0
      %v7781 = vadd.f32 0.0, %v7780
      %v7782 = vpop.f32.mrb[0].mxu0
      %v7783 = vpop.f32.mrb[0].mxu0
      %v7784 = vadd.f32 0.0, %v7783
      %v7785 = vpop.f32.mrb[0].mxu0
      %7786 = vmatprep.mubr.bf16.mxu0 0
      %7787 = vmatmul.mubr.bf16.gmra.mrb[0].mxu0 %v7040
      %v7788 = vpop.f32.mrb[0].mxu0
      %v7789 = vadd.f32 0.0, %v7788
      %v7790 = vpop.f32.mrb[0].mxu0
      %v7791 = vpop.f32.mrb[0].mxu0
      %v7792 = vadd.f32 0.0, %v7791
      %v7793 = vpop.f32.mrb[0].mxu0
      %7794 = vmatprep.mubr.bf16.mxu0 0
      %7795 = vmatmul.mubr.bf16.gmra.mrb[0].mxu0 %v7043
      %v7796 = vpop.f32.mrb[0].mxu0
      %v7797 = vadd.f32 0.0, %v7796
      %v7798 = vpop.f32.mrb[0].mxu0
      %v7799 = vpop.f32.mrb[0].mxu0
      %v7800 = vadd.f32 0.0, %v7799
      %v7801 = vpop.f32.mrb[0].mxu0
      %7802 = vmatprep.mubr.bf16.mxu0 0
      %7803 = vmatmul.mubr.bf16.gmra.mrb[0].mxu0 %v7046
      %v7804 = vpop.f32.mrb[0].mxu0
      %v7805 = vadd.f32 0.0, %v7804
      %v7806 = vpop.f32.mrb[0].mxu0
      %v7807 = vpop.f32.mrb[0].mxu0
      %v7808 = vadd.f32 0.0, %v7807
      %v7809 = vpop.f32.mrb[0].mxu0
      %7810 = vmatprep.mubr.bf16.mxu0 0
      %7811 = vmatmul.mubr.bf16.gmra.mrb[0].mxu0 %v7049
      %v7812 = vpop.f32.mrb[0].mxu0
      %v7813 = vadd.f32 0.0, %v7812
      %v7814 = vpop.f32.mrb[0].mxu0
      %v7815 = vpop.f32.mrb[0].mxu0
      %v7816 = vadd.f32 0.0, %v7815
      %v7817 = vpop.f32.mrb[0].mxu0
      %7818 = vmatprep.mubr.bf16.mxu0 0
      %7819 = vmatmul.mubr.bf16.gmra.mrb[0].mxu0 %v7052
      %v7820 = vpop.f32.mrb[0].mxu0
      %v7821 = vadd.f32 0.0, %v7820
      %v7822 = vpop.f32.mrb[0].mxu0
      %v7823 = vpop.f32.mrb[0].mxu0
      %v7824 = vadd.f32 0.0, %v7823
      %v7825 = vpop.f32.mrb[0].mxu0
      %7826 = vmatprep.mubr.bf16.mxu0 0
      %7827 = vmatmul.mubr.bf16.gmra.mrb[0].mxu0 %v7055
      %v7828 = vpop.f32.mrb[0].mxu0
      %v7829 = vadd.f32 0.0, %v7828
      %v7830 = vpop.f32.mrb[0].mxu0
      %v7831 = vpop.f32.mrb[0].mxu0
      %v7832 = vadd.f32 0.0, %v7831
      %v7833 = vpop.f32.mrb[0].mxu0
      %7834 = vmatprep.mubr.bf16.mxu0 0
      %7835 = vmatmul.mubr.bf16.gmra.mrb[0].mxu0 %v7058
      %v7836 = vpop.f32.mrb[0].mxu0
      %v7837 = vadd.f32 0.0, %v7836
      %v7838 = vpop.f32.mrb[0].mxu0
      %v7839 = vpop.f32.mrb[0].mxu0
      %v7840 = vadd.f32 0.0, %v7839
      %v7841 = vpop.f32.mrb[0].mxu0
      %7842 = vmatprep.mubr.bf16.mxu0 0
      %7843 = vmatmul.mubr.bf16.gmra.mrb[0].mxu0 %v7061
      %v7844 = vpop.f32.mrb[0].mxu0
      %v7845 = vadd.f32 0.0, %v7844
      %v7846 = vpop.f32.mrb[0].mxu0
      %v7847 = vpop.f32.mrb[0].mxu0
      %v7848 = vadd.f32 0.0, %v7847
      %v7849 = vpop.f32.mrb[0].mxu0
      %7850 = vmatprep.mubr.bf16.mxu0 0
      %7851 = vmatmul.mubr.bf16.gmra.mrb[0].mxu0 %v7064
      %v7852 = vpop.f32.mrb[0].mxu0
      %v7853 = vadd.f32 0.0, %v7852
      %v7854 = vpop.f32.mrb[0].mxu0
      %v7855 = vpop.f32.mrb[0].mxu0
      %v7856 = vadd.f32 0.0, %v7855
      %v7857 = vpop.f32.mrb[0].mxu0
      %7858 = vmatprep.mubr.bf16.mxu0 0
      %7859 = vmatmul.mubr.bf16.gmra.mrb[0].mxu0 %v7067
      %v7860 = vpop.f32.mrb[0].mxu0
      %v7861 = vadd.f32 0.0, %v7860
      %v7862 = vpop.f32.mrb[0].mxu0
      %v7863 = vpop.f32.mrb[0].mxu0
      %v7864 = vadd.f32 0.0, %v7863
      %v7865 = vpop.f32.mrb[0].mxu0
      %7866 = vmatprep.mubr.bf16.mxu0 0
      %7867 = vmatmul.mubr.bf16.gmra.mrb[0].mxu0 %v7070
      %v7868 = vpop.f32.mrb[0].mxu0
      %v7869 = vadd.f32 0.0, %v7868
      %v7870 = vpop.f32.mrb[0].mxu0
      %v7871 = vpop.f32.mrb[0].mxu0
      %v7872 = vadd.f32 0.0, %v7871
      %v7873 = vpop.f32.mrb[0].mxu0
      %7874 = vmatprep.mubr.bf16.mxu0 0
      %7875 = vmatmul.mubr.bf16.gmra.mrb[0].mxu0 %v7073
      %v7876 = vpop.f32.mrb[0].mxu0
      %v7877 = vadd.f32 0.0, %v7876
      %v7878 = vpop.f32.mrb[0].mxu0
      %v7879 = vpop.f32.mrb[0].mxu0
      %v7880 = vadd.f32 0.0, %v7879
      %v7881 = vpop.f32.mrb[0].mxu0
      %7882 = vmatprep.mubr.bf16.mxu0 0
      %7883 = vmatmul.mubr.bf16.gmra.mrb[0].mxu0 %v7076
      %v7884 = vpop.f32.mrb[0].mxu0
      %v7885 = vadd.f32 0.0, %v7884
      %v7886 = vpop.f32.mrb[0].mxu0
      %v7887 = vpop.f32.mrb[0].mxu0
      %v7888 = vadd.f32 0.0, %v7887
      %v7889 = vpop.f32.mrb[0].mxu0
      %7890 = vmatprep.mubr.bf16.mxu0 0
      %7891 = vmatmul.mubr.bf16.gmra.mrb[0].mxu0 %v7079
      %v7892 = vpop.f32.mrb[0].mxu0
      %v7893 = vadd.f32 0.0, %v7892
      %v7894 = vpop.f32.mrb[0].mxu0
      %v7895 = vpop.f32.mrb[0].mxu0
      %v7896 = vadd.f32 0.0, %v7895
      %v7897 = vpop.f32.mrb[0].mxu0
      %7898 = vmatprep.mubr.bf16.mxu0 0
      %7899 = vmatmul.mubr.bf16.gmra.mrb[0].mxu0 %v7082
      %v7900 = vpop.f32.mrb[0].mxu0
      %v7901 = vadd.f32 0.0, %v7900
      %v7902 = vpop.f32.mrb[0].mxu0
      %v7903 = vpop.f32.mrb[0].mxu0
      %v7904 = vadd.f32 0.0, %v7903
      %v7905 = vpop.f32.mrb[0].mxu0
      %7906 = vmatprep.mubr.bf16.mxu0 0
      %7907 = vmatmul.mubr.bf16.gmra.mrb[0].mxu0 %v7085
      %v7908 = vpop.f32.mrb[0].mxu0
      %v7909 = vadd.f32 0.0, %v7908
      %v7910 = vpop.f32.mrb[0].mxu0
      %v7911 = vpop.f32.mrb[0].mxu0
      %v7912 = vadd.f32 0.0, %v7911
      %v7913 = vpop.f32.mrb[0].mxu0
      %7914 = vmatprep.mubr.bf16.mxu0 0
      %7915 = vmatmul.mubr.bf16.gmra.mrb[0].mxu0 %v7088
      %v7916 = vpop.f32.mrb[0].mxu0
      %v7917 = vadd.f32 0.0, %v7916
      %v7918 = vpop.f32.mrb[0].mxu0
      %v7919 = vpop.f32.mrb[0].mxu0
      %v7920 = vadd.f32 0.0, %v7919
      %v7921 = vpop.f32.mrb[0].mxu0
      %7922 = vmatprep.mubr.bf16.mxu0 0
      %7923 = vmatmul.mubr.bf16.gmra.mrb[0].mxu0 %v7091
      %v7924 = vpop.f32.mrb[0].mxu0
      %v7925 = vadd.f32 0.0, %v7924
      %v7926 = vpop.f32.mrb[0].mxu0
      %v7927 = vpop.f32.mrb[0].mxu0
      %v7928 = vadd.f32 0.0, %v7927
      %v7929 = vpop.f32.mrb[0].mxu0
      %7930 = vmatprep.mubr.bf16.mxu0 0
      %7931 = vmatmul.mubr.bf16.gmra.mrb[0].mxu0 %v7094
      %v7932 = vpop.f32.mrb[0].mxu0
      %v7933 = vadd.f32 0.0, %v7932
      %v7934 = vpop.f32.mrb[0].mxu0
      %v7935 = vpop.f32.mrb[0].mxu0
      %v7936 = vadd.f32 0.0, %v7935
      %v7937 = vpop.f32.mrb[0].mxu0
      %7938 = vmatprep.mubr.bf16.mxu0 0
      %7939 = vmatmul.mubr.bf16.gmra.mrb[0].mxu0 %v7097
      %v7940 = vpop.f32.mrb[0].mxu0
      %v7941 = vadd.f32 0.0, %v7940
      %v7942 = vpop.f32.mrb[0].mxu0
      %v7943 = vpop.f32.mrb[0].mxu0
      %v7944 = vadd.f32 0.0, %v7943
      %v7945 = vpop.f32.mrb[0].mxu0
      %7946 = vmatprep.mubr.bf16.mxu0 0
      %7947 = vmatmul.mubr.bf16.gmra.mrb[0].mxu0 %v7100
      %v7948 = vpop.f32.mrb[0].mxu0
      %v7949 = vadd.f32 0.0, %v7948
      %v7950 = vpop.f32.mrb[0].mxu0
      %v7951 = vpop.f32.mrb[0].mxu0
      %v7952 = vadd.f32 0.0, %v7951
      %v7953 = vpop.f32.mrb[0].mxu0
      %7954 = vmatprep.mubr.bf16.mxu0 0
      %7955 = vmatmul.mubr.bf16.gmra.mrb[0].mxu0 %v7103
      %v7956 = vpop.f32.mrb[0].mxu0
      %v7957 = vadd.f32 0.0, %v7956
      %v7958 = vpop.f32.mrb[0].mxu0
      %v7959 = vpop.f32.mrb[0].mxu0
      %v7960 = vadd.f32 0.0, %v7959
      %v7961 = vpop.f32.mrb[0].mxu0
      %7962 = vmatprep.mubr.bf16.mxu0 0
      %7963 = vmatmul.mubr.bf16.gmra.mrb[0].mxu0 %v7106
      %v7964 = vpop.f32.mrb[0].mxu0
      %v7965 = vadd.f32 0.0, %v7964
      %v7966 = vpop.f32.mrb[0].mxu0
      %v7967 = vpop.f32.mrb[0].mxu0
      %v7968 = vadd.f32 0.0, %v7967
      %v7969 = vpop.f32.mrb[0].mxu0
      %7970 = vmatprep.mubr.bf16.mxu0 0
      %7971 = vmatmul.mubr.bf16.gmra.mrb[0].mxu0 %v7109
      %v7972 = vpop.f32.mrb[0].mxu0
      %v7973 = vadd.f32 0.0, %v7972
      %v7974 = vpop.f32.mrb[0].mxu0
      %v7975 = vpop.f32.mrb[0].mxu0
      %v7976 = vadd.f32 0.0, %v7975
      %v7977 = vpop.f32.mrb[0].mxu0
      %7978 = vmatprep.mubr.bf16.mxu0 0
      %7979 = vmatmul.mubr.bf16.gmra.mrb[0].mxu0 %v7112
      %v7980 = vpop.f32.mrb[0].mxu0
      %v7981 = vadd.f32 0.0, %v7980
      %v7982 = vpop.f32.mrb[0].mxu0
      %v7983 = vpop.f32.mrb[0].mxu0
      %v7984 = vadd.f32 0.0, %v7983
      %v7985 = vpop.f32.mrb[0].mxu0
      %7986 = vmatprep.mubr.bf16.mxu0 0
      %7987 = vmatmul.mubr.bf16.gmra.mrb[0].mxu0 %v7115
      %v7988 = vpop.f32.mrb[0].mxu0
      %v7989 = vadd.f32 0.0, %v7988
      %v7990 = vpop.f32.mrb[0].mxu0
      %v7991 = vpop.f32.mrb[0].mxu0
      %v7992 = vadd.f32 0.0, %v7991
      %v7993 = vpop.f32.mrb[0].mxu0
      %7994 = vmatprep.mubr.bf16.mxu0 0
      %7995 = vmatmul.mubr.bf16.gmra.mrb[0].mxu0 %v7118
      %v7996 = vpop.f32.mrb[0].mxu0
      %v7997 = vadd.f32 0.0, %v7996
      %v7998 = vpop.f32.mrb[0].mxu0
      %v7999 = vpop.f32.mrb[0].mxu0
      %v8000 = vadd.f32 0.0, %v7999
      %v8001 = vpop.f32.mrb[0].mxu0
      %8002 = vmatprep.mubr.bf16.mxu0 0
      %8003 = vmatmul.mubr.bf16.gmra.mrb[0].mxu0 %v7121
      %v8004 = vpop.f32.mrb[0].mxu0
      %v8005 = vadd.f32 0.0, %v8004
      %v8006 = vpop.f32.mrb[0].mxu0
      %v8007 = vpop.f32.mrb[0].mxu0
      %v8008 = vadd.f32 0.0, %v8007
      %v8009 = vpop.f32.mrb[0].mxu0
      %8010 = vmatprep.mubr.bf16.mxu0 0
      %8011 = vmatmul.mubr.bf16.gmra.mrb[0].mxu0 %v7124
      %v8012 = vpop.f32.mrb[0].mxu0
      %v8013 = vadd.f32 0.0, %v8012
      %v8014 = vpop.f32.mrb[0].mxu0
      %v8015 = vpop.f32.mrb[0].mxu0
      %v8016 = vadd.f32 0.0, %v8015
      %v8017 = vpop.f32.mrb[0].mxu0
      %8018 = vmatprep.mubr.bf16.mxu0 0
      %8019 = vmatmul.mubr.bf16.gmra.mrb[0].mxu0 %v7127
      %v8020 = vpop.f32.mrb[0].mxu0
      %v8021 = vadd.f32 0.0, %v8020
      %v8022 = vpop.f32.mrb[0].mxu0
      %v8023 = vpop.f32.mrb[0].mxu0
      %v8024 = vadd.f32 0.0, %v8023
      %v8025 = vpop.f32.mrb[0].mxu0
      %8026 = vmatprep.mubr.bf16.mxu0 0
      %8027 = vmatmul.mubr.bf16.gmra.mrb[0].mxu0 %v7130
      %v8028 = vpop.f32.mrb[0].mxu0
      %v8029 = vadd.f32 0.0, %v8028
      %v8030 = vpop.f32.mrb[0].mxu0
      %v8031 = vpop.f32.mrb[0].mxu0
      %v8032 = vadd.f32 0.0, %v8031
      %v8033 = vpop.f32.mrb[0].mxu0
      %8034 = vmatprep.mubr.bf16.mxu0 0
      %8035 = vmatmul.mubr.bf16.gmra.mrb[0].mxu0 %v7133
      %v8036 = vpop.f32.mrb[0].mxu0
      %v8037 = vadd.f32 0.0, %v8036
      %v8038 = vpop.f32.mrb[0].mxu0
      %v8039 = vpop.f32.mrb[0].mxu0
      %v8040 = vadd.f32 0.0, %v8039
      %v8041 = vpop.f32.mrb[0].mxu0
      %8042 = vmatprep.mubr.bf16.mxu0 0
      %8043 = vmatmul.mubr.bf16.gmra.mrb[0].mxu0 %v7136
      %v8044 = vpop.f32.mrb[0].mxu0
      %v8045 = vadd.f32 0.0, %v8044
      %v8046 = vpop.f32.mrb[0].mxu0
      %v8047 = vpop.f32.mrb[0].mxu0
      %v8048 = vadd.f32 0.0, %v8047
      %v8049 = vpop.f32.mrb[0].mxu0
      %8050 = vmatprep.mubr.bf16.mxu0 0
      %8051 = vmatmul.mubr.bf16.gmra.mrb[0].mxu0 %v7139
      %v8052 = vpop.f32.mrb[0].mxu0
      %v8053 = vadd.f32 0.0, %v8052
      %v8054 = vpop.f32.mrb[0].mxu0
      %v8055 = vpop.f32.mrb[0].mxu0
      %v8056 = vadd.f32 0.0, %v8055
      %v8057 = vpop.f32.mrb[0].mxu0
      %8058 = vmatprep.mubr.bf16.mxu0 0
      %8059 = vmatmul.mubr.bf16.gmra.mrb[0].mxu0 %v7142
      %v8060 = vpop.f32.mrb[0].mxu0
      %v8061 = vadd.f32 0.0, %v8060
      %v8062 = vpop.f32.mrb[0].mxu0
      %v8063 = vpop.f32.mrb[0].mxu0
      %v8064 = vadd.f32 0.0, %v8063
      %v8065 = vpop.f32.mrb[0].mxu0
      %8066 = vmatprep.mubr.bf16.mxu0 0
      %8067 = vmatmul.mubr.bf16.gmra.mrb[0].mxu0 %v7145
      %v8068 = vpop.f32.mrb[0].mxu0
      %v8069 = vadd.f32 0.0, %v8068
      %v8070 = vpop.f32.mrb[0].mxu0
      %v8071 = vpop.f32.mrb[0].mxu0
      %v8072 = vadd.f32 0.0, %v8071
      %v8073 = vpop.f32.mrb[0].mxu0
      %8074 = vmatprep.mubr.bf16.mxu0 0
      %8075 = vmatmul.mubr.bf16.gmra.mrb[0].mxu0 %v7148
      %v8076 = vpop.f32.mrb[0].mxu0
      %v8077 = vadd.f32 0.0, %v8076
      %v8078 = vpop.f32.mrb[0].mxu0
      %v8079 = vpop.f32.mrb[0].mxu0
      %v8080 = vadd.f32 0.0, %v8079
      %v8081 = vpop.f32.mrb[0].mxu0
      %8082 = vmatprep.mubr.bf16.mxu0 0
      %8083 = vmatmul.mubr.bf16.gmra.mrb[0].mxu0 %v7151
      %v8084 = vpop.f32.mrb[0].mxu0
      %v8085 = vadd.f32 0.0, %v8084
      %v8086 = vpop.f32.mrb[0].mxu0
      %v8087 = vpop.f32.mrb[0].mxu0
      %v8088 = vadd.f32 0.0, %v8087
      %v8089 = vpop.f32.mrb[0].mxu0
      %8090 = vmatprep.mubr.bf16.mxu0 0
      %8091 = vmatmul.mubr.bf16.gmra.mrb[0].mxu0 %v7154
      %v8092 = vpop.f32.mrb[0].mxu0
      %v8093 = vadd.f32 0.0, %v8092
      %v8094 = vpop.f32.mrb[0].mxu0
      %v8095 = vpop.f32.mrb[0].mxu0
      %v8096 = vadd.f32 0.0, %v8095
      %v8097 = vpop.f32.mrb[0].mxu0
      %8098 = vmatprep.mubr.bf16.mxu0 0
      %8099 = vmatmul.mubr.bf16.gmra.mrb[0].mxu0 %v7157
      %v8100 = vpop.f32.mrb[0].mxu0
      %v8101 = vadd.f32 0.0, %v8100
      %v8102 = vpop.f32.mrb[0].mxu0
      %v8103 = vpop.f32.mrb[0].mxu0
      %v8104 = vadd.f32 0.0, %v8103
      %v8105 = vpop.f32.mrb[0].mxu0
      %8106 = vmatprep.mubr.bf16.mxu0 0
      %8107 = vmatmul.mubr.bf16.gmra.mrb[0].mxu0 %v7160
      %v8108 = vpop.f32.mrb[0].mxu0
      %v8109 = vadd.f32 0.0, %v8108
      %v8110 = vpop.f32.mrb[0].mxu0
      %v8111 = vpop.f32.mrb[0].mxu0
      %v8112 = vadd.f32 0.0, %v8111
      %v8113 = vpop.f32.mrb[0].mxu0
      %8114 = vmatprep.mubr.bf16.mxu0 0
      %8115 = vmatmul.mubr.bf16.gmra.mrb[0].mxu0 %v7163
      %v8116 = vpop.f32.mrb[0].mxu0
      %v8117 = vadd.f32 0.0, %v8116
      %v8118 = vpop.f32.mrb[0].mxu0
      %v8119 = vpop.f32.mrb[0].mxu0
      %v8120 = vadd.f32 0.0, %v8119
      %v8121 = vpop.f32.mrb[0].mxu0
      %8122 = vmatprep.mubr.bf16.mxu0 0
      %8123 = vmatmul.mubr.bf16.gmra.mrb[0].mxu0 %v7166
      %v8124 = vpop.f32.mrb[0].mxu0
      %v8125 = vadd.f32 0.0, %v8124
      %v8126 = vpop.f32.mrb[0].mxu0
      %v8127 = vpop.f32.mrb[0].mxu0
      %v8128 = vadd.f32 0.0, %v8127
      %v8129 = vpop.f32.mrb[0].mxu0
      %8130 = vmatprep.mubr.bf16.mxu0 0
      %8131 = vmatmul.mubr.bf16.gmra.mrb[0].mxu0 %v7169
      %v8132 = vpop.f32.mrb[0].mxu0
      %v8133 = vadd.f32 0.0, %v8132
      %v8134 = vpop.f32.mrb[0].mxu0
      %v8135 = vpop.f32.mrb[0].mxu0
      %v8136 = vadd.f32 0.0, %v8135
      %v8137 = vpop.f32.mrb[0].mxu0
      %8138 = vmatprep.mubr.bf16.mxu0 0
      %8139 = vmatmul.mubr.bf16.gmra.mrb[0].mxu0 %v7172
      %v8140 = vpop.f32.mrb[0].mxu0
      %v8141 = vadd.f32 0.0, %v8140
      %v8142 = vpop.f32.mrb[0].mxu0
      %v8143 = vpop.f32.mrb[0].mxu0
      %v8144 = vadd.f32 0.0, %v8143
      %v8145 = vpop.f32.mrb[0].mxu0
      %8146 = vmatprep.mubr.bf16.mxu0 0
      %8147 = vmatmul.mubr.bf16.gmra.mrb[0].mxu0 %v7175
      %v8148 = vpop.f32.mrb[0].mxu0
      %v8149 = vadd.f32 0.0, %v8148
      %v8150 = vpop.f32.mrb[0].mxu0
      %v8151 = vpop.f32.mrb[0].mxu0
      %v8152 = vadd.f32 0.0, %v8151
      %v8153 = vpop.f32.mrb[0].mxu0
      %8154 = vmatprep.mubr.bf16.mxu0 0
      %8155 = vmatmul.mubr.bf16.gmra.mrb[0].mxu0 %v7178
      %v8156 = vpop.f32.mrb[0].mxu0
      %v8157 = vadd.f32 0.0, %v8156
      %v8158 = vpop.f32.mrb[0].mxu0
      %v8159 = vpop.f32.mrb[0].mxu0
      %v8160 = vadd.f32 0.0, %v8159
      %v8161 = vpop.f32.mrb[0].mxu0
      %8162 = vmatprep.mubr.bf16.mxu0 0
      %8163 = vmatmul.mubr.bf16.gmra.mrb[0].mxu0 %v7181
      %v8164 = vpop.f32.mrb[0].mxu0
      %v8165 = vadd.f32 0.0, %v8164
      %v8166 = vpop.f32.mrb[0].mxu0
      %v8167 = vpop.f32.mrb[0].mxu0
      %v8168 = vadd.f32 0.0, %v8167
      %v8169 = vpop.f32.mrb[0].mxu0
      %8170 = vmatprep.mubr.bf16.mxu0 0
      %8171 = vmatmul.mubr.bf16.gmra.mrb[0].mxu0 %v7184
      %v8172 = vpop.f32.mrb[0].mxu0
      %v8173 = vadd.f32 0.0, %v8172
      %v8174 = vpop.f32.mrb[0].mxu0
      %v8175 = vpop.f32.mrb[0].mxu0
      %v8176 = vadd.f32 0.0, %v8175
      %v8177 = vpop.f32.mrb[0].mxu0
      %8178 = vmatprep.mubr.bf16.mxu0 0
      %8179 = vmatmul.mubr.bf16.gmra.mrb[0].mxu0 %v7187
      %v8180 = vpop.f32.mrb[0].mxu0
      %v8181 = vadd.f32 0.0, %v8180
      %v8182 = vpop.f32.mrb[0].mxu0
      %v8183 = vpop.f32.mrb[0].mxu0
      %v8184 = vadd.f32 0.0, %v8183
      %v8185 = vpop.f32.mrb[0].mxu0
      %8186 = vmatprep.mubr.bf16.mxu0 0
      %8187 = vmatmul.mubr.bf16.gmra.mrb[0].mxu0 %v7190
      %v8188 = vpop.f32.mrb[0].mxu0
      %v8189 = vadd.f32 0.0, %v8188
      %v8190 = vpop.f32.mrb[0].mxu0
      %v8191 = vpop.f32.mrb[0].mxu0
      %v8192 = vadd.f32 0.0, %v8191
      %v8193 = vpop.f32.mrb[0].mxu0
      %8194 = vmatprep.mubr.bf16.mxu0 0
      %8195 = vmatmul.mubr.bf16.gmra.mrb[0].mxu0 %v7193
      %v8196 = vpop.f32.mrb[0].mxu0
      %v8197 = vadd.f32 0.0, %v8196
      %v8198 = vpop.f32.mrb[0].mxu0
      %v8199 = vpop.f32.mrb[0].mxu0
      %v8200 = vadd.f32 0.0, %v8199
      %v8201 = vpop.f32.mrb[0].mxu0
      %8202 = vmatprep.mubr.bf16.mxu0 0
      %8203 = vmatmul.mubr.bf16.gmra.mrb[0].mxu0 %v7196
      %v8204 = vpop.f32.mrb[0].mxu0
      %v8205 = vadd.f32 0.0, %v8204
      %v8206 = vpop.f32.mrb[0].mxu0
      %v8207 = vpop.f32.mrb[0].mxu0
      %v8208 = vadd.f32 0.0, %v8207
      %v8209 = vpop.f32.mrb[0].mxu0
      %8210 = vmatprep.mubr.bf16.mxu0 0
      %8211 = vmatmul.mubr.bf16.gmra.mrb[0].mxu0 %v7199
      %v8212 = vpop.f32.mrb[0].mxu0
      %v8213 = vadd.f32 0.0, %v8212
      %v8214 = vpop.f32.mrb[0].mxu0
      %v8215 = vpop.f32.mrb[0].mxu0
      %v8216 = vadd.f32 0.0, %v8215
      %v8217 = vpop.f32.mrb[0].mxu0
      %8218 = vmatprep.mubr.bf16.mxu0 0
      %8219 = vmatmul.mubr.bf16.gmra.mrb[0].mxu0 %v7202
      %v8220 = vpop.f32.mrb[0].mxu0
      %v8221 = vadd.f32 0.0, %v8220
      %v8222 = vpop.f32.mrb[0].mxu0
      %v8223 = vpop.f32.mrb[0].mxu0
      %v8224 = vadd.f32 0.0, %v8223
      %v8225 = vpop.f32.mrb[0].mxu0
      %8226 = vmatprep.mubr.bf16.mxu0 0
      %8227 = vmatmul.mubr.bf16.gmra.mrb[0].mxu0 %v7205
      %v8228 = vpop.f32.mrb[0].mxu0
      %v8229 = vadd.f32 0.0, %v8228
      %v8230 = vpop.f32.mrb[0].mxu0
      %v8231 = vpop.f32.mrb[0].mxu0
      %v8232 = vadd.f32 0.0, %v8231
      %v8233 = vpop.f32.mrb[0].mxu0
      %8234 = vmatprep.mubr.bf16.mxu0 0
      %8235 = vmatmul.mubr.bf16.gmra.mrb[0].mxu0 %v7208
      %v8236 = vpop.f32.mrb[0].mxu0
      %v8237 = vadd.f32 0.0, %v8236
      %v8238 = vpop.f32.mrb[0].mxu0
      %v8239 = vpop.f32.mrb[0].mxu0
      %v8240 = vadd.f32 0.0, %v8239
      %v8241 = vpop.f32.mrb[0].mxu0
      %8242 = vmatprep.mubr.bf16.mxu0 0
      %8243 = vmatmul.mubr.bf16.gmra.mrb[0].mxu0 %v7211
      %v8244 = vpop.f32.mrb[0].mxu0
      %v8245 = vadd.f32 0.0, %v8244
      %v8246 = vpop.f32.mrb[0].mxu0
      %v8247 = vpop.f32.mrb[0].mxu0
      %v8248 = vadd.f32 0.0, %v8247
      %v8249 = vpop.f32.mrb[0].mxu0
      %8250 = vmatprep.mubr.bf16.mxu0 0
      %8251 = vmatmul.mubr.bf16.gmra.mrb[0].mxu0 %v7214
      %v8252 = vpop.f32.mrb[0].mxu0
      %v8253 = vadd.f32 0.0, %v8252
      %v8254 = vpop.f32.mrb[0].mxu0
      %v8255 = vpop.f32.mrb[0].mxu0
      %v8256 = vadd.f32 0.0, %v8255
      %v8257 = vpop.f32.mrb[0].mxu0
      %8258 = vmatprep.mubr.bf16.mxu0 0
      %8259 = vmatmul.mubr.bf16.gmra.mrb[0].mxu0 %v7217
      %v8260 = vpop.f32.mrb[0].mxu0
      %v8261 = vadd.f32 0.0, %v8260
      %v8262 = vpop.f32.mrb[0].mxu0
      %v8263 = vpop.f32.mrb[0].mxu0
      %v8264 = vadd.f32 0.0, %v8263
      %v8265 = vpop.f32.mrb[0].mxu0
      %8266 = vmatprep.mubr.bf16.mxu0 0
      %8267 = vmatmul.mubr.bf16.gmra.mrb[0].mxu0 %v7220
      %v8268 = vpop.f32.mrb[0].mxu0
      %v8269 = vadd.f32 0.0, %v8268
      %v8270 = vpop.f32.mrb[0].mxu0
      %v8271 = vpop.f32.mrb[0].mxu0
      %v8272 = vadd.f32 0.0, %v8271
      %v8273 = vpop.f32.mrb[0].mxu0
      %8274 = vmatprep.mubr.bf16.mxu0 0
      %8275 = vmatmul.mubr.bf16.gmra.mrb[0].mxu0 %v7223
      %v8276 = vpop.f32.mrb[0].mxu0
      %v8277 = vadd.f32 0.0, %v8276
      %v8278 = vpop.f32.mrb[0].mxu0
      %v8279 = vpop.f32.mrb[0].mxu0
      %v8280 = vadd.f32 0.0, %v8279
      %v8281 = vpop.f32.mrb[0].mxu0
      %8282 = vmatprep.mubr.bf16.mxu0 0
      %8283 = vmatmul.mubr.bf16.gmra.mrb[0].mxu0 %v7226
      %v8284 = vpop.f32.mrb[0].mxu0
      %v8285 = vadd.f32 0.0, %v8284
      %v8286 = vpop.f32.mrb[0].mxu0
      %v8287 = vpop.f32.mrb[0].mxu0
      %v8288 = vadd.f32 0.0, %v8287
      %v8289 = vpop.f32.mrb[0].mxu0
      %8290 = vdwg.mxu0
      %8291 = vxpose.xlu0.b32.start [1/16] %v7269, 128
      %8292 = vxpose.xlu0.b32.cont [2/16] %v7272, 128
      %8293 = vxpose.xlu0.b32.cont [3/16] %v7277, 128
      %8294 = vxpose.xlu0.b32.cont [4/16] %v7280, 128
      %8295 = vxpose.xlu0.b32.cont [5/16] %v7285, 128
      %8296 = vxpose.xlu0.b32.cont [6/16] %v7288, 128
      %8297 = vxpose.xlu0.b32.cont [7/16] %v7293, 128
      %8298 = vxpose.xlu0.b32.cont [8/16] %v7296, 128
      %8299 = vxpose.xlu0.b32.cont [9/16] %v7301, 128
      %8300 = vxpose.xlu0.b32.cont [10/16] %v7304, 128
      %8301 = vxpose.xlu0.b32.cont [11/16] %v7309, 128
      %8302 = vxpose.xlu0.b32.cont [12/16] %v7312, 128
      %8303 = vxpose.xlu0.b32.cont [13/16] %v7317, 128
      %8304 = vxpose.xlu0.b32.cont [14/16] %v7320, 128
      %8305 = vxpose.xlu0.b32.cont [15/16] %v7325, 128
      %8306 = vxpose.xlu0.b32.end [16/16] %v7328, 128
      %v8307 = vpop.trf.xlu0
      %v8308 = vpop.trf.xlu0
      %v8309 = vpop.trf.xlu0
      %v8310 = vpop.trf.xlu0
      %v8311 = vpop.trf.xlu0
      %v8312 = vpop.trf.xlu0
      %v8313 = vpop.trf.xlu0
      %v8314 = vpop.trf.xlu0
      %v8315 = vpop.trf.xlu0
      %v8316 = vpop.trf.xlu0
      %v8317 = vpop.trf.xlu0
      %v8318 = vpop.trf.xlu0
      %v8319 = vpop.trf.xlu0
      %v8320 = vpop.trf.xlu0
      %v8321 = vpop.trf.xlu0
      %v8322 = vpop.trf.xlu0
      %8323 = vxpose.xlu0.b32.start [1/16] %v7333, 128
      %8324 = vxpose.xlu0.b32.cont [2/16] %v7336, 128
      %8325 = vxpose.xlu0.b32.cont [3/16] %v7341, 128
      %8326 = vxpose.xlu0.b32.cont [4/16] %v7344, 128
      %8327 = vxpose.xlu0.b32.cont [5/16] %v7349, 128
      %8328 = vxpose.xlu0.b32.cont [6/16] %v7352, 128
      %8329 = vxpose.xlu0.b32.cont [7/16] %v7357, 128
      %8330 = vxpose.xlu0.b32.cont [8/16] %v7360, 128
      %8331 = vxpose.xlu0.b32.cont [9/16] %v7365, 128
      %8332 = vxpose.xlu0.b32.cont [10/16] %v7368, 128
      %8333 = vxpose.xlu0.b32.cont [11/16] %v7373, 128
      %8334 = vxpose.xlu0.b32.cont [12/16] %v7376, 128
      %8335 = vxpose.xlu0.b32.cont [13/16] %v7381, 128
      %8336 = vxpose.xlu0.b32.cont [14/16] %v7384, 128
      %8337 = vxpose.xlu0.b32.cont [15/16] %v7389, 128
      %8338 = vxpose.xlu0.b32.end [16/16] %v7392, 128
      %v8339 = vpop.trf.xlu0
      %v8340 = vpop.trf.xlu0
      %v8341 = vpop.trf.xlu0
      %v8342 = vpop.trf.xlu0
      %v8343 = vpop.trf.xlu0
      %v8344 = vpop.trf.xlu0
      %v8345 = vpop.trf.xlu0
      %v8346 = vpop.trf.xlu0
      %v8347 = vpop.trf.xlu0
      %v8348 = vpop.trf.xlu0
      %v8349 = vpop.trf.xlu0
      %v8350 = vpop.trf.xlu0
      %v8351 = vpop.trf.xlu0
      %v8352 = vpop.trf.xlu0
      %v8353 = vpop.trf.xlu0
      %v8354 = vpop.trf.xlu0
      %8355 = vxpose.xlu0.b32.start [1/16] %v7397, 128
      %8356 = vxpose.xlu0.b32.cont [2/16] %v7400, 128
      %8357 = vxpose.xlu0.b32.cont [3/16] %v7405, 128
      %8358 = vxpose.xlu0.b32.cont [4/16] %v7408, 128
      %8359 = vxpose.xlu0.b32.cont [5/16] %v7413, 128
      %8360 = vxpose.xlu0.b32.cont [6/16] %v7416, 128
      %8361 = vxpose.xlu0.b32.cont [7/16] %v7421, 128
      %8362 = vxpose.xlu0.b32.cont [8/16] %v7424, 128
      %8363 = vxpose.xlu0.b32.cont [9/16] %v7429, 128
      %8364 = vxpose.xlu0.b32.cont [10/16] %v7432, 128
      %8365 = vxpose.xlu0.b32.cont [11/16] %v7437, 128
      %8366 = vxpose.xlu0.b32.cont [12/16] %v7440, 128
      %8367 = vxpose.xlu0.b32.cont [13/16] %v7445, 128
      %8368 = vxpose.xlu0.b32.cont [14/16] %v7448, 128
      %8369 = vxpose.xlu0.b32.cont [15/16] %v7453, 128
      %8370 = vxpose.xlu0.b32.end [16/16] %v7456, 128
      %v8371 = vpop.trf.xlu0
      %v8372 = vpop.trf.xlu0
      %v8373 = vpop.trf.xlu0
      %v8374 = vpop.trf.xlu0
      %v8375 = vpop.trf.xlu0
      %v8376 = vpop.trf.xlu0
      %v8377 = vpop.trf.xlu0
      %v8378 = vpop.trf.xlu0
      %v8379 = vpop.trf.xlu0
      %v8380 = vpop.trf.xlu0
      %v8381 = vpop.trf.xlu0
      %v8382 = vpop.trf.xlu0
      %v8383 = vpop.trf.xlu0
      %v8384 = vpop.trf.xlu0
      %v8385 = vpop.trf.xlu0
      %v8386 = vpop.trf.xlu0
      %8387 = vxpose.xlu0.b32.start [1/16] %v7461, 128
      %8388 = vxpose.xlu0.b32.cont [2/16] %v7464, 128
      %8389 = vxpose.xlu0.b32.cont [3/16] %v7469, 128
      %8390 = vxpose.xlu0.b32.cont [4/16] %v7472, 128
      %8391 = vxpose.xlu0.b32.cont [5/16] %v7477, 128
      %8392 = vxpose.xlu0.b32.cont [6/16] %v7480, 128
      %8393 = vxpose.xlu0.b32.cont [7/16] %v7485, 128
      %8394 = vxpose.xlu0.b32.cont [8/16] %v7488, 128
      %8395 = vxpose.xlu0.b32.cont [9/16] %v7493, 128
      %8396 = vxpose.xlu0.b32.cont [10/16] %v7496, 128
      %8397 = vxpose.xlu0.b32.cont [11/16] %v7501, 128
      %8398 = vxpose.xlu0.b32.cont [12/16] %v7504, 128
      %8399 = vxpose.xlu0.b32.cont [13/16] %v7509, 128
      %8400 = vxpose.xlu0.b32.cont [14/16] %v7512, 128
      %8401 = vxpose.xlu0.b32.cont [15/16] %v7517, 128
      %8402 = vxpose.xlu0.b32.end [16/16] %v7520, 128
      %v8403 = vpop.trf.xlu0
      %v8404 = vpop.trf.xlu0
      %v8405 = vpop.trf.xlu0
      %v8406 = vpop.trf.xlu0
      %v8407 = vpop.trf.xlu0
      %v8408 = vpop.trf.xlu0
      %v8409 = vpop.trf.xlu0
      %v8410 = vpop.trf.xlu0
      %v8411 = vpop.trf.xlu0
      %v8412 = vpop.trf.xlu0
      %v8413 = vpop.trf.xlu0
      %v8414 = vpop.trf.xlu0
      %v8415 = vpop.trf.xlu0
      %v8416 = vpop.trf.xlu0
      %v8417 = vpop.trf.xlu0
      %v8418 = vpop.trf.xlu0
      %8419 = vxpose.xlu0.b32.start [1/16] %v7525, 128
      %8420 = vxpose.xlu0.b32.cont [2/16] %v7528, 128
      %8421 = vxpose.xlu0.b32.cont [3/16] %v7533, 128
      %8422 = vxpose.xlu0.b32.cont [4/16] %v7536, 128
      %8423 = vxpose.xlu0.b32.cont [5/16] %v7541, 128
      %8424 = vxpose.xlu0.b32.cont [6/16] %v7544, 128
      %8425 = vxpose.xlu0.b32.cont [7/16] %v7549, 128
      %8426 = vxpose.xlu0.b32.cont [8/16] %v7552, 128
      %8427 = vxpose.xlu0.b32.cont [9/16] %v7557, 128
      %8428 = vxpose.xlu0.b32.cont [10/16] %v7560, 128
      %8429 = vxpose.xlu0.b32.cont [11/16] %v7565, 128
      %8430 = vxpose.xlu0.b32.cont [12/16] %v7568, 128
      %8431 = vxpose.xlu0.b32.cont [13/16] %v7573, 128
      %8432 = vxpose.xlu0.b32.cont [14/16] %v7576, 128
      %8433 = vxpose.xlu0.b32.cont [15/16] %v7581, 128
      %8434 = vxpose.xlu0.b32.end [16/16] %v7584, 128
      %v8435 = vpop.trf.xlu0
      %v8436 = vpop.trf.xlu0
      %v8437 = vpop.trf.xlu0
      %v8438 = vpop.trf.xlu0
      %v8439 = vpop.trf.xlu0
      %v8440 = vpop.trf.xlu0
      %v8441 = vpop.trf.xlu0
      %v8442 = vpop.trf.xlu0
      %v8443 = vpop.trf.xlu0
      %v8444 = vpop.trf.xlu0
      %v8445 = vpop.trf.xlu0
      %v8446 = vpop.trf.xlu0
      %v8447 = vpop.trf.xlu0
      %v8448 = vpop.trf.xlu0
      %v8449 = vpop.trf.xlu0
      %v8450 = vpop.trf.xlu0
      %8451 = vxpose.xlu0.b32.start [1/16] %v7589, 128
      %8452 = vxpose.xlu0.b32.cont [2/16] %v7592, 128
      %8453 = vxpose.xlu0.b32.cont [3/16] %v7597, 128
      %8454 = vxpose.xlu0.b32.cont [4/16] %v7600, 128
      %8455 = vxpose.xlu0.b32.cont [5/16] %v7605, 128
      %8456 = vxpose.xlu0.b32.cont [6/16] %v7608, 128
      %8457 = vxpose.xlu0.b32.cont [7/16] %v7613, 128
      %8458 = vxpose.xlu0.b32.cont [8/16] %v7616, 128
      %8459 = vxpose.xlu0.b32.cont [9/16] %v7621, 128
      %8460 = vxpose.xlu0.b32.cont [10/16] %v7624, 128
      %8461 = vxpose.xlu0.b32.cont [11/16] %v7629, 128
      %8462 = vxpose.xlu0.b32.cont [12/16] %v7632, 128
      %8463 = vxpose.xlu0.b32.cont [13/16] %v7637, 128
      %8464 = vxpose.xlu0.b32.cont [14/16] %v7640, 128
      %8465 = vxpose.xlu0.b32.cont [15/16] %v7645, 128
      %8466 = vxpose.xlu0.b32.end [16/16] %v7648, 128
      %v8467 = vpop.trf.xlu0
      %v8468 = vpop.trf.xlu0
      %v8469 = vpop.trf.xlu0
      %v8470 = vpop.trf.xlu0
      %v8471 = vpop.trf.xlu0
      %v8472 = vpop.trf.xlu0
      %v8473 = vpop.trf.xlu0
      %v8474 = vpop.trf.xlu0
      %v8475 = vpop.trf.xlu0
      %v8476 = vpop.trf.xlu0
      %v8477 = vpop.trf.xlu0
      %v8478 = vpop.trf.xlu0
      %v8479 = vpop.trf.xlu0
      %v8480 = vpop.trf.xlu0
      %v8481 = vpop.trf.xlu0
      %v8482 = vpop.trf.xlu0
      %8483 = vxpose.xlu0.b32.start [1/16] %v7653, 128
      %8484 = vxpose.xlu0.b32.cont [2/16] %v7656, 128
      %8485 = vxpose.xlu0.b32.cont [3/16] %v7661, 128
      %8486 = vxpose.xlu0.b32.cont [4/16] %v7664, 128
      %8487 = vxpose.xlu0.b32.cont [5/16] %v7669, 128
      %8488 = vxpose.xlu0.b32.cont [6/16] %v7672, 128
      %8489 = vxpose.xlu0.b32.cont [7/16] %v7677, 128
      %8490 = vxpose.xlu0.b32.cont [8/16] %v7680, 128
      %8491 = vxpose.xlu0.b32.cont [9/16] %v7685, 128
      %8492 = vxpose.xlu0.b32.cont [10/16] %v7688, 128
      %8493 = vxpose.xlu0.b32.cont [11/16] %v7693, 128
      %8494 = vxpose.xlu0.b32.cont [12/16] %v7696, 128
      %8495 = vxpose.xlu0.b32.cont [13/16] %v7701, 128
      %8496 = vxpose.xlu0.b32.cont [14/16] %v7704, 128
      %8497 = vxpose.xlu0.b32.cont [15/16] %v7709, 128
      %8498 = vxpose.xlu0.b32.end [16/16] %v7712, 128
      %v8499 = vpop.trf.xlu0
      %v8500 = vpop.trf.xlu0
      %v8501 = vpop.trf.xlu0
      %v8502 = vpop.trf.xlu0
      %v8503 = vpop.trf.xlu0
      %v8504 = vpop.trf.xlu0
      %v8505 = vpop.trf.xlu0
      %v8506 = vpop.trf.xlu0
      %v8507 = vpop.trf.xlu0
      %v8508 = vpop.trf.xlu0
      %v8509 = vpop.trf.xlu0
      %v8510 = vpop.trf.xlu0
      %v8511 = vpop.trf.xlu0
      %v8512 = vpop.trf.xlu0
      %v8513 = vpop.trf.xlu0
      %v8514 = vpop.trf.xlu0
      %8515 = vxpose.xlu0.b32.start [1/16] %v7717, 128
      %8516 = vxpose.xlu0.b32.cont [2/16] %v7720, 128
      %8517 = vxpose.xlu0.b32.cont [3/16] %v7725, 128
      %8518 = vxpose.xlu0.b32.cont [4/16] %v7728, 128
      %8519 = vxpose.xlu0.b32.cont [5/16] %v7733, 128
      %8520 = vxpose.xlu0.b32.cont [6/16] %v7736, 128
      %8521 = vxpose.xlu0.b32.cont [7/16] %v7741, 128
      %8522 = vxpose.xlu0.b32.cont [8/16] %v7744, 128
      %8523 = vxpose.xlu0.b32.cont [9/16] %v7749, 128
      %8524 = vxpose.xlu0.b32.cont [10/16] %v7752, 128
      %8525 = vxpose.xlu0.b32.cont [11/16] %v7757, 128
      %8526 = vxpose.xlu0.b32.cont [12/16] %v7760, 128
      %8527 = vxpose.xlu0.b32.cont [13/16] %v7765, 128
      %8528 = vxpose.xlu0.b32.cont [14/16] %v7768, 128
      %8529 = vxpose.xlu0.b32.cont [15/16] %v7773, 128
      %8530 = vxpose.xlu0.b32.end [16/16] %v7776, 128
      %v8531 = vpop.trf.xlu0
      %v8532 = vpop.trf.xlu0
      %v8533 = vpop.trf.xlu0
      %v8534 = vpop.trf.xlu0
      %v8535 = vpop.trf.xlu0
      %v8536 = vpop.trf.xlu0
      %v8537 = vpop.trf.xlu0
      %v8538 = vpop.trf.xlu0
      %v8539 = vpop.trf.xlu0
      %v8540 = vpop.trf.xlu0
      %v8541 = vpop.trf.xlu0
      %v8542 = vpop.trf.xlu0
      %v8543 = vpop.trf.xlu0
      %v8544 = vpop.trf.xlu0
      %v8545 = vpop.trf.xlu0
      %v8546 = vpop.trf.xlu0
      %8547 = vxpose.xlu0.b32.start [1/16] %v7781, 128
      %8548 = vxpose.xlu0.b32.cont [2/16] %v7784, 128
      %8549 = vxpose.xlu0.b32.cont [3/16] %v7789, 128
      %8550 = vxpose.xlu0.b32.cont [4/16] %v7792, 128
      %8551 = vxpose.xlu0.b32.cont [5/16] %v7797, 128
      %8552 = vxpose.xlu0.b32.cont [6/16] %v7800, 128
      %8553 = vxpose.xlu0.b32.cont [7/16] %v7805, 128
      %8554 = vxpose.xlu0.b32.cont [8/16] %v7808, 128
      %8555 = vxpose.xlu0.b32.cont [9/16] %v7813, 128
      %8556 = vxpose.xlu0.b32.cont [10/16] %v7816, 128
      %8557 = vxpose.xlu0.b32.cont [11/16] %v7821, 128
      %8558 = vxpose.xlu0.b32.cont [12/16] %v7824, 128
      %8559 = vxpose.xlu0.b32.cont [13/16] %v7829, 128
      %8560 = vxpose.xlu0.b32.cont [14/16] %v7832, 128
      %8561 = vxpose.xlu0.b32.cont [15/16] %v7837, 128
      %8562 = vxpose.xlu0.b32.end [16/16] %v7840, 128
      %v8563 = vpop.trf.xlu0
      %v8564 = vpop.trf.xlu0
      %v8565 = vpop.trf.xlu0
      %v8566 = vpop.trf.xlu0
      %v8567 = vpop.trf.xlu0
      %v8568 = vpop.trf.xlu0
      %v8569 = vpop.trf.xlu0
      %v8570 = vpop.trf.xlu0
      %v8571 = vpop.trf.xlu0
      %v8572 = vpop.trf.xlu0
      %v8573 = vpop.trf.xlu0
      %v8574 = vpop.trf.xlu0
      %v8575 = vpop.trf.xlu0
      %v8576 = vpop.trf.xlu0
      %v8577 = vpop.trf.xlu0
      %v8578 = vpop.trf.xlu0
      %8579 = vxpose.xlu0.b32.start [1/16] %v7845, 128
      %8580 = vxpose.xlu0.b32.cont [2/16] %v7848, 128
      %8581 = vxpose.xlu0.b32.cont [3/16] %v7853, 128
      %8582 = vxpose.xlu0.b32.cont [4/16] %v7856, 128
      %8583 = vxpose.xlu0.b32.cont [5/16] %v7861, 128
      %8584 = vxpose.xlu0.b32.cont [6/16] %v7864, 128
      %8585 = vxpose.xlu0.b32.cont [7/16] %v7869, 128
      %8586 = vxpose.xlu0.b32.cont [8/16] %v7872, 128
      %8587 = vxpose.xlu0.b32.cont [9/16] %v7877, 128
      %8588 = vxpose.xlu0.b32.cont [10/16] %v7880, 128
      %8589 = vxpose.xlu0.b32.cont [11/16] %v7885, 128
      %8590 = vxpose.xlu0.b32.cont [12/16] %v7888, 128
      %8591 = vxpose.xlu0.b32.cont [13/16] %v7893, 128
      %8592 = vxpose.xlu0.b32.cont [14/16] %v7896, 128
      %8593 = vxpose.xlu0.b32.cont [15/16] %v7901, 128
      %8594 = vxpose.xlu0.b32.end [16/16] %v7904, 128
      %v8595 = vpop.trf.xlu0
      %v8596 = vpop.trf.xlu0
      %v8597 = vpop.trf.xlu0
      %v8598 = vpop.trf.xlu0
      %v8599 = vpop.trf.xlu0
      %v8600 = vpop.trf.xlu0
      %v8601 = vpop.trf.xlu0
      %v8602 = vpop.trf.xlu0
      %v8603 = vpop.trf.xlu0
      %v8604 = vpop.trf.xlu0
      %v8605 = vpop.trf.xlu0
      %v8606 = vpop.trf.xlu0
      %v8607 = vpop.trf.xlu0
      %v8608 = vpop.trf.xlu0
      %v8609 = vpop.trf.xlu0
      %v8610 = vpop.trf.xlu0
      %8611 = vxpose.xlu0.b32.start [1/16] %v7909, 128
      %8612 = vxpose.xlu0.b32.cont [2/16] %v7912, 128
      %8613 = vxpose.xlu0.b32.cont [3/16] %v7917, 128
      %8614 = vxpose.xlu0.b32.cont [4/16] %v7920, 128
      %8615 = vxpose.xlu0.b32.cont [5/16] %v7925, 128
      %8616 = vxpose.xlu0.b32.cont [6/16] %v7928, 128
      %8617 = vxpose.xlu0.b32.cont [7/16] %v7933, 128
      %8618 = vxpose.xlu0.b32.cont [8/16] %v7936, 128
      %8619 = vxpose.xlu0.b32.cont [9/16] %v7941, 128
      %8620 = vxpose.xlu0.b32.cont [10/16] %v7944, 128
      %8621 = vxpose.xlu0.b32.cont [11/16] %v7949, 128
      %8622 = vxpose.xlu0.b32.cont [12/16] %v7952, 128
      %8623 = vxpose.xlu0.b32.cont [13/16] %v7957, 128
      %8624 = vxpose.xlu0.b32.cont [14/16] %v7960, 128
      %8625 = vxpose.xlu0.b32.cont [15/16] %v7965, 128
      %8626 = vxpose.xlu0.b32.end [16/16] %v7968, 128
      %v8627 = vpop.trf.xlu0
      %v8628 = vpop.trf.xlu0
      %v8629 = vpop.trf.xlu0
      %v8630 = vpop.trf.xlu0
      %v8631 = vpop.trf.xlu0
      %v8632 = vpop.trf.xlu0
      %v8633 = vpop.trf.xlu0
      %v8634 = vpop.trf.xlu0
      %v8635 = vpop.trf.xlu0
      %v8636 = vpop.trf.xlu0
      %v8637 = vpop.trf.xlu0
      %v8638 = vpop.trf.xlu0
      %v8639 = vpop.trf.xlu0
      %v8640 = vpop.trf.xlu0
      %v8641 = vpop.trf.xlu0
      %v8642 = vpop.trf.xlu0
      %8643 = vxpose.xlu0.b32.start [1/16] %v7973, 128
      %8644 = vxpose.xlu0.b32.cont [2/16] %v7976, 128
      %8645 = vxpose.xlu0.b32.cont [3/16] %v7981, 128
      %8646 = vxpose.xlu0.b32.cont [4/16] %v7984, 128
      %8647 = vxpose.xlu0.b32.cont [5/16] %v7989, 128
      %8648 = vxpose.xlu0.b32.cont [6/16] %v7992, 128
      %8649 = vxpose.xlu0.b32.cont [7/16] %v7997, 128
      %8650 = vxpose.xlu0.b32.cont [8/16] %v8000, 128
      %8651 = vxpose.xlu0.b32.cont [9/16] %v8005, 128
      %8652 = vxpose.xlu0.b32.cont [10/16] %v8008, 128
      %8653 = vxpose.xlu0.b32.cont [11/16] %v8013, 128
      %8654 = vxpose.xlu0.b32.cont [12/16] %v8016, 128
      %8655 = vxpose.xlu0.b32.cont [13/16] %v8021, 128
      %8656 = vxpose.xlu0.b32.cont [14/16] %v8024, 128
      %8657 = vxpose.xlu0.b32.cont [15/16] %v8029, 128
      %8658 = vxpose.xlu0.b32.end [16/16] %v8032, 128
      %v8659 = vpop.trf.xlu0
      %v8660 = vpop.trf.xlu0
      %v8661 = vpop.trf.xlu0
      %v8662 = vpop.trf.xlu0
      %v8663 = vpop.trf.xlu0
      %v8664 = vpop.trf.xlu0
      %v8665 = vpop.trf.xlu0
      %v8666 = vpop.trf.xlu0
      %v8667 = vpop.trf.xlu0
      %v8668 = vpop.trf.xlu0
      %v8669 = vpop.trf.xlu0
      %v8670 = vpop.trf.xlu0
      %v8671 = vpop.trf.xlu0
      %v8672 = vpop.trf.xlu0
      %v8673 = vpop.trf.xlu0
      %v8674 = vpop.trf.xlu0
      %8675 = vxpose.xlu0.b32.start [1/16] %v8037, 128
      %8676 = vxpose.xlu0.b32.cont [2/16] %v8040, 128
      %8677 = vxpose.xlu0.b32.cont [3/16] %v8045, 128
      %8678 = vxpose.xlu0.b32.cont [4/16] %v8048, 128
      %8679 = vxpose.xlu0.b32.cont [5/16] %v8053, 128
      %8680 = vxpose.xlu0.b32.cont [6/16] %v8056, 128
      %8681 = vxpose.xlu0.b32.cont [7/16] %v8061, 128
      %8682 = vxpose.xlu0.b32.cont [8/16] %v8064, 128
      %8683 = vxpose.xlu0.b32.cont [9/16] %v8069, 128
      %8684 = vxpose.xlu0.b32.cont [10/16] %v8072, 128
      %8685 = vxpose.xlu0.b32.cont [11/16] %v8077, 128
      %8686 = vxpose.xlu0.b32.cont [12/16] %v8080, 128
      %8687 = vxpose.xlu0.b32.cont [13/16] %v8085, 128
      %8688 = vxpose.xlu0.b32.cont [14/16] %v8088, 128
      %8689 = vxpose.xlu0.b32.cont [15/16] %v8093, 128
      %8690 = vxpose.xlu0.b32.end [16/16] %v8096, 128
      %v8691 = vpop.trf.xlu0
      %v8692 = vpop.trf.xlu0
      %v8693 = vpop.trf.xlu0
      %v8694 = vpop.trf.xlu0
      %v8695 = vpop.trf.xlu0
      %v8696 = vpop.trf.xlu0
      %v8697 = vpop.trf.xlu0
      %v8698 = vpop.trf.xlu0
      %v8699 = vpop.trf.xlu0
      %v8700 = vpop.trf.xlu0
      %v8701 = vpop.trf.xlu0
      %v8702 = vpop.trf.xlu0
      %v8703 = vpop.trf.xlu0
      %v8704 = vpop.trf.xlu0
      %v8705 = vpop.trf.xlu0
      %v8706 = vpop.trf.xlu0
      %8707 = vxpose.xlu0.b32.start [1/16] %v8101, 128
      %8708 = vxpose.xlu0.b32.cont [2/16] %v8104, 128
      %8709 = vxpose.xlu0.b32.cont [3/16] %v8109, 128
      %8710 = vxpose.xlu0.b32.cont [4/16] %v8112, 128
      %8711 = vxpose.xlu0.b32.cont [5/16] %v8117, 128
      %8712 = vxpose.xlu0.b32.cont [6/16] %v8120, 128
      %8713 = vxpose.xlu0.b32.cont [7/16] %v8125, 128
      %8714 = vxpose.xlu0.b32.cont [8/16] %v8128, 128
      %8715 = vxpose.xlu0.b32.cont [9/16] %v8133, 128
      %8716 = vxpose.xlu0.b32.cont [10/16] %v8136, 128
      %8717 = vxpose.xlu0.b32.cont [11/16] %v8141, 128
      %8718 = vxpose.xlu0.b32.cont [12/16] %v8144, 128
      %8719 = vxpose.xlu0.b32.cont [13/16] %v8149, 128
      %8720 = vxpose.xlu0.b32.cont [14/16] %v8152, 128
      %8721 = vxpose.xlu0.b32.cont [15/16] %v8157, 128
      %8722 = vxpose.xlu0.b32.end [16/16] %v8160, 128
      %v8723 = vpop.trf.xlu0
      %v8724 = vpop.trf.xlu0
      %v8725 = vpop.trf.xlu0
      %v8726 = vpop.trf.xlu0
      %v8727 = vpop.trf.xlu0
      %v8728 = vpop.trf.xlu0
      %v8729 = vpop.trf.xlu0
      %v8730 = vpop.trf.xlu0
      %v8731 = vpop.trf.xlu0
      %v8732 = vpop.trf.xlu0
      %v8733 = vpop.trf.xlu0
      %v8734 = vpop.trf.xlu0
      %v8735 = vpop.trf.xlu0
      %v8736 = vpop.trf.xlu0
      %v8737 = vpop.trf.xlu0
      %v8738 = vpop.trf.xlu0
      %8739 = vxpose.xlu0.b32.start [1/16] %v8165, 128
      %8740 = vxpose.xlu0.b32.cont [2/16] %v8168, 128
      %8741 = vxpose.xlu0.b32.cont [3/16] %v8173, 128
      %8742 = vxpose.xlu0.b32.cont [4/16] %v8176, 128
      %8743 = vxpose.xlu0.b32.cont [5/16] %v8181, 128
      %8744 = vxpose.xlu0.b32.cont [6/16] %v8184, 128
      %8745 = vxpose.xlu0.b32.cont [7/16] %v8189, 128
      %8746 = vxpose.xlu0.b32.cont [8/16] %v8192, 128
      %8747 = vxpose.xlu0.b32.cont [9/16] %v8197, 128
      %8748 = vxpose.xlu0.b32.cont [10/16] %v8200, 128
      %8749 = vxpose.xlu0.b32.cont [11/16] %v8205, 128
      %8750 = vxpose.xlu0.b32.cont [12/16] %v8208, 128
      %8751 = vxpose.xlu0.b32.cont [13/16] %v8213, 128
      %8752 = vxpose.xlu0.b32.cont [14/16] %v8216, 128
      %8753 = vxpose.xlu0.b32.cont [15/16] %v8221, 128
      %8754 = vxpose.xlu0.b32.end [16/16] %v8224, 128
      %v8755 = vpop.trf.xlu0
      %v8756 = vpop.trf.xlu0
      %v8757 = vpop.trf.xlu0
      %v8758 = vpop.trf.xlu0
      %v8759 = vpop.trf.xlu0
      %v8760 = vpop.trf.xlu0
      %v8761 = vpop.trf.xlu0
      %v8762 = vpop.trf.xlu0
      %v8763 = vpop.trf.xlu0
      %v8764 = vpop.trf.xlu0
      %v8765 = vpop.trf.xlu0
      %v8766 = vpop.trf.xlu0
      %v8767 = vpop.trf.xlu0
      %v8768 = vpop.trf.xlu0
      %v8769 = vpop.trf.xlu0
      %v8770 = vpop.trf.xlu0
      %8771 = vxpose.xlu0.b32.start [1/16] %v8229, 128
      %8772 = vxpose.xlu0.b32.cont [2/16] %v8232, 128
      %8773 = vxpose.xlu0.b32.cont [3/16] %v8237, 128
      %8774 = vxpose.xlu0.b32.cont [4/16] %v8240, 128
      %8775 = vxpose.xlu0.b32.cont [5/16] %v8245, 128
      %8776 = vxpose.xlu0.b32.cont [6/16] %v8248, 128
      %8777 = vxpose.xlu0.b32.cont [7/16] %v8253, 128
      %8778 = vxpose.xlu0.b32.cont [8/16] %v8256, 128
      %8779 = vxpose.xlu0.b32.cont [9/16] %v8261, 128
      %8780 = vxpose.xlu0.b32.cont [10/16] %v8264, 128
      %8781 = vxpose.xlu0.b32.cont [11/16] %v8269, 128
      %8782 = vxpose.xlu0.b32.cont [12/16] %v8272, 128
      %8783 = vxpose.xlu0.b32.cont [13/16] %v8277, 128
      %8784 = vxpose.xlu0.b32.cont [14/16] %v8280, 128
      %8785 = vxpose.xlu0.b32.cont [15/16] %v8285, 128
      %8786 = vxpose.xlu0.b32.end [16/16] %v8288, 128
      %v8787 = vpop.trf.xlu0
      %v8788 = vpop.trf.xlu0
      %v8789 = vpop.trf.xlu0
      %v8790 = vpop.trf.xlu0
      %v8791 = vpop.trf.xlu0
      %v8792 = vpop.trf.xlu0
      %v8793 = vpop.trf.xlu0
      %v8794 = vpop.trf.xlu0
      %v8795 = vpop.trf.xlu0
      %v8796 = vpop.trf.xlu0
      %v8797 = vpop.trf.xlu0
      %v8798 = vpop.trf.xlu0
      %v8799 = vpop.trf.xlu0
      %v8800 = vpop.trf.xlu0
      %v8801 = vpop.trf.xlu0
      %v8802 = vpop.trf.xlu0
      %v8803 = vld [vmem:[%s8] sm:$0xff]
      %v8804 = vld [vmem:[%s8 + $0x8] sm:$0xff]
      %v8807 = vcombine.high %v8803, %v8803
      %v8809 = vunpack.c.l.s4 1966171168
      %v8810 = vunpack.c.0.s8 %v8809
      %v8811 = vlaneseq
      %v8812 = vshrl.u32 %v8811, 7
      %v8813 = vsub.s32 %v8810, %v8812
      %v8814 = vrot.slane %v8803, %v8813
      %v8816 = vunpack.c.l.s4 1966171168
      %v8817 = vunpack.c.0.s8 %v8816
      %v8818 = vlaneseq
      %v8819 = vshrl.u32 %v8818, 7
      %v8820 = vsub.s32 %v8817, %v8819
      %v8821 = vrot.slane %v8807, %v8820
      %v8822 = vcombine.high %v8814, %v8814
      %v8823 = vcombine.high %v8821, %v8821
      %v8825 = vunpack.c.l.s4 1966171168
      %v8826 = vunpack.c.0.s8 %v8825
      %v8827 = vlaneseq
      %v8828 = vshrl.u32 %v8827, 7
      %v8829 = vsub.s32 %v8826, %v8828
      %v8830 = vrot.slane %v8814, %v8829
      %v8832 = vunpack.c.l.s4 1966171168
      %v8833 = vunpack.c.0.s8 %v8832
      %v8834 = vlaneseq
      %v8835 = vshrl.u32 %v8834, 7
      %v8836 = vsub.s32 %v8833, %v8835
      %v8837 = vrot.slane %v8821, %v8836
      %v8839 = vunpack.c.l.s4 1966171168
      %v8840 = vunpack.c.0.s8 %v8839
      %v8841 = vlaneseq
      %v8842 = vshrl.u32 %v8841, 7
      %v8843 = vsub.s32 %v8840, %v8842
      %v8844 = vrot.slane %v8822, %v8843
      %v8846 = vunpack.c.l.s4 1966171168
      %v8847 = vunpack.c.0.s8 %v8846
      %v8848 = vlaneseq
      %v8849 = vshrl.u32 %v8848, 7
      %v8850 = vsub.s32 %v8847, %v8849
      %v8851 = vrot.slane %v8823, %v8850
      %v8852 = vcombine.high %v8830, %v8830
      %v8853 = vcombine.high %v8837, %v8837
      %v8854 = vcombine.high %v8844, %v8844
      %v8855 = vcombine.high %v8851, %v8851
      %v8856 = vcombine.high %v8804, %v8804
      %v8858 = vunpack.c.l.s4 1966171168
      %v8859 = vunpack.c.0.s8 %v8858
      %v8860 = vlaneseq
      %v8861 = vshrl.u32 %v8860, 7
      %v8862 = vsub.s32 %v8859, %v8861
      %v8863 = vrot.slane %v8804, %v8862
      %v8865 = vunpack.c.l.s4 1966171168
      %v8866 = vunpack.c.0.s8 %v8865
      %v8867 = vlaneseq
      %v8868 = vshrl.u32 %v8867, 7
      %v8869 = vsub.s32 %v8866, %v8868
      %v8870 = vrot.slane %v8856, %v8869
      %v8871 = vcombine.high %v8863, %v8863
      %v8872 = vcombine.high %v8870, %v8870
      %v8874 = vunpack.c.l.s4 1966171168
      %v8875 = vunpack.c.0.s8 %v8874
      %v8876 = vlaneseq
      %v8877 = vshrl.u32 %v8876, 7
      %v8878 = vsub.s32 %v8875, %v8877
      %v8879 = vrot.slane %v8863, %v8878
      %v8881 = vunpack.c.l.s4 1966171168
      %v8882 = vunpack.c.0.s8 %v8881
      %v8883 = vlaneseq
      %v8884 = vshrl.u32 %v8883, 7
      %v8885 = vsub.s32 %v8882, %v8884
      %v8886 = vrot.slane %v8870, %v8885
      %v8888 = vunpack.c.l.s4 1966171168
      %v8889 = vunpack.c.0.s8 %v8888
      %v8890 = vlaneseq
      %v8891 = vshrl.u32 %v8890, 7
      %v8892 = vsub.s32 %v8889, %v8891
      %v8893 = vrot.slane %v8871, %v8892
      %v8895 = vunpack.c.l.s4 1966171168
      %v8896 = vunpack.c.0.s8 %v8895
      %v8897 = vlaneseq
      %v8898 = vshrl.u32 %v8897, 7
      %v8899 = vsub.s32 %v8896, %v8898
      %v8900 = vrot.slane %v8872, %v8899
      %v8901 = vcombine.high %v8879, %v8879
      %v8902 = vcombine.high %v8886, %v8886
      %v8903 = vcombine.high %v8893, %v8893
      %v8904 = vcombine.high %v8900, %v8900
      %v8905 = vlaneseq
      %v8906 = vshrl.u32 %v8905, 7
      %v8907 = vsub.s32 0, %v8906
      %v8908 = vrot.slane %v8830, %v8907
      %v8909 = vlaneseq
      %v8910 = vshrl.u32 %v8909, 7
      %v8911 = vsub.s32 0, %v8910
      %v8912 = vrot.slane %v8844, %v8911
      %v8913 = vlaneseq
      %v8914 = vshrl.u32 %v8913, 7
      %v8915 = vsub.s32 0, %v8914
      %v8916 = vrot.slane %v8852, %v8915
      %v8917 = vlaneseq
      %v8918 = vshrl.u32 %v8917, 7
      %v8919 = vsub.s32 0, %v8918
      %v8920 = vrot.slane %v8854, %v8919
      %v8921 = vlaneseq
      %v8922 = vshrl.u32 %v8921, 7
      %v8923 = vsub.s32 0, %v8922
      %v8924 = vrot.slane %v8837, %v8923
      %v8925 = vlaneseq
      %v8926 = vshrl.u32 %v8925, 7
      %v8927 = vsub.s32 0, %v8926
      %v8928 = vrot.slane %v8851, %v8927
      %v8929 = vlaneseq
      %v8930 = vshrl.u32 %v8929, 7
      %v8931 = vsub.s32 0, %v8930
      %v8932 = vrot.slane %v8853, %v8931
      %v8933 = vlaneseq
      %v8934 = vshrl.u32 %v8933, 7
      %v8935 = vsub.s32 0, %v8934
      %v8936 = vrot.slane %v8855, %v8935
      %v8937 = vlaneseq
      %v8938 = vshrl.u32 %v8937, 7
      %v8939 = vsub.s32 0, %v8938
      %v8940 = vrot.slane %v8879, %v8939
      %v8941 = vlaneseq
      %v8942 = vshrl.u32 %v8941, 7
      %v8943 = vsub.s32 0, %v8942
      %v8944 = vrot.slane %v8893, %v8943
      %v8945 = vlaneseq
      %v8946 = vshrl.u32 %v8945, 7
      %v8947 = vsub.s32 0, %v8946
      %v8948 = vrot.slane %v8901, %v8947
      %v8949 = vlaneseq
      %v8950 = vshrl.u32 %v8949, 7
      %v8951 = vsub.s32 0, %v8950
      %v8952 = vrot.slane %v8903, %v8951
      %v8953 = vlaneseq
      %v8954 = vshrl.u32 %v8953, 7
      %v8955 = vsub.s32 0, %v8954
      %v8956 = vrot.slane %v8886, %v8955
      %v8957 = vlaneseq
      %v8958 = vshrl.u32 %v8957, 7
      %v8959 = vsub.s32 0, %v8958
      %v8960 = vrot.slane %v8900, %v8959
      %v8961 = vlaneseq
      %v8962 = vshrl.u32 %v8961, 7
      %v8963 = vsub.s32 0, %v8962
      %v8964 = vrot.slane %v8902, %v8963
      %v8965 = vlaneseq
      %v8966 = vshrl.u32 %v8965, 7
      %v8967 = vsub.s32 0, %v8966
      %v8968 = vrot.slane %v8904, %v8967
      %v8985 = vmul.f32 %v8908, %v8307
      %v8986 = vmul.f32 %v8908, %v8308
      %v8987 = vmul.f32 %v8908, %v8309
      %v8988 = vmul.f32 %v8908, %v8310
      %v8989 = vmul.f32 %v8912, %v8307
      %v8990 = vmul.f32 %v8912, %v8308
      %v8991 = vmul.f32 %v8912, %v8309
      %v8992 = vmul.f32 %v8912, %v8310
      %v8993 = vmul.f32 %v8916, %v8339
      %v8994 = vmul.f32 %v8916, %v8340
      %v8995 = vmul.f32 %v8916, %v8341
      %v8996 = vmul.f32 %v8916, %v8342
      %v8997 = vmul.f32 %v8920, %v8371
      %v8998 = vmul.f32 %v8920, %v8372
      %v8999 = vmul.f32 %v8920, %v8373
      %v9000 = vmul.f32 %v8920, %v8374
      %v9001 = vmul.f32 %v8924, %v8403
      %v9002 = vmul.f32 %v8924, %v8404
      %v9003 = vmul.f32 %v8924, %v8405
      %v9004 = vmul.f32 %v8924, %v8406
      %v9005 = vmul.f32 %v8928, %v8435
      %v9006 = vmul.f32 %v8928, %v8436
      %v9007 = vmul.f32 %v8928, %v8437
      %v9008 = vmul.f32 %v8928, %v8438
      %v9009 = vmul.f32 %v8932, %v8467
      %v9010 = vmul.f32 %v8932, %v8468
      %v9011 = vmul.f32 %v8932, %v8469
      %v9012 = vmul.f32 %v8932, %v8470
      %v9013 = vmul.f32 %v8936, %v8499
      %v9014 = vmul.f32 %v8936, %v8500
      %v9015 = vmul.f32 %v8936, %v8501
      %v9016 = vmul.f32 %v8936, %v8502
      %v9017 = vmul.f32 %v8940, %v8531
      %v9018 = vmul.f32 %v8940, %v8532
      %v9019 = vmul.f32 %v8940, %v8533
      %v9020 = vmul.f32 %v8940, %v8534
      %v9021 = vmul.f32 %v8944, %v8563
      %v9022 = vmul.f32 %v8944, %v8564
      %v9023 = vmul.f32 %v8944, %v8565
      %v9024 = vmul.f32 %v8944, %v8566
      %v9025 = vmul.f32 %v8948, %v8595
      %v9026 = vmul.f32 %v8948, %v8596
      %v9027 = vmul.f32 %v8948, %v8597
      %v9028 = vmul.f32 %v8948, %v8598
      %v9029 = vmul.f32 %v8952, %v8627
      %v9030 = vmul.f32 %v8952, %v8628
      %v9031 = vmul.f32 %v8952, %v8629
      %v9032 = vmul.f32 %v8952, %v8630
      %v9033 = vmul.f32 %v8956, %v8659
      %v9034 = vmul.f32 %v8956, %v8660
      %v9035 = vmul.f32 %v8956, %v8661
      %v9036 = vmul.f32 %v8956, %v8662
      %v9037 = vmul.f32 %v8960, %v8691
      %v9038 = vmul.f32 %v8960, %v8692
      %v9039 = vmul.f32 %v8960, %v8693
      %v9040 = vmul.f32 %v8960, %v8694
      %v9041 = vmul.f32 %v8964, %v8723
      %v9042 = vmul.f32 %v8964, %v8724
      %v9043 = vmul.f32 %v8964, %v8725
      %v9044 = vmul.f32 %v8964, %v8726
      %v9045 = vmul.f32 %v8968, %v8755
      %v9046 = vmul.f32 %v8968, %v8756
      %v9047 = vmul.f32 %v8968, %v8757
      %v9048 = vmul.f32 %v8968, %v8758
      %s9049 = scalar_lea.vmem %s8, 16
      %v9050 = vld [vmem:[%s9049] sm:$0xff]
      %v9051 = vld [vmem:[%s9049 + $0x8] sm:$0xff]
      %v9054 = vcombine.high %v9050, %v9050
      %v9056 = vunpack.c.l.s4 1966171168
      %v9057 = vunpack.c.0.s8 %v9056
      %v9058 = vlaneseq
      %v9059 = vshrl.u32 %v9058, 7
      %v9060 = vsub.s32 %v9057, %v9059
      %v9061 = vrot.slane %v9050, %v9060
      %v9063 = vunpack.c.l.s4 1966171168
      %v9064 = vunpack.c.0.s8 %v9063
      %v9065 = vlaneseq
      %v9066 = vshrl.u32 %v9065, 7
      %v9067 = vsub.s32 %v9064, %v9066
      %v9068 = vrot.slane %v9054, %v9067
      %v9069 = vcombine.high %v9061, %v9061
      %v9070 = vcombine.high %v9068, %v9068
      %v9072 = vunpack.c.l.s4 1966171168
      %v9073 = vunpack.c.0.s8 %v9072
      %v9074 = vlaneseq
      %v9075 = vshrl.u32 %v9074, 7
      %v9076 = vsub.s32 %v9073, %v9075
      %v9077 = vrot.slane %v9061, %v9076
      %v9079 = vunpack.c.l.s4 1966171168
      %v9080 = vunpack.c.0.s8 %v9079
      %v9081 = vlaneseq
      %v9082 = vshrl.u32 %v9081, 7
      %v9083 = vsub.s32 %v9080, %v9082
      %v9084 = vrot.slane %v9068, %v9083
      %v9086 = vunpack.c.l.s4 1966171168
      %v9087 = vunpack.c.0.s8 %v9086
      %v9088 = vlaneseq
      %v9089 = vshrl.u32 %v9088, 7
      %v9090 = vsub.s32 %v9087, %v9089
      %v9091 = vrot.slane %v9069, %v9090
      %v9093 = vunpack.c.l.s4 1966171168
      %v9094 = vunpack.c.0.s8 %v9093
      %v9095 = vlaneseq
      %v9096 = vshrl.u32 %v9095, 7
      %v9097 = vsub.s32 %v9094, %v9096
      %v9098 = vrot.slane %v9070, %v9097
      %v9099 = vcombine.high %v9077, %v9077
      %v9100 = vcombine.high %v9084, %v9084
      %v9101 = vcombine.high %v9091, %v9091
      %v9102 = vcombine.high %v9098, %v9098
      %v9103 = vcombine.high %v9051, %v9051
      %v9105 = vunpack.c.l.s4 1966171168
      %v9106 = vunpack.c.0.s8 %v9105
      %v9107 = vlaneseq
      %v9108 = vshrl.u32 %v9107, 7
      %v9109 = vsub.s32 %v9106, %v9108
      %v9110 = vrot.slane %v9051, %v9109
      %v9112 = vunpack.c.l.s4 1966171168
      %v9113 = vunpack.c.0.s8 %v9112
      %v9114 = vlaneseq
      %v9115 = vshrl.u32 %v9114, 7
      %v9116 = vsub.s32 %v9113, %v9115
      %v9117 = vrot.slane %v9103, %v9116
      %v9118 = vcombine.high %v9110, %v9110
      %v9119 = vcombine.high %v9117, %v9117
      %v9121 = vunpack.c.l.s4 1966171168
      %v9122 = vunpack.c.0.s8 %v9121
      %v9123 = vlaneseq
      %v9124 = vshrl.u32 %v9123, 7
      %v9125 = vsub.s32 %v9122, %v9124
      %v9126 = vrot.slane %v9110, %v9125
      %v9128 = vunpack.c.l.s4 1966171168
      %v9129 = vunpack.c.0.s8 %v9128
      %v9130 = vlaneseq
      %v9131 = vshrl.u32 %v9130, 7
      %v9132 = vsub.s32 %v9129, %v9131
      %v9133 = vrot.slane %v9117, %v9132
      %v9135 = vunpack.c.l.s4 1966171168
      %v9136 = vunpack.c.0.s8 %v9135
      %v9137 = vlaneseq
      %v9138 = vshrl.u32 %v9137, 7
      %v9139 = vsub.s32 %v9136, %v9138
      %v9140 = vrot.slane %v9118, %v9139
      %v9142 = vunpack.c.l.s4 1966171168
      %v9143 = vunpack.c.0.s8 %v9142
      %v9144 = vlaneseq
      %v9145 = vshrl.u32 %v9144, 7
      %v9146 = vsub.s32 %v9143, %v9145
      %v9147 = vrot.slane %v9119, %v9146
      %v9148 = vcombine.high %v9126, %v9126
      %v9149 = vcombine.high %v9133, %v9133
      %v9150 = vcombine.high %v9140, %v9140
      %v9151 = vcombine.high %v9147, %v9147
      %v9152 = vlaneseq
      %v9153 = vshrl.u32 %v9152, 7
      %v9154 = vsub.s32 0, %v9153
      %v9155 = vrot.slane %v9077, %v9154
      %v9156 = vlaneseq
      %v9157 = vshrl.u32 %v9156, 7
      %v9158 = vsub.s32 0, %v9157
      %v9159 = vrot.slane %v9091, %v9158
      %v9160 = vlaneseq
      %v9161 = vshrl.u32 %v9160, 7
      %v9162 = vsub.s32 0, %v9161
      %v9163 = vrot.slane %v9099, %v9162
      %v9164 = vlaneseq
      %v9165 = vshrl.u32 %v9164, 7
      %v9166 = vsub.s32 0, %v9165
      %v9167 = vrot.slane %v9101, %v9166
      %v9168 = vlaneseq
      %v9169 = vshrl.u32 %v9168, 7
      %v9170 = vsub.s32 0, %v9169
      %v9171 = vrot.slane %v9084, %v9170
      %v9172 = vlaneseq
      %v9173 = vshrl.u32 %v9172, 7
      %v9174 = vsub.s32 0, %v9173
      %v9175 = vrot.slane %v9098, %v9174
      %v9176 = vlaneseq
      %v9177 = vshrl.u32 %v9176, 7
      %v9178 = vsub.s32 0, %v9177
      %v9179 = vrot.slane %v9100, %v9178
      %v9180 = vlaneseq
      %v9181 = vshrl.u32 %v9180, 7
      %v9182 = vsub.s32 0, %v9181
      %v9183 = vrot.slane %v9102, %v9182
      %v9184 = vlaneseq
      %v9185 = vshrl.u32 %v9184, 7
      %v9186 = vsub.s32 0, %v9185
      %v9187 = vrot.slane %v9126, %v9186
      %v9188 = vlaneseq
      %v9189 = vshrl.u32 %v9188, 7
      %v9190 = vsub.s32 0, %v9189
      %v9191 = vrot.slane %v9140, %v9190
      %v9192 = vlaneseq
      %v9193 = vshrl.u32 %v9192, 7
      %v9194 = vsub.s32 0, %v9193
      %v9195 = vrot.slane %v9148, %v9194
      %v9196 = vlaneseq
      %v9197 = vshrl.u32 %v9196, 7
      %v9198 = vsub.s32 0, %v9197
      %v9199 = vrot.slane %v9150, %v9198
      %v9200 = vlaneseq
      %v9201 = vshrl.u32 %v9200, 7
      %v9202 = vsub.s32 0, %v9201
      %v9203 = vrot.slane %v9133, %v9202
      %v9204 = vlaneseq
      %v9205 = vshrl.u32 %v9204, 7
      %v9206 = vsub.s32 0, %v9205
      %v9207 = vrot.slane %v9147, %v9206
      %v9208 = vlaneseq
      %v9209 = vshrl.u32 %v9208, 7
      %v9210 = vsub.s32 0, %v9209
      %v9211 = vrot.slane %v9149, %v9210
      %v9212 = vlaneseq
      %v9213 = vshrl.u32 %v9212, 7
      %v9214 = vsub.s32 0, %v9213
      %v9215 = vrot.slane %v9151, %v9214
      %v9232 = vmul.f32 %v9155, %v8307
      %v9233 = vmul.f32 %v9155, %v8308
      %v9234 = vmul.f32 %v9155, %v8309
      %v9235 = vmul.f32 %v9155, %v8310
      %v9236 = vmul.f32 %v9159, %v8339
      %v9237 = vmul.f32 %v9159, %v8340
      %v9238 = vmul.f32 %v9159, %v8341
      %v9239 = vmul.f32 %v9159, %v8342
      %v9240 = vmul.f32 %v9163, %v8371
      %v9241 = vmul.f32 %v9163, %v8372
      %v9242 = vmul.f32 %v9163, %v8373
      %v9243 = vmul.f32 %v9163, %v8374
      %v9244 = vmul.f32 %v9167, %v8403
      %v9245 = vmul.f32 %v9167, %v8404
      %v9246 = vmul.f32 %v9167, %v8405
      %v9247 = vmul.f32 %v9167, %v8406
      %v9248 = vmul.f32 %v9171, %v8435
      %v9249 = vmul.f32 %v9171, %v8436
      %v9250 = vmul.f32 %v9171, %v8437
      %v9251 = vmul.f32 %v9171, %v8438
      %v9252 = vmul.f32 %v9175, %v8467
      %v9253 = vmul.f32 %v9175, %v8468
      %v9254 = vmul.f32 %v9175, %v8469
      %v9255 = vmul.f32 %v9175, %v8470
      %v9256 = vmul.f32 %v9179, %v8499
      %v9257 = vmul.f32 %v9179, %v8500
      %v9258 = vmul.f32 %v9179, %v8501
      %v9259 = vmul.f32 %v9179, %v8502
      %v9260 = vmul.f32 %v9183, %v8531
      %v9261 = vmul.f32 %v9183, %v8532
      %v9262 = vmul.f32 %v9183, %v8533
      %v9263 = vmul.f32 %v9183, %v8534
      %v9264 = vmul.f32 %v9187, %v8563
      %v9265 = vmul.f32 %v9187, %v8564
      %v9266 = vmul.f32 %v9187, %v8565
      %v9267 = vmul.f32 %v9187, %v8566
      %v9268 = vmul.f32 %v9191, %v8595
      %v9269 = vmul.f32 %v9191, %v8596
      %v9270 = vmul.f32 %v9191, %v8597
      %v9271 = vmul.f32 %v9191, %v8598
      %v9272 = vmul.f32 %v9195, %v8627
      %v9273 = vmul.f32 %v9195, %v8628
      %v9274 = vmul.f32 %v9195, %v8629
      %v9275 = vmul.f32 %v9195, %v8630
      %v9276 = vmul.f32 %v9199, %v8659
      %v9277 = vmul.f32 %v9199, %v8660
      %v9278 = vmul.f32 %v9199, %v8661
      %v9279 = vmul.f32 %v9199, %v8662
      %v9280 = vmul.f32 %v9203, %v8691
      %v9281 = vmul.f32 %v9203, %v8692
      %v9282 = vmul.f32 %v9203, %v8693
      %v9283 = vmul.f32 %v9203, %v8694
      %v9284 = vmul.f32 %v9207, %v8723
      %v9285 = vmul.f32 %v9207, %v8724
      %v9286 = vmul.f32 %v9207, %v8725
      %v9287 = vmul.f32 %v9207, %v8726
      %v9288 = vmul.f32 %v9211, %v8755
      %v9289 = vmul.f32 %v9211, %v8756
      %v9290 = vmul.f32 %v9211, %v8757
      %v9291 = vmul.f32 %v9211, %v8758
      %v9292 = vmul.f32 %v9215, %v8787
      %v9293 = vmul.f32 %v9215, %v8788
      %v9294 = vmul.f32 %v9215, %v8789
      %v9295 = vmul.f32 %v9215, %v8790
      %v9296 = vadd.f32 %v8985, %v9232
      %v9297 = vadd.f32 %v8986, %v9233
      %v9298 = vadd.f32 %v8987, %v9234
      %v9299 = vadd.f32 %v8988, %v9235
      %v9300 = vadd.f32 %v8989, %v9236
      %v9301 = vadd.f32 %v8990, %v9237
      %v9302 = vadd.f32 %v8991, %v9238
      %v9303 = vadd.f32 %v8992, %v9239
      %v9304 = vadd.f32 %v8993, %v9240
      %v9305 = vadd.f32 %v8994, %v9241
      %v9306 = vadd.f32 %v8995, %v9242
      %v9307 = vadd.f32 %v8996, %v9243
      %v9308 = vadd.f32 %v8997, %v9244
      %v9309 = vadd.f32 %v8998, %v9245
      %v9310 = vadd.f32 %v8999, %v9246
      %v9311 = vadd.f32 %v9000, %v9247
      %v9312 = vadd.f32 %v9001, %v9248
      %v9313 = vadd.f32 %v9002, %v9249
      %v9314 = vadd.f32 %v9003, %v9250
      %v9315 = vadd.f32 %v9004, %v9251
      %v9316 = vadd.f32 %v9005, %v9252
      %v9317 = vadd.f32 %v9006, %v9253
      %v9318 = vadd.f32 %v9007, %v9254
      %v9319 = vadd.f32 %v9008, %v9255
      %v9320 = vadd.f32 %v9009, %v9256
      %v9321 = vadd.f32 %v9010, %v9257
      %v9322 = vadd.f32 %v9011, %v9258
      %v9323 = vadd.f32 %v9012, %v9259
      %v9324 = vadd.f32 %v9013, %v9260
      %v9325 = vadd.f32 %v9014, %v9261
      %v9326 = vadd.f32 %v9015, %v9262
      %v9327 = vadd.f32 %v9016, %v9263
      %v9328 = vadd.f32 %v9017, %v9264
      %v9329 = vadd.f32 %v9018, %v9265
      %v9330 = vadd.f32 %v9019, %v9266
      %v9331 = vadd.f32 %v9020, %v9267
      %v9332 = vadd.f32 %v9021, %v9268
      %v9333 = vadd.f32 %v9022, %v9269
      %v9334 = vadd.f32 %v9023, %v9270
      %v9335 = vadd.f32 %v9024, %v9271
      %v9336 = vadd.f32 %v9025, %v9272
      %v9337 = vadd.f32 %v9026, %v9273
      %v9338 = vadd.f32 %v9027, %v9274
      %v9339 = vadd.f32 %v9028, %v9275
      %v9340 = vadd.f32 %v9029, %v9276
      %v9341 = vadd.f32 %v9030, %v9277
      %v9342 = vadd.f32 %v9031, %v9278
      %v9343 = vadd.f32 %v9032, %v9279
      %v9344 = vadd.f32 %v9033, %v9280
      %v9345 = vadd.f32 %v9034, %v9281
      %v9346 = vadd.f32 %v9035, %v9282
      %v9347 = vadd.f32 %v9036, %v9283
      %v9348 = vadd.f32 %v9037, %v9284
      %v9349 = vadd.f32 %v9038, %v9285
      %v9350 = vadd.f32 %v9039, %v9286
      %v9351 = vadd.f32 %v9040, %v9287
      %v9352 = vadd.f32 %v9041, %v9288
      %v9353 = vadd.f32 %v9042, %v9289
      %v9354 = vadd.f32 %v9043, %v9290
      %v9355 = vadd.f32 %v9044, %v9291
      %v9356 = vadd.f32 %v9045, %v9292
      %v9357 = vadd.f32 %v9046, %v9293
      %v9358 = vadd.f32 %v9047, %v9294
      %v9359 = vadd.f32 %v9048, %v9295
      %s9360 = scalar_lea.vmem %s8, 32
      %v9361 = vld [vmem:[%s9360] sm:$0xff]
      %v9362 = vld [vmem:[%s9360 + $0x8] sm:$0xff]
      %v9365 = vcombine.high %v9361, %v9361
      %v9367 = vunpack.c.l.s4 1966171168
      %v9368 = vunpack.c.0.s8 %v9367
      %v9369 = vlaneseq
      %v9370 = vshrl.u32 %v9369, 7
      %v9371 = vsub.s32 %v9368, %v9370
      %v9372 = vrot.slane %v9361, %v9371
      %v9374 = vunpack.c.l.s4 1966171168
      %v9375 = vunpack.c.0.s8 %v9374
      %v9376 = vlaneseq
      %v9377 = vshrl.u32 %v9376, 7
      %v9378 = vsub.s32 %v9375, %v9377
      %v9379 = vrot.slane %v9365, %v9378
      %v9380 = vcombine.high %v9372, %v9372
      %v9381 = vcombine.high %v9379, %v9379
      %v9383 = vunpack.c.l.s4 1966171168
      %v9384 = vunpack.c.0.s8 %v9383
      %v9385 = vlaneseq
      %v9386 = vshrl.u32 %v9385, 7
      %v9387 = vsub.s32 %v9384, %v9386
      %v9388 = vrot.slane %v9372, %v9387
      %v9390 = vunpack.c.l.s4 1966171168
      %v9391 = vunpack.c.0.s8 %v9390
      %v9392 = vlaneseq
      %v9393 = vshrl.u32 %v9392, 7
      %v9394 = vsub.s32 %v9391, %v9393
      %v9395 = vrot.slane %v9379, %v9394
      %v9397 = vunpack.c.l.s4 1966171168
      %v9398 = vunpack.c.0.s8 %v9397
      %v9399 = vlaneseq
      %v9400 = vshrl.u32 %v9399, 7
      %v9401 = vsub.s32 %v9398, %v9400
      %v9402 = vrot.slane %v9380, %v9401
      %v9404 = vunpack.c.l.s4 1966171168
      %v9405 = vunpack.c.0.s8 %v9404
      %v9406 = vlaneseq
      %v9407 = vshrl.u32 %v9406, 7
      %v9408 = vsub.s32 %v9405, %v9407
      %v9409 = vrot.slane %v9381, %v9408
      %v9410 = vcombine.high %v9388, %v9388
      %v9411 = vcombine.high %v9395, %v9395
      %v9412 = vcombine.high %v9402, %v9402
      %v9413 = vcombine.high %v9409, %v9409
      %v9414 = vcombine.high %v9362, %v9362
      %v9416 = vunpack.c.l.s4 1966171168
      %v9417 = vunpack.c.0.s8 %v9416
      %v9418 = vlaneseq
      %v9419 = vshrl.u32 %v9418, 7
      %v9420 = vsub.s32 %v9417, %v9419
      %v9421 = vrot.slane %v9362, %v9420
      %v9423 = vunpack.c.l.s4 1966171168
      %v9424 = vunpack.c.0.s8 %v9423
      %v9425 = vlaneseq
      %v9426 = vshrl.u32 %v9425, 7
      %v9427 = vsub.s32 %v9424, %v9426
      %v9428 = vrot.slane %v9414, %v9427
      %v9429 = vcombine.high %v9421, %v9421
      %v9430 = vcombine.high %v9428, %v9428
      %v9432 = vunpack.c.l.s4 1966171168
      %v9433 = vunpack.c.0.s8 %v9432
      %v9434 = vlaneseq
      %v9435 = vshrl.u32 %v9434, 7
      %v9436 = vsub.s32 %v9433, %v9435
      %v9437 = vrot.slane %v9421, %v9436
      %v9439 = vunpack.c.l.s4 1966171168
      %v9440 = vunpack.c.0.s8 %v9439
      %v9441 = vlaneseq
      %v9442 = vshrl.u32 %v9441, 7
      %v9443 = vsub.s32 %v9440, %v9442
      %v9444 = vrot.slane %v9428, %v9443
      %v9446 = vunpack.c.l.s4 1966171168
      %v9447 = vunpack.c.0.s8 %v9446
      %v9448 = vlaneseq
      %v9449 = vshrl.u32 %v9448, 7
      %v9450 = vsub.s32 %v9447, %v9449
      %v9451 = vrot.slane %v9429, %v9450
      %v9453 = vunpack.c.l.s4 1966171168
      %v9454 = vunpack.c.0.s8 %v9453
      %v9455 = vlaneseq
      %v9456 = vshrl.u32 %v9455, 7
      %v9457 = vsub.s32 %v9454, %v9456
      %v9458 = vrot.slane %v9430, %v9457
      %v9459 = vcombine.high %v9437, %v9437
      %v9460 = vcombine.high %v9444, %v9444
      %v9461 = vcombine.high %v9451, %v9451
      %v9462 = vcombine.high %v9458, %v9458
      %v9463 = vlaneseq
      %v9464 = vshrl.u32 %v9463, 7
      %v9465 = vsub.s32 0, %v9464
      %v9466 = vrot.slane %v9388, %v9465
      %v9467 = vlaneseq
      %v9468 = vshrl.u32 %v9467, 7
      %v9469 = vsub.s32 0, %v9468
      %v9470 = vrot.slane %v9402, %v9469
      %v9471 = vlaneseq
      %v9472 = vshrl.u32 %v9471, 7
      %v9473 = vsub.s32 0, %v9472
      %v9474 = vrot.slane %v9410, %v9473
      %v9475 = vlaneseq
      %v9476 = vshrl.u32 %v9475, 7
      %v9477 = vsub.s32 0, %v9476
      %v9478 = vrot.slane %v9412, %v9477
      %v9479 = vlaneseq
      %v9480 = vshrl.u32 %v9479, 7
      %v9481 = vsub.s32 0, %v9480
      %v9482 = vrot.slane %v9395, %v9481
      %v9483 = vlaneseq
      %v9484 = vshrl.u32 %v9483, 7
      %v9485 = vsub.s32 0, %v9484
      %v9486 = vrot.slane %v9409, %v9485
      %v9487 = vlaneseq
      %v9488 = vshrl.u32 %v9487, 7
      %v9489 = vsub.s32 0, %v9488
      %v9490 = vrot.slane %v9411, %v9489
      %v9491 = vlaneseq
      %v9492 = vshrl.u32 %v9491, 7
      %v9493 = vsub.s32 0, %v9492
      %v9494 = vrot.slane %v9413, %v9493
      %v9495 = vlaneseq
      %v9496 = vshrl.u32 %v9495, 7
      %v9497 = vsub.s32 0, %v9496
      %v9498 = vrot.slane %v9437, %v9497
      %v9499 = vlaneseq
      %v9500 = vshrl.u32 %v9499, 7
      %v9501 = vsub.s32 0, %v9500
      %v9502 = vrot.slane %v9451, %v9501
      %v9503 = vlaneseq
      %v9504 = vshrl.u32 %v9503, 7
      %v9505 = vsub.s32 0, %v9504
      %v9506 = vrot.slane %v9459, %v9505
      %v9507 = vlaneseq
      %v9508 = vshrl.u32 %v9507, 7
      %v9509 = vsub.s32 0, %v9508
      %v9510 = vrot.slane %v9461, %v9509
      %v9511 = vlaneseq
      %v9512 = vshrl.u32 %v9511, 7
      %v9513 = vsub.s32 0, %v9512
      %v9514 = vrot.slane %v9444, %v9513
      %v9515 = vlaneseq
      %v9516 = vshrl.u32 %v9515, 7
      %v9517 = vsub.s32 0, %v9516
      %v9518 = vrot.slane %v9458, %v9517
      %v9519 = vlaneseq
      %v9520 = vshrl.u32 %v9519, 7
      %v9521 = vsub.s32 0, %v9520
      %v9522 = vrot.slane %v9460, %v9521
      %v9523 = vlaneseq
      %v9524 = vshrl.u32 %v9523, 7
      %v9525 = vsub.s32 0, %v9524
      %v9526 = vrot.slane %v9462, %v9525
      %v9543 = vmul.f32 %v9466, %v8307
      %v9544 = vmul.f32 %v9466, %v8308
      %v9545 = vmul.f32 %v9466, %v8309
      %v9546 = vmul.f32 %v9466, %v8310
      %v9547 = vmul.f32 %v9470, %v8339
      %v9548 = vmul.f32 %v9470, %v8340
      %v9549 = vmul.f32 %v9470, %v8341
      %v9550 = vmul.f32 %v9470, %v8342
      %v9551 = vmul.f32 %v9474, %v8371
      %v9552 = vmul.f32 %v9474, %v8372
      %v9553 = vmul.f32 %v9474, %v8373
      %v9554 = vmul.f32 %v9474, %v8374
      %v9555 = vmul.f32 %v9478, %v8403
      %v9556 = vmul.f32 %v9478, %v8404
      %v9557 = vmul.f32 %v9478, %v8405
      %v9558 = vmul.f32 %v9478, %v8406
      %v9559 = vmul.f32 %v9482, %v8435
      %v9560 = vmul.f32 %v9482, %v8436
      %v9561 = vmul.f32 %v9482, %v8437
      %v9562 = vmul.f32 %v9482, %v8438
      %v9563 = vmul.f32 %v9486, %v8467
      %v9564 = vmul.f32 %v9486, %v8468
      %v9565 = vmul.f32 %v9486, %v8469
      %v9566 = vmul.f32 %v9486, %v8470
      %v9567 = vmul.f32 %v9490, %v8499
      %v9568 = vmul.f32 %v9490, %v8500
      %v9569 = vmul.f32 %v9490, %v8501
      %v9570 = vmul.f32 %v9490, %v8502
      %v9571 = vmul.f32 %v9494, %v8531
      %v9572 = vmul.f32 %v9494, %v8532
      %v9573 = vmul.f32 %v9494, %v8533
      %v9574 = vmul.f32 %v9494, %v8534
      %v9575 = vmul.f32 %v9498, %v8563
      %v9576 = vmul.f32 %v9498, %v8564
      %v9577 = vmul.f32 %v9498, %v8565
      %v9578 = vmul.f32 %v9498, %v8566
      %v9579 = vmul.f32 %v9502, %v8595
      %v9580 = vmul.f32 %v9502, %v8596
      %v9581 = vmul.f32 %v9502, %v8597
      %v9582 = vmul.f32 %v9502, %v8598
      %v9583 = vmul.f32 %v9506, %v8627
      %v9584 = vmul.f32 %v9506, %v8628
      %v9585 = vmul.f32 %v9506, %v8629
      %v9586 = vmul.f32 %v9506, %v8630
      %v9587 = vmul.f32 %v9510, %v8659
      %v9588 = vmul.f32 %v9510, %v8660
      %v9589 = vmul.f32 %v9510, %v8661
      %v9590 = vmul.f32 %v9510, %v8662
      %v9591 = vmul.f32 %v9514, %v8691
      %v9592 = vmul.f32 %v9514, %v8692
      %v9593 = vmul.f32 %v9514, %v8693
      %v9594 = vmul.f32 %v9514, %v8694
      %v9595 = vmul.f32 %v9518, %v8723
      %v9596 = vmul.f32 %v9518, %v8724
      %v9597 = vmul.f32 %v9518, %v8725
      %v9598 = vmul.f32 %v9518, %v8726
      %v9599 = vmul.f32 %v9522, %v8755
      %v9600 = vmul.f32 %v9522, %v8756
      %v9601 = vmul.f32 %v9522, %v8757
      %v9602 = vmul.f32 %v9522, %v8758
      %v9603 = vmul.f32 %v9526, %v8787
      %v9604 = vmul.f32 %v9526, %v8788
      %v9605 = vmul.f32 %v9526, %v8789
      %v9606 = vmul.f32 %v9526, %v8790
      %s9607 = scalar_lea.vmem %s8, 48
      %v9608 = vld [vmem:[%s9607] sm:$0xff]
      %v9609 = vld [vmem:[%s9607 + $0x8] sm:$0xff]
      %v9612 = vcombine.high %v9608, %v9608
      %v9614 = vunpack.c.l.s4 1966171168
      %v9615 = vunpack.c.0.s8 %v9614
      %v9616 = vlaneseq
      %v9617 = vshrl.u32 %v9616, 7
      %v9618 = vsub.s32 %v9615, %v9617
      %v9619 = vrot.slane %v9608, %v9618
      %v9621 = vunpack.c.l.s4 1966171168
      %v9622 = vunpack.c.0.s8 %v9621
      %v9623 = vlaneseq
      %v9624 = vshrl.u32 %v9623, 7
      %v9625 = vsub.s32 %v9622, %v9624
      %v9626 = vrot.slane %v9612, %v9625
      %v9627 = vcombine.high %v9619, %v9619
      %v9628 = vcombine.high %v9626, %v9626
      %v9630 = vunpack.c.l.s4 1966171168
      %v9631 = vunpack.c.0.s8 %v9630
      %v9632 = vlaneseq
      %v9633 = vshrl.u32 %v9632, 7
      %v9634 = vsub.s32 %v9631, %v9633
      %v9635 = vrot.slane %v9619, %v9634
      %v9637 = vunpack.c.l.s4 1966171168
      %v9638 = vunpack.c.0.s8 %v9637
      %v9639 = vlaneseq
      %v9640 = vshrl.u32 %v9639, 7
      %v9641 = vsub.s32 %v9638, %v9640
      %v9642 = vrot.slane %v9626, %v9641
      %v9644 = vunpack.c.l.s4 1966171168
      %v9645 = vunpack.c.0.s8 %v9644
      %v9646 = vlaneseq
      %v9647 = vshrl.u32 %v9646, 7
      %v9648 = vsub.s32 %v9645, %v9647
      %v9649 = vrot.slane %v9627, %v9648
      %v9651 = vunpack.c.l.s4 1966171168
      %v9652 = vunpack.c.0.s8 %v9651
      %v9653 = vlaneseq
      %v9654 = vshrl.u32 %v9653, 7
      %v9655 = vsub.s32 %v9652, %v9654
      %v9656 = vrot.slane %v9628, %v9655
      %v9657 = vcombine.high %v9635, %v9635
      %v9658 = vcombine.high %v9642, %v9642
      %v9659 = vcombine.high %v9649, %v9649
      %v9660 = vcombine.high %v9656, %v9656
      %v9661 = vcombine.high %v9609, %v9609
      %v9663 = vunpack.c.l.s4 1966171168
      %v9664 = vunpack.c.0.s8 %v9663
      %v9665 = vlaneseq
      %v9666 = vshrl.u32 %v9665, 7
      %v9667 = vsub.s32 %v9664, %v9666
      %v9668 = vrot.slane %v9609, %v9667
      %v9670 = vunpack.c.l.s4 1966171168
      %v9671 = vunpack.c.0.s8 %v9670
      %v9672 = vlaneseq
      %v9673 = vshrl.u32 %v9672, 7
      %v9674 = vsub.s32 %v9671, %v9673
      %v9675 = vrot.slane %v9661, %v9674
      %v9676 = vcombine.high %v9668, %v9668
      %v9677 = vcombine.high %v9675, %v9675
      %v9679 = vunpack.c.l.s4 1966171168
      %v9680 = vunpack.c.0.s8 %v9679
      %v9681 = vlaneseq
      %v9682 = vshrl.u32 %v9681, 7
      %v9683 = vsub.s32 %v9680, %v9682
      %v9684 = vrot.slane %v9668, %v9683
      %v9686 = vunpack.c.l.s4 1966171168
      %v9687 = vunpack.c.0.s8 %v9686
      %v9688 = vlaneseq
      %v9689 = vshrl.u32 %v9688, 7
      %v9690 = vsub.s32 %v9687, %v9689
      %v9691 = vrot.slane %v9675, %v9690
      %v9693 = vunpack.c.l.s4 1966171168
      %v9694 = vunpack.c.0.s8 %v9693
      %v9695 = vlaneseq
      %v9696 = vshrl.u32 %v9695, 7
      %v9697 = vsub.s32 %v9694, %v9696
      %v9698 = vrot.slane %v9676, %v9697
      %v9700 = vunpack.c.l.s4 1966171168
      %v9701 = vunpack.c.0.s8 %v9700
      %v9702 = vlaneseq
      %v9703 = vshrl.u32 %v9702, 7
      %v9704 = vsub.s32 %v9701, %v9703
      %v9705 = vrot.slane %v9677, %v9704
      %v9706 = vcombine.high %v9684, %v9684
      %v9707 = vcombine.high %v9691, %v9691
      %v9708 = vcombine.high %v9698, %v9698
      %v9709 = vcombine.high %v9705, %v9705
      %v9710 = vlaneseq
      %v9711 = vshrl.u32 %v9710, 7
      %v9712 = vsub.s32 0, %v9711
      %v9713 = vrot.slane %v9635, %v9712
      %v9714 = vlaneseq
      %v9715 = vshrl.u32 %v9714, 7
      %v9716 = vsub.s32 0, %v9715
      %v9717 = vrot.slane %v9649, %v9716
      %v9718 = vlaneseq
      %v9719 = vshrl.u32 %v9718, 7
      %v9720 = vsub.s32 0, %v9719
      %v9721 = vrot.slane %v9657, %v9720
      %v9722 = vlaneseq
      %v9723 = vshrl.u32 %v9722, 7
      %v9724 = vsub.s32 0, %v9723
      %v9725 = vrot.slane %v9659, %v9724
      %v9726 = vlaneseq
      %v9727 = vshrl.u32 %v9726, 7
      %v9728 = vsub.s32 0, %v9727
      %v9729 = vrot.slane %v9642, %v9728
      %v9730 = vlaneseq
      %v9731 = vshrl.u32 %v9730, 7
      %v9732 = vsub.s32 0, %v9731
      %v9733 = vrot.slane %v9656, %v9732
      %v9734 = vlaneseq
      %v9735 = vshrl.u32 %v9734, 7
      %v9736 = vsub.s32 0, %v9735
      %v9737 = vrot.slane %v9658, %v9736
      %v9738 = vlaneseq
      %v9739 = vshrl.u32 %v9738, 7
      %v9740 = vsub.s32 0, %v9739
      %v9741 = vrot.slane %v9660, %v9740
      %v9742 = vlaneseq
      %v9743 = vshrl.u32 %v9742, 7
      %v9744 = vsub.s32 0, %v9743
      %v9745 = vrot.slane %v9684, %v9744
      %v9746 = vlaneseq
      %v9747 = vshrl.u32 %v9746, 7
      %v9748 = vsub.s32 0, %v9747
      %v9749 = vrot.slane %v9698, %v9748
      %v9750 = vlaneseq
      %v9751 = vshrl.u32 %v9750, 7
      %v9752 = vsub.s32 0, %v9751
      %v9753 = vrot.slane %v9706, %v9752
      %v9754 = vlaneseq
      %v9755 = vshrl.u32 %v9754, 7
      %v9756 = vsub.s32 0, %v9755
      %v9757 = vrot.slane %v9708, %v9756
      %v9758 = vlaneseq
      %v9759 = vshrl.u32 %v9758, 7
      %v9760 = vsub.s32 0, %v9759
      %v9761 = vrot.slane %v9691, %v9760
      %v9762 = vlaneseq
      %v9763 = vshrl.u32 %v9762, 7
      %v9764 = vsub.s32 0, %v9763
      %v9765 = vrot.slane %v9705, %v9764
      %v9766 = vlaneseq
      %v9767 = vshrl.u32 %v9766, 7
      %v9768 = vsub.s32 0, %v9767
      %v9769 = vrot.slane %v9707, %v9768
      %v9770 = vlaneseq
      %v9771 = vshrl.u32 %v9770, 7
      %v9772 = vsub.s32 0, %v9771
      %v9773 = vrot.slane %v9709, %v9772
      %v9790 = vmul.f32 %v9713, %v8339
      %v9791 = vmul.f32 %v9713, %v8340
      %v9792 = vmul.f32 %v9713, %v8341
      %v9793 = vmul.f32 %v9713, %v8342
      %v9794 = vmul.f32 %v9717, %v8371
      %v9795 = vmul.f32 %v9717, %v8372
      %v9796 = vmul.f32 %v9717, %v8373
      %v9797 = vmul.f32 %v9717, %v8374
      %v9798 = vmul.f32 %v9721, %v8403
      %v9799 = vmul.f32 %v9721, %v8404
      %v9800 = vmul.f32 %v9721, %v8405
      %v9801 = vmul.f32 %v9721, %v8406
      %v9802 = vmul.f32 %v9725, %v8435
      %v9803 = vmul.f32 %v9725, %v8436
      %v9804 = vmul.f32 %v9725, %v8437
      %v9805 = vmul.f32 %v9725, %v8438
      %v9806 = vmul.f32 %v9729, %v8467
      %v9807 = vmul.f32 %v9729, %v8468
      %v9808 = vmul.f32 %v9729, %v8469
      %v9809 = vmul.f32 %v9729, %v8470
      %v9810 = vmul.f32 %v9733, %v8499
      %v9811 = vmul.f32 %v9733, %v8500
      %v9812 = vmul.f32 %v9733, %v8501
      %v9813 = vmul.f32 %v9733, %v8502
      %v9814 = vmul.f32 %v9737, %v8531
      %v9815 = vmul.f32 %v9737, %v8532
      %v9816 = vmul.f32 %v9737, %v8533
      %v9817 = vmul.f32 %v9737, %v8534
      %v9818 = vmul.f32 %v9741, %v8563
      %v9819 = vmul.f32 %v9741, %v8564
      %v9820 = vmul.f32 %v9741, %v8565
      %v9821 = vmul.f32 %v9741, %v8566
      %v9822 = vmul.f32 %v9745, %v8595
      %v9823 = vmul.f32 %v9745, %v8596
      %v9824 = vmul.f32 %v9745, %v8597
      %v9825 = vmul.f32 %v9745, %v8598
      %v9826 = vmul.f32 %v9749, %v8627
      %v9827 = vmul.f32 %v9749, %v8628
      %v9828 = vmul.f32 %v9749, %v8629
      %v9829 = vmul.f32 %v9749, %v8630
      %v9830 = vmul.f32 %v9753, %v8659
      %v9831 = vmul.f32 %v9753, %v8660
      %v9832 = vmul.f32 %v9753, %v8661
      %v9833 = vmul.f32 %v9753, %v8662
      %v9834 = vmul.f32 %v9757, %v8691
      %v9835 = vmul.f32 %v9757, %v8692
      %v9836 = vmul.f32 %v9757, %v8693
      %v9837 = vmul.f32 %v9757, %v8694
      %v9838 = vmul.f32 %v9761, %v8723
      %v9839 = vmul.f32 %v9761, %v8724
      %v9840 = vmul.f32 %v9761, %v8725
      %v9841 = vmul.f32 %v9761, %v8726
      %v9842 = vmul.f32 %v9765, %v8755
      %v9843 = vmul.f32 %v9765, %v8756
      %v9844 = vmul.f32 %v9765, %v8757
      %v9845 = vmul.f32 %v9765, %v8758
      %v9846 = vmul.f32 %v9769, %v8787
      %v9847 = vmul.f32 %v9769, %v8788
      %v9848 = vmul.f32 %v9769, %v8789
      %v9849 = vmul.f32 %v9769, %v8790
      %v9850 = vmul.f32 %v9773, %v8787
      %v9851 = vmul.f32 %v9773, %v8788
      %v9852 = vmul.f32 %v9773, %v8789
      %v9853 = vmul.f32 %v9773, %v8790
      %v9854 = vadd.f32 %v9543, %v9790
      %v9855 = vadd.f32 %v9544, %v9791
      %v9856 = vadd.f32 %v9545, %v9792
      %v9857 = vadd.f32 %v9546, %v9793
      %v9858 = vadd.f32 %v9547, %v9794
      %v9859 = vadd.f32 %v9548, %v9795
      %v9860 = vadd.f32 %v9549, %v9796
      %v9861 = vadd.f32 %v9550, %v9797
      %v9862 = vadd.f32 %v9551, %v9798
      %v9863 = vadd.f32 %v9552, %v9799
      %v9864 = vadd.f32 %v9553, %v9800
      %v9865 = vadd.f32 %v9554, %v9801
      %v9866 = vadd.f32 %v9555, %v9802
      %v9867 = vadd.f32 %v9556, %v9803
      %v9868 = vadd.f32 %v9557, %v9804
      %v9869 = vadd.f32 %v9558, %v9805
      %v9870 = vadd.f32 %v9559, %v9806
      %v9871 = vadd.f32 %v9560, %v9807
      %v9872 = vadd.f32 %v9561, %v9808
      %v9873 = vadd.f32 %v9562, %v9809
      %v9874 = vadd.f32 %v9563, %v9810
      %v9875 = vadd.f32 %v9564, %v9811
      %v9876 = vadd.f32 %v9565, %v9812
      %v9877 = vadd.f32 %v9566, %v9813
      %v9878 = vadd.f32 %v9567, %v9814
      %v9879 = vadd.f32 %v9568, %v9815
      %v9880 = vadd.f32 %v9569, %v9816
      %v9881 = vadd.f32 %v9570, %v9817
      %v9882 = vadd.f32 %v9571, %v9818
      %v9883 = vadd.f32 %v9572, %v9819
      %v9884 = vadd.f32 %v9573, %v9820
      %v9885 = vadd.f32 %v9574, %v9821
      %v9886 = vadd.f32 %v9575, %v9822
      %v9887 = vadd.f32 %v9576, %v9823
      %v9888 = vadd.f32 %v9577, %v9824
      %v9889 = vadd.f32 %v9578, %v9825
      %v9890 = vadd.f32 %v9579, %v9826
      %v9891 = vadd.f32 %v9580, %v9827
      %v9892 = vadd.f32 %v9581, %v9828
      %v9893 = vadd.f32 %v9582, %v9829
      %v9894 = vadd.f32 %v9583, %v9830
      %v9895 = vadd.f32 %v9584, %v9831
      %v9896 = vadd.f32 %v9585, %v9832
      %v9897 = vadd.f32 %v9586, %v9833
      %v9898 = vadd.f32 %v9587, %v9834
      %v9899 = vadd.f32 %v9588, %v9835
      %v9900 = vadd.f32 %v9589, %v9836
      %v9901 = vadd.f32 %v9590, %v9837
      %v9902 = vadd.f32 %v9591, %v9838
      %v9903 = vadd.f32 %v9592, %v9839
      %v9904 = vadd.f32 %v9593, %v9840
      %v9905 = vadd.f32 %v9594, %v9841
      %v9906 = vadd.f32 %v9595, %v9842
      %v9907 = vadd.f32 %v9596, %v9843
      %v9908 = vadd.f32 %v9597, %v9844
      %v9909 = vadd.f32 %v9598, %v9845
      %v9910 = vadd.f32 %v9599, %v9846
      %v9911 = vadd.f32 %v9600, %v9847
      %v9912 = vadd.f32 %v9601, %v9848
      %v9913 = vadd.f32 %v9602, %v9849
      %v9914 = vadd.f32 %v9603, %v9850
      %v9915 = vadd.f32 %v9604, %v9851
      %v9916 = vadd.f32 %v9605, %v9852
      %v9917 = vadd.f32 %v9606, %v9853
      %9918 = vst [vmem:[%s332] sm:$0xff] %v9296
      %9919 = vst [vmem:[%s332 + $0x8] sm:$0xff] %v9297
      %9920 = vst [vmem:[%s332 + $0x10] sm:$0xff] %v9298
      %9921 = vst [vmem:[%s332 + $0x18] sm:$0xff] %v9299
      %9922 = vst [vmem:[%s332 + $0x20] sm:$0xff] %v9854
      %9923 = vst [vmem:[%s332 + $0x28] sm:$0xff] %v9855
      %9924 = vst [vmem:[%s332 + $0x30] sm:$0xff] %v9856
      %9925 = vst [vmem:[%s332 + $0x38] sm:$0xff] %v9857
      %9926 = vst [vmem:[%s332 + $0x40] sm:$0xff] %v9300
      %9927 = vst [vmem:[%s332 + $0x48] sm:$0xff] %v9301
      %9928 = vst [vmem:[%s332 + $0x50] sm:$0xff] %v9302
      %9929 = vst [vmem:[%s332 + $0x58] sm:$0xff] %v9303
      %9930 = vst [vmem:[%s332 + $0x60] sm:$0xff] %v9858
      %9931 = vst [vmem:[%s332 + $0x68] sm:$0xff] %v9859
      %9932 = vst [vmem:[%s332 + $0x70] sm:$0xff] %v9860
      %9933 = vst [vmem:[%s332 + $0x78] sm:$0xff] %v9861
      %9934 = vst [vmem:[%s332 + $0x80] sm:$0xff] %v9304
      %9935 = vst [vmem:[%s332 + $0x88] sm:$0xff] %v9305
      %9936 = vst [vmem:[%s332 + $0x90] sm:$0xff] %v9306
      %9937 = vst [vmem:[%s332 + $0x98] sm:$0xff] %v9307
      %9938 = vst [vmem:[%s332 + $0xa0] sm:$0xff] %v9862
      %9939 = vst [vmem:[%s332 + $0xa8] sm:$0xff] %v9863
      %9940 = vst [vmem:[%s332 + $0xb0] sm:$0xff] %v9864
      %9941 = vst [vmem:[%s332 + $0xb8] sm:$0xff] %v9865
      %9942 = vst [vmem:[%s332 + $0xc0] sm:$0xff] %v9308
      %9943 = vst [vmem:[%s332 + $0xc8] sm:$0xff] %v9309
      %9944 = vst [vmem:[%s332 + $0xd0] sm:$0xff] %v9310
      %9945 = vst [vmem:[%s332 + $0xd8] sm:$0xff] %v9311
      %9946 = vst [vmem:[%s332 + $0xe0] sm:$0xff] %v9866
      %9947 = vst [vmem:[%s332 + $0xe8] sm:$0xff] %v9867
      %9948 = vst [vmem:[%s332 + $0xf0] sm:$0xff] %v9868
      %9949 = vst [vmem:[%s332 + $0xf8] sm:$0xff] %v9869
      %9950 = vst [vmem:[%s332 + $0x100] sm:$0xff] %v9312
      %9951 = vst [vmem:[%s332 + $0x108] sm:$0xff] %v9313
      %9952 = vst [vmem:[%s332 + $0x110] sm:$0xff] %v9314
      %9953 = vst [vmem:[%s332 + $0x118] sm:$0xff] %v9315
      %9954 = vst [vmem:[%s332 + $0x120] sm:$0xff] %v9870
      %9955 = vst [vmem:[%s332 + $0x128] sm:$0xff] %v9871
      %9956 = vst [vmem:[%s332 + $0x130] sm:$0xff] %v9872
      %9957 = vst [vmem:[%s332 + $0x138] sm:$0xff] %v9873
      %9958 = vst [vmem:[%s332 + $0x140] sm:$0xff] %v9316
      %9959 = vst [vmem:[%s332 + $0x148] sm:$0xff] %v9317
      %9960 = vst [vmem:[%s332 + $0x150] sm:$0xff] %v9318
      %9961 = vst [vmem:[%s332 + $0x158] sm:$0xff] %v9319
      %9962 = vst [vmem:[%s332 + $0x160] sm:$0xff] %v9874
      %9963 = vst [vmem:[%s332 + $0x168] sm:$0xff] %v9875
      %9964 = vst [vmem:[%s332 + $0x170] sm:$0xff] %v9876
      %9965 = vst [vmem:[%s332 + $0x178] sm:$0xff] %v9877
      %9966 = vst [vmem:[%s332 + $0x180] sm:$0xff] %v9320
      %9967 = vst [vmem:[%s332 + $0x188] sm:$0xff] %v9321
      %9968 = vst [vmem:[%s332 + $0x190] sm:$0xff] %v9322
      %9969 = vst [vmem:[%s332 + $0x198] sm:$0xff] %v9323
      %9970 = vst [vmem:[%s332 + $0x1a0] sm:$0xff] %v9878
      %9971 = vst [vmem:[%s332 + $0x1a8] sm:$0xff] %v9879
      %9972 = vst [vmem:[%s332 + $0x1b0] sm:$0xff] %v9880
      %9973 = vst [vmem:[%s332 + $0x1b8] sm:$0xff] %v9881
      %9974 = vst [vmem:[%s332 + $0x1c0] sm:$0xff] %v9324
      %9975 = vst [vmem:[%s332 + $0x1c8] sm:$0xff] %v9325
      %9976 = vst [vmem:[%s332 + $0x1d0] sm:$0xff] %v9326
      %9977 = vst [vmem:[%s332 + $0x1d8] sm:$0xff] %v9327
      %9978 = vst [vmem:[%s332 + $0x1e0] sm:$0xff] %v9882
      %9979 = vst [vmem:[%s332 + $0x1e8] sm:$0xff] %v9883
      %9980 = vst [vmem:[%s332 + $0x1f0] sm:$0xff] %v9884
      %9981 = vst [vmem:[%s332 + $0x1f8] sm:$0xff] %v9885
      %9982 = vst [vmem:[%s332 + $0x200] sm:$0xff] %v9328
      %9983 = vst [vmem:[%s332 + $0x208] sm:$0xff] %v9329
      %9984 = vst [vmem:[%s332 + $0x210] sm:$0xff] %v9330
      %9985 = vst [vmem:[%s332 + $0x218] sm:$0xff] %v9331
      %9986 = vst [vmem:[%s332 + $0x220] sm:$0xff] %v9886
      %9987 = vst [vmem:[%s332 + $0x228] sm:$0xff] %v9887
      %9988 = vst [vmem:[%s332 + $0x230] sm:$0xff] %v9888
      %9989 = vst [vmem:[%s332 + $0x238] sm:$0xff] %v9889
      %9990 = vst [vmem:[%s332 + $0x240] sm:$0xff] %v9332
      %9991 = vst [vmem:[%s332 + $0x248] sm:$0xff] %v9333
      %9992 = vst [vmem:[%s332 + $0x250] sm:$0xff] %v9334
      %9993 = vst [vmem:[%s332 + $0x258] sm:$0xff] %v9335
      %9994 = vst [vmem:[%s332 + $0x260] sm:$0xff] %v9890
      %9995 = vst [vmem:[%s332 + $0x268] sm:$0xff] %v9891
      %9996 = vst [vmem:[%s332 + $0x270] sm:$0xff] %v9892
      %9997 = vst [vmem:[%s332 + $0x278] sm:$0xff] %v9893
      %9998 = vst [vmem:[%s332 + $0x280] sm:$0xff] %v9336
      %9999 = vst [vmem:[%s332 + $0x288] sm:$0xff] %v9337
      %10000 = vst [vmem:[%s332 + $0x290] sm:$0xff] %v9338
      %10001 = vst [vmem:[%s332 + $0x298] sm:$0xff] %v9339
      %10002 = vst [vmem:[%s332 + $0x2a0] sm:$0xff] %v9894
      %10003 = vst [vmem:[%s332 + $0x2a8] sm:$0xff] %v9895
      %10004 = vst [vmem:[%s332 + $0x2b0] sm:$0xff] %v9896
      %10005 = vst [vmem:[%s332 + $0x2b8] sm:$0xff] %v9897
      %10006 = vst [vmem:[%s332 + $0x2c0] sm:$0xff] %v9340
      %10007 = vst [vmem:[%s332 + $0x2c8] sm:$0xff] %v9341
      %10008 = vst [vmem:[%s332 + $0x2d0] sm:$0xff] %v9342
      %10009 = vst [vmem:[%s332 + $0x2d8] sm:$0xff] %v9343
      %10010 = vst [vmem:[%s332 + $0x2e0] sm:$0xff] %v9898
      %10011 = vst [vmem:[%s332 + $0x2e8] sm:$0xff] %v9899
      %10012 = vst [vmem:[%s332 + $0x2f0] sm:$0xff] %v9900
      %10013 = vst [vmem:[%s332 + $0x2f8] sm:$0xff] %v9901
      %10014 = vst [vmem:[%s332 + $0x300] sm:$0xff] %v9344
      %10015 = vst [vmem:[%s332 + $0x308] sm:$0xff] %v9345
      %10016 = vst [vmem:[%s332 + $0x310] sm:$0xff] %v9346
      %10017 = vst [vmem:[%s332 + $0x318] sm:$0xff] %v9347
      %10018 = vst [vmem:[%s332 + $0x320] sm:$0xff] %v9902
      %10019 = vst [vmem:[%s332 + $0x328] sm:$0xff] %v9903
      %10020 = vst [vmem:[%s332 + $0x330] sm:$0xff] %v9904
      %10021 = vst [vmem:[%s332 + $0x338] sm:$0xff] %v9905
      %10022 = vst [vmem:[%s332 + $0x340] sm:$0xff] %v9348
      %10023 = vst [vmem:[%s332 + $0x348] sm:$0xff] %v9349
      %10024 = vst [vmem:[%s332 + $0x350] sm:$0xff] %v9350
      %10025 = vst [vmem:[%s332 + $0x358] sm:$0xff] %v9351
      %10026 = vst [vmem:[%s332 + $0x360] sm:$0xff] %v9906
      %10027 = vst [vmem:[%s332 + $0x368] sm:$0xff] %v9907
      %10028 = vst [vmem:[%s332 + $0x370] sm:$0xff] %v9908
      %10029 = vst [vmem:[%s332 + $0x378] sm:$0xff] %v9909
      %10030 = vst [vmem:[%s332 + $0x380] sm:$0xff] %v9352
      %10031 = vst [vmem:[%s332 + $0x388] sm:$0xff] %v9353
      %10032 = vst [vmem:[%s332 + $0x390] sm:$0xff] %v9354
      %10033 = vst [vmem:[%s332 + $0x398] sm:$0xff] %v9355
      %10034 = vst [vmem:[%s332 + $0x3a0] sm:$0xff] %v9910
      %10035 = vst [vmem:[%s332 + $0x3a8] sm:$0xff] %v9911
      %10036 = vst [vmem:[%s332 + $0x3b0] sm:$0xff] %v9912
      %10037 = vst [vmem:[%s332 + $0x3b8] sm:$0xff] %v9913
      %10038 = vst [vmem:[%s332 + $0x3c0] sm:$0xff] %v9356
      %10039 = vst [vmem:[%s332 + $0x3c8] sm:$0xff] %v9357
      %10040 = vst [vmem:[%s332 + $0x3d0] sm:$0xff] %v9358
      %10041 = vst [vmem:[%s332 + $0x3d8] sm:$0xff] %v9359
      %10042 = vst [vmem:[%s332 + $0x3e0] sm:$0xff] %v9914
      %10043 = vst [vmem:[%s332 + $0x3e8] sm:$0xff] %v9915
      %10044 = vst [vmem:[%s332 + $0x3f0] sm:$0xff] %v9916
      %10045 = vst [vmem:[%s332 + $0x3f8] sm:$0xff] %v9917
      %p10046 = scmp.lt.s32.totalorder %s20, 1
      %s10047 = scalar_select %p10046, %s20, 1
      %s10048 = smul.addr %s10047, 128
      %s10049 = smul.addr %s10048, 8
      %s10050 = scalar_lea.vmem %s9, %s10049
      // Predicated region
      $region57: #{up_forward.1} parent=55 // pred_check
        %p10051 = pneg %p232
      $region58: #{up_forward.1} parent=55 // pred_check_branch
        %10053 = sbr.rel (%p10051) target = $region60
      $region59: #{up_forward.1} parent=55 // pred_region
        _
      $region60: #{up_forward.1} parent=55 // pred_fallthru
        _
    $region56: #{up_forward.1} parent=5 // pred_fallthru
      _
    %p10054 = scmp.le.s32.totalorder 2, %s15
    // Predicated region
    $region61: #{up_forward.1} parent=5 // pred_check
      %p10055 = pneg %p10054
    $region62: #{up_forward.1} parent=5 // pred_check_branch
      %10057 = sbr.rel (%p10055) target = $region64
    $region63: #{up_forward.1} parent=5 // pred_region
      %s10058 = ssub.s32 %s15, 2
      // Predicated region
      $region65: #{up_forward.1} parent=63 // pred_check
        %p10059 = pneg %p238
      $region66: #{up_forward.1} parent=63 // pred_check_branch
        %10061 = sbr.rel (%p10059) target = $region68
      $region67: #{up_forward.1} parent=63 // pred_region
        %p10062 = scmp.lt.s32.totalorder %s21, 1
        %s10063 = scalar_select %p10062, %s21, 1
        %s10064 = smul.addr %s10063, 128
        %s10065 = smul.addr %s10064, 8
        %s10066 = scalar_lea.vmem %s9, %s10065
      $region68: #{up_forward.1} parent=63 // pred_fallthru
        _
    $region64: #{up_forward.1} parent=5 // pred_fallthru
      _
  $region6: #{up_forward.1} parent=0 // loop_footer
    %s19 = sadd.s32 1, %s15
  $region7: #{up_forward.1} parent=0 // loop_footer_branch
    %14 = sbr.rel target = $region3
  $region8: #{up_forward.1} parent=0 // loop_exit
    _

</llo_original>
